<compile_context>
chip_gen: v5e
topology: v5e:2x2
jax: 0.10.0
libtpu: 0.0.40
codegen_flags: <defaults>
</compile_context>

<pallas_src>
import functools
import numpy as np
import jax
import jax.numpy as jnp
from jax.experimental import pallas as pl
from jax.experimental.pallas import tpu as pltpu


# --------------------------------------------------------------------------------------
# generation-aware VMEM budgeting + tile selection
# --------------------------------------------------------------------------------------

def _vmem_limit_bytes():
    """Scoped-VMEM limit: half of physical VMEM (64 MiB on v5e/v6e, 32 MiB on v7x)."""
    try:
        cap = int(getattr(pltpu.get_tpu_info(), "vmem_capacity_bytes", 0))
    except Exception:
        cap = 0
    if cap <= 0:
        cap = 64 << 20                       # conservative: assume the smallest (v7x) VMEM
    return max(32 << 20, min(cap // 2, 64 << 20))


def _pick_tile(total, prefs, fits=None):
    """First preference dividing `total` (and satisfying `fits`); falls back to the
    smallest dividing preference, then to the full extent."""
    cands = [t for t in prefs if t <= total and total % t == 0]
    if not cands:
        return total
    if fits is None:
        return cands[0]
    for t in cands:
        if fits(t):
            return t
    return min(cands)


def _prefer_two_blocks(total, t):
    """Keep >=2 blocks along a 'parallel' grid axis (v7x has 2 TensorCores) as long as
    the tile stays lane-dense (>=128 lanes); on 1-TC chips the extra step is ~0.35 us."""
    if total // t < 2 and t % 2 == 0 and t // 2 >= 128 and total % (t // 2) == 0:
        return t // 2
    return t


# --------------------------------------------------------------------------------------
# Pallas kernels
# --------------------------------------------------------------------------------------

def _interp_kernel(g_ref, co_ref, i0_ref, i1_ref, fr_ref, o_ref):
    """Fused factorized trilinear-weight densification + sampling matmul.

    Grid: (M-tiles ["parallel"], V-tiles ["arbitrary" reduction, accumulated in o_ref]).
    g_ref:  (B2, tV)  k-space grid rows (batch*real/imag channels flattened into rows)
    co_ref: (tV, 3)   per-voxel (d, h, w) sub-indices of this V tile (int32)
    i0_ref: (3, tM)   per-axis lower corner indices (d0, h0, w0)
    i1_ref: (3, tM)   per-axis upper corner indices (d1, h1, w1)
    fr_ref: (3, tM)   per-axis fractional weights (ad, ah, aw)
    o_ref:  (B2, tM)  sampled k-space (resident across the V axis; zeroed at k == 0)
    """
    k = pl.program_id(1)

    @pl.when(k == 0)
    def _():
        o_ref[...] = jnp.zeros_like(o_ref)

    co = co_ref[...]                                              # [tV, 3] int32
    i0 = i0_ref[...]                                              # [3, tM] int32
    i1 = i1_ref[...]
    fr = fr_ref[...]                                              # [3, tM] f32

    # Factorized densification: product of three per-axis selectors (pure VPU).
    wt = None
    for a in range(3):                                            # unrolled
        g = co[:, a:a + 1]                                        # [tV, 1]
        lo = i0[a:a + 1, :]                                       # [1, tM]
        hi = i1[a:a + 1, :]
        f = fr[a:a + 1, :]
        s = (jnp.where(g == lo, 1.0 - f, 0.0)
             + jnp.where(g == hi, f, 0.0))                        # [tV, tM]
        wt = s if wt is None else wt * s

    o_ref[...] += jnp.dot(g_ref[...], wt, preferred_element_type=jnp.float32)

    # TODO(synk): a sparsity-aware variant (skip V tiles containing none of this M tile's
    # corners via scalar-prefetched per-tile ranges) would cut the O(M*V) work further.


def _ndft_adjoint_kernel(a_ref, c_ref, s_ref, or_ref, oi_ref):
    """M-tiled complex matmul for the adjoint NDFT with separable phase tables.

    Grid: (HW-tiles ["parallel"], M-tiles ["arbitrary" reduction]).
    a_ref:  (2P, tM)  rows = [Re(ksp*E_d) (P rows), Im(ksp*E_d) (P rows)], P = B*D
    c_ref:  (tM, tHW) Re(E_h * E_w) table block
    s_ref:  (tM, tHW) Im(E_h * E_w) table block
    or/oi:  (P, tHW)  real / imag outputs (resident across the M axis; zeroed at k == 0)
    """
    k = pl.program_id(1)

    @pl.when(k == 0)
    def _():
        or_ref[...] = jnp.zeros_like(or_ref)
        oi_ref[...] = jnp.zeros_like(oi_ref)

    p = or_ref.shape[0]
    a = a_ref[...]                                                         # [2P, tM]
    kc = jnp.dot(a, c_ref[...], preferred_element_type=jnp.float32)        # [2P, tHW]
    ks = jnp.dot(a, s_ref[...], preferred_element_type=jnp.float32)
    or_ref[...] += kc[0:p, :] - ks[p:2 * p, :]                             # Re
    oi_ref[...] += ks[0:p, :] + kc[p:2 * p, :]                             # Im


# --------------------------------------------------------------------------------------
# pallas_call wrappers
# --------------------------------------------------------------------------------------

def pallas_trilinear_sample(grid_flat, coords, i0, i1, fr):
    """grid_flat: [B*2, V]; coords: [V, 3]; i0/i1: [3, M]; fr: [3, M]  ->  ksp [B*2, M]."""
    B2, V = grid_flat.shape
    M = i0.shape[1]
    limit = _vmem_limit_bytes()
    budget = limit // 3

    tM = _prefer_two_blocks(M, _pick_tile(M, (512, 256, 1024, 128, 2048, 64)))

    def fits(tv):
        # ~6 live [tV, tM] f32 temporaries + lane-padded (tV, 3) coord block (x2 buffers)
        return 6 * tv * tM * 4 + 2 * tv * 128 * 4 <= budget

    tV = _pick_tile(V, (2048, 1024, 512, 256, 128), fits)

    return pl.pallas_call(
        _interp_kernel,
        out_shape=jax.ShapeDtypeStruct((B2, M), jnp.float32),
        grid_spec=pltpu.PrefetchScalarGridSpec(
            num_scalar_prefetch=0,
            grid=(M // tM, V // tV),
            in_specs=[pl.BlockSpec((B2, tV), lambda i, k: (0, k)),
                      pl.BlockSpec((tV, 3), lambda i, k: (k, 0)),
                      pl.BlockSpec((3, tM), lambda i, k: (0, i)),
                      pl.BlockSpec((3, tM), lambda i, k: (0, i)),
                      pl.BlockSpec((3, tM), lambda i, k: (0, i))],
            out_specs=pl.BlockSpec((B2, tM), lambda i, k: (0, i)),
        ),
        compiler_params=pltpu.CompilerParams(
            dimension_semantics=("parallel", "arbitrary"),
            vmem_limit_bytes=limit),
    )(grid_flat, coords, i0, i1, fr)


def pallas_ndft_adjoint(A, chw, shw):
    """A: [2P, M] stacked Re/Im of ksp*E_d; chw/shw: [M, HW] separable HW phase tables
    ->  (out_r, out_i) each [P, HW]."""
    P2, M = A.shape
    HW = chw.shape[1]
    P = P2 // 2
    limit = _vmem_limit_bytes()
    budget = limit // 3

    tHW = _prefer_two_blocks(HW, _pick_tile(HW, (512, 256, 1024, 128, 2048, 64)))

    def fits(tm):
        # double-buffered c/s blocks + A block + matmul temporaries/outputs
        return 4 * tm * tHW * 4 + 2 * P2 * tm * 4 + 4 * P2 * tHW * 4 <= budget

    tM = _pick_tile(M, (4096, 2048, 1024, 512, 256, 128), fits)

    return pl.pallas_call(
        _ndft_adjoint_kernel,
        out_shape=(jax.ShapeDtypeStruct((P, HW), jnp.float32),
                   jax.ShapeDtypeStruct((P, HW), jnp.float32)),
        grid_spec=pltpu.PrefetchScalarGridSpec(
            num_scalar_prefetch=0,
            grid=(HW // tHW, M // tM),
            in_specs=[pl.BlockSpec((P2, tM), lambda j, k: (0, k)),
                      pl.BlockSpec((tM, tHW), lambda j, k: (k, j)),
                      pl.BlockSpec((tM, tHW), lambda j, k: (k, j))],
            out_specs=[pl.BlockSpec((P, tHW), lambda j, k: (0, j)),
                       pl.BlockSpec((P, tHW), lambda j, k: (0, j))],
        ),
        compiler_params=pltpu.CompilerParams(
            dimension_semantics=("parallel", "arbitrary"),
            vmem_limit_bytes=limit),
    )(A, chw, shw)


# --------------------------------------------------------------------------------------
# table construction (tiny, fused by XLA under jit)
# --------------------------------------------------------------------------------------

def build_axis_corner_tables(x, D, H, W):
    """Per-axis lower/upper corner indices [3, M] (rows = d, h, w) and fractions [3, M]."""
    fh = jnp.clip(x[:, 0] + H / 2.0, 0.0, H - 1.0)   # coord 0 -> H axis (res)
    fw = jnp.clip(x[:, 1] + W / 2.0, 0.0, W - 1.0)   # coord 1 -> W axis (res)
    fd = jnp.clip(x[:, 2] + D / 2.0, 0.0, D - 1.0)   # coord 2 -> D axis (depth)
    h0 = jnp.floor(fh).astype(jnp.int32); h1 = jnp.minimum(h0 + 1, H - 1)
    w0 = jnp.floor(fw).astype(jnp.int32); w1 = jnp.minimum(w0 + 1, W - 1)
    d0 = jnp.floor(fd).astype(jnp.int32); d1 = jnp.minimum(d0 + 1, D - 1)
    i0 = jnp.stack([d0, h0, w0], 0).astype(jnp.int32)
    i1 = jnp.stack([d1, h1, w1], 0).astype(jnp.int32)
    fr = jnp.stack([fd - d0, fh - h0, fw - w0], 0).astype(jnp.float32)
    return i0, i1, fr


def build_grid_coord_table(D, H, W):
    """Per-voxel (d, h, w) sub-indices [V, 3] int32 (V = D*H*W, row-major d,h,w)."""
    v = jnp.arange(D * H * W, dtype=jnp.int32)
    gd = v // (H * W)
    gh = (v // W) % H
    gw = v % W
    return jnp.stack([gd, gh, gw], axis=1)


def build_separable_phase_tables(x, D, H, W):
    """Separable complex-exponential tables for the adjoint NDFT.

    Only 2*M*(D+H+W) transcendentals are evaluated (vs 2*M*D*H*W for the dense phase).
    The H/W factors are combined here (cheap XLA VPU work) into [M, H*W] cos/sin tables;
    the D factor (cd/sd, [M, D]) is folded into the matmul LHS by the caller.
    """
    M = x.shape[0]
    gh = jnp.arange(H, dtype=jnp.float32) - H / 2.0
    gw = jnp.arange(W, dtype=jnp.float32) - W / 2.0
    gd = jnp.arange(D, dtype=jnp.float32) - D / 2.0
    ph_h = (2.0 * jnp.pi / H) * x[:, 0:1] * gh[None, :]          # [M, H]
    ph_w = (2.0 * jnp.pi / W) * x[:, 1:2] * gw[None, :]          # [M, W]
    ph_d = (2.0 * jnp.pi / D) * x[:, 2:3] * gd[None, :]          # [M, D]
    ch, sh = jnp.cos(ph_h), jnp.sin(ph_h)
    cw, sw = jnp.cos(ph_w), jnp.sin(ph_w)
    cd, sd = jnp.cos(ph_d), jnp.sin(ph_d)
    chw = (ch[:, :, None] * cw[:, None, :]
           - sh[:, :, None] * sw[:, None, :]).reshape(M, H * W)  # Re(E_h * E_w)
    shw = (sh[:, :, None] * cw[:, None, :]
           + ch[:, :, None] * sw[:, None, :]).reshape(M, H * W)  # Im(E_h * E_w)
    return chw, shw, cd, sd


# --------------------------------------------------------------------------------------
# jitted forward pipeline
# --------------------------------------------------------------------------------------

def _forward_impl(inp, x_param, orig_traj, *, res):
    inp = inp[:, 0, 0]                                   # squeeze(1).squeeze(1)
    B, D, H, W, _ = inp.shape
    V = D * H * W

    # trajectory: clamp + NaN refill.
    # TODO(synk): torch masked_scatter consumes source elements sequentially; the
    # positional jnp.where below is equivalent only when no NaNs are present.
    x = x_param.reshape(-1, 3)
    x = jnp.clip(x, -res / 2.0, res / 2.0)
    x = jnp.where(jnp.isnan(x), orig_traj.reshape(-1, 3), x)
    M = x.shape[0]

    # ---- stage 1: trilinear sampling of the complex k-space grid at the trajectory.
    i0, i1, fr = build_axis_corner_tables(x, D, H, W)              # [3, M] each
    coords = build_grid_coord_table(D, H, W)                       # [V, 3]
    grid_flat = jnp.transpose(inp, (0, 4, 1, 2, 3)).reshape(B * 2, V)
    ksp = pallas_trilinear_sample(grid_flat, coords, i0, i1, fr)   # [B*2, M]
    ksp = ksp.reshape(B, 2, M)

    # ---- stage 2: adjoint NUFFT back onto the Cartesian grid (separable phases).
    # TODO(synk): reference pytorch_nufft uses Kaiser-Bessel gridding + oversampled FFT;
    # here the mathematically exact (unnormalized) adjoint NDFT is computed directly.
    chw, shw, cd, sd = build_separable_phase_tables(x, D, H, W)
    kr, ki = ksp[:, 0, :], ksp[:, 1, :]                            # [B, M]
    # Fold the depth factor into the matmul LHS: A[b, d, m] = ksp[b, m] * E_d[m, d].
    # This also fills 2*B*D MXU rows instead of 2*B (better MXU utilization).
    a_r = kr[:, None, :] * cd.T[None, :, :] - ki[:, None, :] * sd.T[None, :, :]  # [B,D,M]
    a_i = kr[:, None, :] * sd.T[None, :, :] + ki[:, None, :] * cd.T[None, :, :]
    P = B * D
    A = jnp.concatenate([a_r.reshape(P, M), a_i.reshape(P, M)], axis=0)          # [2P, M]
    out_r, out_i = pallas_ndft_adjoint(A, chw, shw)                # [P, H*W] each
    out = jnp.stack([out_r.reshape(B, D, H, W),
                     out_i.reshape(B, D, H, W)], axis=-1)          # [B, D, H, W, 2]
    return out[:, None]                                            # unsqueeze(1)


# --------------------------------------------------------------------------------------
# Module port
# --------------------------------------------------------------------------------------

class SubsamplingLayer3D:
    """JAX/Pallas port of Subsampling_Layer_3D (forward pass)."""

    def __init__(self, acceleration_factor, res, depth, trajectory_learning,
                 initialization, points_per_shot, key):
        self.acceleration_factor = acceleration_factor
        self.res = res
        self.depth = depth
        self.initialization = initialization
        self.points_per_shot = points_per_shot
        num_shots = res * depth // acceleration_factor
        scale = jnp.array([res / 2.0, res / 2.0, depth / 2.0], jnp.float32)
        if initialization == 'gaussian':
            x = jax.random.normal(key, (num_shots, points_per_shot, 3), jnp.float32) * scale
        elif initialization == 'uniform':
            x = (jax.random.uniform(key, (num_shots, points_per_shot, 3), jnp.float32) * 2.0 - 1.0) * scale
        else:
            # TODO(synk): 'sticks'/'radial'/'2dradial'/'stackofstars'/'fullkspace' inits need
            # external .mat/.npy files or host loops; only the random inits are ported here.
            raise NotImplementedError(initialization)
        self.orig_trajectory = x      # buffer
        self.x = x                    # learnable nn.Parameter in torch; plain array here
        self._fwd = jax.jit(functools.partial(_forward_impl, res=res))

    def _effective_trajectory(self):
        x = self.x.reshape(-1, 3)
        x = jnp.clip(x, -self.res / 2.0, self.res / 2.0)
        x = jnp.where(jnp.isnan(x), self.orig_trajectory.reshape(-1, 3), x)
        return x

    def forward(self, inp):
        # inp: [B, 1, 1, D, H, W, 2]  ->  [B, 1, D, H, W, 2]
        return self._fwd(inp, self.x, self.orig_trajectory)


# --------------------------------------------------------------------------------------
# main
# --------------------------------------------------------------------------------------

if __name__ == "__main__":
    key = jax.random.PRNGKey(0)
    k_traj, k_inp = jax.random.split(key)

    acceleration_factor, res, depth, pps = 4, 16, 8, 16
    layer = SubsamplingLayer3D(acceleration_factor, res, depth,
                               trajectory_learning=True,
                               initialization='gaussian',
                               points_per_shot=pps, key=k_traj)

    B = 2
    inp = jax.random.normal(k_inp, (B, 1, 1, depth, res, res, 2), jnp.float32)

    out = layer.forward(inp)
    out = jax.block_until_ready(out)
    assert out.shape == (B, 1, depth, res, res, 2)

    # ---- float64 numpy reference for the two Pallas stages (dense, non-factorized) ----
    D, H, W = depth, res, res
    V = D * H * W
    x_np = np.asarray(layer._effective_trajectory(), np.float64)
    M = x_np.shape[0]

    fh = np.clip(x_np[:, 0] + H / 2.0, 0.0, H - 1.0)
    fw = np.clip(x_np[:, 1] + W / 2.0, 0.0, W - 1.0)
    fd = np.clip(x_np[:, 2] + D / 2.0, 0.0, D - 1.0)
    h0 = np.floor(fh).astype(np.int64); h1 = np.minimum(h0 + 1, H - 1); ah = fh - h0
    w0 = np.floor(fw).astype(np.int64); w1 = np.minimum(w0 + 1, W - 1); aw = fw - w0
    d0 = np.floor(fd).astype(np.int64); d1 = np.minimum(d0 + 1, D - 1); ad = fd - d0

    g_np = np.transpose(np.asarray(inp[:, 0, 0], np.float64), (0, 4, 1, 2, 3)).reshape(B * 2, V)
    ksp_np = np.zeros((B * 2, M))
    for di, wd in ((d0, 1.0 - ad), (d1, ad)):
        for hi, wh in ((h0, 1.0 - ah), (h1, ah)):
            for wi, ww in ((w0, 1.0 - aw), (w1, aw)):
                idx = (di * H + hi) * W + wi
                ksp_np += (wd * wh * ww)[None, :] * g_np[:, idx]
    ksp_np = ksp_np.reshape(B, 2, M)

    v = np.arange(V)
    gd = v // (H * W) - D / 2.0
    gh = (v // W) % H - H / 2.0
    gw = v % W - W / 2.0
    ph = 2.0 * np.pi * (x_np[:, 0:1] * gh[None, :] / H
                        + x_np[:, 1:2] * gw[None, :] / W
                        + x_np[:, 2:3] * gd[None, :] / D)
    c_np, s_np = np.cos(ph), np.sin(ph)
    ref_r = ksp_np[:, 0] @ c_np - ksp_np[:, 1] @ s_np
    ref_i = ksp_np[:, 0] @ s_np + ksp_np[:, 1] @ c_np
    ref = np.stack([ref_r, ref_i], -1).reshape(B, D, H, W, 2)[:, None]

    err = np.max(np.abs(np.asarray(out, np.float64) - ref))
    scale = np.max(np.abs(ref)) + 1e-6
    assert np.isfinite(err) and err <= 2e-2 * scale, f"max error {err} vs scale {scale}"

    print("KERNEL_OK")
</pallas_src>

<mosaic_0001>
module attributes {stable_mosaic.version = 11 : i64} {
  func.func @_interp_kernel(%arg0: i32, %arg1: i32, %arg2: memref<4x1024xf32, #tpu.memory_space<vmem>>, %arg3: memref<1024x3xi32, #tpu.memory_space<vmem>>, %arg4: memref<3x256xi32, #tpu.memory_space<vmem>>, %arg5: memref<3x256xi32, #tpu.memory_space<vmem>>, %arg6: memref<3x256xf32, #tpu.memory_space<vmem>>, %arg7: memref<4x256xf32, #tpu.memory_space<vmem>>) attributes {dimension_semantics = [#tpu.dimension_semantics<parallel>, #tpu.dimension_semantics<arbitrary>], iteration_bounds = array<i64: 2, 2>, scalar_prefetch = 0 : i64, scratch_operands = 0 : i64, tpu.core_type = #tpu.core_type<tc>, window_params = [{transform_indices = @transform_0, window_bounds = array<i64: 4, 1024>}, {transform_indices = @transform_1, window_bounds = array<i64: 1024, 3>}, {transform_indices = @transform_2, window_bounds = array<i64: 3, 256>}, {transform_indices = @transform_3, window_bounds = array<i64: 3, 256>}, {transform_indices = @transform_4, window_bounds = array<i64: 3, 256>}, {transform_indices = @transform_5, window_bounds = array<i64: 4, 256>}]} {
    %c0_i32 = arith.constant 0 : i32
    %0 = arith.cmpi eq, %arg1, %c0_i32 : i32
    %1 = arith.extui %0 : i1 to i32
    %c0_i32_0 = arith.constant 0 : i32
    %2 = arith.cmpi ne, %1, %c0_i32_0 : i32
    scf.if %2 {
      %cst_23 = arith.constant 0.000000e+00 : f32
      %77 = vector.broadcast %cst_23 : f32 to vector<4x256xf32>
      %c0_24 = arith.constant 0 : index
      %c0_25 = arith.constant 0 : index
      %78 = vector.load %arg7[%c0_24, %c0_25] : memref<4x256xf32, #tpu.memory_space<vmem>>, vector<4x256xf32>
      tpu.vector_store %arg7[%c0_24, %c0_25], %77 {strides = array<i32>} : memref<4x256xf32, #tpu.memory_space<vmem>>, vector<4x256xf32>,
    } else {
    }
    %c0 = arith.constant 0 : index
    %c0_1 = arith.constant 0 : index
    %3 = vector.load %arg3[%c0, %c0_1] : memref<1024x3xi32, #tpu.memory_space<vmem>>, vector<1024x3xi32>
    %c0_2 = arith.constant 0 : index
    %c0_3 = arith.constant 0 : index
    %4 = vector.load %arg4[%c0_2, %c0_3] : memref<3x256xi32, #tpu.memory_space<vmem>>, vector<3x256xi32>
    %c0_4 = arith.constant 0 : index
    %c0_5 = arith.constant 0 : index
    %5 = vector.load %arg5[%c0_4, %c0_5] : memref<3x256xi32, #tpu.memory_space<vmem>>, vector<3x256xi32>
    %c0_6 = arith.constant 0 : index
    %c0_7 = arith.constant 0 : index
    %6 = vector.load %arg6[%c0_6, %c0_7] : memref<3x256xf32, #tpu.memory_space<vmem>>, vector<3x256xf32>
    %7 = vector.extract_strided_slice %3 {offsets = [0, 0], sizes = [1024, 1], strides = [1, 1]} : vector<1024x3xi32> to vector<1024x1xi32>
    %8 = vector.extract_strided_slice %4 {offsets = [0, 0], sizes = [1, 256], strides = [1, 1]} : vector<3x256xi32> to vector<1x256xi32>
    %9 = vector.extract_strided_slice %5 {offsets = [0, 0], sizes = [1, 256], strides = [1, 1]} : vector<3x256xi32> to vector<1x256xi32>
    %10 = vector.extract_strided_slice %6 {offsets = [0, 0], sizes = [1, 256], strides = [1, 1]} : vector<3x256xf32> to vector<1x256xf32>
    %11 = vector.broadcast %7 : vector<1024x1xi32> to vector<1024x256xi32>
    %12 = vector.broadcast %8 : vector<1x256xi32> to vector<1024x256xi32>
    %13 = arith.cmpi eq, %11, %12 : vector<1024x256xi32>
    %cst = arith.constant 1.000000e+00 : f32
    %14 = vector.broadcast %cst : f32 to vector<1x256xf32>
    %15 = arith.subf %14, %10 : vector<1x256xf32>
    %cst_8 = arith.constant 0.000000e+00 : f32
    %16 = vector.shape_cast %15 : vector<1x256xf32> to vector<1x256xf32>
    %17 = vector.broadcast %16 : vector<1x256xf32> to vector<1024x256xf32>
    %18 = vector.broadcast %cst_8 : f32 to vector<1024x256xf32>
    %19 = arith.select %13, %17, %18 : vector<1024x256xi1>, vector<1024x256xf32>
    %20 = vector.broadcast %7 : vector<1024x1xi32> to vector<1024x256xi32>
    %21 = vector.broadcast %9 : vector<1x256xi32> to vector<1024x256xi32>
    %22 = arith.cmpi eq, %20, %21 : vector<1024x256xi32>
    %cst_9 = arith.constant 0.000000e+00 : f32
    %23 = vector.shape_cast %10 : vector<1x256xf32> to vector<1x256xf32>
    %24 = vector.broadcast %23 : vector<1x256xf32> to vector<1024x256xf32>
    %25 = vector.broadcast %cst_9 : f32 to vector<1024x256xf32>
    %26 = arith.select %22, %24, %25 : vector<1024x256xi1>, vector<1024x256xf32>
    %27 = arith.addf %19, %26 : vector<1024x256xf32>
    %28 = vector.extract_strided_slice %3 {offsets = [0, 1], sizes = [1024, 1], strides = [1, 1]} : vector<1024x3xi32> to vector<1024x1xi32>
    %29 = vector.extract_strided_slice %4 {offsets = [1, 0], sizes = [1, 256], strides = [1, 1]} : vector<3x256xi32> to vector<1x256xi32>
    %30 = vector.extract_strided_slice %5 {offsets = [1, 0], sizes = [1, 256], strides = [1, 1]} : vector<3x256xi32> to vector<1x256xi32>
    %31 = vector.extract_strided_slice %6 {offsets = [1, 0], sizes = [1, 256], strides = [1, 1]} : vector<3x256xf32> to vector<1x256xf32>
    %32 = vector.broadcast %28 : vector<1024x1xi32> to vector<1024x256xi32>
    %33 = vector.broadcast %29 : vector<1x256xi32> to vector<1024x256xi32>
    %34 = arith.cmpi eq, %32, %33 : vector<1024x256xi32>
    %cst_10 = arith.constant 1.000000e+00 : f32
    %35 = vector.broadcast %cst_10 : f32 to vector<1x256xf32>
    %36 = arith.subf %35, %31 : vector<1x256xf32>
    %cst_11 = arith.constant 0.000000e+00 : f32
    %37 = vector.shape_cast %36 : vector<1x256xf32> to vector<1x256xf32>
    %38 = vector.broadcast %37 : vector<1x256xf32> to vector<1024x256xf32>
    %39 = vector.broadcast %cst_11 : f32 to vector<1024x256xf32>
    %40 = arith.select %34, %38, %39 : vector<1024x256xi1>, vector<1024x256xf32>
    %41 = vector.broadcast %28 : vector<1024x1xi32> to vector<1024x256xi32>
    %42 = vector.broadcast %30 : vector<1x256xi32> to vector<1024x256xi32>
    %43 = arith.cmpi eq, %41, %42 : vector<1024x256xi32>
    %cst_12 = arith.constant 0.000000e+00 : f32
    %44 = vector.shape_cast %31 : vector<1x256xf32> to vector<1x256xf32>
    %45 = vector.broadcast %44 : vector<1x256xf32> to vector<1024x256xf32>
    %46 = vector.broadcast %cst_12 : f32 to vector<1024x256xf32>
    %47 = arith.select %43, %45, %46 : vector<1024x256xi1>, vector<1024x256xf32>
    %48 = arith.addf %40, %47 : vector<1024x256xf32>
    %49 = arith.mulf %27, %48 : vector<1024x256xf32>
    %50 = vector.extract_strided_slice %3 {offsets = [0, 2], sizes = [1024, 1], strides = [1, 1]} : vector<1024x3xi32> to vector<1024x1xi32>
    %51 = vector.extract_strided_slice %4 {offsets = [2, 0], sizes = [1, 256], strides = [1, 1]} : vector<3x256xi32> to vector<1x256xi32>
    %52 = vector.extract_strided_slice %5 {offsets = [2, 0], sizes = [1, 256], strides = [1, 1]} : vector<3x256xi32> to vector<1x256xi32>
    %53 = vector.extract_strided_slice %6 {offsets = [2, 0], sizes = [1, 256], strides = [1, 1]} : vector<3x256xf32> to vector<1x256xf32>
    %54 = vector.broadcast %50 : vector<1024x1xi32> to vector<1024x256xi32>
    %55 = vector.broadcast %51 : vector<1x256xi32> to vector<1024x256xi32>
    %56 = arith.cmpi eq, %54, %55 : vector<1024x256xi32>
    %cst_13 = arith.constant 1.000000e+00 : f32
    %57 = vector.broadcast %cst_13 : f32 to vector<1x256xf32>
    %58 = arith.subf %57, %53 : vector<1x256xf32>
    %cst_14 = arith.constant 0.000000e+00 : f32
    %59 = vector.shape_cast %58 : vector<1x256xf32> to vector<1x256xf32>
    %60 = vector.broadcast %59 : vector<1x256xf32> to vector<1024x256xf32>
    %61 = vector.broadcast %cst_14 : f32 to vector<1024x256xf32>
    %62 = arith.select %56, %60, %61 : vector<1024x256xi1>, vector<1024x256xf32>
    %63 = vector.broadcast %50 : vector<1024x1xi32> to vector<1024x256xi32>
    %64 = vector.broadcast %52 : vector<1x256xi32> to vector<1024x256xi32>
    %65 = arith.cmpi eq, %63, %64 : vector<1024x256xi32>
    %cst_15 = arith.constant 0.000000e+00 : f32
    %66 = vector.shape_cast %53 : vector<1x256xf32> to vector<1x256xf32>
    %67 = vector.broadcast %66 : vector<1x256xf32> to vector<1024x256xf32>
    %68 = vector.broadcast %cst_15 : f32 to vector<1024x256xf32>
    %69 = arith.select %65, %67, %68 : vector<1024x256xi1>, vector<1024x256xf32>
    %70 = arith.addf %62, %69 : vector<1024x256xf32>
    %71 = arith.mulf %49, %70 : vector<1024x256xf32>
    %c0_16 = arith.constant 0 : index
    %c0_17 = arith.constant 0 : index
    %72 = vector.load %arg7[%c0_16, %c0_17] : memref<4x256xf32, #tpu.memory_space<vmem>>, vector<4x256xf32>
    %c0_18 = arith.constant 0 : index
    %c0_19 = arith.constant 0 : index
    %73 = vector.load %arg2[%c0_18, %c0_19] : memref<4x1024xf32, #tpu.memory_space<vmem>>, vector<4x1024xf32>
    %cst_20 = arith.constant dense<0.000000e+00> : vector<4x256xf32>
    %74 = tpu.matmul %73, %71, %cst_20 {dimension_numbers = #tpu.dot_dimension_numbers<[1], [0], [0], [1], [0, 0, 1, 1], [], []>} : vector<4x1024xf32>, vector<1024x256xf32>, vector<4x256xf32> -> vector<4x256xf32>
    %75 = arith.addf %72, %74 : vector<4x256xf32>
    %c0_21 = arith.constant 0 : index
    %c0_22 = arith.constant 0 : index
    %76 = vector.load %arg7[%c0_21, %c0_22] : memref<4x256xf32, #tpu.memory_space<vmem>>, vector<4x256xf32>
    tpu.vector_store %arg7[%c0_21, %c0_22], %75 {strides = array<i32>} : memref<4x256xf32, #tpu.memory_space<vmem>>, vector<4x256xf32>,
    return
  }
  func.func @transform_0(%arg0: i32, %arg1: i32) -> (i32, i32) {
    %c0_i32 = arith.constant 0 : i32
    %c0_i32_0 = arith.constant 0 : i32
    return %c0_i32, %arg1 : i32, i32
  }
  func.func @transform_1(%arg0: i32, %arg1: i32) -> (i32, i32) {
    %c0_i32 = arith.constant 0 : i32
    %c0_i32_0 = arith.constant 0 : i32
    return %arg1, %c0_i32 : i32, i32
  }
  func.func @transform_2(%arg0: i32, %arg1: i32) -> (i32, i32) {
    %c0_i32 = arith.constant 0 : i32
    %c0_i32_0 = arith.constant 0 : i32
    return %c0_i32, %arg0 : i32, i32
  }
  func.func @transform_3(%arg0: i32, %arg1: i32) -> (i32, i32) {
    %c0_i32 = arith.constant 0 : i32
    %c0_i32_0 = arith.constant 0 : i32
    return %c0_i32, %arg0 : i32, i32
  }
  func.func @transform_4(%arg0: i32, %arg1: i32) -> (i32, i32) {
    %c0_i32 = arith.constant 0 : i32
    %c0_i32_0 = arith.constant 0 : i32
    return %c0_i32, %arg0 : i32, i32
  }
  func.func @transform_5(%arg0: i32, %arg1: i32) -> (i32, i32) {
    %c0_i32 = arith.constant 0 : i32
    %c0_i32_0 = arith.constant 0 : i32
    return %c0_i32, %arg0 : i32, i32
  }
}

module attributes {stable_mosaic.version = 11 : i64} {
  func.func @_ndft_adjoint_kernel(%arg0: i32, %arg1: i32, %arg2: memref<32x512xf32, #tpu.memory_space<vmem>>, %arg3: memref<512x128xf32, #tpu.memory_space<vmem>>, %arg4: memref<512x128xf32, #tpu.memory_space<vmem>>, %arg5: memref<16x128xf32, #tpu.memory_space<vmem>>, %arg6: memref<16x128xf32, #tpu.memory_space<vmem>>) attributes {dimension_semantics = [#tpu.dimension_semantics<parallel>, #tpu.dimension_semantics<arbitrary>], iteration_bounds = array<i64: 2, 1>, scalar_prefetch = 0 : i64, scratch_operands = 0 : i64, tpu.core_type = #tpu.core_type<tc>, window_params = [{transform_indices = @transform_0, window_bounds = array<i64: 32, 512>}, {transform_indices = @transform_1, window_bounds = array<i64: 512, 128>}, {transform_indices = @transform_2, window_bounds = array<i64: 512, 128>}, {transform_indices = @transform_3, window_bounds = array<i64: 16, 128>}, {transform_indices = @transform_4, window_bounds = array<i64: 16, 128>}]} {
    %c0_i32 = arith.constant 0 : i32
    %0 = arith.cmpi eq, %arg1, %c0_i32 : i32
    %1 = arith.extui %0 : i1 to i32
    %c0_i32_0 = arith.constant 0 : i32
    %2 = arith.cmpi ne, %1, %c0_i32_0 : i32
    scf.if %2 {
      %cst_15 = arith.constant 0.000000e+00 : f32
      %20 = vector.broadcast %cst_15 : f32 to vector<16x128xf32>
      %c0_16 = arith.constant 0 : index
      %c0_17 = arith.constant 0 : index
      %21 = vector.load %arg5[%c0_16, %c0_17] : memref<16x128xf32, #tpu.memory_space<vmem>>, vector<16x128xf32>
      tpu.vector_store %arg5[%c0_16, %c0_17], %20 {strides = array<i32>} : memref<16x128xf32, #tpu.memory_space<vmem>>, vector<16x128xf32>,
      %cst_18 = arith.constant 0.000000e+00 : f32
      %22 = vector.broadcast %cst_18 : f32 to vector<16x128xf32>
      %c0_19 = arith.constant 0 : index
      %c0_20 = arith.constant 0 : index
      %23 = vector.load %arg6[%c0_19, %c0_20] : memref<16x128xf32, #tpu.memory_space<vmem>>, vector<16x128xf32>
      tpu.vector_store %arg6[%c0_19, %c0_20], %22 {strides = array<i32>} : memref<16x128xf32, #tpu.memory_space<vmem>>, vector<16x128xf32>,
    } else {
    }
    %c0 = arith.constant 0 : index
    %c0_1 = arith.constant 0 : index
    %3 = vector.load %arg2[%c0, %c0_1] : memref<32x512xf32, #tpu.memory_space<vmem>>, vector<32x512xf32>
    %c0_2 = arith.constant 0 : index
    %c0_3 = arith.constant 0 : index
    %4 = vector.load %arg3[%c0_2, %c0_3] : memref<512x128xf32, #tpu.memory_space<vmem>>, vector<512x128xf32>
    %cst = arith.constant dense<0.000000e+00> : vector<32x128xf32>
    %5 = tpu.matmul %3, %4, %cst {dimension_numbers = #tpu.dot_dimension_numbers<[1], [0], [0], [1], [0, 0, 1, 1], [], []>} : vector<32x512xf32>, vector<512x128xf32>, vector<32x128xf32> -> vector<32x128xf32>
    %c0_4 = arith.constant 0 : index
    %c0_5 = arith.constant 0 : index
    %6 = vector.load %arg4[%c0_4, %c0_5] : memref<512x128xf32, #tpu.memory_space<vmem>>, vector<512x128xf32>
    %cst_6 = arith.constant dense<0.000000e+00> : vector<32x128xf32>
    %7 = tpu.matmul %3, %6, %cst_6 {dimension_numbers = #tpu.dot_dimension_numbers<[1], [0], [0], [1], [0, 0, 1, 1], [], []>} : vector<32x512xf32>, vector<512x128xf32>, vector<32x128xf32> -> vector<32x128xf32>
    %c0_7 = arith.constant 0 : index
    %c0_8 = arith.constant 0 : index
    %8 = vector.load %arg5[%c0_7, %c0_8] : memref<16x128xf32, #tpu.memory_space<vmem>>, vector<16x128xf32>
    %9 = vector.extract_strided_slice %5 {offsets = [0, 0], sizes = [16, 128], strides = [1, 1]} : vector<32x128xf32> to vector<16x128xf32>
    %10 = vector.extract_strided_slice %7 {offsets = [16, 0], sizes = [16, 128], strides = [1, 1]} : vector<32x128xf32> to vector<16x128xf32>
    %11 = arith.subf %9, %10 : vector<16x128xf32>
    %12 = arith.addf %8, %11 : vector<16x128xf32>
    %c0_9 = arith.constant 0 : index
    %c0_10 = arith.constant 0 : index
    %13 = vector.load %arg5[%c0_9, %c0_10] : memref<16x128xf32, #tpu.memory_space<vmem>>, vector<16x128xf32>
    tpu.vector_store %arg5[%c0_9, %c0_10], %12 {strides = array<i32>} : memref<16x128xf32, #tpu.memory_space<vmem>>, vector<16x128xf32>,
    %c0_11 = arith.constant 0 : index
    %c0_12 = arith.constant 0 : index
    %14 = vector.load %arg6[%c0_11, %c0_12] : memref<16x128xf32, #tpu.memory_space<vmem>>, vector<16x128xf32>
    %15 = vector.extract_strided_slice %7 {offsets = [0, 0], sizes = [16, 128], strides = [1, 1]} : vector<32x128xf32> to vector<16x128xf32>
    %16 = vector.extract_strided_slice %5 {offsets = [16, 0], sizes = [16, 128], strides = [1, 1]} : vector<32x128xf32> to vector<16x128xf32>
    %17 = arith.addf %15, %16 : vector<16x128xf32>
    %18 = arith.addf %14, %17 : vector<16x128xf32>
    %c0_13 = arith.constant 0 : index
    %c0_14 = arith.constant 0 : index
    %19 = vector.load %arg6[%c0_13, %c0_14] : memref<16x128xf32, #tpu.memory_space<vmem>>, vector<16x128xf32>
    tpu.vector_store %arg6[%c0_13, %c0_14], %18 {strides = array<i32>} : memref<16x128xf32, #tpu.memory_space<vmem>>, vector<16x128xf32>,
    return
  }
  func.func @transform_0(%arg0: i32, %arg1: i32) -> (i32, i32) {
    %c0_i32 = arith.constant 0 : i32
    %c0_i32_0 = arith.constant 0 : i32
    return %c0_i32, %arg1 : i32, i32
  }
  func.func @transform_1(%arg0: i32, %arg1: i32) -> (i32, i32) {
    %c0_i32 = arith.constant 0 : i32
    return %arg1, %arg0 : i32, i32
  }
  func.func @transform_2(%arg0: i32, %arg1: i32) -> (i32, i32) {
    %c0_i32 = arith.constant 0 : i32
    return %arg1, %arg0 : i32, i32
  }
  func.func @transform_3(%arg0: i32, %arg1: i32) -> (i32, i32) {
    %c0_i32 = arith.constant 0 : i32
    %c0_i32_0 = arith.constant 0 : i32
    return %c0_i32, %arg0 : i32, i32
  }
  func.func @transform_4(%arg0: i32, %arg1: i32) -> (i32, i32) {
    %c0_i32 = arith.constant 0 : i32
    %c0_i32_0 = arith.constant 0 : i32
    return %c0_i32, %arg0 : i32, i32
  }
}

</mosaic_0001>

<llo_original>
// kernel: _forward_impl.3
$region0: #{_forward_impl.3}
  #allocation0 [shape = 'u32[]', space=smem, size = 0x4, offset = 0x4, fixed_abs, tag = 'smem constant byte address 0x4 - core index']
  #allocation1 [shape = 'u32[72,128]{1,0:T(1,128)}', space=vmem, size = 0x9000, scoped, tag = 'internal scratch']
  %s0 = inlined_call_operand.vmem [shape: f32[32,512], index: 0, kind: input, shape index: {}]
  %s1 = inlined_call_operand.vmem [shape: f32[512,256], index: 1, kind: input, shape index: {}]
  %s2 = inlined_call_operand.vmem [shape: f32[512,256], index: 2, kind: input, shape index: {}]
  %s3 = inlined_call_operand.vmem [shape: f32[16,256], index: 3, kind: output, shape index: {0}]
  %s4 = inlined_call_operand.vmem [shape: f32[16,256], index: 4, kind: output, shape index: {1}]
  %5 = xla_tuple %s3, %s4
  %s6 = sld [smem:[#allocation0]]
  $region201: #{_forward_impl.3} parent=0
    _
  %s8 = ssub.s32 1, %s6
  %s9 = scalar_select 0, %s8, %s6
  $region1: #{_forward_impl.3} parent=0
    #allocation2 [shape = 'u8[524288]{0}', space=vmem, size = 0x80000, scoped, tag = 'input window, operand 1']
    #allocation3 [shape = 'u8[524288]{0}', space=vmem, size = 0x80000, scoped, tag = 'input window, operand 2']
    #allocation4 [shape = 'u8[16384]{0}', space=vmem, size = 0x4000, scoped, tag = 'output window, operand 0']
    #allocation5 [shape = 'u8[16384]{0}', space=vmem, size = 0x4000, scoped, tag = 'output window, operand 1']
    loop: start=0, step=1, limit=4
    $region2: #{_forward_impl.3} parent=1 // loop_pre_header
      _
    $region3: #{_forward_impl.3} parent=1 // loop_header
      %s11 = sphi 0, %s15
      %p12 = scmp.ge.s32.totalorder %s11, 4
      %s18 = sphi 0, %s30
      %s19 = sphi 0, %s26
      %s20 = sphi 0, %s18
      %s21 = sphi 0, %s19
      %s22 = sphi 0, %s20
      %s23 = sphi 0, %s21
      %s33 = sphi 0, %s35
      %s36 = sphi 0, %s33
      %s37 = sphi 0, %s36
      %s53 = sphi 0, %s37
      %s61 = sphi 0, %s63
      %s64 = sphi 0, %s61
      %s65 = sphi 0, %s64
      %s81 = sphi 0, %s65
      %s89 = sphi 0, %s91
      %s92 = sphi 0, %s89
      %s93 = sphi 0, %s92
      %s109 = sphi 0, %s93
      %s115 = sphi 0, %s117
      %s118 = sphi 0, %s115
      %s119 = sphi 0, %s118
      %s135 = sphi 0, %s119
      %s141 = sphi 0, %s143
      %s144 = sphi 0, %s141
      %s145 = sphi 0, %s144
      %s161 = sphi 0, %s145
    $region4: #{_forward_impl.3} parent=1 // loop_header_branch
      %14 = sbr.rel (%p12) target = $region8
    $region5: #{_forward_impl.3} parent=1 // loop_body
      %s16 = ssub.s32 %s11, 1
      %s17 = ssub.s32 %s11, 2
      %s24 = sadd.s32 1, %s19
      %p25 = scmp.ge.s32.totalorder %s24, 1
      %s26 = scalar_select %p25, 0, %s24
      %s27 = sadd.s32 1, %s18
      %s28 = scalar_select %p25, %s27, %s18
      %p29 = scmp.ge.s32.totalorder %s28, 2
      %s30 = scalar_select %p29, 0, %s28
      %s31 = ssub.s32 %s19, %s26
      %p32 = scmp.eq.s32.totalorder %s31, 0
      %s34 = sadd.s32 %s33, 1
      %s35 = scalar_select %p32, %s33, %s34
      %p38 = pneg %p32
      %p39 = scmp.eq.s32.totalorder %s11, 1
      %p40 = por %p38, %p39
      %p41 = scmp.ne.s32.totalorder %s33, %s36
      %p42 = scmp.eq.s32.totalorder %s11, 0
      %p43 = por %p41, %p42
      %p44 = scmp.ne.s32.totalorder %s33, %s36
      %p45 = scmp.eq.s32.totalorder %s16, 1
      %p46 = por %p44, %p45
      %p47 = scmp.ne.s32.totalorder %s36, %s37
      %p48 = scmp.eq.s32.totalorder %s16, 0
      %p49 = por %p47, %p48
      %p50 = scmp.ne.s32.totalorder %s36, %s37
      %p51 = scmp.eq.s32.totalorder %s17, 1
      %p52 = por %p50, %p51
      %p54 = scmp.ne.s32.totalorder %s37, %s53
      %p55 = scmp.eq.s32.totalorder %s17, 0
      %p56 = por %p54, %p55
      %s57 = ssub.s32 %s19, %s26
      %s58 = ssub.s32 %s18, %s30
      %s59 = sor.u32 %s57, %s58
      %p60 = scmp.eq.s32.totalorder %s59, 0
      %s62 = sadd.s32 %s61, 1
      %s63 = scalar_select %p60, %s61, %s62
      %p66 = pneg %p60
      %p67 = scmp.eq.s32.totalorder %s11, 1
      %p68 = por %p66, %p67
      %p69 = scmp.ne.s32.totalorder %s61, %s64
      %p70 = scmp.eq.s32.totalorder %s11, 0
      %p71 = por %p69, %p70
      %p72 = scmp.ne.s32.totalorder %s61, %s64
      %p73 = scmp.eq.s32.totalorder %s16, 1
      %p74 = por %p72, %p73
      %p75 = scmp.ne.s32.totalorder %s64, %s65
      %p76 = scmp.eq.s32.totalorder %s16, 0
      %p77 = por %p75, %p76
      %p78 = scmp.ne.s32.totalorder %s64, %s65
      %p79 = scmp.eq.s32.totalorder %s17, 1
      %p80 = por %p78, %p79
      %p82 = scmp.ne.s32.totalorder %s65, %s81
      %p83 = scmp.eq.s32.totalorder %s17, 0
      %p84 = por %p82, %p83
      %s85 = ssub.s32 %s19, %s26
      %s86 = ssub.s32 %s18, %s30
      %s87 = sor.u32 %s85, %s86
      %p88 = scmp.eq.s32.totalorder %s87, 0
      %s90 = sadd.s32 %s89, 1
      %s91 = scalar_select %p88, %s89, %s90
      %p94 = pneg %p88
      %p95 = scmp.eq.s32.totalorder %s11, 1
      %p96 = por %p94, %p95
      %p97 = scmp.ne.s32.totalorder %s89, %s92
      %p98 = scmp.eq.s32.totalorder %s11, 0
      %p99 = por %p97, %p98
      %p100 = scmp.ne.s32.totalorder %s89, %s92
      %p101 = scmp.eq.s32.totalorder %s16, 1
      %p102 = por %p100, %p101
      %p103 = scmp.ne.s32.totalorder %s92, %s93
      %p104 = scmp.eq.s32.totalorder %s16, 0
      %p105 = por %p103, %p104
      %p106 = scmp.ne.s32.totalorder %s92, %s93
      %p107 = scmp.eq.s32.totalorder %s17, 1
      %p108 = por %p106, %p107
      %p110 = scmp.ne.s32.totalorder %s93, %s109
      %p111 = scmp.eq.s32.totalorder %s17, 0
      %p112 = por %p110, %p111
      %s113 = ssub.s32 %s18, %s30
      %p114 = scmp.eq.s32.totalorder %s113, 0
      %s116 = sadd.s32 %s115, 1
      %s117 = scalar_select %p114, %s115, %s116
      %p120 = pneg %p114
      %p121 = scmp.eq.s32.totalorder %s11, 1
      %p122 = por %p120, %p121
      %p123 = scmp.ne.s32.totalorder %s115, %s118
      %p124 = scmp.eq.s32.totalorder %s11, 0
      %p125 = por %p123, %p124
      %p126 = scmp.ne.s32.totalorder %s115, %s118
      %p127 = scmp.eq.s32.totalorder %s16, 1
      %p128 = por %p126, %p127
      %p129 = scmp.ne.s32.totalorder %s118, %s119
      %p130 = scmp.eq.s32.totalorder %s16, 0
      %p131 = por %p129, %p130
      %p132 = scmp.ne.s32.totalorder %s118, %s119
      %p133 = scmp.eq.s32.totalorder %s17, 1
      %p134 = por %p132, %p133
      %p136 = scmp.ne.s32.totalorder %s119, %s135
      %p137 = scmp.eq.s32.totalorder %s17, 0
      %p138 = por %p136, %p137
      %s139 = ssub.s32 %s18, %s30
      %p140 = scmp.eq.s32.totalorder %s139, 0
      %s142 = sadd.s32 %s141, 1
      %s143 = scalar_select %p140, %s141, %s142
      %p146 = pneg %p140
      %p147 = scmp.eq.s32.totalorder %s11, 1
      %p148 = por %p146, %p147
      %p149 = scmp.ne.s32.totalorder %s141, %s144
      %p150 = scmp.eq.s32.totalorder %s11, 0
      %p151 = por %p149, %p150
      %p152 = scmp.ne.s32.totalorder %s141, %s144
      %p153 = scmp.eq.s32.totalorder %s16, 1
      %p154 = por %p152, %p153
      %p155 = scmp.ne.s32.totalorder %s144, %s145
      %p156 = scmp.eq.s32.totalorder %s16, 0
      %p157 = por %p155, %p156
      %p158 = scmp.ne.s32.totalorder %s144, %s145
      %p159 = scmp.eq.s32.totalorder %s17, 1
      %p160 = por %p158, %p159
      %p162 = scmp.ne.s32.totalorder %s145, %s161
      %p163 = scmp.eq.s32.totalorder %s17, 0
      %p164 = por %p162, %p163
      %p165 = scmp.le.s32.totalorder 1, %s11
      %p166 = scmp.lt.s32.totalorder %s11, 3
      %p167 = pnand %p165, %p166
      %p168 = pneg %p167
      // Predicated region
      $region9: #{_forward_impl.3} parent=5 // pred_check
        _
      $region10: #{_forward_impl.3} parent=5 // pred_check_branch
        %170 = sbr.rel (%p167) target = $region12
      $region11: #{_forward_impl.3} parent=5 // pred_region
        %s171 = ssub.s32 %s11, 1
        // Predicated region
        $region13: #{_forward_impl.3} parent=11 // pred_check
          %p172 = pneg %p49
        $region14: #{_forward_impl.3} parent=11 // pred_check_branch
          %174 = sbr.rel (%p172) target = $region16
        $region15: #{_forward_impl.3} parent=11 // pred_region
          %s175 = smul.u32 4, %s21
          %p176 = scmp.lt.s32.totalorder %s175, 3
          %s177 = scalar_select %p176, %s175, 3
          %s178 = smul.addr %s177, 8
          %s179 = scalar_lea.vmem %s0, %s178
          %s180 = smul.u32 4, %s21
        $region16: #{_forward_impl.3} parent=11 // pred_fallthru
          _
      $region12: #{_forward_impl.3} parent=5 // pred_fallthru
        _
      %p181 = scmp.lt.s32.totalorder %s11, 2
      // Predicated region
      $region17: #{_forward_impl.3} parent=5 // pred_check
        %p182 = pneg %p181
      $region18: #{_forward_impl.3} parent=5 // pred_check_branch
        %184 = sbr.rel (%p182) target = $region20
      $region19: #{_forward_impl.3} parent=5 // pred_region
        // Predicated region
        $region21: #{_forward_impl.3} parent=19 // pred_check
          %p185 = pneg %p71
        $region22: #{_forward_impl.3} parent=19 // pred_check_branch
          %187 = sbr.rel (%p185) target = $region24
        $region23: #{_forward_impl.3} parent=19 // pred_region
          %s188 = sand.u32 %s61, 1
          %s189 = sand.u32 %s61, 1
          %s190 = smul.addr %s189, 512
          %s191 = scalar_lea.vmem [#allocation2], %s190
          %s192 = smul.u32 64, %s19
          %s193 = smul.addr %s192, 2
          %s194 = sadd.s32 %s18, %s193
          %s195 = smul.addr %s194, 8
          %s196 = scalar_lea.vmem %s1, %s195
          // Predicated region
          $region25: #{_forward_impl.3} parent=23 // pred_check
            _
          $region26: #{_forward_impl.3} parent=23 // pred_check_branch
            %198 = sbr.rel (0) target = $region28
          $region27: #{_forward_impl.3} parent=23 // pred_region
            // Predicated region
            $region29: #{_forward_impl.3} parent=27 // pred_check
              _
            $region30: #{_forward_impl.3} parent=27 // pred_check_branch
              %200 = sbr.rel (0) target = $region32
            $region31: #{_forward_impl.3} parent=27 // pred_region
              // Predicated region
              $region44: #{_forward_impl.3} parent=31 // pred_check
                _
              $region45: #{_forward_impl.3} parent=31 // pred_check_branch
                %342 = sbr.rel (0) target = $region47
              $region46: #{_forward_impl.3} parent=31 // pred_region
                loop: start=0, step=1, limit=1
                $region48: #{_forward_impl.3} parent=46 // loop_pre_header
                  _
                $region49: #{_forward_impl.3} parent=46 // loop_header
                  %s344 = sphi 0, %s348
                  %p345 = scmp.ge.s32.totalorder %s344, 1
                  %s349 = sphi %s196, %s196
                  %s350 = sphi %s191, %s191
                $region50: #{_forward_impl.3} parent=46 // loop_header_branch
                  %347 = sbr.rel (%p345) target = $region54
                $region51: #{_forward_impl.3} parent=46 // loop_body
                  %v351 = vld [vmem:[%s349] sm:$0xff]
                  %352 = vst [vmem:[%s350] sm:$0xff] %v351
                  %v353 = vld [vmem:[%s349 + $0x10] sm:$0xff]
                  %354 = vst [vmem:[%s350 + $0x8] sm:$0xff] %v353
                  %v355 = vld [vmem:[%s349 + $0x20] sm:$0xff]
                  %356 = vst [vmem:[%s350 + $0x10] sm:$0xff] %v355
                  %v357 = vld [vmem:[%s349 + $0x30] sm:$0xff]
                  %358 = vst [vmem:[%s350 + $0x18] sm:$0xff] %v357
                  %v359 = vld [vmem:[%s349 + $0x40] sm:$0xff]
                  %360 = vst [vmem:[%s350 + $0x20] sm:$0xff] %v359
                  %v361 = vld [vmem:[%s349 + $0x50] sm:$0xff]
                  %362 = vst [vmem:[%s350 + $0x28] sm:$0xff] %v361
                  %v363 = vld [vmem:[%s349 + $0x60] sm:$0xff]
                  %364 = vst [vmem:[%s350 + $0x30] sm:$0xff] %v363
                  %v365 = vld [vmem:[%s349 + $0x70] sm:$0xff]
                  %366 = vst [vmem:[%s350 + $0x38] sm:$0xff] %v365
                  %v367 = vld [vmem:[%s349 + $0x80] sm:$0xff]
                  %368 = vst [vmem:[%s350 + $0x40] sm:$0xff] %v367
                  %v369 = vld [vmem:[%s349 + $0x90] sm:$0xff]
                  %370 = vst [vmem:[%s350 + $0x48] sm:$0xff] %v369
                  %v371 = vld [vmem:[%s349 + $0xa0] sm:$0xff]
                  %372 = vst [vmem:[%s350 + $0x50] sm:$0xff] %v371
                  %v373 = vld [vmem:[%s349 + $0xb0] sm:$0xff]
                  %374 = vst [vmem:[%s350 + $0x58] sm:$0xff] %v373
                  %v375 = vld [vmem:[%s349 + $0xc0] sm:$0xff]
                  %376 = vst [vmem:[%s350 + $0x60] sm:$0xff] %v375
                  %v377 = vld [vmem:[%s349 + $0xd0] sm:$0xff]
                  %378 = vst [vmem:[%s350 + $0x68] sm:$0xff] %v377
                  %v379 = vld [vmem:[%s349 + $0xe0] sm:$0xff]
                  %380 = vst [vmem:[%s350 + $0x70] sm:$0xff] %v379
                  %v381 = vld [vmem:[%s349 + $0xf0] sm:$0xff]
                  %382 = vst [vmem:[%s350 + $0x78] sm:$0xff] %v381
                  %v383 = vld [vmem:[%s349 + $0x100] sm:$0xff]
                  %384 = vst [vmem:[%s350 + $0x80] sm:$0xff] %v383
                  %v385 = vld [vmem:[%s349 + $0x110] sm:$0xff]
                  %386 = vst [vmem:[%s350 + $0x88] sm:$0xff] %v385
                  %v387 = vld [vmem:[%s349 + $0x120] sm:$0xff]
                  %388 = vst [vmem:[%s350 + $0x90] sm:$0xff] %v387
                  %v389 = vld [vmem:[%s349 + $0x130] sm:$0xff]
                  %390 = vst [vmem:[%s350 + $0x98] sm:$0xff] %v389
                  %v391 = vld [vmem:[%s349 + $0x140] sm:$0xff]
                  %392 = vst [vmem:[%s350 + $0xa0] sm:$0xff] %v391
                  %v393 = vld [vmem:[%s349 + $0x150] sm:$0xff]
                  %394 = vst [vmem:[%s350 + $0xa8] sm:$0xff] %v393
                  %v395 = vld [vmem:[%s349 + $0x160] sm:$0xff]
                  %396 = vst [vmem:[%s350 + $0xb0] sm:$0xff] %v395
                  %v397 = vld [vmem:[%s349 + $0x170] sm:$0xff]
                  %398 = vst [vmem:[%s350 + $0xb8] sm:$0xff] %v397
                  %v399 = vld [vmem:[%s349 + $0x180] sm:$0xff]
                  %400 = vst [vmem:[%s350 + $0xc0] sm:$0xff] %v399
                  %v401 = vld [vmem:[%s349 + $0x190] sm:$0xff]
                  %402 = vst [vmem:[%s350 + $0xc8] sm:$0xff] %v401
                  %v403 = vld [vmem:[%s349 + $0x1a0] sm:$0xff]
                  %404 = vst [vmem:[%s350 + $0xd0] sm:$0xff] %v403
                  %v405 = vld [vmem:[%s349 + $0x1b0] sm:$0xff]
                  %406 = vst [vmem:[%s350 + $0xd8] sm:$0xff] %v405
                  %v407 = vld [vmem:[%s349 + $0x1c0] sm:$0xff]
                  %408 = vst [vmem:[%s350 + $0xe0] sm:$0xff] %v407
                  %v409 = vld [vmem:[%s349 + $0x1d0] sm:$0xff]
                  %410 = vst [vmem:[%s350 + $0xe8] sm:$0xff] %v409
                  %v411 = vld [vmem:[%s349 + $0x1e0] sm:$0xff]
                  %412 = vst [vmem:[%s350 + $0xf0] sm:$0xff] %v411
                  %v413 = vld [vmem:[%s349 + $0x1f0] sm:$0xff]
                  %414 = vst [vmem:[%s350 + $0xf8] sm:$0xff] %v413
                  %v415 = vld [vmem:[%s349 + $0x200] sm:$0xff]
                  %416 = vst [vmem:[%s350 + $0x100] sm:$0xff] %v415
                  %v417 = vld [vmem:[%s349 + $0x210] sm:$0xff]
                  %418 = vst [vmem:[%s350 + $0x108] sm:$0xff] %v417
                  %v419 = vld [vmem:[%s349 + $0x220] sm:$0xff]
                  %420 = vst [vmem:[%s350 + $0x110] sm:$0xff] %v419
                  %v421 = vld [vmem:[%s349 + $0x230] sm:$0xff]
                  %422 = vst [vmem:[%s350 + $0x118] sm:$0xff] %v421
                  %v423 = vld [vmem:[%s349 + $0x240] sm:$0xff]
                  %424 = vst [vmem:[%s350 + $0x120] sm:$0xff] %v423
                  %v425 = vld [vmem:[%s349 + $0x250] sm:$0xff]
                  %426 = vst [vmem:[%s350 + $0x128] sm:$0xff] %v425
                  %v427 = vld [vmem:[%s349 + $0x260] sm:$0xff]
                  %428 = vst [vmem:[%s350 + $0x130] sm:$0xff] %v427
                  %v429 = vld [vmem:[%s349 + $0x270] sm:$0xff]
                  %430 = vst [vmem:[%s350 + $0x138] sm:$0xff] %v429
                  %v431 = vld [vmem:[%s349 + $0x280] sm:$0xff]
                  %432 = vst [vmem:[%s350 + $0x140] sm:$0xff] %v431
                  %v433 = vld [vmem:[%s349 + $0x290] sm:$0xff]
                  %434 = vst [vmem:[%s350 + $0x148] sm:$0xff] %v433
                  %v435 = vld [vmem:[%s349 + $0x2a0] sm:$0xff]
                  %436 = vst [vmem:[%s350 + $0x150] sm:$0xff] %v435
                  %v437 = vld [vmem:[%s349 + $0x2b0] sm:$0xff]
                  %438 = vst [vmem:[%s350 + $0x158] sm:$0xff] %v437
                  %v439 = vld [vmem:[%s349 + $0x2c0] sm:$0xff]
                  %440 = vst [vmem:[%s350 + $0x160] sm:$0xff] %v439
                  %v441 = vld [vmem:[%s349 + $0x2d0] sm:$0xff]
                  %442 = vst [vmem:[%s350 + $0x168] sm:$0xff] %v441
                  %v443 = vld [vmem:[%s349 + $0x2e0] sm:$0xff]
                  %444 = vst [vmem:[%s350 + $0x170] sm:$0xff] %v443
                  %v445 = vld [vmem:[%s349 + $0x2f0] sm:$0xff]
                  %446 = vst [vmem:[%s350 + $0x178] sm:$0xff] %v445
                  %v447 = vld [vmem:[%s349 + $0x300] sm:$0xff]
                  %448 = vst [vmem:[%s350 + $0x180] sm:$0xff] %v447
                  %v449 = vld [vmem:[%s349 + $0x310] sm:$0xff]
                  %450 = vst [vmem:[%s350 + $0x188] sm:$0xff] %v449
                  %v451 = vld [vmem:[%s349 + $0x320] sm:$0xff]
                  %452 = vst [vmem:[%s350 + $0x190] sm:$0xff] %v451
                  %v453 = vld [vmem:[%s349 + $0x330] sm:$0xff]
                  %454 = vst [vmem:[%s350 + $0x198] sm:$0xff] %v453
                  %v455 = vld [vmem:[%s349 + $0x340] sm:$0xff]
                  %456 = vst [vmem:[%s350 + $0x1a0] sm:$0xff] %v455
                  %v457 = vld [vmem:[%s349 + $0x350] sm:$0xff]
                  %458 = vst [vmem:[%s350 + $0x1a8] sm:$0xff] %v457
                  %v459 = vld [vmem:[%s349 + $0x360] sm:$0xff]
                  %460 = vst [vmem:[%s350 + $0x1b0] sm:$0xff] %v459
                  %v461 = vld [vmem:[%s349 + $0x370] sm:$0xff]
                  %462 = vst [vmem:[%s350 + $0x1b8] sm:$0xff] %v461
                  %v463 = vld [vmem:[%s349 + $0x380] sm:$0xff]
                  %464 = vst [vmem:[%s350 + $0x1c0] sm:$0xff] %v463
                  %v465 = vld [vmem:[%s349 + $0x390] sm:$0xff]
                  %466 = vst [vmem:[%s350 + $0x1c8] sm:$0xff] %v465
                  %v467 = vld [vmem:[%s349 + $0x3a0] sm:$0xff]
                  %468 = vst [vmem:[%s350 + $0x1d0] sm:$0xff] %v467
                  %v469 = vld [vmem:[%s349 + $0x3b0] sm:$0xff]
                  %470 = vst [vmem:[%s350 + $0x1d8] sm:$0xff] %v469
                  %v471 = vld [vmem:[%s349 + $0x3c0] sm:$0xff]
                  %472 = vst [vmem:[%s350 + $0x1e0] sm:$0xff] %v471
                  %v473 = vld [vmem:[%s349 + $0x3d0] sm:$0xff]
                  %474 = vst [vmem:[%s350 + $0x1e8] sm:$0xff] %v473
                  %v475 = vld [vmem:[%s349 + $0x3e0] sm:$0xff]
                  %476 = vst [vmem:[%s350 + $0x1f0] sm:$0xff] %v475
                  %v477 = vld [vmem:[%s349 + $0x3f0] sm:$0xff]
                  %478 = vst [vmem:[%s350 + $0x1f8] sm:$0xff] %v477
                $region52: #{_forward_impl.3} parent=46 // loop_footer
                  %s348 = sadd.s32 1, %s344
                $region53: #{_forward_impl.3} parent=46 // loop_footer_branch
                  %343 = sbr.rel target = $region49
                $region54: #{_forward_impl.3} parent=46 // loop_exit
                  _
              $region47: #{_forward_impl.3} parent=31 // pred_fallthru
                _
              // Predicated region
              $region55: #{_forward_impl.3} parent=31 // pred_check
                _
              $region56: #{_forward_impl.3} parent=31 // pred_check_branch
                %480 = sbr.rel target = $region58
              $region57: #{_forward_impl.3} parent=31 // pred_region
                _
              $region58: #{_forward_impl.3} parent=31 // pred_fallthru
                _
            $region32: #{_forward_impl.3} parent=27 // pred_fallthru
              _
            // Predicated region
            $region33: #{_forward_impl.3} parent=27 // pred_check
              _
            $region34: #{_forward_impl.3} parent=27 // pred_check_branch
              %202 = sbr.rel target = $region36
            $region35: #{_forward_impl.3} parent=27 // pred_region
              %s204 = ssub.s32 256, 1
              loop: start=0, step=1, limit=1
              $region37: #{_forward_impl.3} parent=35 // loop_pre_header
                _
              $region38: #{_forward_impl.3} parent=35 // loop_header
                %s206 = sphi 0, %s210
                %p207 = scmp.ge.s32.totalorder %s206, 1
                %s211 = sphi %s196, %s196
                %s212 = sphi %s191, %s191
              $region39: #{_forward_impl.3} parent=35 // loop_header_branch
                %209 = sbr.rel (%p207) target = $region43
              $region40: #{_forward_impl.3} parent=35 // loop_body
                %v213 = vld [vmem:[%s211] sm:%s204]
                %214 = vst [vmem:[%s212] sm:%s204] %v213
                %v215 = vld [vmem:[%s211 + $0x10] sm:%s204]
                %216 = vst [vmem:[%s212 + $0x8] sm:%s204] %v215
                %v217 = vld [vmem:[%s211 + $0x20] sm:%s204]
                %218 = vst [vmem:[%s212 + $0x10] sm:%s204] %v217
                %v219 = vld [vmem:[%s211 + $0x30] sm:%s204]
                %220 = vst [vmem:[%s212 + $0x18] sm:%s204] %v219
                %v221 = vld [vmem:[%s211 + $0x40] sm:%s204]
                %222 = vst [vmem:[%s212 + $0x20] sm:%s204] %v221
                %v223 = vld [vmem:[%s211 + $0x50] sm:%s204]
                %224 = vst [vmem:[%s212 + $0x28] sm:%s204] %v223
                %v225 = vld [vmem:[%s211 + $0x60] sm:%s204]
                %226 = vst [vmem:[%s212 + $0x30] sm:%s204] %v225
                %v227 = vld [vmem:[%s211 + $0x70] sm:%s204]
                %228 = vst [vmem:[%s212 + $0x38] sm:%s204] %v227
                %v229 = vld [vmem:[%s211 + $0x80] sm:%s204]
                %230 = vst [vmem:[%s212 + $0x40] sm:%s204] %v229
                %v231 = vld [vmem:[%s211 + $0x90] sm:%s204]
                %232 = vst [vmem:[%s212 + $0x48] sm:%s204] %v231
                %v233 = vld [vmem:[%s211 + $0xa0] sm:%s204]
                %234 = vst [vmem:[%s212 + $0x50] sm:%s204] %v233
                %v235 = vld [vmem:[%s211 + $0xb0] sm:%s204]
                %236 = vst [vmem:[%s212 + $0x58] sm:%s204] %v235
                %v237 = vld [vmem:[%s211 + $0xc0] sm:%s204]
                %238 = vst [vmem:[%s212 + $0x60] sm:%s204] %v237
                %v239 = vld [vmem:[%s211 + $0xd0] sm:%s204]
                %240 = vst [vmem:[%s212 + $0x68] sm:%s204] %v239
                %v241 = vld [vmem:[%s211 + $0xe0] sm:%s204]
                %242 = vst [vmem:[%s212 + $0x70] sm:%s204] %v241
                %v243 = vld [vmem:[%s211 + $0xf0] sm:%s204]
                %244 = vst [vmem:[%s212 + $0x78] sm:%s204] %v243
                %v245 = vld [vmem:[%s211 + $0x100] sm:%s204]
                %246 = vst [vmem:[%s212 + $0x80] sm:%s204] %v245
                %v247 = vld [vmem:[%s211 + $0x110] sm:%s204]
                %248 = vst [vmem:[%s212 + $0x88] sm:%s204] %v247
                %v249 = vld [vmem:[%s211 + $0x120] sm:%s204]
                %250 = vst [vmem:[%s212 + $0x90] sm:%s204] %v249
                %v251 = vld [vmem:[%s211 + $0x130] sm:%s204]
                %252 = vst [vmem:[%s212 + $0x98] sm:%s204] %v251
                %v253 = vld [vmem:[%s211 + $0x140] sm:%s204]
                %254 = vst [vmem:[%s212 + $0xa0] sm:%s204] %v253
                %v255 = vld [vmem:[%s211 + $0x150] sm:%s204]
                %256 = vst [vmem:[%s212 + $0xa8] sm:%s204] %v255
                %v257 = vld [vmem:[%s211 + $0x160] sm:%s204]
                %258 = vst [vmem:[%s212 + $0xb0] sm:%s204] %v257
                %v259 = vld [vmem:[%s211 + $0x170] sm:%s204]
                %260 = vst [vmem:[%s212 + $0xb8] sm:%s204] %v259
                %v261 = vld [vmem:[%s211 + $0x180] sm:%s204]
                %262 = vst [vmem:[%s212 + $0xc0] sm:%s204] %v261
                %v263 = vld [vmem:[%s211 + $0x190] sm:%s204]
                %264 = vst [vmem:[%s212 + $0xc8] sm:%s204] %v263
                %v265 = vld [vmem:[%s211 + $0x1a0] sm:%s204]
                %266 = vst [vmem:[%s212 + $0xd0] sm:%s204] %v265
                %v267 = vld [vmem:[%s211 + $0x1b0] sm:%s204]
                %268 = vst [vmem:[%s212 + $0xd8] sm:%s204] %v267
                %v269 = vld [vmem:[%s211 + $0x1c0] sm:%s204]
                %270 = vst [vmem:[%s212 + $0xe0] sm:%s204] %v269
                %v271 = vld [vmem:[%s211 + $0x1d0] sm:%s204]
                %272 = vst [vmem:[%s212 + $0xe8] sm:%s204] %v271
                %v273 = vld [vmem:[%s211 + $0x1e0] sm:%s204]
                %274 = vst [vmem:[%s212 + $0xf0] sm:%s204] %v273
                %v275 = vld [vmem:[%s211 + $0x1f0] sm:%s204]
                %276 = vst [vmem:[%s212 + $0xf8] sm:%s204] %v275
                %v277 = vld [vmem:[%s211 + $0x200] sm:%s204]
                %278 = vst [vmem:[%s212 + $0x100] sm:%s204] %v277
                %v279 = vld [vmem:[%s211 + $0x210] sm:%s204]
                %280 = vst [vmem:[%s212 + $0x108] sm:%s204] %v279
                %v281 = vld [vmem:[%s211 + $0x220] sm:%s204]
                %282 = vst [vmem:[%s212 + $0x110] sm:%s204] %v281
                %v283 = vld [vmem:[%s211 + $0x230] sm:%s204]
                %284 = vst [vmem:[%s212 + $0x118] sm:%s204] %v283
                %v285 = vld [vmem:[%s211 + $0x240] sm:%s204]
                %286 = vst [vmem:[%s212 + $0x120] sm:%s204] %v285
                %v287 = vld [vmem:[%s211 + $0x250] sm:%s204]
                %288 = vst [vmem:[%s212 + $0x128] sm:%s204] %v287
                %v289 = vld [vmem:[%s211 + $0x260] sm:%s204]
                %290 = vst [vmem:[%s212 + $0x130] sm:%s204] %v289
                %v291 = vld [vmem:[%s211 + $0x270] sm:%s204]
                %292 = vst [vmem:[%s212 + $0x138] sm:%s204] %v291
                %v293 = vld [vmem:[%s211 + $0x280] sm:%s204]
                %294 = vst [vmem:[%s212 + $0x140] sm:%s204] %v293
                %v295 = vld [vmem:[%s211 + $0x290] sm:%s204]
                %296 = vst [vmem:[%s212 + $0x148] sm:%s204] %v295
                %v297 = vld [vmem:[%s211 + $0x2a0] sm:%s204]
                %298 = vst [vmem:[%s212 + $0x150] sm:%s204] %v297
                %v299 = vld [vmem:[%s211 + $0x2b0] sm:%s204]
                %300 = vst [vmem:[%s212 + $0x158] sm:%s204] %v299
                %v301 = vld [vmem:[%s211 + $0x2c0] sm:%s204]
                %302 = vst [vmem:[%s212 + $0x160] sm:%s204] %v301
                %v303 = vld [vmem:[%s211 + $0x2d0] sm:%s204]
                %304 = vst [vmem:[%s212 + $0x168] sm:%s204] %v303
                %v305 = vld [vmem:[%s211 + $0x2e0] sm:%s204]
                %306 = vst [vmem:[%s212 + $0x170] sm:%s204] %v305
                %v307 = vld [vmem:[%s211 + $0x2f0] sm:%s204]
                %308 = vst [vmem:[%s212 + $0x178] sm:%s204] %v307
                %v309 = vld [vmem:[%s211 + $0x300] sm:%s204]
                %310 = vst [vmem:[%s212 + $0x180] sm:%s204] %v309
                %v311 = vld [vmem:[%s211 + $0x310] sm:%s204]
                %312 = vst [vmem:[%s212 + $0x188] sm:%s204] %v311
                %v313 = vld [vmem:[%s211 + $0x320] sm:%s204]
                %314 = vst [vmem:[%s212 + $0x190] sm:%s204] %v313
                %v315 = vld [vmem:[%s211 + $0x330] sm:%s204]
                %316 = vst [vmem:[%s212 + $0x198] sm:%s204] %v315
                %v317 = vld [vmem:[%s211 + $0x340] sm:%s204]
                %318 = vst [vmem:[%s212 + $0x1a0] sm:%s204] %v317
                %v319 = vld [vmem:[%s211 + $0x350] sm:%s204]
                %320 = vst [vmem:[%s212 + $0x1a8] sm:%s204] %v319
                %v321 = vld [vmem:[%s211 + $0x360] sm:%s204]
                %322 = vst [vmem:[%s212 + $0x1b0] sm:%s204] %v321
                %v323 = vld [vmem:[%s211 + $0x370] sm:%s204]
                %324 = vst [vmem:[%s212 + $0x1b8] sm:%s204] %v323
                %v325 = vld [vmem:[%s211 + $0x380] sm:%s204]
                %326 = vst [vmem:[%s212 + $0x1c0] sm:%s204] %v325
                %v327 = vld [vmem:[%s211 + $0x390] sm:%s204]
                %328 = vst [vmem:[%s212 + $0x1c8] sm:%s204] %v327
                %v329 = vld [vmem:[%s211 + $0x3a0] sm:%s204]
                %330 = vst [vmem:[%s212 + $0x1d0] sm:%s204] %v329
                %v331 = vld [vmem:[%s211 + $0x3b0] sm:%s204]
                %332 = vst [vmem:[%s212 + $0x1d8] sm:%s204] %v331
                %v333 = vld [vmem:[%s211 + $0x3c0] sm:%s204]
                %334 = vst [vmem:[%s212 + $0x1e0] sm:%s204] %v333
                %v335 = vld [vmem:[%s211 + $0x3d0] sm:%s204]
                %336 = vst [vmem:[%s212 + $0x1e8] sm:%s204] %v335
                %v337 = vld [vmem:[%s211 + $0x3e0] sm:%s204]
                %338 = vst [vmem:[%s212 + $0x1f0] sm:%s204] %v337
                %v339 = vld [vmem:[%s211 + $0x3f0] sm:%s204]
                %340 = vst [vmem:[%s212 + $0x1f8] sm:%s204] %v339
              $region41: #{_forward_impl.3} parent=35 // loop_footer
                %s210 = sadd.s32 1, %s206
              $region42: #{_forward_impl.3} parent=35 // loop_footer_branch
                %205 = sbr.rel target = $region38
              $region43: #{_forward_impl.3} parent=35 // loop_exit
                _
            $region36: #{_forward_impl.3} parent=27 // pred_fallthru
              _
          $region28: #{_forward_impl.3} parent=23 // pred_fallthru
            _
          %481 = vnop
        $region24: #{_forward_impl.3} parent=19 // pred_fallthru
          _
        // Predicated region
        $region59: #{_forward_impl.3} parent=19 // pred_check
          %p482 = pneg %p99
        $region60: #{_forward_impl.3} parent=19 // pred_check_branch
          %484 = sbr.rel (%p482) target = $region62
        $region61: #{_forward_impl.3} parent=19 // pred_region
          %s485 = sand.u32 %s89, 1
          %s486 = sand.u32 %s89, 1
          %s487 = smul.addr %s486, 512
          %s488 = scalar_lea.vmem [#allocation3], %s487
          %s489 = smul.u32 64, %s19
          %s490 = smul.addr %s489, 2
          %s491 = sadd.s32 %s18, %s490
          %s492 = smul.addr %s491, 8
          %s493 = scalar_lea.vmem %s2, %s492
          // Predicated region
          $region63: #{_forward_impl.3} parent=61 // pred_check
            _
          $region64: #{_forward_impl.3} parent=61 // pred_check_branch
            %495 = sbr.rel (0) target = $region66
          $region65: #{_forward_impl.3} parent=61 // pred_region
            // Predicated region
            $region67: #{_forward_impl.3} parent=65 // pred_check
              _
            $region68: #{_forward_impl.3} parent=65 // pred_check_branch
              %497 = sbr.rel (0) target = $region70
            $region69: #{_forward_impl.3} parent=65 // pred_region
              // Predicated region
              $region82: #{_forward_impl.3} parent=69 // pred_check
                _
              $region83: #{_forward_impl.3} parent=69 // pred_check_branch
                %639 = sbr.rel (0) target = $region85
              $region84: #{_forward_impl.3} parent=69 // pred_region
                loop: start=0, step=1, limit=1
                $region86: #{_forward_impl.3} parent=84 // loop_pre_header
                  _
                $region87: #{_forward_impl.3} parent=84 // loop_header
                  %s641 = sphi 0, %s645
                  %p642 = scmp.ge.s32.totalorder %s641, 1
                  %s646 = sphi %s493, %s493
                  %s647 = sphi %s488, %s488
                $region88: #{_forward_impl.3} parent=84 // loop_header_branch
                  %644 = sbr.rel (%p642) target = $region92
                $region89: #{_forward_impl.3} parent=84 // loop_body
                  %v648 = vld [vmem:[%s646] sm:$0xff]
                  %649 = vst [vmem:[%s647] sm:$0xff] %v648
                  %v650 = vld [vmem:[%s646 + $0x10] sm:$0xff]
                  %651 = vst [vmem:[%s647 + $0x8] sm:$0xff] %v650
                  %v652 = vld [vmem:[%s646 + $0x20] sm:$0xff]
                  %653 = vst [vmem:[%s647 + $0x10] sm:$0xff] %v652
                  %v654 = vld [vmem:[%s646 + $0x30] sm:$0xff]
                  %655 = vst [vmem:[%s647 + $0x18] sm:$0xff] %v654
                  %v656 = vld [vmem:[%s646 + $0x40] sm:$0xff]
                  %657 = vst [vmem:[%s647 + $0x20] sm:$0xff] %v656
                  %v658 = vld [vmem:[%s646 + $0x50] sm:$0xff]
                  %659 = vst [vmem:[%s647 + $0x28] sm:$0xff] %v658
                  %v660 = vld [vmem:[%s646 + $0x60] sm:$0xff]
                  %661 = vst [vmem:[%s647 + $0x30] sm:$0xff] %v660
                  %v662 = vld [vmem:[%s646 + $0x70] sm:$0xff]
                  %663 = vst [vmem:[%s647 + $0x38] sm:$0xff] %v662
                  %v664 = vld [vmem:[%s646 + $0x80] sm:$0xff]
                  %665 = vst [vmem:[%s647 + $0x40] sm:$0xff] %v664
                  %v666 = vld [vmem:[%s646 + $0x90] sm:$0xff]
                  %667 = vst [vmem:[%s647 + $0x48] sm:$0xff] %v666
                  %v668 = vld [vmem:[%s646 + $0xa0] sm:$0xff]
                  %669 = vst [vmem:[%s647 + $0x50] sm:$0xff] %v668
                  %v670 = vld [vmem:[%s646 + $0xb0] sm:$0xff]
                  %671 = vst [vmem:[%s647 + $0x58] sm:$0xff] %v670
                  %v672 = vld [vmem:[%s646 + $0xc0] sm:$0xff]
                  %673 = vst [vmem:[%s647 + $0x60] sm:$0xff] %v672
                  %v674 = vld [vmem:[%s646 + $0xd0] sm:$0xff]
                  %675 = vst [vmem:[%s647 + $0x68] sm:$0xff] %v674
                  %v676 = vld [vmem:[%s646 + $0xe0] sm:$0xff]
                  %677 = vst [vmem:[%s647 + $0x70] sm:$0xff] %v676
                  %v678 = vld [vmem:[%s646 + $0xf0] sm:$0xff]
                  %679 = vst [vmem:[%s647 + $0x78] sm:$0xff] %v678
                  %v680 = vld [vmem:[%s646 + $0x100] sm:$0xff]
                  %681 = vst [vmem:[%s647 + $0x80] sm:$0xff] %v680
                  %v682 = vld [vmem:[%s646 + $0x110] sm:$0xff]
                  %683 = vst [vmem:[%s647 + $0x88] sm:$0xff] %v682
                  %v684 = vld [vmem:[%s646 + $0x120] sm:$0xff]
                  %685 = vst [vmem:[%s647 + $0x90] sm:$0xff] %v684
                  %v686 = vld [vmem:[%s646 + $0x130] sm:$0xff]
                  %687 = vst [vmem:[%s647 + $0x98] sm:$0xff] %v686
                  %v688 = vld [vmem:[%s646 + $0x140] sm:$0xff]
                  %689 = vst [vmem:[%s647 + $0xa0] sm:$0xff] %v688
                  %v690 = vld [vmem:[%s646 + $0x150] sm:$0xff]
                  %691 = vst [vmem:[%s647 + $0xa8] sm:$0xff] %v690
                  %v692 = vld [vmem:[%s646 + $0x160] sm:$0xff]
                  %693 = vst [vmem:[%s647 + $0xb0] sm:$0xff] %v692
                  %v694 = vld [vmem:[%s646 + $0x170] sm:$0xff]
                  %695 = vst [vmem:[%s647 + $0xb8] sm:$0xff] %v694
                  %v696 = vld [vmem:[%s646 + $0x180] sm:$0xff]
                  %697 = vst [vmem:[%s647 + $0xc0] sm:$0xff] %v696
                  %v698 = vld [vmem:[%s646 + $0x190] sm:$0xff]
                  %699 = vst [vmem:[%s647 + $0xc8] sm:$0xff] %v698
                  %v700 = vld [vmem:[%s646 + $0x1a0] sm:$0xff]
                  %701 = vst [vmem:[%s647 + $0xd0] sm:$0xff] %v700
                  %v702 = vld [vmem:[%s646 + $0x1b0] sm:$0xff]
                  %703 = vst [vmem:[%s647 + $0xd8] sm:$0xff] %v702
                  %v704 = vld [vmem:[%s646 + $0x1c0] sm:$0xff]
                  %705 = vst [vmem:[%s647 + $0xe0] sm:$0xff] %v704
                  %v706 = vld [vmem:[%s646 + $0x1d0] sm:$0xff]
                  %707 = vst [vmem:[%s647 + $0xe8] sm:$0xff] %v706
                  %v708 = vld [vmem:[%s646 + $0x1e0] sm:$0xff]
                  %709 = vst [vmem:[%s647 + $0xf0] sm:$0xff] %v708
                  %v710 = vld [vmem:[%s646 + $0x1f0] sm:$0xff]
                  %711 = vst [vmem:[%s647 + $0xf8] sm:$0xff] %v710
                  %v712 = vld [vmem:[%s646 + $0x200] sm:$0xff]
                  %713 = vst [vmem:[%s647 + $0x100] sm:$0xff] %v712
                  %v714 = vld [vmem:[%s646 + $0x210] sm:$0xff]
                  %715 = vst [vmem:[%s647 + $0x108] sm:$0xff] %v714
                  %v716 = vld [vmem:[%s646 + $0x220] sm:$0xff]
                  %717 = vst [vmem:[%s647 + $0x110] sm:$0xff] %v716
                  %v718 = vld [vmem:[%s646 + $0x230] sm:$0xff]
                  %719 = vst [vmem:[%s647 + $0x118] sm:$0xff] %v718
                  %v720 = vld [vmem:[%s646 + $0x240] sm:$0xff]
                  %721 = vst [vmem:[%s647 + $0x120] sm:$0xff] %v720
                  %v722 = vld [vmem:[%s646 + $0x250] sm:$0xff]
                  %723 = vst [vmem:[%s647 + $0x128] sm:$0xff] %v722
                  %v724 = vld [vmem:[%s646 + $0x260] sm:$0xff]
                  %725 = vst [vmem:[%s647 + $0x130] sm:$0xff] %v724
                  %v726 = vld [vmem:[%s646 + $0x270] sm:$0xff]
                  %727 = vst [vmem:[%s647 + $0x138] sm:$0xff] %v726
                  %v728 = vld [vmem:[%s646 + $0x280] sm:$0xff]
                  %729 = vst [vmem:[%s647 + $0x140] sm:$0xff] %v728
                  %v730 = vld [vmem:[%s646 + $0x290] sm:$0xff]
                  %731 = vst [vmem:[%s647 + $0x148] sm:$0xff] %v730
                  %v732 = vld [vmem:[%s646 + $0x2a0] sm:$0xff]
                  %733 = vst [vmem:[%s647 + $0x150] sm:$0xff] %v732
                  %v734 = vld [vmem:[%s646 + $0x2b0] sm:$0xff]
                  %735 = vst [vmem:[%s647 + $0x158] sm:$0xff] %v734
                  %v736 = vld [vmem:[%s646 + $0x2c0] sm:$0xff]
                  %737 = vst [vmem:[%s647 + $0x160] sm:$0xff] %v736
                  %v738 = vld [vmem:[%s646 + $0x2d0] sm:$0xff]
                  %739 = vst [vmem:[%s647 + $0x168] sm:$0xff] %v738
                  %v740 = vld [vmem:[%s646 + $0x2e0] sm:$0xff]
                  %741 = vst [vmem:[%s647 + $0x170] sm:$0xff] %v740
                  %v742 = vld [vmem:[%s646 + $0x2f0] sm:$0xff]
                  %743 = vst [vmem:[%s647 + $0x178] sm:$0xff] %v742
                  %v744 = vld [vmem:[%s646 + $0x300] sm:$0xff]
                  %745 = vst [vmem:[%s647 + $0x180] sm:$0xff] %v744
                  %v746 = vld [vmem:[%s646 + $0x310] sm:$0xff]
                  %747 = vst [vmem:[%s647 + $0x188] sm:$0xff] %v746
                  %v748 = vld [vmem:[%s646 + $0x320] sm:$0xff]
                  %749 = vst [vmem:[%s647 + $0x190] sm:$0xff] %v748
                  %v750 = vld [vmem:[%s646 + $0x330] sm:$0xff]
                  %751 = vst [vmem:[%s647 + $0x198] sm:$0xff] %v750
                  %v752 = vld [vmem:[%s646 + $0x340] sm:$0xff]
                  %753 = vst [vmem:[%s647 + $0x1a0] sm:$0xff] %v752
                  %v754 = vld [vmem:[%s646 + $0x350] sm:$0xff]
                  %755 = vst [vmem:[%s647 + $0x1a8] sm:$0xff] %v754
                  %v756 = vld [vmem:[%s646 + $0x360] sm:$0xff]
                  %757 = vst [vmem:[%s647 + $0x1b0] sm:$0xff] %v756
                  %v758 = vld [vmem:[%s646 + $0x370] sm:$0xff]
                  %759 = vst [vmem:[%s647 + $0x1b8] sm:$0xff] %v758
                  %v760 = vld [vmem:[%s646 + $0x380] sm:$0xff]
                  %761 = vst [vmem:[%s647 + $0x1c0] sm:$0xff] %v760
                  %v762 = vld [vmem:[%s646 + $0x390] sm:$0xff]
                  %763 = vst [vmem:[%s647 + $0x1c8] sm:$0xff] %v762
                  %v764 = vld [vmem:[%s646 + $0x3a0] sm:$0xff]
                  %765 = vst [vmem:[%s647 + $0x1d0] sm:$0xff] %v764
                  %v766 = vld [vmem:[%s646 + $0x3b0] sm:$0xff]
                  %767 = vst [vmem:[%s647 + $0x1d8] sm:$0xff] %v766
                  %v768 = vld [vmem:[%s646 + $0x3c0] sm:$0xff]
                  %769 = vst [vmem:[%s647 + $0x1e0] sm:$0xff] %v768
                  %v770 = vld [vmem:[%s646 + $0x3d0] sm:$0xff]
                  %771 = vst [vmem:[%s647 + $0x1e8] sm:$0xff] %v770
                  %v772 = vld [vmem:[%s646 + $0x3e0] sm:$0xff]
                  %773 = vst [vmem:[%s647 + $0x1f0] sm:$0xff] %v772
                  %v774 = vld [vmem:[%s646 + $0x3f0] sm:$0xff]
                  %775 = vst [vmem:[%s647 + $0x1f8] sm:$0xff] %v774
                $region90: #{_forward_impl.3} parent=84 // loop_footer
                  %s645 = sadd.s32 1, %s641
                $region91: #{_forward_impl.3} parent=84 // loop_footer_branch
                  %640 = sbr.rel target = $region87
                $region92: #{_forward_impl.3} parent=84 // loop_exit
                  _
              $region85: #{_forward_impl.3} parent=69 // pred_fallthru
                _
              // Predicated region
              $region93: #{_forward_impl.3} parent=69 // pred_check
                _
              $region94: #{_forward_impl.3} parent=69 // pred_check_branch
                %777 = sbr.rel target = $region96
              $region95: #{_forward_impl.3} parent=69 // pred_region
                _
              $region96: #{_forward_impl.3} parent=69 // pred_fallthru
                _
            $region70: #{_forward_impl.3} parent=65 // pred_fallthru
              _
            // Predicated region
            $region71: #{_forward_impl.3} parent=65 // pred_check
              _
            $region72: #{_forward_impl.3} parent=65 // pred_check_branch
              %499 = sbr.rel target = $region74
            $region73: #{_forward_impl.3} parent=65 // pred_region
              %s501 = ssub.s32 256, 1
              loop: start=0, step=1, limit=1
              $region75: #{_forward_impl.3} parent=73 // loop_pre_header
                _
              $region76: #{_forward_impl.3} parent=73 // loop_header
                %s503 = sphi 0, %s507
                %p504 = scmp.ge.s32.totalorder %s503, 1
                %s508 = sphi %s493, %s493
                %s509 = sphi %s488, %s488
              $region77: #{_forward_impl.3} parent=73 // loop_header_branch
                %506 = sbr.rel (%p504) target = $region81
              $region78: #{_forward_impl.3} parent=73 // loop_body
                %v510 = vld [vmem:[%s508] sm:%s501]
                %511 = vst [vmem:[%s509] sm:%s501] %v510
                %v512 = vld [vmem:[%s508 + $0x10] sm:%s501]
                %513 = vst [vmem:[%s509 + $0x8] sm:%s501] %v512
                %v514 = vld [vmem:[%s508 + $0x20] sm:%s501]
                %515 = vst [vmem:[%s509 + $0x10] sm:%s501] %v514
                %v516 = vld [vmem:[%s508 + $0x30] sm:%s501]
                %517 = vst [vmem:[%s509 + $0x18] sm:%s501] %v516
                %v518 = vld [vmem:[%s508 + $0x40] sm:%s501]
                %519 = vst [vmem:[%s509 + $0x20] sm:%s501] %v518
                %v520 = vld [vmem:[%s508 + $0x50] sm:%s501]
                %521 = vst [vmem:[%s509 + $0x28] sm:%s501] %v520
                %v522 = vld [vmem:[%s508 + $0x60] sm:%s501]
                %523 = vst [vmem:[%s509 + $0x30] sm:%s501] %v522
                %v524 = vld [vmem:[%s508 + $0x70] sm:%s501]
                %525 = vst [vmem:[%s509 + $0x38] sm:%s501] %v524
                %v526 = vld [vmem:[%s508 + $0x80] sm:%s501]
                %527 = vst [vmem:[%s509 + $0x40] sm:%s501] %v526
                %v528 = vld [vmem:[%s508 + $0x90] sm:%s501]
                %529 = vst [vmem:[%s509 + $0x48] sm:%s501] %v528
                %v530 = vld [vmem:[%s508 + $0xa0] sm:%s501]
                %531 = vst [vmem:[%s509 + $0x50] sm:%s501] %v530
                %v532 = vld [vmem:[%s508 + $0xb0] sm:%s501]
                %533 = vst [vmem:[%s509 + $0x58] sm:%s501] %v532
                %v534 = vld [vmem:[%s508 + $0xc0] sm:%s501]
                %535 = vst [vmem:[%s509 + $0x60] sm:%s501] %v534
                %v536 = vld [vmem:[%s508 + $0xd0] sm:%s501]
                %537 = vst [vmem:[%s509 + $0x68] sm:%s501] %v536
                %v538 = vld [vmem:[%s508 + $0xe0] sm:%s501]
                %539 = vst [vmem:[%s509 + $0x70] sm:%s501] %v538
                %v540 = vld [vmem:[%s508 + $0xf0] sm:%s501]
                %541 = vst [vmem:[%s509 + $0x78] sm:%s501] %v540
                %v542 = vld [vmem:[%s508 + $0x100] sm:%s501]
                %543 = vst [vmem:[%s509 + $0x80] sm:%s501] %v542
                %v544 = vld [vmem:[%s508 + $0x110] sm:%s501]
                %545 = vst [vmem:[%s509 + $0x88] sm:%s501] %v544
                %v546 = vld [vmem:[%s508 + $0x120] sm:%s501]
                %547 = vst [vmem:[%s509 + $0x90] sm:%s501] %v546
                %v548 = vld [vmem:[%s508 + $0x130] sm:%s501]
                %549 = vst [vmem:[%s509 + $0x98] sm:%s501] %v548
                %v550 = vld [vmem:[%s508 + $0x140] sm:%s501]
                %551 = vst [vmem:[%s509 + $0xa0] sm:%s501] %v550
                %v552 = vld [vmem:[%s508 + $0x150] sm:%s501]
                %553 = vst [vmem:[%s509 + $0xa8] sm:%s501] %v552
                %v554 = vld [vmem:[%s508 + $0x160] sm:%s501]
                %555 = vst [vmem:[%s509 + $0xb0] sm:%s501] %v554
                %v556 = vld [vmem:[%s508 + $0x170] sm:%s501]
                %557 = vst [vmem:[%s509 + $0xb8] sm:%s501] %v556
                %v558 = vld [vmem:[%s508 + $0x180] sm:%s501]
                %559 = vst [vmem:[%s509 + $0xc0] sm:%s501] %v558
                %v560 = vld [vmem:[%s508 + $0x190] sm:%s501]
                %561 = vst [vmem:[%s509 + $0xc8] sm:%s501] %v560
                %v562 = vld [vmem:[%s508 + $0x1a0] sm:%s501]
                %563 = vst [vmem:[%s509 + $0xd0] sm:%s501] %v562
                %v564 = vld [vmem:[%s508 + $0x1b0] sm:%s501]
                %565 = vst [vmem:[%s509 + $0xd8] sm:%s501] %v564
                %v566 = vld [vmem:[%s508 + $0x1c0] sm:%s501]
                %567 = vst [vmem:[%s509 + $0xe0] sm:%s501] %v566
                %v568 = vld [vmem:[%s508 + $0x1d0] sm:%s501]
                %569 = vst [vmem:[%s509 + $0xe8] sm:%s501] %v568
                %v570 = vld [vmem:[%s508 + $0x1e0] sm:%s501]
                %571 = vst [vmem:[%s509 + $0xf0] sm:%s501] %v570
                %v572 = vld [vmem:[%s508 + $0x1f0] sm:%s501]
                %573 = vst [vmem:[%s509 + $0xf8] sm:%s501] %v572
                %v574 = vld [vmem:[%s508 + $0x200] sm:%s501]
                %575 = vst [vmem:[%s509 + $0x100] sm:%s501] %v574
                %v576 = vld [vmem:[%s508 + $0x210] sm:%s501]
                %577 = vst [vmem:[%s509 + $0x108] sm:%s501] %v576
                %v578 = vld [vmem:[%s508 + $0x220] sm:%s501]
                %579 = vst [vmem:[%s509 + $0x110] sm:%s501] %v578
                %v580 = vld [vmem:[%s508 + $0x230] sm:%s501]
                %581 = vst [vmem:[%s509 + $0x118] sm:%s501] %v580
                %v582 = vld [vmem:[%s508 + $0x240] sm:%s501]
                %583 = vst [vmem:[%s509 + $0x120] sm:%s501] %v582
                %v584 = vld [vmem:[%s508 + $0x250] sm:%s501]
                %585 = vst [vmem:[%s509 + $0x128] sm:%s501] %v584
                %v586 = vld [vmem:[%s508 + $0x260] sm:%s501]
                %587 = vst [vmem:[%s509 + $0x130] sm:%s501] %v586
                %v588 = vld [vmem:[%s508 + $0x270] sm:%s501]
                %589 = vst [vmem:[%s509 + $0x138] sm:%s501] %v588
                %v590 = vld [vmem:[%s508 + $0x280] sm:%s501]
                %591 = vst [vmem:[%s509 + $0x140] sm:%s501] %v590
                %v592 = vld [vmem:[%s508 + $0x290] sm:%s501]
                %593 = vst [vmem:[%s509 + $0x148] sm:%s501] %v592
                %v594 = vld [vmem:[%s508 + $0x2a0] sm:%s501]
                %595 = vst [vmem:[%s509 + $0x150] sm:%s501] %v594
                %v596 = vld [vmem:[%s508 + $0x2b0] sm:%s501]
                %597 = vst [vmem:[%s509 + $0x158] sm:%s501] %v596
                %v598 = vld [vmem:[%s508 + $0x2c0] sm:%s501]
                %599 = vst [vmem:[%s509 + $0x160] sm:%s501] %v598
                %v600 = vld [vmem:[%s508 + $0x2d0] sm:%s501]
                %601 = vst [vmem:[%s509 + $0x168] sm:%s501] %v600
                %v602 = vld [vmem:[%s508 + $0x2e0] sm:%s501]
                %603 = vst [vmem:[%s509 + $0x170] sm:%s501] %v602
                %v604 = vld [vmem:[%s508 + $0x2f0] sm:%s501]
                %605 = vst [vmem:[%s509 + $0x178] sm:%s501] %v604
                %v606 = vld [vmem:[%s508 + $0x300] sm:%s501]
                %607 = vst [vmem:[%s509 + $0x180] sm:%s501] %v606
                %v608 = vld [vmem:[%s508 + $0x310] sm:%s501]
                %609 = vst [vmem:[%s509 + $0x188] sm:%s501] %v608
                %v610 = vld [vmem:[%s508 + $0x320] sm:%s501]
                %611 = vst [vmem:[%s509 + $0x190] sm:%s501] %v610
                %v612 = vld [vmem:[%s508 + $0x330] sm:%s501]
                %613 = vst [vmem:[%s509 + $0x198] sm:%s501] %v612
                %v614 = vld [vmem:[%s508 + $0x340] sm:%s501]
                %615 = vst [vmem:[%s509 + $0x1a0] sm:%s501] %v614
                %v616 = vld [vmem:[%s508 + $0x350] sm:%s501]
                %617 = vst [vmem:[%s509 + $0x1a8] sm:%s501] %v616
                %v618 = vld [vmem:[%s508 + $0x360] sm:%s501]
                %619 = vst [vmem:[%s509 + $0x1b0] sm:%s501] %v618
                %v620 = vld [vmem:[%s508 + $0x370] sm:%s501]
                %621 = vst [vmem:[%s509 + $0x1b8] sm:%s501] %v620
                %v622 = vld [vmem:[%s508 + $0x380] sm:%s501]
                %623 = vst [vmem:[%s509 + $0x1c0] sm:%s501] %v622
                %v624 = vld [vmem:[%s508 + $0x390] sm:%s501]
                %625 = vst [vmem:[%s509 + $0x1c8] sm:%s501] %v624
                %v626 = vld [vmem:[%s508 + $0x3a0] sm:%s501]
                %627 = vst [vmem:[%s509 + $0x1d0] sm:%s501] %v626
                %v628 = vld [vmem:[%s508 + $0x3b0] sm:%s501]
                %629 = vst [vmem:[%s509 + $0x1d8] sm:%s501] %v628
                %v630 = vld [vmem:[%s508 + $0x3c0] sm:%s501]
                %631 = vst [vmem:[%s509 + $0x1e0] sm:%s501] %v630
                %v632 = vld [vmem:[%s508 + $0x3d0] sm:%s501]
                %633 = vst [vmem:[%s509 + $0x1e8] sm:%s501] %v632
                %v634 = vld [vmem:[%s508 + $0x3e0] sm:%s501]
                %635 = vst [vmem:[%s509 + $0x1f0] sm:%s501] %v634
                %v636 = vld [vmem:[%s508 + $0x3f0] sm:%s501]
                %637 = vst [vmem:[%s509 + $0x1f8] sm:%s501] %v636
              $region79: #{_forward_impl.3} parent=73 // loop_footer
                %s507 = sadd.s32 1, %s503
              $region80: #{_forward_impl.3} parent=73 // loop_footer_branch
                %502 = sbr.rel target = $region76
              $region81: #{_forward_impl.3} parent=73 // loop_exit
                _
            $region74: #{_forward_impl.3} parent=65 // pred_fallthru
              _
          $region66: #{_forward_impl.3} parent=61 // pred_fallthru
            _
          %778 = vnop
        $region62: #{_forward_impl.3} parent=19 // pred_fallthru
          _
      $region20: #{_forward_impl.3} parent=5 // pred_fallthru
        _
      %p779 = scmp.le.s32.totalorder 1, %s11
      %p780 = scmp.lt.s32.totalorder %s11, 3
      %p781 = pnand %p779, %p780
      %p782 = pneg %p781
      // Predicated region
      $region97: #{_forward_impl.3} parent=5 // pred_check
        _
      $region98: #{_forward_impl.3} parent=5 // pred_check_branch
        %784 = sbr.rel (%p781) target = $region100
      $region99: #{_forward_impl.3} parent=5 // pred_region
        %s785 = ssub.s32 %s11, 1
        %s786 = sand.u32 %s64, 1
        %s787 = sand.u32 %s64, 1
        %s788 = smul.addr %s787, 512
        %s789 = scalar_lea.vmem [#allocation2], %s788
        // Predicated region
        $region101: #{_forward_impl.3} parent=99 // pred_check
          %p790 = pneg %p77
        $region102: #{_forward_impl.3} parent=99 // pred_check_branch
          %792 = sbr.rel (%p790) target = $region104
        $region103: #{_forward_impl.3} parent=99 // pred_region
          _
        $region104: #{_forward_impl.3} parent=99 // pred_fallthru
          _
        %s793 = sand.u32 %s92, 1
        %s794 = sand.u32 %s92, 1
        %s795 = smul.addr %s794, 512
        %s796 = scalar_lea.vmem [#allocation3], %s795
        // Predicated region
        $region105: #{_forward_impl.3} parent=99 // pred_check
          %p797 = pneg %p105
        $region106: #{_forward_impl.3} parent=99 // pred_check_branch
          %799 = sbr.rel (%p797) target = $region108
        $region107: #{_forward_impl.3} parent=99 // pred_region
          _
        $region108: #{_forward_impl.3} parent=99 // pred_fallthru
          _
        %s800 = smul.u32 4, %s21
        %p801 = scmp.lt.s32.totalorder %s800, 3
        %s802 = scalar_select %p801, %s800, 3
        %s803 = smul.addr %s802, 8
        %s804 = scalar_lea.vmem %s0, %s803
        %p805 = pneg %p49
        %p806 = pneg %p46
        %s807 = sand.u32 %s64, 1
        %s808 = sand.u32 %s64, 1
        %s809 = smul.addr %s808, 512
        %s810 = scalar_lea.vmem [#allocation2], %s809
        %p811 = pneg %p77
        %p812 = pneg %p74
        %s813 = sand.u32 %s92, 1
        %s814 = sand.u32 %s92, 1
        %s815 = smul.addr %s814, 512
        %s816 = scalar_lea.vmem [#allocation3], %s815
        %p817 = pneg %p105
        %p818 = pneg %p102
        %p819 = pneg %p131
        %p820 = pneg %p128
        %s821 = sand.u32 %s118, 1
        %s822 = sand.u32 %s118, 1
        %s823 = smul.addr %s822, 16
        %s824 = scalar_lea.vmem [#allocation4], %s823
        %p825 = pneg %p157
        %p826 = pneg %p154
        %s827 = sand.u32 %s144, 1
        %s828 = sand.u32 %s144, 1
        %s829 = smul.addr %s828, 16
        %s830 = scalar_lea.vmem [#allocation5], %s829
        %s831 = smul.u32 4, %s21
        %p832 = scmp.lt.s32.totalorder %s831, 3
        %s833 = scalar_select %p832, %s831, 3
        %s834 = smul.addr %s833, 8
        %s835 = scalar_lea.vmem %s0, %s834
        %s836 = smul.u32 4, %s21
        %s837 = smul.u32 64, %s21
        %s838 = smul.u32 64, %s21
        %p839 = scmp.eq.s32.totalorder %s21, 0
        // Predicated region
        $region109: #{_forward_impl.3} parent=99 // pred_check
          %p840 = pneg %p839
        $region110: #{_forward_impl.3} parent=99 // pred_check_branch
          %842 = sbr.rel (%p840) target = $region112
        $region111: #{_forward_impl.3} parent=99 // pred_region
          %843 = vst [vmem:[%s824] sm:$0xff] 0.0
          %844 = vst [vmem:[%s824 + $0x8] sm:$0xff] 0.0
          %845 = vst [vmem:[%s830] sm:$0xff] 0.0
          %846 = vst [vmem:[%s830 + $0x8] sm:$0xff] 0.0
        $region112: #{_forward_impl.3} parent=99 // pred_fallthru
          _
        %v847 = vld [vmem:[%s835] sm:$0xff]
        %v848 = vld [vmem:[%s835 + $0x8] sm:$0xff]
        %v849 = vld [vmem:[%s835 + $0x10] sm:$0xff]
        %v850 = vld [vmem:[%s835 + $0x18] sm:$0xff]
        %v851 = vld [vmem:[%s835 + $0x20] sm:$0xff]
        %v852 = vld [vmem:[%s835 + $0x28] sm:$0xff]
        %v853 = vld [vmem:[%s835 + $0x30] sm:$0xff]
        %v854 = vld [vmem:[%s835 + $0x38] sm:$0xff]
        %v855 = vld [vmem:[%s835 + $0x40] sm:$0xff]
        %v856 = vld [vmem:[%s835 + $0x48] sm:$0xff]
        %v857 = vld [vmem:[%s835 + $0x50] sm:$0xff]
        %v858 = vld [vmem:[%s835 + $0x58] sm:$0xff]
        %v859 = vld [vmem:[%s835 + $0x60] sm:$0xff]
        %v860 = vld [vmem:[%s835 + $0x68] sm:$0xff]
        %v861 = vld [vmem:[%s835 + $0x70] sm:$0xff]
        %v862 = vld [vmem:[%s835 + $0x78] sm:$0xff]
        %v863 = vld [vmem:[%s789] sm:$0xff]
        %v864 = vld [vmem:[%s789 + $0x8] sm:$0xff]
        %v865 = vld [vmem:[%s789 + $0x10] sm:$0xff]
        %v866 = vld [vmem:[%s789 + $0x18] sm:$0xff]
        %v867 = vld [vmem:[%s789 + $0x20] sm:$0xff]
        %v868 = vld [vmem:[%s789 + $0x28] sm:$0xff]
        %v869 = vld [vmem:[%s789 + $0x30] sm:$0xff]
        %v870 = vld [vmem:[%s789 + $0x38] sm:$0xff]
        %v871 = vld [vmem:[%s789 + $0x40] sm:$0xff]
        %v872 = vld [vmem:[%s789 + $0x48] sm:$0xff]
        %v873 = vld [vmem:[%s789 + $0x50] sm:$0xff]
        %v874 = vld [vmem:[%s789 + $0x58] sm:$0xff]
        %v875 = vld [vmem:[%s789 + $0x60] sm:$0xff]
        %v876 = vld [vmem:[%s789 + $0x68] sm:$0xff]
        %v877 = vld [vmem:[%s789 + $0x70] sm:$0xff]
        %v878 = vld [vmem:[%s789 + $0x78] sm:$0xff]
        %v879 = vld [vmem:[%s789 + $0x80] sm:$0xff]
        %v880 = vld [vmem:[%s789 + $0x88] sm:$0xff]
        %v881 = vld [vmem:[%s789 + $0x90] sm:$0xff]
        %v882 = vld [vmem:[%s789 + $0x98] sm:$0xff]
        %v883 = vld [vmem:[%s789 + $0xa0] sm:$0xff]
        %v884 = vld [vmem:[%s789 + $0xa8] sm:$0xff]
        %v885 = vld [vmem:[%s789 + $0xb0] sm:$0xff]
        %v886 = vld [vmem:[%s789 + $0xb8] sm:$0xff]
        %v887 = vld [vmem:[%s789 + $0xc0] sm:$0xff]
        %v888 = vld [vmem:[%s789 + $0xc8] sm:$0xff]
        %v889 = vld [vmem:[%s789 + $0xd0] sm:$0xff]
        %v890 = vld [vmem:[%s789 + $0xd8] sm:$0xff]
        %v891 = vld [vmem:[%s789 + $0xe0] sm:$0xff]
        %v892 = vld [vmem:[%s789 + $0xe8] sm:$0xff]
        %v893 = vld [vmem:[%s789 + $0xf0] sm:$0xff]
        %v894 = vld [vmem:[%s789 + $0xf8] sm:$0xff]
        %v895 = vld [vmem:[%s789 + $0x100] sm:$0xff]
        %v896 = vld [vmem:[%s789 + $0x108] sm:$0xff]
        %v897 = vld [vmem:[%s789 + $0x110] sm:$0xff]
        %v898 = vld [vmem:[%s789 + $0x118] sm:$0xff]
        %v899 = vld [vmem:[%s789 + $0x120] sm:$0xff]
        %v900 = vld [vmem:[%s789 + $0x128] sm:$0xff]
        %v901 = vld [vmem:[%s789 + $0x130] sm:$0xff]
        %v902 = vld [vmem:[%s789 + $0x138] sm:$0xff]
        %v903 = vld [vmem:[%s789 + $0x140] sm:$0xff]
        %v904 = vld [vmem:[%s789 + $0x148] sm:$0xff]
        %v905 = vld [vmem:[%s789 + $0x150] sm:$0xff]
        %v906 = vld [vmem:[%s789 + $0x158] sm:$0xff]
        %v907 = vld [vmem:[%s789 + $0x160] sm:$0xff]
        %v908 = vld [vmem:[%s789 + $0x168] sm:$0xff]
        %v909 = vld [vmem:[%s789 + $0x170] sm:$0xff]
        %v910 = vld [vmem:[%s789 + $0x178] sm:$0xff]
        %v911 = vld [vmem:[%s789 + $0x180] sm:$0xff]
        %v912 = vld [vmem:[%s789 + $0x188] sm:$0xff]
        %v913 = vld [vmem:[%s789 + $0x190] sm:$0xff]
        %v914 = vld [vmem:[%s789 + $0x198] sm:$0xff]
        %v915 = vld [vmem:[%s789 + $0x1a0] sm:$0xff]
        %v916 = vld [vmem:[%s789 + $0x1a8] sm:$0xff]
        %v917 = vld [vmem:[%s789 + $0x1b0] sm:$0xff]
        %v918 = vld [vmem:[%s789 + $0x1b8] sm:$0xff]
        %v919 = vld [vmem:[%s789 + $0x1c0] sm:$0xff]
        %v920 = vld [vmem:[%s789 + $0x1c8] sm:$0xff]
        %v921 = vld [vmem:[%s789 + $0x1d0] sm:$0xff]
        %v922 = vld [vmem:[%s789 + $0x1d8] sm:$0xff]
        %v923 = vld [vmem:[%s789 + $0x1e0] sm:$0xff]
        %v924 = vld [vmem:[%s789 + $0x1e8] sm:$0xff]
        %v925 = vld [vmem:[%s789 + $0x1f0] sm:$0xff]
        %v926 = vld [vmem:[%s789 + $0x1f8] sm:$0xff]
        %927 = vmatpush.msra.mxu0 %v878
        %928 = vmatpush.msra.mxu0 %v877
        %929 = vmatpush.msra.mxu0 %v876
        %930 = vmatpush.msra.mxu0 %v875
        %931 = vmatpush.msra.mxu0 %v874
        %932 = vmatpush.msra.mxu0 %v873
        %933 = vmatpush.msra.mxu0 %v872
        %934 = vmatpush.msra.mxu0 %v871
        %935 = vmatpush.msra.mxu0 %v870
        %936 = vmatpush.msra.mxu0 %v869
        %937 = vmatpush.msra.mxu0 %v868
        %938 = vmatpush.msra.mxu0 %v867
        %939 = vmatpush.msra.mxu0 %v866
        %940 = vmatpush.msra.mxu0 %v865
        %941 = vmatpush.msra.mxu0 %v864
        %942 = vmatpush.msra.mxu0 %v863
        %943 = vmatmul.f32.gmra.mxu0 %v847
        %v944 = vpop.f32.mrf.mxu0
        %v945 = vadd.f32 0.0, %v944
        %946 = vmatmul.f32.gmra.mxu0 %v851
        %v947 = vpop.f32.mrf.mxu0
        %v948 = vadd.f32 0.0, %v947
        %949 = vmatmul.f32.gmra.mxu0 %v855
        %v950 = vpop.f32.mrf.mxu0
        %v951 = vadd.f32 0.0, %v950
        %952 = vmatmul.f32.gmra.mxu0 %v859
        %v953 = vpop.f32.mrf.mxu0
        %v954 = vadd.f32 0.0, %v953
        %955 = vdwg.mxu0
        %956 = vmatpush.msra.mxu0 %v894
        %957 = vmatpush.msra.mxu0 %v893
        %958 = vmatpush.msra.mxu0 %v892
        %959 = vmatpush.msra.mxu0 %v891
        %960 = vmatpush.msra.mxu0 %v890
        %961 = vmatpush.msra.mxu0 %v889
        %962 = vmatpush.msra.mxu0 %v888
        %963 = vmatpush.msra.mxu0 %v887
        %964 = vmatpush.msra.mxu0 %v886
        %965 = vmatpush.msra.mxu0 %v885
        %966 = vmatpush.msra.mxu0 %v884
        %967 = vmatpush.msra.mxu0 %v883
        %968 = vmatpush.msra.mxu0 %v882
        %969 = vmatpush.msra.mxu0 %v881
        %970 = vmatpush.msra.mxu0 %v880
        %971 = vmatpush.msra.mxu0 %v879
        %972 = vmatmul.f32.gmra.mxu0 %v848
        %v973 = vpop.f32.mrf.mxu0
        %v974 = vadd.f32 %v945, %v973
        %975 = vmatmul.f32.gmra.mxu0 %v852
        %v976 = vpop.f32.mrf.mxu0
        %v977 = vadd.f32 %v948, %v976
        %978 = vmatmul.f32.gmra.mxu0 %v856
        %v979 = vpop.f32.mrf.mxu0
        %v980 = vadd.f32 %v951, %v979
        %981 = vmatmul.f32.gmra.mxu0 %v860
        %v982 = vpop.f32.mrf.mxu0
        %v983 = vadd.f32 %v954, %v982
        %984 = vdwg.mxu0
        %985 = vmatpush.msra.mxu0 %v910
        %986 = vmatpush.msra.mxu0 %v909
        %987 = vmatpush.msra.mxu0 %v908
        %988 = vmatpush.msra.mxu0 %v907
        %989 = vmatpush.msra.mxu0 %v906
        %990 = vmatpush.msra.mxu0 %v905
        %991 = vmatpush.msra.mxu0 %v904
        %992 = vmatpush.msra.mxu0 %v903
        %993 = vmatpush.msra.mxu0 %v902
        %994 = vmatpush.msra.mxu0 %v901
        %995 = vmatpush.msra.mxu0 %v900
        %996 = vmatpush.msra.mxu0 %v899
        %997 = vmatpush.msra.mxu0 %v898
        %998 = vmatpush.msra.mxu0 %v897
        %999 = vmatpush.msra.mxu0 %v896
        %1000 = vmatpush.msra.mxu0 %v895
        %1001 = vmatmul.f32.gmra.mxu0 %v849
        %v1002 = vpop.f32.mrf.mxu0
        %v1003 = vadd.f32 %v974, %v1002
        %1004 = vmatmul.f32.gmra.mxu0 %v853
        %v1005 = vpop.f32.mrf.mxu0
        %v1006 = vadd.f32 %v977, %v1005
        %1007 = vmatmul.f32.gmra.mxu0 %v857
        %v1008 = vpop.f32.mrf.mxu0
        %v1009 = vadd.f32 %v980, %v1008
        %1010 = vmatmul.f32.gmra.mxu0 %v861
        %v1011 = vpop.f32.mrf.mxu0
        %v1012 = vadd.f32 %v983, %v1011
        %1013 = vdwg.mxu0
        %1014 = vmatpush.msra.mxu0 %v926
        %1015 = vmatpush.msra.mxu0 %v925
        %1016 = vmatpush.msra.mxu0 %v924
        %1017 = vmatpush.msra.mxu0 %v923
        %1018 = vmatpush.msra.mxu0 %v922
        %1019 = vmatpush.msra.mxu0 %v921
        %1020 = vmatpush.msra.mxu0 %v920
        %1021 = vmatpush.msra.mxu0 %v919
        %1022 = vmatpush.msra.mxu0 %v918
        %1023 = vmatpush.msra.mxu0 %v917
        %1024 = vmatpush.msra.mxu0 %v916
        %1025 = vmatpush.msra.mxu0 %v915
        %1026 = vmatpush.msra.mxu0 %v914
        %1027 = vmatpush.msra.mxu0 %v913
        %1028 = vmatpush.msra.mxu0 %v912
        %1029 = vmatpush.msra.mxu0 %v911
        %1030 = vmatmul.f32.gmra.mxu0 %v850
        %v1031 = vpop.f32.mrf.mxu0
        %v1032 = vadd.f32 %v1003, %v1031
        %1033 = vmatmul.f32.gmra.mxu0 %v854
        %v1034 = vpop.f32.mrf.mxu0
        %v1035 = vadd.f32 %v1006, %v1034
        %1036 = vmatmul.f32.gmra.mxu0 %v858
        %v1037 = vpop.f32.mrf.mxu0
        %v1038 = vadd.f32 %v1009, %v1037
        %1039 = vmatmul.f32.gmra.mxu0 %v862
        %v1040 = vpop.f32.mrf.mxu0
        %v1041 = vadd.f32 %v1012, %v1040
        %1042 = vdwg.mxu0
        %v1043 = vld [vmem:[%s796] sm:$0xff]
        %v1044 = vld [vmem:[%s796 + $0x8] sm:$0xff]
        %v1045 = vld [vmem:[%s796 + $0x10] sm:$0xff]
        %v1046 = vld [vmem:[%s796 + $0x18] sm:$0xff]
        %v1047 = vld [vmem:[%s796 + $0x20] sm:$0xff]
        %v1048 = vld [vmem:[%s796 + $0x28] sm:$0xff]
        %v1049 = vld [vmem:[%s796 + $0x30] sm:$0xff]
        %v1050 = vld [vmem:[%s796 + $0x38] sm:$0xff]
        %v1051 = vld [vmem:[%s796 + $0x40] sm:$0xff]
        %v1052 = vld [vmem:[%s796 + $0x48] sm:$0xff]
        %v1053 = vld [vmem:[%s796 + $0x50] sm:$0xff]
        %v1054 = vld [vmem:[%s796 + $0x58] sm:$0xff]
        %v1055 = vld [vmem:[%s796 + $0x60] sm:$0xff]
        %v1056 = vld [vmem:[%s796 + $0x68] sm:$0xff]
        %v1057 = vld [vmem:[%s796 + $0x70] sm:$0xff]
        %v1058 = vld [vmem:[%s796 + $0x78] sm:$0xff]
        %v1059 = vld [vmem:[%s796 + $0x80] sm:$0xff]
        %v1060 = vld [vmem:[%s796 + $0x88] sm:$0xff]
        %v1061 = vld [vmem:[%s796 + $0x90] sm:$0xff]
        %v1062 = vld [vmem:[%s796 + $0x98] sm:$0xff]
        %v1063 = vld [vmem:[%s796 + $0xa0] sm:$0xff]
        %v1064 = vld [vmem:[%s796 + $0xa8] sm:$0xff]
        %v1065 = vld [vmem:[%s796 + $0xb0] sm:$0xff]
        %v1066 = vld [vmem:[%s796 + $0xb8] sm:$0xff]
        %v1067 = vld [vmem:[%s796 + $0xc0] sm:$0xff]
        %v1068 = vld [vmem:[%s796 + $0xc8] sm:$0xff]
        %v1069 = vld [vmem:[%s796 + $0xd0] sm:$0xff]
        %v1070 = vld [vmem:[%s796 + $0xd8] sm:$0xff]
        %v1071 = vld [vmem:[%s796 + $0xe0] sm:$0xff]
        %v1072 = vld [vmem:[%s796 + $0xe8] sm:$0xff]
        %v1073 = vld [vmem:[%s796 + $0xf0] sm:$0xff]
        %v1074 = vld [vmem:[%s796 + $0xf8] sm:$0xff]
        %v1075 = vld [vmem:[%s796 + $0x100] sm:$0xff]
        %v1076 = vld [vmem:[%s796 + $0x108] sm:$0xff]
        %v1077 = vld [vmem:[%s796 + $0x110] sm:$0xff]
        %v1078 = vld [vmem:[%s796 + $0x118] sm:$0xff]
        %v1079 = vld [vmem:[%s796 + $0x120] sm:$0xff]
        %v1080 = vld [vmem:[%s796 + $0x128] sm:$0xff]
        %v1081 = vld [vmem:[%s796 + $0x130] sm:$0xff]
        %v1082 = vld [vmem:[%s796 + $0x138] sm:$0xff]
        %v1083 = vld [vmem:[%s796 + $0x140] sm:$0xff]
        %v1084 = vld [vmem:[%s796 + $0x148] sm:$0xff]
        %v1085 = vld [vmem:[%s796 + $0x150] sm:$0xff]
        %v1086 = vld [vmem:[%s796 + $0x158] sm:$0xff]
        %v1087 = vld [vmem:[%s796 + $0x160] sm:$0xff]
        %v1088 = vld [vmem:[%s796 + $0x168] sm:$0xff]
        %v1089 = vld [vmem:[%s796 + $0x170] sm:$0xff]
        %v1090 = vld [vmem:[%s796 + $0x178] sm:$0xff]
        %v1091 = vld [vmem:[%s796 + $0x180] sm:$0xff]
        %v1092 = vld [vmem:[%s796 + $0x188] sm:$0xff]
        %v1093 = vld [vmem:[%s796 + $0x190] sm:$0xff]
        %v1094 = vld [vmem:[%s796 + $0x198] sm:$0xff]
        %v1095 = vld [vmem:[%s796 + $0x1a0] sm:$0xff]
        %v1096 = vld [vmem:[%s796 + $0x1a8] sm:$0xff]
        %v1097 = vld [vmem:[%s796 + $0x1b0] sm:$0xff]
        %v1098 = vld [vmem:[%s796 + $0x1b8] sm:$0xff]
        %v1099 = vld [vmem:[%s796 + $0x1c0] sm:$0xff]
        %v1100 = vld [vmem:[%s796 + $0x1c8] sm:$0xff]
        %v1101 = vld [vmem:[%s796 + $0x1d0] sm:$0xff]
        %v1102 = vld [vmem:[%s796 + $0x1d8] sm:$0xff]
        %v1103 = vld [vmem:[%s796 + $0x1e0] sm:$0xff]
        %v1104 = vld [vmem:[%s796 + $0x1e8] sm:$0xff]
        %v1105 = vld [vmem:[%s796 + $0x1f0] sm:$0xff]
        %v1106 = vld [vmem:[%s796 + $0x1f8] sm:$0xff]
        %1107 = vmatpush.msra.mxu0 %v1058
        %1108 = vmatpush.msra.mxu0 %v1057
        %1109 = vmatpush.msra.mxu0 %v1056
        %1110 = vmatpush.msra.mxu0 %v1055
        %1111 = vmatpush.msra.mxu0 %v1054
        %1112 = vmatpush.msra.mxu0 %v1053
        %1113 = vmatpush.msra.mxu0 %v1052
        %1114 = vmatpush.msra.mxu0 %v1051
        %1115 = vmatpush.msra.mxu0 %v1050
        %1116 = vmatpush.msra.mxu0 %v1049
        %1117 = vmatpush.msra.mxu0 %v1048
        %1118 = vmatpush.msra.mxu0 %v1047
        %1119 = vmatpush.msra.mxu0 %v1046
        %1120 = vmatpush.msra.mxu0 %v1045
        %1121 = vmatpush.msra.mxu0 %v1044
        %1122 = vmatpush.msra.mxu0 %v1043
        %1123 = vmatmul.f32.gmra.mxu0 %v847
        %v1124 = vpop.f32.mrf.mxu0
        %v1125 = vadd.f32 0.0, %v1124
        %1126 = vmatmul.f32.gmra.mxu0 %v851
        %v1127 = vpop.f32.mrf.mxu0
        %v1128 = vadd.f32 0.0, %v1127
        %1129 = vmatmul.f32.gmra.mxu0 %v855
        %v1130 = vpop.f32.mrf.mxu0
        %v1131 = vadd.f32 0.0, %v1130
        %1132 = vmatmul.f32.gmra.mxu0 %v859
        %v1133 = vpop.f32.mrf.mxu0
        %v1134 = vadd.f32 0.0, %v1133
        %1135 = vdwg.mxu0
        %1136 = vmatpush.msra.mxu0 %v1074
        %1137 = vmatpush.msra.mxu0 %v1073
        %1138 = vmatpush.msra.mxu0 %v1072
        %1139 = vmatpush.msra.mxu0 %v1071
        %1140 = vmatpush.msra.mxu0 %v1070
        %1141 = vmatpush.msra.mxu0 %v1069
        %1142 = vmatpush.msra.mxu0 %v1068
        %1143 = vmatpush.msra.mxu0 %v1067
        %1144 = vmatpush.msra.mxu0 %v1066
        %1145 = vmatpush.msra.mxu0 %v1065
        %1146 = vmatpush.msra.mxu0 %v1064
        %1147 = vmatpush.msra.mxu0 %v1063
        %1148 = vmatpush.msra.mxu0 %v1062
        %1149 = vmatpush.msra.mxu0 %v1061
        %1150 = vmatpush.msra.mxu0 %v1060
        %1151 = vmatpush.msra.mxu0 %v1059
        %1152 = vmatmul.f32.gmra.mxu0 %v848
        %v1153 = vpop.f32.mrf.mxu0
        %v1154 = vadd.f32 %v1125, %v1153
        %1155 = vmatmul.f32.gmra.mxu0 %v852
        %v1156 = vpop.f32.mrf.mxu0
        %v1157 = vadd.f32 %v1128, %v1156
        %1158 = vmatmul.f32.gmra.mxu0 %v856
        %v1159 = vpop.f32.mrf.mxu0
        %v1160 = vadd.f32 %v1131, %v1159
        %1161 = vmatmul.f32.gmra.mxu0 %v860
        %v1162 = vpop.f32.mrf.mxu0
        %v1163 = vadd.f32 %v1134, %v1162
        %1164 = vdwg.mxu0
        %1165 = vmatpush.msra.mxu0 %v1090
        %1166 = vmatpush.msra.mxu0 %v1089
        %1167 = vmatpush.msra.mxu0 %v1088
        %1168 = vmatpush.msra.mxu0 %v1087
        %1169 = vmatpush.msra.mxu0 %v1086
        %1170 = vmatpush.msra.mxu0 %v1085
        %1171 = vmatpush.msra.mxu0 %v1084
        %1172 = vmatpush.msra.mxu0 %v1083
        %1173 = vmatpush.msra.mxu0 %v1082
        %1174 = vmatpush.msra.mxu0 %v1081
        %1175 = vmatpush.msra.mxu0 %v1080
        %1176 = vmatpush.msra.mxu0 %v1079
        %1177 = vmatpush.msra.mxu0 %v1078
        %1178 = vmatpush.msra.mxu0 %v1077
        %1179 = vmatpush.msra.mxu0 %v1076
        %1180 = vmatpush.msra.mxu0 %v1075
        %1181 = vmatmul.f32.gmra.mxu0 %v849
        %v1182 = vpop.f32.mrf.mxu0
        %v1183 = vadd.f32 %v1154, %v1182
        %1184 = vmatmul.f32.gmra.mxu0 %v853
        %v1185 = vpop.f32.mrf.mxu0
        %v1186 = vadd.f32 %v1157, %v1185
        %1187 = vmatmul.f32.gmra.mxu0 %v857
        %v1188 = vpop.f32.mrf.mxu0
        %v1189 = vadd.f32 %v1160, %v1188
        %1190 = vmatmul.f32.gmra.mxu0 %v861
        %v1191 = vpop.f32.mrf.mxu0
        %v1192 = vadd.f32 %v1163, %v1191
        %1193 = vdwg.mxu0
        %1194 = vmatpush.msra.mxu0 %v1106
        %1195 = vmatpush.msra.mxu0 %v1105
        %1196 = vmatpush.msra.mxu0 %v1104
        %1197 = vmatpush.msra.mxu0 %v1103
        %1198 = vmatpush.msra.mxu0 %v1102
        %1199 = vmatpush.msra.mxu0 %v1101
        %1200 = vmatpush.msra.mxu0 %v1100
        %1201 = vmatpush.msra.mxu0 %v1099
        %1202 = vmatpush.msra.mxu0 %v1098
        %1203 = vmatpush.msra.mxu0 %v1097
        %1204 = vmatpush.msra.mxu0 %v1096
        %1205 = vmatpush.msra.mxu0 %v1095
        %1206 = vmatpush.msra.mxu0 %v1094
        %1207 = vmatpush.msra.mxu0 %v1093
        %1208 = vmatpush.msra.mxu0 %v1092
        %1209 = vmatpush.msra.mxu0 %v1091
        %1210 = vmatmul.f32.gmra.mxu0 %v850
        %v1211 = vpop.f32.mrf.mxu0
        %v1212 = vadd.f32 %v1183, %v1211
        %1213 = vmatmul.f32.gmra.mxu0 %v854
        %v1214 = vpop.f32.mrf.mxu0
        %v1215 = vadd.f32 %v1186, %v1214
        %1216 = vmatmul.f32.gmra.mxu0 %v858
        %v1217 = vpop.f32.mrf.mxu0
        %v1218 = vadd.f32 %v1189, %v1217
        %1219 = vmatmul.f32.gmra.mxu0 %v862
        %v1220 = vpop.f32.mrf.mxu0
        %v1221 = vadd.f32 %v1192, %v1220
        %1222 = vdwg.mxu0
        %v1223 = vld [vmem:[%s824] sm:$0xff]
        %v1224 = vld [vmem:[%s824 + $0x8] sm:$0xff]
        %v1225 = vsub.f32 %v1032, %v1218
        %v1226 = vsub.f32 %v1035, %v1221
        %v1227 = vadd.f32 %v1223, %v1225
        %v1228 = vadd.f32 %v1224, %v1226
        %1229 = vst [vmem:[%s824] sm:$0xff] %v1227
        %1230 = vst [vmem:[%s824 + $0x8] sm:$0xff] %v1228
        %v1231 = vld [vmem:[%s830] sm:$0xff]
        %v1232 = vld [vmem:[%s830 + $0x8] sm:$0xff]
        %v1233 = vadd.f32 %v1212, %v1038
        %v1234 = vadd.f32 %v1215, %v1041
        %v1235 = vadd.f32 %v1231, %v1233
        %v1236 = vadd.f32 %v1232, %v1234
        %1237 = vst [vmem:[%s830] sm:$0xff] %v1235
        %1238 = vst [vmem:[%s830 + $0x8] sm:$0xff] %v1236
        %s1239 = sand.u32 %s118, 1
        %s1240 = sand.u32 %s118, 1
        %s1241 = smul.addr %s1240, 16
        %s1242 = scalar_lea.vmem [#allocation4], %s1241
        %s1243 = sand.u32 %s144, 1
        %s1244 = sand.u32 %s144, 1
        %s1245 = smul.addr %s1244, 16
        %s1246 = scalar_lea.vmem [#allocation5], %s1245
        // Predicated region
        $region113: #{_forward_impl.3} parent=99 // pred_check
          %p1247 = pneg %p128
        $region114: #{_forward_impl.3} parent=99 // pred_check_branch
          %1249 = sbr.rel (%p1247) target = $region116
        $region115: #{_forward_impl.3} parent=99 // pred_region
          %s1250 = smul.addr %s20, 8
          %s1251 = scalar_lea.vmem %s3, %s1250
          // Predicated region
          $region117: #{_forward_impl.3} parent=115 // pred_check
            _
          $region118: #{_forward_impl.3} parent=115 // pred_check_branch
            %1253 = sbr.rel (0) target = $region120
          $region119: #{_forward_impl.3} parent=115 // pred_region
            // Predicated region
            $region121: #{_forward_impl.3} parent=119 // pred_check
              _
            $region122: #{_forward_impl.3} parent=119 // pred_check_branch
              %1255 = sbr.rel (0) target = $region124
            $region123: #{_forward_impl.3} parent=119 // pred_region
              // Predicated region
              $region136: #{_forward_impl.3} parent=123 // pred_check
                _
              $region137: #{_forward_impl.3} parent=123 // pred_check_branch
                %1273 = sbr.rel (0) target = $region139
              $region138: #{_forward_impl.3} parent=123 // pred_region
                loop: start=0, step=1, limit=1
                $region140: #{_forward_impl.3} parent=138 // loop_pre_header
                  _
                $region141: #{_forward_impl.3} parent=138 // loop_header
                  %s1275 = sphi 0, %s1279
                  %p1276 = scmp.ge.s32.totalorder %s1275, 1
                  %s1280 = sphi %s1242, %s1242
                  %s1281 = sphi %s1251, %s1251
                $region142: #{_forward_impl.3} parent=138 // loop_header_branch
                  %1278 = sbr.rel (%p1276) target = $region146
                $region143: #{_forward_impl.3} parent=138 // loop_body
                  %v1282 = vld [vmem:[%s1280] sm:$0xff]
                  %1283 = vst [vmem:[%s1281] sm:$0xff] %v1282
                  %v1284 = vld [vmem:[%s1280 + $0x8] sm:$0xff]
                  %1285 = vst [vmem:[%s1281 + $0x10] sm:$0xff] %v1284
                $region144: #{_forward_impl.3} parent=138 // loop_footer
                  %s1279 = sadd.s32 1, %s1275
                $region145: #{_forward_impl.3} parent=138 // loop_footer_branch
                  %1274 = sbr.rel target = $region141
                $region146: #{_forward_impl.3} parent=138 // loop_exit
                  _
              $region139: #{_forward_impl.3} parent=123 // pred_fallthru
                _
              // Predicated region
              $region147: #{_forward_impl.3} parent=123 // pred_check
                _
              $region148: #{_forward_impl.3} parent=123 // pred_check_branch
                %1287 = sbr.rel target = $region150
              $region149: #{_forward_impl.3} parent=123 // pred_region
                _
              $region150: #{_forward_impl.3} parent=123 // pred_fallthru
                _
            $region124: #{_forward_impl.3} parent=119 // pred_fallthru
              _
            // Predicated region
            $region125: #{_forward_impl.3} parent=119 // pred_check
              _
            $region126: #{_forward_impl.3} parent=119 // pred_check_branch
              %1257 = sbr.rel target = $region128
            $region127: #{_forward_impl.3} parent=119 // pred_region
              %s1259 = ssub.s32 256, 1
              loop: start=0, step=1, limit=1
              $region129: #{_forward_impl.3} parent=127 // loop_pre_header
                _
              $region130: #{_forward_impl.3} parent=127 // loop_header
                %s1261 = sphi 0, %s1265
                %p1262 = scmp.ge.s32.totalorder %s1261, 1
                %s1266 = sphi %s1242, %s1242
                %s1267 = sphi %s1251, %s1251
              $region131: #{_forward_impl.3} parent=127 // loop_header_branch
                %1264 = sbr.rel (%p1262) target = $region135
              $region132: #{_forward_impl.3} parent=127 // loop_body
                %v1268 = vld [vmem:[%s1266] sm:%s1259]
                %1269 = vst [vmem:[%s1267] sm:%s1259] %v1268
                %v1270 = vld [vmem:[%s1266 + $0x8] sm:%s1259]
                %1271 = vst [vmem:[%s1267 + $0x10] sm:%s1259] %v1270
              $region133: #{_forward_impl.3} parent=127 // loop_footer
                %s1265 = sadd.s32 1, %s1261
              $region134: #{_forward_impl.3} parent=127 // loop_footer_branch
                %1260 = sbr.rel target = $region130
              $region135: #{_forward_impl.3} parent=127 // loop_exit
                _
            $region128: #{_forward_impl.3} parent=119 // pred_fallthru
              _
          $region120: #{_forward_impl.3} parent=115 // pred_fallthru
            _
          %1288 = vnop
        $region116: #{_forward_impl.3} parent=99 // pred_fallthru
          _
        // Predicated region
        $region151: #{_forward_impl.3} parent=99 // pred_check
          %p1289 = pneg %p154
        $region152: #{_forward_impl.3} parent=99 // pred_check_branch
          %1291 = sbr.rel (%p1289) target = $region154
        $region153: #{_forward_impl.3} parent=99 // pred_region
          %s1292 = smul.addr %s20, 8
          %s1293 = scalar_lea.vmem %s4, %s1292
          // Predicated region
          $region155: #{_forward_impl.3} parent=153 // pred_check
            _
          $region156: #{_forward_impl.3} parent=153 // pred_check_branch
            %1295 = sbr.rel (0) target = $region158
          $region157: #{_forward_impl.3} parent=153 // pred_region
            // Predicated region
            $region159: #{_forward_impl.3} parent=157 // pred_check
              _
            $region160: #{_forward_impl.3} parent=157 // pred_check_branch
              %1297 = sbr.rel (0) target = $region162
            $region161: #{_forward_impl.3} parent=157 // pred_region
              // Predicated region
              $region174: #{_forward_impl.3} parent=161 // pred_check
                _
              $region175: #{_forward_impl.3} parent=161 // pred_check_branch
                %1315 = sbr.rel (0) target = $region177
              $region176: #{_forward_impl.3} parent=161 // pred_region
                loop: start=0, step=1, limit=1
                $region178: #{_forward_impl.3} parent=176 // loop_pre_header
                  _
                $region179: #{_forward_impl.3} parent=176 // loop_header
                  %s1317 = sphi 0, %s1321
                  %p1318 = scmp.ge.s32.totalorder %s1317, 1
                  %s1322 = sphi %s1246, %s1246
                  %s1323 = sphi %s1293, %s1293
                $region180: #{_forward_impl.3} parent=176 // loop_header_branch
                  %1320 = sbr.rel (%p1318) target = $region184
                $region181: #{_forward_impl.3} parent=176 // loop_body
                  %v1324 = vld [vmem:[%s1322] sm:$0xff]
                  %1325 = vst [vmem:[%s1323] sm:$0xff] %v1324
                  %v1326 = vld [vmem:[%s1322 + $0x8] sm:$0xff]
                  %1327 = vst [vmem:[%s1323 + $0x10] sm:$0xff] %v1326
                $region182: #{_forward_impl.3} parent=176 // loop_footer
                  %s1321 = sadd.s32 1, %s1317
                $region183: #{_forward_impl.3} parent=176 // loop_footer_branch
                  %1316 = sbr.rel target = $region179
                $region184: #{_forward_impl.3} parent=176 // loop_exit
                  _
              $region177: #{_forward_impl.3} parent=161 // pred_fallthru
                _
              // Predicated region
              $region185: #{_forward_impl.3} parent=161 // pred_check
                _
              $region186: #{_forward_impl.3} parent=161 // pred_check_branch
                %1329 = sbr.rel target = $region188
              $region187: #{_forward_impl.3} parent=161 // pred_region
                _
              $region188: #{_forward_impl.3} parent=161 // pred_fallthru
                _
            $region162: #{_forward_impl.3} parent=157 // pred_fallthru
              _
            // Predicated region
            $region163: #{_forward_impl.3} parent=157 // pred_check
              _
            $region164: #{_forward_impl.3} parent=157 // pred_check_branch
              %1299 = sbr.rel target = $region166
            $region165: #{_forward_impl.3} parent=157 // pred_region
              %s1301 = ssub.s32 256, 1
              loop: start=0, step=1, limit=1
              $region167: #{_forward_impl.3} parent=165 // loop_pre_header
                _
              $region168: #{_forward_impl.3} parent=165 // loop_header
                %s1303 = sphi 0, %s1307
                %p1304 = scmp.ge.s32.totalorder %s1303, 1
                %s1308 = sphi %s1246, %s1246
                %s1309 = sphi %s1293, %s1293
              $region169: #{_forward_impl.3} parent=165 // loop_header_branch
                %1306 = sbr.rel (%p1304) target = $region173
              $region170: #{_forward_impl.3} parent=165 // loop_body
                %v1310 = vld [vmem:[%s1308] sm:%s1301]
                %1311 = vst [vmem:[%s1309] sm:%s1301] %v1310
                %v1312 = vld [vmem:[%s1308 + $0x8] sm:%s1301]
                %1313 = vst [vmem:[%s1309 + $0x10] sm:%s1301] %v1312
              $region171: #{_forward_impl.3} parent=165 // loop_footer
                %s1307 = sadd.s32 1, %s1303
              $region172: #{_forward_impl.3} parent=165 // loop_footer_branch
                %1302 = sbr.rel target = $region168
              $region173: #{_forward_impl.3} parent=165 // loop_exit
                _
            $region166: #{_forward_impl.3} parent=157 // pred_fallthru
              _
          $region158: #{_forward_impl.3} parent=153 // pred_fallthru
            _
          %1330 = vnop
        $region154: #{_forward_impl.3} parent=99 // pred_fallthru
          _
      $region100: #{_forward_impl.3} parent=5 // pred_fallthru
        _
      %p1331 = scmp.le.s32.totalorder 2, %s11
      // Predicated region
      $region189: #{_forward_impl.3} parent=5 // pred_check
        %p1332 = pneg %p1331
      $region190: #{_forward_impl.3} parent=5 // pred_check_branch
        %1334 = sbr.rel (%p1332) target = $region192
      $region191: #{_forward_impl.3} parent=5 // pred_region
        %s1335 = ssub.s32 %s11, 2
        // Predicated region
        $region193: #{_forward_impl.3} parent=191 // pred_check
          %p1336 = pneg %p134
        $region194: #{_forward_impl.3} parent=191 // pred_check_branch
          %1338 = sbr.rel (%p1336) target = $region196
        $region195: #{_forward_impl.3} parent=191 // pred_region
          %s1339 = sand.u32 %s119, 1
          %s1340 = sand.u32 %s119, 1
          %s1341 = smul.addr %s1340, 16
          %s1342 = scalar_lea.vmem [#allocation4], %s1341
        $region196: #{_forward_impl.3} parent=191 // pred_fallthru
          _
        // Predicated region
        $region197: #{_forward_impl.3} parent=191 // pred_check
          %p1343 = pneg %p160
        $region198: #{_forward_impl.3} parent=191 // pred_check_branch
          %1345 = sbr.rel (%p1343) target = $region200
        $region199: #{_forward_impl.3} parent=191 // pred_region
          %s1346 = sand.u32 %s145, 1
          %s1347 = sand.u32 %s145, 1
          %s1348 = smul.addr %s1347, 16
          %s1349 = scalar_lea.vmem [#allocation5], %s1348
        $region200: #{_forward_impl.3} parent=191 // pred_fallthru
          _
      $region192: #{_forward_impl.3} parent=5 // pred_fallthru
        _
    $region6: #{_forward_impl.3} parent=1 // loop_footer
      %s15 = sadd.s32 1, %s11
    $region7: #{_forward_impl.3} parent=1 // loop_footer_branch
      %10 = sbr.rel target = $region3
    $region8: #{_forward_impl.3} parent=1 // loop_exit
      _

// kernel: _forward_impl.2
$region0: #{_forward_impl.2}
  #allocation0 [shape = 'u32[]', space=smem, size = 0x4, offset = 0x4, fixed_abs, tag = 'smem constant byte address 0x4 - core index']
  #allocation1 [shape = 'u32[72,128]{1,0:T(1,128)}', space=vmem, size = 0x9000, scoped, tag = 'internal scratch']
  %s0 = inlined_call_operand.vmem [shape: f32[4,2048], index: 0, kind: input, shape index: {}]
  %s1 = inlined_call_operand.vmem [shape: s32[2048,3], index: 1, kind: input, shape index: {}]
  %s2 = inlined_call_operand.vmem [shape: s32[3,512], index: 2, kind: input, shape index: {}]
  %s3 = inlined_call_operand.vmem [shape: s32[3,512], index: 3, kind: input, shape index: {}]
  %s4 = inlined_call_operand.vmem [shape: f32[3,512], index: 4, kind: input, shape index: {}]
  %s5 = inlined_call_operand.vmem [shape: f32[4,512], index: 5, kind: output, shape index: {}]
  %s6 = sld [smem:[#allocation0]]
  $region57: #{_forward_impl.2} parent=0
    _
  %s8 = ssub.s32 1, %s6
  %s9 = scalar_select 0, %s8, %s6
  loop: start=0, step=1, limit=6
  $region2: #{_forward_impl.2} parent=0 // loop_pre_header
    _
  $region3: #{_forward_impl.2} parent=0 // loop_header
    %s11 = sphi 0, %s15
    %p12 = scmp.ge.s32.totalorder %s11, 6
    %s18 = sphi 0, %s30
    %s19 = sphi 0, %s26
    %s20 = sphi 0, %s18
    %s21 = sphi 0, %s19
    %s22 = sphi 0, %s20
    %s23 = sphi 0, %s21
    %s33 = sphi 0, %s35
    %s36 = sphi 0, %s33
    %s37 = sphi 0, %s36
    %s53 = sphi 0, %s37
    %s59 = sphi 0, %s61
    %s62 = sphi 0, %s59
    %s63 = sphi 0, %s62
    %s79 = sphi 0, %s63
    %s85 = sphi 0, %s87
    %s88 = sphi 0, %s85
    %s89 = sphi 0, %s88
    %s105 = sphi 0, %s89
    %s111 = sphi 0, %s113
    %s114 = sphi 0, %s111
    %s115 = sphi 0, %s114
    %s131 = sphi 0, %s115
    %s137 = sphi 0, %s139
    %s140 = sphi 0, %s137
    %s141 = sphi 0, %s140
    %s157 = sphi 0, %s141
    %s163 = sphi 0, %s165
    %s166 = sphi 0, %s163
    %s167 = sphi 0, %s166
    %s183 = sphi 0, %s167
  $region4: #{_forward_impl.2} parent=0 // loop_header_branch
    %14 = sbr.rel (%p12) target = $region8
  $region5: #{_forward_impl.2} parent=0 // loop_body
    %s16 = ssub.s32 %s11, 1
    %s17 = ssub.s32 %s11, 2
    %s24 = sadd.s32 1, %s19
    %p25 = scmp.ge.s32.totalorder %s24, 2
    %s26 = scalar_select %p25, 0, %s24
    %s27 = sadd.s32 1, %s18
    %s28 = scalar_select %p25, %s27, %s18
    %p29 = scmp.ge.s32.totalorder %s28, 2
    %s30 = scalar_select %p29, 0, %s28
    %s31 = ssub.s32 %s19, %s26
    %p32 = scmp.eq.s32.totalorder %s31, 0
    %s34 = sadd.s32 %s33, 1
    %s35 = scalar_select %p32, %s33, %s34
    %p38 = pneg %p32
    %p39 = scmp.eq.s32.totalorder %s11, 3
    %p40 = por %p38, %p39
    %p41 = scmp.ne.s32.totalorder %s33, %s36
    %p42 = scmp.eq.s32.totalorder %s11, 0
    %p43 = por %p41, %p42
    %p44 = scmp.ne.s32.totalorder %s33, %s36
    %p45 = scmp.eq.s32.totalorder %s16, 3
    %p46 = por %p44, %p45
    %p47 = scmp.ne.s32.totalorder %s36, %s37
    %p48 = scmp.eq.s32.totalorder %s16, 0
    %p49 = por %p47, %p48
    %p50 = scmp.ne.s32.totalorder %s36, %s37
    %p51 = scmp.eq.s32.totalorder %s17, 3
    %p52 = por %p50, %p51
    %p54 = scmp.ne.s32.totalorder %s37, %s53
    %p55 = scmp.eq.s32.totalorder %s17, 0
    %p56 = por %p54, %p55
    %s57 = ssub.s32 %s19, %s26
    %p58 = scmp.eq.s32.totalorder %s57, 0
    %s60 = sadd.s32 %s59, 1
    %s61 = scalar_select %p58, %s59, %s60
    %p64 = pneg %p58
    %p65 = scmp.eq.s32.totalorder %s11, 3
    %p66 = por %p64, %p65
    %p67 = scmp.ne.s32.totalorder %s59, %s62
    %p68 = scmp.eq.s32.totalorder %s11, 0
    %p69 = por %p67, %p68
    %p70 = scmp.ne.s32.totalorder %s59, %s62
    %p71 = scmp.eq.s32.totalorder %s16, 3
    %p72 = por %p70, %p71
    %p73 = scmp.ne.s32.totalorder %s62, %s63
    %p74 = scmp.eq.s32.totalorder %s16, 0
    %p75 = por %p73, %p74
    %p76 = scmp.ne.s32.totalorder %s62, %s63
    %p77 = scmp.eq.s32.totalorder %s17, 3
    %p78 = por %p76, %p77
    %p80 = scmp.ne.s32.totalorder %s63, %s79
    %p81 = scmp.eq.s32.totalorder %s17, 0
    %p82 = por %p80, %p81
    %s83 = ssub.s32 %s18, %s30
    %p84 = scmp.eq.s32.totalorder %s83, 0
    %s86 = sadd.s32 %s85, 1
    %s87 = scalar_select %p84, %s85, %s86
    %p90 = pneg %p84
    %p91 = scmp.eq.s32.totalorder %s11, 3
    %p92 = por %p90, %p91
    %p93 = scmp.ne.s32.totalorder %s85, %s88
    %p94 = scmp.eq.s32.totalorder %s11, 0
    %p95 = por %p93, %p94
    %p96 = scmp.ne.s32.totalorder %s85, %s88
    %p97 = scmp.eq.s32.totalorder %s16, 3
    %p98 = por %p96, %p97
    %p99 = scmp.ne.s32.totalorder %s88, %s89
    %p100 = scmp.eq.s32.totalorder %s16, 0
    %p101 = por %p99, %p100
    %p102 = scmp.ne.s32.totalorder %s88, %s89
    %p103 = scmp.eq.s32.totalorder %s17, 3
    %p104 = por %p102, %p103
    %p106 = scmp.ne.s32.totalorder %s89, %s105
    %p107 = scmp.eq.s32.totalorder %s17, 0
    %p108 = por %p106, %p107
    %s109 = ssub.s32 %s18, %s30
    %p110 = scmp.eq.s32.totalorder %s109, 0
    %s112 = sadd.s32 %s111, 1
    %s113 = scalar_select %p110, %s111, %s112
    %p116 = pneg %p110
    %p117 = scmp.eq.s32.totalorder %s11, 3
    %p118 = por %p116, %p117
    %p119 = scmp.ne.s32.totalorder %s111, %s114
    %p120 = scmp.eq.s32.totalorder %s11, 0
    %p121 = por %p119, %p120
    %p122 = scmp.ne.s32.totalorder %s111, %s114
    %p123 = scmp.eq.s32.totalorder %s16, 3
    %p124 = por %p122, %p123
    %p125 = scmp.ne.s32.totalorder %s114, %s115
    %p126 = scmp.eq.s32.totalorder %s16, 0
    %p127 = por %p125, %p126
    %p128 = scmp.ne.s32.totalorder %s114, %s115
    %p129 = scmp.eq.s32.totalorder %s17, 3
    %p130 = por %p128, %p129
    %p132 = scmp.ne.s32.totalorder %s115, %s131
    %p133 = scmp.eq.s32.totalorder %s17, 0
    %p134 = por %p132, %p133
    %s135 = ssub.s32 %s18, %s30
    %p136 = scmp.eq.s32.totalorder %s135, 0
    %s138 = sadd.s32 %s137, 1
    %s139 = scalar_select %p136, %s137, %s138
    %p142 = pneg %p136
    %p143 = scmp.eq.s32.totalorder %s11, 3
    %p144 = por %p142, %p143
    %p145 = scmp.ne.s32.totalorder %s137, %s140
    %p146 = scmp.eq.s32.totalorder %s11, 0
    %p147 = por %p145, %p146
    %p148 = scmp.ne.s32.totalorder %s137, %s140
    %p149 = scmp.eq.s32.totalorder %s16, 3
    %p150 = por %p148, %p149
    %p151 = scmp.ne.s32.totalorder %s140, %s141
    %p152 = scmp.eq.s32.totalorder %s16, 0
    %p153 = por %p151, %p152
    %p154 = scmp.ne.s32.totalorder %s140, %s141
    %p155 = scmp.eq.s32.totalorder %s17, 3
    %p156 = por %p154, %p155
    %p158 = scmp.ne.s32.totalorder %s141, %s157
    %p159 = scmp.eq.s32.totalorder %s17, 0
    %p160 = por %p158, %p159
    %s161 = ssub.s32 %s18, %s30
    %p162 = scmp.eq.s32.totalorder %s161, 0
    %s164 = sadd.s32 %s163, 1
    %s165 = scalar_select %p162, %s163, %s164
    %p168 = pneg %p162
    %p169 = scmp.eq.s32.totalorder %s11, 3
    %p170 = por %p168, %p169
    %p171 = scmp.ne.s32.totalorder %s163, %s166
    %p172 = scmp.eq.s32.totalorder %s11, 0
    %p173 = por %p171, %p172
    %p174 = scmp.ne.s32.totalorder %s163, %s166
    %p175 = scmp.eq.s32.totalorder %s16, 3
    %p176 = por %p174, %p175
    %p177 = scmp.ne.s32.totalorder %s166, %s167
    %p178 = scmp.eq.s32.totalorder %s16, 0
    %p179 = por %p177, %p178
    %p180 = scmp.ne.s32.totalorder %s166, %s167
    %p181 = scmp.eq.s32.totalorder %s17, 3
    %p182 = por %p180, %p181
    %p184 = scmp.ne.s32.totalorder %s167, %s183
    %p185 = scmp.eq.s32.totalorder %s17, 0
    %p186 = por %p184, %p185
    %p187 = scmp.le.s32.totalorder 1, %s11
    %p188 = scmp.lt.s32.totalorder %s11, 5
    %p189 = pnand %p187, %p188
    %p190 = pneg %p189
    // Predicated region
    $region9: #{_forward_impl.2} parent=5 // pred_check
      _
    $region10: #{_forward_impl.2} parent=5 // pred_check_branch
      %192 = sbr.rel (%p189) target = $region12
    $region11: #{_forward_impl.2} parent=5 // pred_region
      %s193 = ssub.s32 %s11, 1
    $region12: #{_forward_impl.2} parent=5 // pred_fallthru
      _
    %p194 = scmp.lt.s32.totalorder %s11, 4
    // Predicated region
    $region13: #{_forward_impl.2} parent=5 // pred_check
      %p195 = pneg %p194
    $region14: #{_forward_impl.2} parent=5 // pred_check_branch
      %197 = sbr.rel (%p195) target = $region16
    $region15: #{_forward_impl.2} parent=5 // pred_region
      // Predicated region
      $region17: #{_forward_impl.2} parent=15 // pred_check
        %p198 = pneg %p43
      $region18: #{_forward_impl.2} parent=15 // pred_check_branch
        %200 = sbr.rel (%p198) target = $region20
      $region19: #{_forward_impl.2} parent=15 // pred_region
        %s201 = smul.u32 8, %s19
        %p202 = scmp.lt.s32.totalorder %s201, 15
        %s203 = scalar_select %p202, %s201, 15
        %s204 = smul.addr %s203, 4
        %s205 = scalar_lea.vmem %s0, %s204
        %s206 = smul.u32 8, %s19
      $region20: #{_forward_impl.2} parent=15 // pred_fallthru
        _
      // Predicated region
      $region21: #{_forward_impl.2} parent=15 // pred_check
        %p207 = pneg %p69
      $region22: #{_forward_impl.2} parent=15 // pred_check_branch
        %209 = sbr.rel (%p207) target = $region24
      $region23: #{_forward_impl.2} parent=15 // pred_region
        %s210 = smul.u32 128, %s19
        %p211 = scmp.lt.s32.totalorder %s210, 255
        %s212 = scalar_select %p211, %s210, 255
        %s213 = smul.addr %s212, 8
        %s214 = scalar_lea.vmem %s1, %s213
        %s215 = smul.u32 128, %s19
      $region24: #{_forward_impl.2} parent=15 // pred_fallthru
        _
      // Predicated region
      $region25: #{_forward_impl.2} parent=15 // pred_check
        %p216 = pneg %p95
      $region26: #{_forward_impl.2} parent=15 // pred_check_branch
        %218 = sbr.rel (%p216) target = $region28
      $region27: #{_forward_impl.2} parent=15 // pred_region
        %s219 = smul.u32 2, %s18
        %p220 = scmp.lt.s32.totalorder %s219, 3
        %s221 = scalar_select %p220, %s219, 3
        %s222 = smul.addr %s221, 4
        %s223 = scalar_lea.vmem %s2, %s222
        %s224 = smul.u32 2, %s18
      $region28: #{_forward_impl.2} parent=15 // pred_fallthru
        _
      // Predicated region
      $region29: #{_forward_impl.2} parent=15 // pred_check
        %p225 = pneg %p121
      $region30: #{_forward_impl.2} parent=15 // pred_check_branch
        %227 = sbr.rel (%p225) target = $region32
      $region31: #{_forward_impl.2} parent=15 // pred_region
        %s228 = smul.u32 2, %s18
        %p229 = scmp.lt.s32.totalorder %s228, 3
        %s230 = scalar_select %p229, %s228, 3
        %s231 = smul.addr %s230, 4
        %s232 = scalar_lea.vmem %s3, %s231
        %s233 = smul.u32 2, %s18
      $region32: #{_forward_impl.2} parent=15 // pred_fallthru
        _
      // Predicated region
      $region33: #{_forward_impl.2} parent=15 // pred_check
        %p234 = pneg %p147
      $region34: #{_forward_impl.2} parent=15 // pred_check_branch
        %236 = sbr.rel (%p234) target = $region36
      $region35: #{_forward_impl.2} parent=15 // pred_region
        %s237 = smul.u32 2, %s18
        %p238 = scmp.lt.s32.totalorder %s237, 3
        %s239 = scalar_select %p238, %s237, 3
        %s240 = smul.addr %s239, 4
        %s241 = scalar_lea.vmem %s4, %s240
        %s242 = smul.u32 2, %s18
      $region36: #{_forward_impl.2} parent=15 // pred_fallthru
        _
    $region16: #{_forward_impl.2} parent=5 // pred_fallthru
      _
    %p243 = scmp.le.s32.totalorder 1, %s11
    %p244 = scmp.lt.s32.totalorder %s11, 5
    %p245 = pnand %p243, %p244
    %p246 = pneg %p245
    // Predicated region
    $region37: #{_forward_impl.2} parent=5 // pred_check
      _
    $region38: #{_forward_impl.2} parent=5 // pred_check_branch
      %248 = sbr.rel (%p245) target = $region40
    $region39: #{_forward_impl.2} parent=5 // pred_region
      %s249 = ssub.s32 %s11, 1
      %s250 = smul.u32 8, %s21
      %p251 = scmp.lt.s32.totalorder %s250, 15
      %s252 = scalar_select %p251, %s250, 15
      %s253 = smul.addr %s252, 4
      %s254 = scalar_lea.vmem %s0, %s253
      %p255 = pneg %p49
      %p256 = pneg %p46
      %s257 = smul.u32 128, %s21
      %p258 = scmp.lt.s32.totalorder %s257, 255
      %s259 = scalar_select %p258, %s257, 255
      %s260 = smul.addr %s259, 8
      %s261 = scalar_lea.vmem %s1, %s260
      %p262 = pneg %p75
      %p263 = pneg %p72
      %s264 = smul.u32 2, %s20
      %p265 = scmp.lt.s32.totalorder %s264, 3
      %s266 = scalar_select %p265, %s264, 3
      %s267 = smul.addr %s266, 4
      %s268 = scalar_lea.vmem %s2, %s267
      %p269 = pneg %p101
      %p270 = pneg %p98
      %s271 = smul.u32 2, %s20
      %p272 = scmp.lt.s32.totalorder %s271, 3
      %s273 = scalar_select %p272, %s271, 3
      %s274 = smul.addr %s273, 4
      %s275 = scalar_lea.vmem %s3, %s274
      %p276 = pneg %p127
      %p277 = pneg %p124
      %s278 = smul.u32 2, %s20
      %p279 = scmp.lt.s32.totalorder %s278, 3
      %s280 = scalar_select %p279, %s278, 3
      %s281 = smul.addr %s280, 4
      %s282 = scalar_lea.vmem %s4, %s281
      %p283 = pneg %p153
      %p284 = pneg %p150
      %p285 = pneg %p179
      %p286 = pneg %p176
      %s287 = smul.u32 2, %s20
      %p288 = scmp.lt.s32.totalorder %s287, 3
      %s289 = scalar_select %p288, %s287, 3
      %s290 = smul.addr %s289, 4
      %s291 = scalar_lea.vmem %s5, %s290
      %s292 = smul.u32 8, %s21
      %p293 = scmp.lt.s32.totalorder %s292, 15
      %s294 = scalar_select %p293, %s292, 15
      %s295 = smul.addr %s294, 4
      %s296 = scalar_lea.vmem %s0, %s295
      %s297 = smul.u32 8, %s21
      %s298 = smul.u32 128, %s21
      %p299 = scmp.lt.s32.totalorder %s298, 255
      %s300 = scalar_select %p299, %s298, 255
      %s301 = smul.addr %s300, 8
      %s302 = scalar_lea.vmem %s1, %s301
      %s303 = smul.u32 128, %s21
      %s304 = smul.u32 2, %s20
      %p305 = scmp.lt.s32.totalorder %s304, 3
      %s306 = scalar_select %p305, %s304, 3
      %s307 = smul.addr %s306, 4
      %s308 = scalar_lea.vmem %s2, %s307
      %s309 = smul.u32 2, %s20
      %s310 = smul.u32 2, %s20
      %p311 = scmp.lt.s32.totalorder %s310, 3
      %s312 = scalar_select %p311, %s310, 3
      %s313 = smul.addr %s312, 4
      %s314 = scalar_lea.vmem %s3, %s313
      %s315 = smul.u32 2, %s20
      %s316 = smul.u32 2, %s20
      %p317 = scmp.lt.s32.totalorder %s316, 3
      %s318 = scalar_select %p317, %s316, 3
      %s319 = smul.addr %s318, 4
      %s320 = scalar_lea.vmem %s4, %s319
      %s321 = smul.u32 2, %s20
      %s322 = smul.u32 2, %s20
      %p323 = scmp.lt.s32.totalorder %s322, 3
      %s324 = scalar_select %p323, %s322, 3
      %s325 = smul.addr %s324, 4
      %s326 = scalar_lea.vmem %s5, %s325
      %s327 = smul.u32 2, %s20
      %p328 = scmp.eq.s32.totalorder %s21, 0
      // Predicated region
      $region41: #{_forward_impl.2} parent=39 // pred_check
        %p329 = pneg %p328
      $region42: #{_forward_impl.2} parent=39 // pred_check_branch
        %331 = sbr.rel (%p329) target = $region44
      $region43: #{_forward_impl.2} parent=39 // pred_region
        %332 = vst [vmem:[%s326] sm:$0xff] 0.0
      $region44: #{_forward_impl.2} parent=39 // pred_fallthru
        _
      %v333 = vld [vmem:[%s302] sm:$0xff]
      %v334 = vld [vmem:[%s302 + $0x8] sm:$0xff]
      %v335 = vld [vmem:[%s302 + $0x10] sm:$0xff]
      %v336 = vld [vmem:[%s302 + $0x18] sm:$0xff]
      %v337 = vld [vmem:[%s302 + $0x20] sm:$0xff]
      %v338 = vld [vmem:[%s302 + $0x28] sm:$0xff]
      %v339 = vld [vmem:[%s302 + $0x30] sm:$0xff]
      %v340 = vld [vmem:[%s302 + $0x38] sm:$0xff]
      %v341 = vld [vmem:[%s302 + $0x40] sm:$0xff]
      %v342 = vld [vmem:[%s302 + $0x48] sm:$0xff]
      %v343 = vld [vmem:[%s302 + $0x50] sm:$0xff]
      %v344 = vld [vmem:[%s302 + $0x58] sm:$0xff]
      %v345 = vld [vmem:[%s302 + $0x60] sm:$0xff]
      %v346 = vld [vmem:[%s302 + $0x68] sm:$0xff]
      %v347 = vld [vmem:[%s302 + $0x70] sm:$0xff]
      %v348 = vld [vmem:[%s302 + $0x78] sm:$0xff]
      %v349 = vld [vmem:[%s302 + $0x80] sm:$0xff]
      %v350 = vld [vmem:[%s302 + $0x88] sm:$0xff]
      %v351 = vld [vmem:[%s302 + $0x90] sm:$0xff]
      %v352 = vld [vmem:[%s302 + $0x98] sm:$0xff]
      %v353 = vld [vmem:[%s302 + $0xa0] sm:$0xff]
      %v354 = vld [vmem:[%s302 + $0xa8] sm:$0xff]
      %v355 = vld [vmem:[%s302 + $0xb0] sm:$0xff]
      %v356 = vld [vmem:[%s302 + $0xb8] sm:$0xff]
      %v357 = vld [vmem:[%s302 + $0xc0] sm:$0xff]
      %v358 = vld [vmem:[%s302 + $0xc8] sm:$0xff]
      %v359 = vld [vmem:[%s302 + $0xd0] sm:$0xff]
      %v360 = vld [vmem:[%s302 + $0xd8] sm:$0xff]
      %v361 = vld [vmem:[%s302 + $0xe0] sm:$0xff]
      %v362 = vld [vmem:[%s302 + $0xe8] sm:$0xff]
      %v363 = vld [vmem:[%s302 + $0xf0] sm:$0xff]
      %v364 = vld [vmem:[%s302 + $0xf8] sm:$0xff]
      %v365 = vld [vmem:[%s302 + $0x100] sm:$0xff]
      %v366 = vld [vmem:[%s302 + $0x108] sm:$0xff]
      %v367 = vld [vmem:[%s302 + $0x110] sm:$0xff]
      %v368 = vld [vmem:[%s302 + $0x118] sm:$0xff]
      %v369 = vld [vmem:[%s302 + $0x120] sm:$0xff]
      %v370 = vld [vmem:[%s302 + $0x128] sm:$0xff]
      %v371 = vld [vmem:[%s302 + $0x130] sm:$0xff]
      %v372 = vld [vmem:[%s302 + $0x138] sm:$0xff]
      %v373 = vld [vmem:[%s302 + $0x140] sm:$0xff]
      %v374 = vld [vmem:[%s302 + $0x148] sm:$0xff]
      %v375 = vld [vmem:[%s302 + $0x150] sm:$0xff]
      %v376 = vld [vmem:[%s302 + $0x158] sm:$0xff]
      %v377 = vld [vmem:[%s302 + $0x160] sm:$0xff]
      %v378 = vld [vmem:[%s302 + $0x168] sm:$0xff]
      %v379 = vld [vmem:[%s302 + $0x170] sm:$0xff]
      %v380 = vld [vmem:[%s302 + $0x178] sm:$0xff]
      %v381 = vld [vmem:[%s302 + $0x180] sm:$0xff]
      %v382 = vld [vmem:[%s302 + $0x188] sm:$0xff]
      %v383 = vld [vmem:[%s302 + $0x190] sm:$0xff]
      %v384 = vld [vmem:[%s302 + $0x198] sm:$0xff]
      %v385 = vld [vmem:[%s302 + $0x1a0] sm:$0xff]
      %v386 = vld [vmem:[%s302 + $0x1a8] sm:$0xff]
      %v387 = vld [vmem:[%s302 + $0x1b0] sm:$0xff]
      %v388 = vld [vmem:[%s302 + $0x1b8] sm:$0xff]
      %v389 = vld [vmem:[%s302 + $0x1c0] sm:$0xff]
      %v390 = vld [vmem:[%s302 + $0x1c8] sm:$0xff]
      %v391 = vld [vmem:[%s302 + $0x1d0] sm:$0xff]
      %v392 = vld [vmem:[%s302 + $0x1d8] sm:$0xff]
      %v393 = vld [vmem:[%s302 + $0x1e0] sm:$0xff]
      %v394 = vld [vmem:[%s302 + $0x1e8] sm:$0xff]
      %v395 = vld [vmem:[%s302 + $0x1f0] sm:$0xff]
      %v396 = vld [vmem:[%s302 + $0x1f8] sm:$0xff]
      %v397 = vld [vmem:[%s302 + $0x200] sm:$0xff]
      %v398 = vld [vmem:[%s302 + $0x208] sm:$0xff]
      %v399 = vld [vmem:[%s302 + $0x210] sm:$0xff]
      %v400 = vld [vmem:[%s302 + $0x218] sm:$0xff]
      %v401 = vld [vmem:[%s302 + $0x220] sm:$0xff]
      %v402 = vld [vmem:[%s302 + $0x228] sm:$0xff]
      %v403 = vld [vmem:[%s302 + $0x230] sm:$0xff]
      %v404 = vld [vmem:[%s302 + $0x238] sm:$0xff]
      %v405 = vld [vmem:[%s302 + $0x240] sm:$0xff]
      %v406 = vld [vmem:[%s302 + $0x248] sm:$0xff]
      %v407 = vld [vmem:[%s302 + $0x250] sm:$0xff]
      %v408 = vld [vmem:[%s302 + $0x258] sm:$0xff]
      %v409 = vld [vmem:[%s302 + $0x260] sm:$0xff]
      %v410 = vld [vmem:[%s302 + $0x268] sm:$0xff]
      %v411 = vld [vmem:[%s302 + $0x270] sm:$0xff]
      %v412 = vld [vmem:[%s302 + $0x278] sm:$0xff]
      %v413 = vld [vmem:[%s302 + $0x280] sm:$0xff]
      %v414 = vld [vmem:[%s302 + $0x288] sm:$0xff]
      %v415 = vld [vmem:[%s302 + $0x290] sm:$0xff]
      %v416 = vld [vmem:[%s302 + $0x298] sm:$0xff]
      %v417 = vld [vmem:[%s302 + $0x2a0] sm:$0xff]
      %v418 = vld [vmem:[%s302 + $0x2a8] sm:$0xff]
      %v419 = vld [vmem:[%s302 + $0x2b0] sm:$0xff]
      %v420 = vld [vmem:[%s302 + $0x2b8] sm:$0xff]
      %v421 = vld [vmem:[%s302 + $0x2c0] sm:$0xff]
      %v422 = vld [vmem:[%s302 + $0x2c8] sm:$0xff]
      %v423 = vld [vmem:[%s302 + $0x2d0] sm:$0xff]
      %v424 = vld [vmem:[%s302 + $0x2d8] sm:$0xff]
      %v425 = vld [vmem:[%s302 + $0x2e0] sm:$0xff]
      %v426 = vld [vmem:[%s302 + $0x2e8] sm:$0xff]
      %v427 = vld [vmem:[%s302 + $0x2f0] sm:$0xff]
      %v428 = vld [vmem:[%s302 + $0x2f8] sm:$0xff]
      %v429 = vld [vmem:[%s302 + $0x300] sm:$0xff]
      %v430 = vld [vmem:[%s302 + $0x308] sm:$0xff]
      %v431 = vld [vmem:[%s302 + $0x310] sm:$0xff]
      %v432 = vld [vmem:[%s302 + $0x318] sm:$0xff]
      %v433 = vld [vmem:[%s302 + $0x320] sm:$0xff]
      %v434 = vld [vmem:[%s302 + $0x328] sm:$0xff]
      %v435 = vld [vmem:[%s302 + $0x330] sm:$0xff]
      %v436 = vld [vmem:[%s302 + $0x338] sm:$0xff]
      %v437 = vld [vmem:[%s302 + $0x340] sm:$0xff]
      %v438 = vld [vmem:[%s302 + $0x348] sm:$0xff]
      %v439 = vld [vmem:[%s302 + $0x350] sm:$0xff]
      %v440 = vld [vmem:[%s302 + $0x358] sm:$0xff]
      %v441 = vld [vmem:[%s302 + $0x360] sm:$0xff]
      %v442 = vld [vmem:[%s302 + $0x368] sm:$0xff]
      %v443 = vld [vmem:[%s302 + $0x370] sm:$0xff]
      %v444 = vld [vmem:[%s302 + $0x378] sm:$0xff]
      %v445 = vld [vmem:[%s302 + $0x380] sm:$0xff]
      %v446 = vld [vmem:[%s302 + $0x388] sm:$0xff]
      %v447 = vld [vmem:[%s302 + $0x390] sm:$0xff]
      %v448 = vld [vmem:[%s302 + $0x398] sm:$0xff]
      %v449 = vld [vmem:[%s302 + $0x3a0] sm:$0xff]
      %v450 = vld [vmem:[%s302 + $0x3a8] sm:$0xff]
      %v451 = vld [vmem:[%s302 + $0x3b0] sm:$0xff]
      %v452 = vld [vmem:[%s302 + $0x3b8] sm:$0xff]
      %v453 = vld [vmem:[%s302 + $0x3c0] sm:$0xff]
      %v454 = vld [vmem:[%s302 + $0x3c8] sm:$0xff]
      %v455 = vld [vmem:[%s302 + $0x3d0] sm:$0xff]
      %v456 = vld [vmem:[%s302 + $0x3d8] sm:$0xff]
      %v457 = vld [vmem:[%s302 + $0x3e0] sm:$0xff]
      %v458 = vld [vmem:[%s302 + $0x3e8] sm:$0xff]
      %v459 = vld [vmem:[%s302 + $0x3f0] sm:$0xff]
      %v460 = vld [vmem:[%s302 + $0x3f8] sm:$0xff]
      %v461 = vld [vmem:[%s308] sm:$0x77]
      %v462 = vld [vmem:[%s314] sm:$0x77]
      %v463 = vld [vmem:[%s320] sm:$0x77]
      %464 = vset.pattern.permute.xlu0 0
      %465 = vperm.xlu0 %464, %v333
      %v466 = vpop.permute.xlu0 %465
      %467 = vset.pattern.permute.xlu0 0
      %468 = vperm.xlu0 %467, %v334
      %v469 = vpop.permute.xlu0 %468
      %470 = vset.pattern.permute.xlu0 0
      %471 = vperm.xlu0 %470, %v335
      %v472 = vpop.permute.xlu0 %471
      %473 = vset.pattern.permute.xlu0 0
      %474 = vperm.xlu0 %473, %v336
      %v475 = vpop.permute.xlu0 %474
      %476 = vset.pattern.permute.xlu0 0
      %477 = vperm.xlu0 %476, %v337
      %v478 = vpop.permute.xlu0 %477
      %479 = vset.pattern.permute.xlu0 0
      %480 = vperm.xlu0 %479, %v338
      %v481 = vpop.permute.xlu0 %480
      %482 = vset.pattern.permute.xlu0 0
      %483 = vperm.xlu0 %482, %v339
      %v484 = vpop.permute.xlu0 %483
      %485 = vset.pattern.permute.xlu0 0
      %486 = vperm.xlu0 %485, %v340
      %v487 = vpop.permute.xlu0 %486
      %488 = vset.pattern.permute.xlu0 0
      %489 = vperm.xlu0 %488, %v341
      %v490 = vpop.permute.xlu0 %489
      %491 = vset.pattern.permute.xlu0 0
      %492 = vperm.xlu0 %491, %v342
      %v493 = vpop.permute.xlu0 %492
      %494 = vset.pattern.permute.xlu0 0
      %495 = vperm.xlu0 %494, %v343
      %v496 = vpop.permute.xlu0 %495
      %497 = vset.pattern.permute.xlu0 0
      %498 = vperm.xlu0 %497, %v344
      %v499 = vpop.permute.xlu0 %498
      %500 = vset.pattern.permute.xlu0 0
      %501 = vperm.xlu0 %500, %v345
      %v502 = vpop.permute.xlu0 %501
      %503 = vset.pattern.permute.xlu0 0
      %504 = vperm.xlu0 %503, %v346
      %v505 = vpop.permute.xlu0 %504
      %506 = vset.pattern.permute.xlu0 0
      %507 = vperm.xlu0 %506, %v347
      %v508 = vpop.permute.xlu0 %507
      %509 = vset.pattern.permute.xlu0 0
      %510 = vperm.xlu0 %509, %v348
      %v511 = vpop.permute.xlu0 %510
      %512 = vset.pattern.permute.xlu0 0
      %513 = vperm.xlu0 %512, %v349
      %v514 = vpop.permute.xlu0 %513
      %515 = vset.pattern.permute.xlu0 0
      %516 = vperm.xlu0 %515, %v350
      %v517 = vpop.permute.xlu0 %516
      %518 = vset.pattern.permute.xlu0 0
      %519 = vperm.xlu0 %518, %v351
      %v520 = vpop.permute.xlu0 %519
      %521 = vset.pattern.permute.xlu0 0
      %522 = vperm.xlu0 %521, %v352
      %v523 = vpop.permute.xlu0 %522
      %524 = vset.pattern.permute.xlu0 0
      %525 = vperm.xlu0 %524, %v353
      %v526 = vpop.permute.xlu0 %525
      %527 = vset.pattern.permute.xlu0 0
      %528 = vperm.xlu0 %527, %v354
      %v529 = vpop.permute.xlu0 %528
      %530 = vset.pattern.permute.xlu0 0
      %531 = vperm.xlu0 %530, %v355
      %v532 = vpop.permute.xlu0 %531
      %533 = vset.pattern.permute.xlu0 0
      %534 = vperm.xlu0 %533, %v356
      %v535 = vpop.permute.xlu0 %534
      %536 = vset.pattern.permute.xlu0 0
      %537 = vperm.xlu0 %536, %v357
      %v538 = vpop.permute.xlu0 %537
      %539 = vset.pattern.permute.xlu0 0
      %540 = vperm.xlu0 %539, %v358
      %v541 = vpop.permute.xlu0 %540
      %542 = vset.pattern.permute.xlu0 0
      %543 = vperm.xlu0 %542, %v359
      %v544 = vpop.permute.xlu0 %543
      %545 = vset.pattern.permute.xlu0 0
      %546 = vperm.xlu0 %545, %v360
      %v547 = vpop.permute.xlu0 %546
      %548 = vset.pattern.permute.xlu0 0
      %549 = vperm.xlu0 %548, %v361
      %v550 = vpop.permute.xlu0 %549
      %551 = vset.pattern.permute.xlu0 0
      %552 = vperm.xlu0 %551, %v362
      %v553 = vpop.permute.xlu0 %552
      %554 = vset.pattern.permute.xlu0 0
      %555 = vperm.xlu0 %554, %v363
      %v556 = vpop.permute.xlu0 %555
      %557 = vset.pattern.permute.xlu0 0
      %558 = vperm.xlu0 %557, %v364
      %v559 = vpop.permute.xlu0 %558
      %560 = vset.pattern.permute.xlu0 0
      %561 = vperm.xlu0 %560, %v365
      %v562 = vpop.permute.xlu0 %561
      %563 = vset.pattern.permute.xlu0 0
      %564 = vperm.xlu0 %563, %v366
      %v565 = vpop.permute.xlu0 %564
      %566 = vset.pattern.permute.xlu0 0
      %567 = vperm.xlu0 %566, %v367
      %v568 = vpop.permute.xlu0 %567
      %569 = vset.pattern.permute.xlu0 0
      %570 = vperm.xlu0 %569, %v368
      %v571 = vpop.permute.xlu0 %570
      %572 = vset.pattern.permute.xlu0 0
      %573 = vperm.xlu0 %572, %v369
      %v574 = vpop.permute.xlu0 %573
      %575 = vset.pattern.permute.xlu0 0
      %576 = vperm.xlu0 %575, %v370
      %v577 = vpop.permute.xlu0 %576
      %578 = vset.pattern.permute.xlu0 0
      %579 = vperm.xlu0 %578, %v371
      %v580 = vpop.permute.xlu0 %579
      %581 = vset.pattern.permute.xlu0 0
      %582 = vperm.xlu0 %581, %v372
      %v583 = vpop.permute.xlu0 %582
      %584 = vset.pattern.permute.xlu0 0
      %585 = vperm.xlu0 %584, %v373
      %v586 = vpop.permute.xlu0 %585
      %587 = vset.pattern.permute.xlu0 0
      %588 = vperm.xlu0 %587, %v374
      %v589 = vpop.permute.xlu0 %588
      %590 = vset.pattern.permute.xlu0 0
      %591 = vperm.xlu0 %590, %v375
      %v592 = vpop.permute.xlu0 %591
      %593 = vset.pattern.permute.xlu0 0
      %594 = vperm.xlu0 %593, %v376
      %v595 = vpop.permute.xlu0 %594
      %596 = vset.pattern.permute.xlu0 0
      %597 = vperm.xlu0 %596, %v377
      %v598 = vpop.permute.xlu0 %597
      %599 = vset.pattern.permute.xlu0 0
      %600 = vperm.xlu0 %599, %v378
      %v601 = vpop.permute.xlu0 %600
      %602 = vset.pattern.permute.xlu0 0
      %603 = vperm.xlu0 %602, %v379
      %v604 = vpop.permute.xlu0 %603
      %605 = vset.pattern.permute.xlu0 0
      %606 = vperm.xlu0 %605, %v380
      %v607 = vpop.permute.xlu0 %606
      %608 = vset.pattern.permute.xlu0 0
      %609 = vperm.xlu0 %608, %v381
      %v610 = vpop.permute.xlu0 %609
      %611 = vset.pattern.permute.xlu0 0
      %612 = vperm.xlu0 %611, %v382
      %v613 = vpop.permute.xlu0 %612
      %614 = vset.pattern.permute.xlu0 0
      %615 = vperm.xlu0 %614, %v383
      %v616 = vpop.permute.xlu0 %615
      %617 = vset.pattern.permute.xlu0 0
      %618 = vperm.xlu0 %617, %v384
      %v619 = vpop.permute.xlu0 %618
      %620 = vset.pattern.permute.xlu0 0
      %621 = vperm.xlu0 %620, %v385
      %v622 = vpop.permute.xlu0 %621
      %623 = vset.pattern.permute.xlu0 0
      %624 = vperm.xlu0 %623, %v386
      %v625 = vpop.permute.xlu0 %624
      %626 = vset.pattern.permute.xlu0 0
      %627 = vperm.xlu0 %626, %v387
      %v628 = vpop.permute.xlu0 %627
      %629 = vset.pattern.permute.xlu0 0
      %630 = vperm.xlu0 %629, %v388
      %v631 = vpop.permute.xlu0 %630
      %632 = vset.pattern.permute.xlu0 0
      %633 = vperm.xlu0 %632, %v389
      %v634 = vpop.permute.xlu0 %633
      %635 = vset.pattern.permute.xlu0 0
      %636 = vperm.xlu0 %635, %v390
      %v637 = vpop.permute.xlu0 %636
      %638 = vset.pattern.permute.xlu0 0
      %639 = vperm.xlu0 %638, %v391
      %v640 = vpop.permute.xlu0 %639
      %641 = vset.pattern.permute.xlu0 0
      %642 = vperm.xlu0 %641, %v392
      %v643 = vpop.permute.xlu0 %642
      %644 = vset.pattern.permute.xlu0 0
      %645 = vperm.xlu0 %644, %v393
      %v646 = vpop.permute.xlu0 %645
      %647 = vset.pattern.permute.xlu0 0
      %648 = vperm.xlu0 %647, %v394
      %v649 = vpop.permute.xlu0 %648
      %650 = vset.pattern.permute.xlu0 0
      %651 = vperm.xlu0 %650, %v395
      %v652 = vpop.permute.xlu0 %651
      %653 = vset.pattern.permute.xlu0 0
      %654 = vperm.xlu0 %653, %v396
      %v655 = vpop.permute.xlu0 %654
      %656 = vset.pattern.permute.xlu0 0
      %657 = vperm.xlu0 %656, %v397
      %v658 = vpop.permute.xlu0 %657
      %659 = vset.pattern.permute.xlu0 0
      %660 = vperm.xlu0 %659, %v398
      %v661 = vpop.permute.xlu0 %660
      %662 = vset.pattern.permute.xlu0 0
      %663 = vperm.xlu0 %662, %v399
      %v664 = vpop.permute.xlu0 %663
      %665 = vset.pattern.permute.xlu0 0
      %666 = vperm.xlu0 %665, %v400
      %v667 = vpop.permute.xlu0 %666
      %668 = vset.pattern.permute.xlu0 0
      %669 = vperm.xlu0 %668, %v401
      %v670 = vpop.permute.xlu0 %669
      %671 = vset.pattern.permute.xlu0 0
      %672 = vperm.xlu0 %671, %v402
      %v673 = vpop.permute.xlu0 %672
      %674 = vset.pattern.permute.xlu0 0
      %675 = vperm.xlu0 %674, %v403
      %v676 = vpop.permute.xlu0 %675
      %677 = vset.pattern.permute.xlu0 0
      %678 = vperm.xlu0 %677, %v404
      %v679 = vpop.permute.xlu0 %678
      %680 = vset.pattern.permute.xlu0 0
      %681 = vperm.xlu0 %680, %v405
      %v682 = vpop.permute.xlu0 %681
      %683 = vset.pattern.permute.xlu0 0
      %684 = vperm.xlu0 %683, %v406
      %v685 = vpop.permute.xlu0 %684
      %686 = vset.pattern.permute.xlu0 0
      %687 = vperm.xlu0 %686, %v407
      %v688 = vpop.permute.xlu0 %687
      %689 = vset.pattern.permute.xlu0 0
      %690 = vperm.xlu0 %689, %v408
      %v691 = vpop.permute.xlu0 %690
      %692 = vset.pattern.permute.xlu0 0
      %693 = vperm.xlu0 %692, %v409
      %v694 = vpop.permute.xlu0 %693
      %695 = vset.pattern.permute.xlu0 0
      %696 = vperm.xlu0 %695, %v410
      %v697 = vpop.permute.xlu0 %696
      %698 = vset.pattern.permute.xlu0 0
      %699 = vperm.xlu0 %698, %v411
      %v700 = vpop.permute.xlu0 %699
      %701 = vset.pattern.permute.xlu0 0
      %702 = vperm.xlu0 %701, %v412
      %v703 = vpop.permute.xlu0 %702
      %704 = vset.pattern.permute.xlu0 0
      %705 = vperm.xlu0 %704, %v413
      %v706 = vpop.permute.xlu0 %705
      %707 = vset.pattern.permute.xlu0 0
      %708 = vperm.xlu0 %707, %v414
      %v709 = vpop.permute.xlu0 %708
      %710 = vset.pattern.permute.xlu0 0
      %711 = vperm.xlu0 %710, %v415
      %v712 = vpop.permute.xlu0 %711
      %713 = vset.pattern.permute.xlu0 0
      %714 = vperm.xlu0 %713, %v416
      %v715 = vpop.permute.xlu0 %714
      %716 = vset.pattern.permute.xlu0 0
      %717 = vperm.xlu0 %716, %v417
      %v718 = vpop.permute.xlu0 %717
      %719 = vset.pattern.permute.xlu0 0
      %720 = vperm.xlu0 %719, %v418
      %v721 = vpop.permute.xlu0 %720
      %722 = vset.pattern.permute.xlu0 0
      %723 = vperm.xlu0 %722, %v419
      %v724 = vpop.permute.xlu0 %723
      %725 = vset.pattern.permute.xlu0 0
      %726 = vperm.xlu0 %725, %v420
      %v727 = vpop.permute.xlu0 %726
      %728 = vset.pattern.permute.xlu0 0
      %729 = vperm.xlu0 %728, %v421
      %v730 = vpop.permute.xlu0 %729
      %731 = vset.pattern.permute.xlu0 0
      %732 = vperm.xlu0 %731, %v422
      %v733 = vpop.permute.xlu0 %732
      %734 = vset.pattern.permute.xlu0 0
      %735 = vperm.xlu0 %734, %v423
      %v736 = vpop.permute.xlu0 %735
      %737 = vset.pattern.permute.xlu0 0
      %738 = vperm.xlu0 %737, %v424
      %v739 = vpop.permute.xlu0 %738
      %740 = vset.pattern.permute.xlu0 0
      %741 = vperm.xlu0 %740, %v425
      %v742 = vpop.permute.xlu0 %741
      %743 = vset.pattern.permute.xlu0 0
      %744 = vperm.xlu0 %743, %v426
      %v745 = vpop.permute.xlu0 %744
      %746 = vset.pattern.permute.xlu0 0
      %747 = vperm.xlu0 %746, %v427
      %v748 = vpop.permute.xlu0 %747
      %749 = vset.pattern.permute.xlu0 0
      %750 = vperm.xlu0 %749, %v428
      %v751 = vpop.permute.xlu0 %750
      %752 = vset.pattern.permute.xlu0 0
      %753 = vperm.xlu0 %752, %v429
      %v754 = vpop.permute.xlu0 %753
      %755 = vset.pattern.permute.xlu0 0
      %756 = vperm.xlu0 %755, %v430
      %v757 = vpop.permute.xlu0 %756
      %758 = vset.pattern.permute.xlu0 0
      %759 = vperm.xlu0 %758, %v431
      %v760 = vpop.permute.xlu0 %759
      %761 = vset.pattern.permute.xlu0 0
      %762 = vperm.xlu0 %761, %v432
      %v763 = vpop.permute.xlu0 %762
      %764 = vset.pattern.permute.xlu0 0
      %765 = vperm.xlu0 %764, %v433
      %v766 = vpop.permute.xlu0 %765
      %767 = vset.pattern.permute.xlu0 0
      %768 = vperm.xlu0 %767, %v434
      %v769 = vpop.permute.xlu0 %768
      %770 = vset.pattern.permute.xlu0 0
      %771 = vperm.xlu0 %770, %v435
      %v772 = vpop.permute.xlu0 %771
      %773 = vset.pattern.permute.xlu0 0
      %774 = vperm.xlu0 %773, %v436
      %v775 = vpop.permute.xlu0 %774
      %776 = vset.pattern.permute.xlu0 0
      %777 = vperm.xlu0 %776, %v437
      %v778 = vpop.permute.xlu0 %777
      %779 = vset.pattern.permute.xlu0 0
      %780 = vperm.xlu0 %779, %v438
      %v781 = vpop.permute.xlu0 %780
      %782 = vset.pattern.permute.xlu0 0
      %783 = vperm.xlu0 %782, %v439
      %v784 = vpop.permute.xlu0 %783
      %785 = vset.pattern.permute.xlu0 0
      %786 = vperm.xlu0 %785, %v440
      %v787 = vpop.permute.xlu0 %786
      %788 = vset.pattern.permute.xlu0 0
      %789 = vperm.xlu0 %788, %v441
      %v790 = vpop.permute.xlu0 %789
      %791 = vset.pattern.permute.xlu0 0
      %792 = vperm.xlu0 %791, %v442
      %v793 = vpop.permute.xlu0 %792
      %794 = vset.pattern.permute.xlu0 0
      %795 = vperm.xlu0 %794, %v443
      %v796 = vpop.permute.xlu0 %795
      %797 = vset.pattern.permute.xlu0 0
      %798 = vperm.xlu0 %797, %v444
      %v799 = vpop.permute.xlu0 %798
      %800 = vset.pattern.permute.xlu0 0
      %801 = vperm.xlu0 %800, %v445
      %v802 = vpop.permute.xlu0 %801
      %803 = vset.pattern.permute.xlu0 0
      %804 = vperm.xlu0 %803, %v446
      %v805 = vpop.permute.xlu0 %804
      %806 = vset.pattern.permute.xlu0 0
      %807 = vperm.xlu0 %806, %v447
      %v808 = vpop.permute.xlu0 %807
      %809 = vset.pattern.permute.xlu0 0
      %810 = vperm.xlu0 %809, %v448
      %v811 = vpop.permute.xlu0 %810
      %812 = vset.pattern.permute.xlu0 0
      %813 = vperm.xlu0 %812, %v449
      %v814 = vpop.permute.xlu0 %813
      %815 = vset.pattern.permute.xlu0 0
      %816 = vperm.xlu0 %815, %v450
      %v817 = vpop.permute.xlu0 %816
      %818 = vset.pattern.permute.xlu0 0
      %819 = vperm.xlu0 %818, %v451
      %v820 = vpop.permute.xlu0 %819
      %821 = vset.pattern.permute.xlu0 0
      %822 = vperm.xlu0 %821, %v452
      %v823 = vpop.permute.xlu0 %822
      %824 = vset.pattern.permute.xlu0 0
      %825 = vperm.xlu0 %824, %v453
      %v826 = vpop.permute.xlu0 %825
      %827 = vset.pattern.permute.xlu0 0
      %828 = vperm.xlu0 %827, %v454
      %v829 = vpop.permute.xlu0 %828
      %830 = vset.pattern.permute.xlu0 0
      %831 = vperm.xlu0 %830, %v455
      %v832 = vpop.permute.xlu0 %831
      %833 = vset.pattern.permute.xlu0 0
      %834 = vperm.xlu0 %833, %v456
      %v835 = vpop.permute.xlu0 %834
      %836 = vset.pattern.permute.xlu0 0
      %837 = vperm.xlu0 %836, %v457
      %v838 = vpop.permute.xlu0 %837
      %839 = vset.pattern.permute.xlu0 0
      %840 = vperm.xlu0 %839, %v458
      %v841 = vpop.permute.xlu0 %840
      %842 = vset.pattern.permute.xlu0 0
      %843 = vperm.xlu0 %842, %v459
      %v844 = vpop.permute.xlu0 %843
      %845 = vset.pattern.permute.xlu0 0
      %846 = vperm.xlu0 %845, %v460
      %v847 = vpop.permute.xlu0 %846
      %v848 = vperm.slane %v461, 0
      %v849 = vperm.slane %v461, 4
      %v850 = vperm.slane %v848, 0
      %v851 = vperm.slane %v849, 0
      %vm852 = vcmp.eq.s32.totalorder %v466, %v850
      %vm853 = vcmp.eq.s32.totalorder %v466, %v851
      %vm854 = vcmp.eq.s32.totalorder %v469, %v850
      %vm855 = vcmp.eq.s32.totalorder %v469, %v851
      %vm856 = vcmp.eq.s32.totalorder %v472, %v850
      %vm857 = vcmp.eq.s32.totalorder %v472, %v851
      %vm858 = vcmp.eq.s32.totalorder %v475, %v850
      %vm859 = vcmp.eq.s32.totalorder %v475, %v851
      %vm860 = vcmp.eq.s32.totalorder %v478, %v850
      %vm861 = vcmp.eq.s32.totalorder %v478, %v851
      %vm862 = vcmp.eq.s32.totalorder %v481, %v850
      %vm863 = vcmp.eq.s32.totalorder %v481, %v851
      %vm864 = vcmp.eq.s32.totalorder %v484, %v850
      %vm865 = vcmp.eq.s32.totalorder %v484, %v851
      %vm866 = vcmp.eq.s32.totalorder %v487, %v850
      %vm867 = vcmp.eq.s32.totalorder %v487, %v851
      %vm868 = vcmp.eq.s32.totalorder %v490, %v850
      %vm869 = vcmp.eq.s32.totalorder %v490, %v851
      %vm870 = vcmp.eq.s32.totalorder %v493, %v850
      %vm871 = vcmp.eq.s32.totalorder %v493, %v851
      %vm872 = vcmp.eq.s32.totalorder %v496, %v850
      %vm873 = vcmp.eq.s32.totalorder %v496, %v851
      %vm874 = vcmp.eq.s32.totalorder %v499, %v850
      %vm875 = vcmp.eq.s32.totalorder %v499, %v851
      %vm876 = vcmp.eq.s32.totalorder %v502, %v850
      %vm877 = vcmp.eq.s32.totalorder %v502, %v851
      %vm878 = vcmp.eq.s32.totalorder %v505, %v850
      %vm879 = vcmp.eq.s32.totalorder %v505, %v851
      %vm880 = vcmp.eq.s32.totalorder %v508, %v850
      %vm881 = vcmp.eq.s32.totalorder %v508, %v851
      %vm882 = vcmp.eq.s32.totalorder %v511, %v850
      %vm883 = vcmp.eq.s32.totalorder %v511, %v851
      %vm884 = vcmp.eq.s32.totalorder %v514, %v850
      %vm885 = vcmp.eq.s32.totalorder %v514, %v851
      %vm886 = vcmp.eq.s32.totalorder %v517, %v850
      %vm887 = vcmp.eq.s32.totalorder %v517, %v851
      %vm888 = vcmp.eq.s32.totalorder %v520, %v850
      %vm889 = vcmp.eq.s32.totalorder %v520, %v851
      %vm890 = vcmp.eq.s32.totalorder %v523, %v850
      %vm891 = vcmp.eq.s32.totalorder %v523, %v851
      %vm892 = vcmp.eq.s32.totalorder %v526, %v850
      %vm893 = vcmp.eq.s32.totalorder %v526, %v851
      %vm894 = vcmp.eq.s32.totalorder %v529, %v850
      %vm895 = vcmp.eq.s32.totalorder %v529, %v851
      %vm896 = vcmp.eq.s32.totalorder %v532, %v850
      %vm897 = vcmp.eq.s32.totalorder %v532, %v851
      %vm898 = vcmp.eq.s32.totalorder %v535, %v850
      %vm899 = vcmp.eq.s32.totalorder %v535, %v851
      %vm900 = vcmp.eq.s32.totalorder %v538, %v850
      %vm901 = vcmp.eq.s32.totalorder %v538, %v851
      %vm902 = vcmp.eq.s32.totalorder %v541, %v850
      %vm903 = vcmp.eq.s32.totalorder %v541, %v851
      %vm904 = vcmp.eq.s32.totalorder %v544, %v850
      %vm905 = vcmp.eq.s32.totalorder %v544, %v851
      %vm906 = vcmp.eq.s32.totalorder %v547, %v850
      %vm907 = vcmp.eq.s32.totalorder %v547, %v851
      %vm908 = vcmp.eq.s32.totalorder %v550, %v850
      %vm909 = vcmp.eq.s32.totalorder %v550, %v851
      %vm910 = vcmp.eq.s32.totalorder %v553, %v850
      %vm911 = vcmp.eq.s32.totalorder %v553, %v851
      %vm912 = vcmp.eq.s32.totalorder %v556, %v850
      %vm913 = vcmp.eq.s32.totalorder %v556, %v851
      %vm914 = vcmp.eq.s32.totalorder %v559, %v850
      %vm915 = vcmp.eq.s32.totalorder %v559, %v851
      %vm916 = vcmp.eq.s32.totalorder %v562, %v850
      %vm917 = vcmp.eq.s32.totalorder %v562, %v851
      %vm918 = vcmp.eq.s32.totalorder %v565, %v850
      %vm919 = vcmp.eq.s32.totalorder %v565, %v851
      %vm920 = vcmp.eq.s32.totalorder %v568, %v850
      %vm921 = vcmp.eq.s32.totalorder %v568, %v851
      %vm922 = vcmp.eq.s32.totalorder %v571, %v850
      %vm923 = vcmp.eq.s32.totalorder %v571, %v851
      %vm924 = vcmp.eq.s32.totalorder %v574, %v850
      %vm925 = vcmp.eq.s32.totalorder %v574, %v851
      %vm926 = vcmp.eq.s32.totalorder %v577, %v850
      %vm927 = vcmp.eq.s32.totalorder %v577, %v851
      %vm928 = vcmp.eq.s32.totalorder %v580, %v850
      %vm929 = vcmp.eq.s32.totalorder %v580, %v851
      %vm930 = vcmp.eq.s32.totalorder %v583, %v850
      %vm931 = vcmp.eq.s32.totalorder %v583, %v851
      %vm932 = vcmp.eq.s32.totalorder %v586, %v850
      %vm933 = vcmp.eq.s32.totalorder %v586, %v851
      %vm934 = vcmp.eq.s32.totalorder %v589, %v850
      %vm935 = vcmp.eq.s32.totalorder %v589, %v851
      %vm936 = vcmp.eq.s32.totalorder %v592, %v850
      %vm937 = vcmp.eq.s32.totalorder %v592, %v851
      %vm938 = vcmp.eq.s32.totalorder %v595, %v850
      %vm939 = vcmp.eq.s32.totalorder %v595, %v851
      %vm940 = vcmp.eq.s32.totalorder %v598, %v850
      %vm941 = vcmp.eq.s32.totalorder %v598, %v851
      %vm942 = vcmp.eq.s32.totalorder %v601, %v850
      %vm943 = vcmp.eq.s32.totalorder %v601, %v851
      %vm944 = vcmp.eq.s32.totalorder %v604, %v850
      %vm945 = vcmp.eq.s32.totalorder %v604, %v851
      %vm946 = vcmp.eq.s32.totalorder %v607, %v850
      %vm947 = vcmp.eq.s32.totalorder %v607, %v851
      %vm948 = vcmp.eq.s32.totalorder %v610, %v850
      %vm949 = vcmp.eq.s32.totalorder %v610, %v851
      %vm950 = vcmp.eq.s32.totalorder %v613, %v850
      %vm951 = vcmp.eq.s32.totalorder %v613, %v851
      %vm952 = vcmp.eq.s32.totalorder %v616, %v850
      %vm953 = vcmp.eq.s32.totalorder %v616, %v851
      %vm954 = vcmp.eq.s32.totalorder %v619, %v850
      %vm955 = vcmp.eq.s32.totalorder %v619, %v851
      %vm956 = vcmp.eq.s32.totalorder %v622, %v850
      %vm957 = vcmp.eq.s32.totalorder %v622, %v851
      %vm958 = vcmp.eq.s32.totalorder %v625, %v850
      %vm959 = vcmp.eq.s32.totalorder %v625, %v851
      %vm960 = vcmp.eq.s32.totalorder %v628, %v850
      %vm961 = vcmp.eq.s32.totalorder %v628, %v851
      %vm962 = vcmp.eq.s32.totalorder %v631, %v850
      %vm963 = vcmp.eq.s32.totalorder %v631, %v851
      %vm964 = vcmp.eq.s32.totalorder %v634, %v850
      %vm965 = vcmp.eq.s32.totalorder %v634, %v851
      %vm966 = vcmp.eq.s32.totalorder %v637, %v850
      %vm967 = vcmp.eq.s32.totalorder %v637, %v851
      %vm968 = vcmp.eq.s32.totalorder %v640, %v850
      %vm969 = vcmp.eq.s32.totalorder %v640, %v851
      %vm970 = vcmp.eq.s32.totalorder %v643, %v850
      %vm971 = vcmp.eq.s32.totalorder %v643, %v851
      %vm972 = vcmp.eq.s32.totalorder %v646, %v850
      %vm973 = vcmp.eq.s32.totalorder %v646, %v851
      %vm974 = vcmp.eq.s32.totalorder %v649, %v850
      %vm975 = vcmp.eq.s32.totalorder %v649, %v851
      %vm976 = vcmp.eq.s32.totalorder %v652, %v850
      %vm977 = vcmp.eq.s32.totalorder %v652, %v851
      %vm978 = vcmp.eq.s32.totalorder %v655, %v850
      %vm979 = vcmp.eq.s32.totalorder %v655, %v851
      %vm980 = vcmp.eq.s32.totalorder %v658, %v850
      %vm981 = vcmp.eq.s32.totalorder %v658, %v851
      %vm982 = vcmp.eq.s32.totalorder %v661, %v850
      %vm983 = vcmp.eq.s32.totalorder %v661, %v851
      %vm984 = vcmp.eq.s32.totalorder %v664, %v850
      %vm985 = vcmp.eq.s32.totalorder %v664, %v851
      %vm986 = vcmp.eq.s32.totalorder %v667, %v850
      %vm987 = vcmp.eq.s32.totalorder %v667, %v851
      %vm988 = vcmp.eq.s32.totalorder %v670, %v850
      %vm989 = vcmp.eq.s32.totalorder %v670, %v851
      %vm990 = vcmp.eq.s32.totalorder %v673, %v850
      %vm991 = vcmp.eq.s32.totalorder %v673, %v851
      %vm992 = vcmp.eq.s32.totalorder %v676, %v850
      %vm993 = vcmp.eq.s32.totalorder %v676, %v851
      %vm994 = vcmp.eq.s32.totalorder %v679, %v850
      %vm995 = vcmp.eq.s32.totalorder %v679, %v851
      %vm996 = vcmp.eq.s32.totalorder %v682, %v850
      %vm997 = vcmp.eq.s32.totalorder %v682, %v851
      %vm998 = vcmp.eq.s32.totalorder %v685, %v850
      %vm999 = vcmp.eq.s32.totalorder %v685, %v851
      %vm1000 = vcmp.eq.s32.totalorder %v688, %v850
      %vm1001 = vcmp.eq.s32.totalorder %v688, %v851
      %vm1002 = vcmp.eq.s32.totalorder %v691, %v850
      %vm1003 = vcmp.eq.s32.totalorder %v691, %v851
      %vm1004 = vcmp.eq.s32.totalorder %v694, %v850
      %vm1005 = vcmp.eq.s32.totalorder %v694, %v851
      %vm1006 = vcmp.eq.s32.totalorder %v697, %v850
      %vm1007 = vcmp.eq.s32.totalorder %v697, %v851
      %vm1008 = vcmp.eq.s32.totalorder %v700, %v850
      %vm1009 = vcmp.eq.s32.totalorder %v700, %v851
      %vm1010 = vcmp.eq.s32.totalorder %v703, %v850
      %vm1011 = vcmp.eq.s32.totalorder %v703, %v851
      %vm1012 = vcmp.eq.s32.totalorder %v706, %v850
      %vm1013 = vcmp.eq.s32.totalorder %v706, %v851
      %vm1014 = vcmp.eq.s32.totalorder %v709, %v850
      %vm1015 = vcmp.eq.s32.totalorder %v709, %v851
      %vm1016 = vcmp.eq.s32.totalorder %v712, %v850
      %vm1017 = vcmp.eq.s32.totalorder %v712, %v851
      %vm1018 = vcmp.eq.s32.totalorder %v715, %v850
      %vm1019 = vcmp.eq.s32.totalorder %v715, %v851
      %vm1020 = vcmp.eq.s32.totalorder %v718, %v850
      %vm1021 = vcmp.eq.s32.totalorder %v718, %v851
      %vm1022 = vcmp.eq.s32.totalorder %v721, %v850
      %vm1023 = vcmp.eq.s32.totalorder %v721, %v851
      %vm1024 = vcmp.eq.s32.totalorder %v724, %v850
      %vm1025 = vcmp.eq.s32.totalorder %v724, %v851
      %vm1026 = vcmp.eq.s32.totalorder %v727, %v850
      %vm1027 = vcmp.eq.s32.totalorder %v727, %v851
      %vm1028 = vcmp.eq.s32.totalorder %v730, %v850
      %vm1029 = vcmp.eq.s32.totalorder %v730, %v851
      %vm1030 = vcmp.eq.s32.totalorder %v733, %v850
      %vm1031 = vcmp.eq.s32.totalorder %v733, %v851
      %vm1032 = vcmp.eq.s32.totalorder %v736, %v850
      %vm1033 = vcmp.eq.s32.totalorder %v736, %v851
      %vm1034 = vcmp.eq.s32.totalorder %v739, %v850
      %vm1035 = vcmp.eq.s32.totalorder %v739, %v851
      %vm1036 = vcmp.eq.s32.totalorder %v742, %v850
      %vm1037 = vcmp.eq.s32.totalorder %v742, %v851
      %vm1038 = vcmp.eq.s32.totalorder %v745, %v850
      %vm1039 = vcmp.eq.s32.totalorder %v745, %v851
      %vm1040 = vcmp.eq.s32.totalorder %v748, %v850
      %vm1041 = vcmp.eq.s32.totalorder %v748, %v851
      %vm1042 = vcmp.eq.s32.totalorder %v751, %v850
      %vm1043 = vcmp.eq.s32.totalorder %v751, %v851
      %vm1044 = vcmp.eq.s32.totalorder %v754, %v850
      %vm1045 = vcmp.eq.s32.totalorder %v754, %v851
      %vm1046 = vcmp.eq.s32.totalorder %v757, %v850
      %vm1047 = vcmp.eq.s32.totalorder %v757, %v851
      %vm1048 = vcmp.eq.s32.totalorder %v760, %v850
      %vm1049 = vcmp.eq.s32.totalorder %v760, %v851
      %vm1050 = vcmp.eq.s32.totalorder %v763, %v850
      %vm1051 = vcmp.eq.s32.totalorder %v763, %v851
      %vm1052 = vcmp.eq.s32.totalorder %v766, %v850
      %vm1053 = vcmp.eq.s32.totalorder %v766, %v851
      %vm1054 = vcmp.eq.s32.totalorder %v769, %v850
      %vm1055 = vcmp.eq.s32.totalorder %v769, %v851
      %vm1056 = vcmp.eq.s32.totalorder %v772, %v850
      %vm1057 = vcmp.eq.s32.totalorder %v772, %v851
      %vm1058 = vcmp.eq.s32.totalorder %v775, %v850
      %vm1059 = vcmp.eq.s32.totalorder %v775, %v851
      %vm1060 = vcmp.eq.s32.totalorder %v778, %v850
      %vm1061 = vcmp.eq.s32.totalorder %v778, %v851
      %vm1062 = vcmp.eq.s32.totalorder %v781, %v850
      %vm1063 = vcmp.eq.s32.totalorder %v781, %v851
      %vm1064 = vcmp.eq.s32.totalorder %v784, %v850
      %vm1065 = vcmp.eq.s32.totalorder %v784, %v851
      %vm1066 = vcmp.eq.s32.totalorder %v787, %v850
      %vm1067 = vcmp.eq.s32.totalorder %v787, %v851
      %vm1068 = vcmp.eq.s32.totalorder %v790, %v850
      %vm1069 = vcmp.eq.s32.totalorder %v790, %v851
      %vm1070 = vcmp.eq.s32.totalorder %v793, %v850
      %vm1071 = vcmp.eq.s32.totalorder %v793, %v851
      %vm1072 = vcmp.eq.s32.totalorder %v796, %v850
      %vm1073 = vcmp.eq.s32.totalorder %v796, %v851
      %vm1074 = vcmp.eq.s32.totalorder %v799, %v850
      %vm1075 = vcmp.eq.s32.totalorder %v799, %v851
      %vm1076 = vcmp.eq.s32.totalorder %v802, %v850
      %vm1077 = vcmp.eq.s32.totalorder %v802, %v851
      %vm1078 = vcmp.eq.s32.totalorder %v805, %v850
      %vm1079 = vcmp.eq.s32.totalorder %v805, %v851
      %vm1080 = vcmp.eq.s32.totalorder %v808, %v850
      %vm1081 = vcmp.eq.s32.totalorder %v808, %v851
      %vm1082 = vcmp.eq.s32.totalorder %v811, %v850
      %vm1083 = vcmp.eq.s32.totalorder %v811, %v851
      %vm1084 = vcmp.eq.s32.totalorder %v814, %v850
      %vm1085 = vcmp.eq.s32.totalorder %v814, %v851
      %vm1086 = vcmp.eq.s32.totalorder %v817, %v850
      %vm1087 = vcmp.eq.s32.totalorder %v817, %v851
      %vm1088 = vcmp.eq.s32.totalorder %v820, %v850
      %vm1089 = vcmp.eq.s32.totalorder %v820, %v851
      %vm1090 = vcmp.eq.s32.totalorder %v823, %v850
      %vm1091 = vcmp.eq.s32.totalorder %v823, %v851
      %vm1092 = vcmp.eq.s32.totalorder %v826, %v850
      %vm1093 = vcmp.eq.s32.totalorder %v826, %v851
      %vm1094 = vcmp.eq.s32.totalorder %v829, %v850
      %vm1095 = vcmp.eq.s32.totalorder %v829, %v851
      %vm1096 = vcmp.eq.s32.totalorder %v832, %v850
      %vm1097 = vcmp.eq.s32.totalorder %v832, %v851
      %vm1098 = vcmp.eq.s32.totalorder %v835, %v850
      %vm1099 = vcmp.eq.s32.totalorder %v835, %v851
      %vm1100 = vcmp.eq.s32.totalorder %v838, %v850
      %vm1101 = vcmp.eq.s32.totalorder %v838, %v851
      %vm1102 = vcmp.eq.s32.totalorder %v841, %v850
      %vm1103 = vcmp.eq.s32.totalorder %v841, %v851
      %vm1104 = vcmp.eq.s32.totalorder %v844, %v850
      %vm1105 = vcmp.eq.s32.totalorder %v844, %v851
      %vm1106 = vcmp.eq.s32.totalorder %v847, %v850
      %vm1107 = vcmp.eq.s32.totalorder %v847, %v851
      %v1108 = vsub.f32 1.0, %v463
      %v1110 = vperm.slane %v1108, 0
      %v1111 = vperm.slane %v1108, 4
      %v1114 = vperm.slane %v1110, 0
      %v1115 = vperm.slane %v1111, 0
      %v1116 = vsel %vm852, %v1114, 0.0
      %v1117 = vsel %vm853, %v1115, 0.0
      %v1118 = vsel %vm854, %v1114, 0.0
      %v1119 = vsel %vm855, %v1115, 0.0
      %v1120 = vsel %vm856, %v1114, 0.0
      %v1121 = vsel %vm857, %v1115, 0.0
      %v1122 = vsel %vm858, %v1114, 0.0
      %v1123 = vsel %vm859, %v1115, 0.0
      %v1124 = vsel %vm860, %v1114, 0.0
      %v1125 = vsel %vm861, %v1115, 0.0
      %v1126 = vsel %vm862, %v1114, 0.0
      %v1127 = vsel %vm863, %v1115, 0.0
      %v1128 = vsel %vm864, %v1114, 0.0
      %v1129 = vsel %vm865, %v1115, 0.0
      %v1130 = vsel %vm866, %v1114, 0.0
      %v1131 = vsel %vm867, %v1115, 0.0
      %v1132 = vsel %vm868, %v1114, 0.0
      %v1133 = vsel %vm869, %v1115, 0.0
      %v1134 = vsel %vm870, %v1114, 0.0
      %v1135 = vsel %vm871, %v1115, 0.0
      %v1136 = vsel %vm872, %v1114, 0.0
      %v1137 = vsel %vm873, %v1115, 0.0
      %v1138 = vsel %vm874, %v1114, 0.0
      %v1139 = vsel %vm875, %v1115, 0.0
      %v1140 = vsel %vm876, %v1114, 0.0
      %v1141 = vsel %vm877, %v1115, 0.0
      %v1142 = vsel %vm878, %v1114, 0.0
      %v1143 = vsel %vm879, %v1115, 0.0
      %v1144 = vsel %vm880, %v1114, 0.0
      %v1145 = vsel %vm881, %v1115, 0.0
      %v1146 = vsel %vm882, %v1114, 0.0
      %v1147 = vsel %vm883, %v1115, 0.0
      %v1148 = vsel %vm884, %v1114, 0.0
      %v1149 = vsel %vm885, %v1115, 0.0
      %v1150 = vsel %vm886, %v1114, 0.0
      %v1151 = vsel %vm887, %v1115, 0.0
      %v1152 = vsel %vm888, %v1114, 0.0
      %v1153 = vsel %vm889, %v1115, 0.0
      %v1154 = vsel %vm890, %v1114, 0.0
      %v1155 = vsel %vm891, %v1115, 0.0
      %v1156 = vsel %vm892, %v1114, 0.0
      %v1157 = vsel %vm893, %v1115, 0.0
      %v1158 = vsel %vm894, %v1114, 0.0
      %v1159 = vsel %vm895, %v1115, 0.0
      %v1160 = vsel %vm896, %v1114, 0.0
      %v1161 = vsel %vm897, %v1115, 0.0
      %v1162 = vsel %vm898, %v1114, 0.0
      %v1163 = vsel %vm899, %v1115, 0.0
      %v1164 = vsel %vm900, %v1114, 0.0
      %v1165 = vsel %vm901, %v1115, 0.0
      %v1166 = vsel %vm902, %v1114, 0.0
      %v1167 = vsel %vm903, %v1115, 0.0
      %v1168 = vsel %vm904, %v1114, 0.0
      %v1169 = vsel %vm905, %v1115, 0.0
      %v1170 = vsel %vm906, %v1114, 0.0
      %v1171 = vsel %vm907, %v1115, 0.0
      %v1172 = vsel %vm908, %v1114, 0.0
      %v1173 = vsel %vm909, %v1115, 0.0
      %v1174 = vsel %vm910, %v1114, 0.0
      %v1175 = vsel %vm911, %v1115, 0.0
      %v1176 = vsel %vm912, %v1114, 0.0
      %v1177 = vsel %vm913, %v1115, 0.0
      %v1178 = vsel %vm914, %v1114, 0.0
      %v1179 = vsel %vm915, %v1115, 0.0
      %v1180 = vsel %vm916, %v1114, 0.0
      %v1181 = vsel %vm917, %v1115, 0.0
      %v1182 = vsel %vm918, %v1114, 0.0
      %v1183 = vsel %vm919, %v1115, 0.0
      %v1184 = vsel %vm920, %v1114, 0.0
      %v1185 = vsel %vm921, %v1115, 0.0
      %v1186 = vsel %vm922, %v1114, 0.0
      %v1187 = vsel %vm923, %v1115, 0.0
      %v1188 = vsel %vm924, %v1114, 0.0
      %v1189 = vsel %vm925, %v1115, 0.0
      %v1190 = vsel %vm926, %v1114, 0.0
      %v1191 = vsel %vm927, %v1115, 0.0
      %v1192 = vsel %vm928, %v1114, 0.0
      %v1193 = vsel %vm929, %v1115, 0.0
      %v1194 = vsel %vm930, %v1114, 0.0
      %v1195 = vsel %vm931, %v1115, 0.0
      %v1196 = vsel %vm932, %v1114, 0.0
      %v1197 = vsel %vm933, %v1115, 0.0
      %v1198 = vsel %vm934, %v1114, 0.0
      %v1199 = vsel %vm935, %v1115, 0.0
      %v1200 = vsel %vm936, %v1114, 0.0
      %v1201 = vsel %vm937, %v1115, 0.0
      %v1202 = vsel %vm938, %v1114, 0.0
      %v1203 = vsel %vm939, %v1115, 0.0
      %v1204 = vsel %vm940, %v1114, 0.0
      %v1205 = vsel %vm941, %v1115, 0.0
      %v1206 = vsel %vm942, %v1114, 0.0
      %v1207 = vsel %vm943, %v1115, 0.0
      %v1208 = vsel %vm944, %v1114, 0.0
      %v1209 = vsel %vm945, %v1115, 0.0
      %v1210 = vsel %vm946, %v1114, 0.0
      %v1211 = vsel %vm947, %v1115, 0.0
      %v1212 = vsel %vm948, %v1114, 0.0
      %v1213 = vsel %vm949, %v1115, 0.0
      %v1214 = vsel %vm950, %v1114, 0.0
      %v1215 = vsel %vm951, %v1115, 0.0
      %v1216 = vsel %vm952, %v1114, 0.0
      %v1217 = vsel %vm953, %v1115, 0.0
      %v1218 = vsel %vm954, %v1114, 0.0
      %v1219 = vsel %vm955, %v1115, 0.0
      %v1220 = vsel %vm956, %v1114, 0.0
      %v1221 = vsel %vm957, %v1115, 0.0
      %v1222 = vsel %vm958, %v1114, 0.0
      %v1223 = vsel %vm959, %v1115, 0.0
      %v1224 = vsel %vm960, %v1114, 0.0
      %v1225 = vsel %vm961, %v1115, 0.0
      %v1226 = vsel %vm962, %v1114, 0.0
      %v1227 = vsel %vm963, %v1115, 0.0
      %v1228 = vsel %vm964, %v1114, 0.0
      %v1229 = vsel %vm965, %v1115, 0.0
      %v1230 = vsel %vm966, %v1114, 0.0
      %v1231 = vsel %vm967, %v1115, 0.0
      %v1232 = vsel %vm968, %v1114, 0.0
      %v1233 = vsel %vm969, %v1115, 0.0
      %v1234 = vsel %vm970, %v1114, 0.0
      %v1235 = vsel %vm971, %v1115, 0.0
      %v1236 = vsel %vm972, %v1114, 0.0
      %v1237 = vsel %vm973, %v1115, 0.0
      %v1238 = vsel %vm974, %v1114, 0.0
      %v1239 = vsel %vm975, %v1115, 0.0
      %v1240 = vsel %vm976, %v1114, 0.0
      %v1241 = vsel %vm977, %v1115, 0.0
      %v1242 = vsel %vm978, %v1114, 0.0
      %v1243 = vsel %vm979, %v1115, 0.0
      %v1244 = vsel %vm980, %v1114, 0.0
      %v1245 = vsel %vm981, %v1115, 0.0
      %v1246 = vsel %vm982, %v1114, 0.0
      %v1247 = vsel %vm983, %v1115, 0.0
      %v1248 = vsel %vm984, %v1114, 0.0
      %v1249 = vsel %vm985, %v1115, 0.0
      %v1250 = vsel %vm986, %v1114, 0.0
      %v1251 = vsel %vm987, %v1115, 0.0
      %v1252 = vsel %vm988, %v1114, 0.0
      %v1253 = vsel %vm989, %v1115, 0.0
      %v1254 = vsel %vm990, %v1114, 0.0
      %v1255 = vsel %vm991, %v1115, 0.0
      %v1256 = vsel %vm992, %v1114, 0.0
      %v1257 = vsel %vm993, %v1115, 0.0
      %v1258 = vsel %vm994, %v1114, 0.0
      %v1259 = vsel %vm995, %v1115, 0.0
      %v1260 = vsel %vm996, %v1114, 0.0
      %v1261 = vsel %vm997, %v1115, 0.0
      %v1262 = vsel %vm998, %v1114, 0.0
      %v1263 = vsel %vm999, %v1115, 0.0
      %v1264 = vsel %vm1000, %v1114, 0.0
      %v1265 = vsel %vm1001, %v1115, 0.0
      %v1266 = vsel %vm1002, %v1114, 0.0
      %v1267 = vsel %vm1003, %v1115, 0.0
      %v1268 = vsel %vm1004, %v1114, 0.0
      %v1269 = vsel %vm1005, %v1115, 0.0
      %v1270 = vsel %vm1006, %v1114, 0.0
      %v1271 = vsel %vm1007, %v1115, 0.0
      %v1272 = vsel %vm1008, %v1114, 0.0
      %v1273 = vsel %vm1009, %v1115, 0.0
      %v1274 = vsel %vm1010, %v1114, 0.0
      %v1275 = vsel %vm1011, %v1115, 0.0
      %v1276 = vsel %vm1012, %v1114, 0.0
      %v1277 = vsel %vm1013, %v1115, 0.0
      %v1278 = vsel %vm1014, %v1114, 0.0
      %v1279 = vsel %vm1015, %v1115, 0.0
      %v1280 = vsel %vm1016, %v1114, 0.0
      %v1281 = vsel %vm1017, %v1115, 0.0
      %v1282 = vsel %vm1018, %v1114, 0.0
      %v1283 = vsel %vm1019, %v1115, 0.0
      %v1284 = vsel %vm1020, %v1114, 0.0
      %v1285 = vsel %vm1021, %v1115, 0.0
      %v1286 = vsel %vm1022, %v1114, 0.0
      %v1287 = vsel %vm1023, %v1115, 0.0
      %v1288 = vsel %vm1024, %v1114, 0.0
      %v1289 = vsel %vm1025, %v1115, 0.0
      %v1290 = vsel %vm1026, %v1114, 0.0
      %v1291 = vsel %vm1027, %v1115, 0.0
      %v1292 = vsel %vm1028, %v1114, 0.0
      %v1293 = vsel %vm1029, %v1115, 0.0
      %v1294 = vsel %vm1030, %v1114, 0.0
      %v1295 = vsel %vm1031, %v1115, 0.0
      %v1296 = vsel %vm1032, %v1114, 0.0
      %v1297 = vsel %vm1033, %v1115, 0.0
      %v1298 = vsel %vm1034, %v1114, 0.0
      %v1299 = vsel %vm1035, %v1115, 0.0
      %v1300 = vsel %vm1036, %v1114, 0.0
      %v1301 = vsel %vm1037, %v1115, 0.0
      %v1302 = vsel %vm1038, %v1114, 0.0
      %v1303 = vsel %vm1039, %v1115, 0.0
      %v1304 = vsel %vm1040, %v1114, 0.0
      %v1305 = vsel %vm1041, %v1115, 0.0
      %v1306 = vsel %vm1042, %v1114, 0.0
      %v1307 = vsel %vm1043, %v1115, 0.0
      %v1308 = vsel %vm1044, %v1114, 0.0
      %v1309 = vsel %vm1045, %v1115, 0.0
      %v1310 = vsel %vm1046, %v1114, 0.0
      %v1311 = vsel %vm1047, %v1115, 0.0
      %v1312 = vsel %vm1048, %v1114, 0.0
      %v1313 = vsel %vm1049, %v1115, 0.0
      %v1314 = vsel %vm1050, %v1114, 0.0
      %v1315 = vsel %vm1051, %v1115, 0.0
      %v1316 = vsel %vm1052, %v1114, 0.0
      %v1317 = vsel %vm1053, %v1115, 0.0
      %v1318 = vsel %vm1054, %v1114, 0.0
      %v1319 = vsel %vm1055, %v1115, 0.0
      %v1320 = vsel %vm1056, %v1114, 0.0
      %v1321 = vsel %vm1057, %v1115, 0.0
      %v1322 = vsel %vm1058, %v1114, 0.0
      %v1323 = vsel %vm1059, %v1115, 0.0
      %v1324 = vsel %vm1060, %v1114, 0.0
      %v1325 = vsel %vm1061, %v1115, 0.0
      %v1326 = vsel %vm1062, %v1114, 0.0
      %v1327 = vsel %vm1063, %v1115, 0.0
      %v1328 = vsel %vm1064, %v1114, 0.0
      %v1329 = vsel %vm1065, %v1115, 0.0
      %v1330 = vsel %vm1066, %v1114, 0.0
      %v1331 = vsel %vm1067, %v1115, 0.0
      %v1332 = vsel %vm1068, %v1114, 0.0
      %v1333 = vsel %vm1069, %v1115, 0.0
      %v1334 = vsel %vm1070, %v1114, 0.0
      %v1335 = vsel %vm1071, %v1115, 0.0
      %v1336 = vsel %vm1072, %v1114, 0.0
      %v1337 = vsel %vm1073, %v1115, 0.0
      %v1338 = vsel %vm1074, %v1114, 0.0
      %v1339 = vsel %vm1075, %v1115, 0.0
      %v1340 = vsel %vm1076, %v1114, 0.0
      %v1341 = vsel %vm1077, %v1115, 0.0
      %v1342 = vsel %vm1078, %v1114, 0.0
      %v1343 = vsel %vm1079, %v1115, 0.0
      %v1344 = vsel %vm1080, %v1114, 0.0
      %v1345 = vsel %vm1081, %v1115, 0.0
      %v1346 = vsel %vm1082, %v1114, 0.0
      %v1347 = vsel %vm1083, %v1115, 0.0
      %v1348 = vsel %vm1084, %v1114, 0.0
      %v1349 = vsel %vm1085, %v1115, 0.0
      %v1350 = vsel %vm1086, %v1114, 0.0
      %v1351 = vsel %vm1087, %v1115, 0.0
      %v1352 = vsel %vm1088, %v1114, 0.0
      %v1353 = vsel %vm1089, %v1115, 0.0
      %v1354 = vsel %vm1090, %v1114, 0.0
      %v1355 = vsel %vm1091, %v1115, 0.0
      %v1356 = vsel %vm1092, %v1114, 0.0
      %v1357 = vsel %vm1093, %v1115, 0.0
      %v1358 = vsel %vm1094, %v1114, 0.0
      %v1359 = vsel %vm1095, %v1115, 0.0
      %v1360 = vsel %vm1096, %v1114, 0.0
      %v1361 = vsel %vm1097, %v1115, 0.0
      %v1362 = vsel %vm1098, %v1114, 0.0
      %v1363 = vsel %vm1099, %v1115, 0.0
      %v1364 = vsel %vm1100, %v1114, 0.0
      %v1365 = vsel %vm1101, %v1115, 0.0
      %v1366 = vsel %vm1102, %v1114, 0.0
      %v1367 = vsel %vm1103, %v1115, 0.0
      %v1368 = vsel %vm1104, %v1114, 0.0
      %v1369 = vsel %vm1105, %v1115, 0.0
      %v1370 = vsel %vm1106, %v1114, 0.0
      %v1371 = vsel %vm1107, %v1115, 0.0
      %v1372 = vperm.slane %v462, 0
      %v1373 = vperm.slane %v462, 4
      %v1374 = vperm.slane %v1372, 0
      %v1375 = vperm.slane %v1373, 0
      %vm1376 = vcmp.eq.s32.totalorder %v466, %v1374
      %vm1377 = vcmp.eq.s32.totalorder %v466, %v1375
      %vm1378 = vcmp.eq.s32.totalorder %v469, %v1374
      %vm1379 = vcmp.eq.s32.totalorder %v469, %v1375
      %vm1380 = vcmp.eq.s32.totalorder %v472, %v1374
      %vm1381 = vcmp.eq.s32.totalorder %v472, %v1375
      %vm1382 = vcmp.eq.s32.totalorder %v475, %v1374
      %vm1383 = vcmp.eq.s32.totalorder %v475, %v1375
      %vm1384 = vcmp.eq.s32.totalorder %v478, %v1374
      %vm1385 = vcmp.eq.s32.totalorder %v478, %v1375
      %vm1386 = vcmp.eq.s32.totalorder %v481, %v1374
      %vm1387 = vcmp.eq.s32.totalorder %v481, %v1375
      %vm1388 = vcmp.eq.s32.totalorder %v484, %v1374
      %vm1389 = vcmp.eq.s32.totalorder %v484, %v1375
      %vm1390 = vcmp.eq.s32.totalorder %v487, %v1374
      %vm1391 = vcmp.eq.s32.totalorder %v487, %v1375
      %vm1392 = vcmp.eq.s32.totalorder %v490, %v1374
      %vm1393 = vcmp.eq.s32.totalorder %v490, %v1375
      %vm1394 = vcmp.eq.s32.totalorder %v493, %v1374
      %vm1395 = vcmp.eq.s32.totalorder %v493, %v1375
      %vm1396 = vcmp.eq.s32.totalorder %v496, %v1374
      %vm1397 = vcmp.eq.s32.totalorder %v496, %v1375
      %vm1398 = vcmp.eq.s32.totalorder %v499, %v1374
      %vm1399 = vcmp.eq.s32.totalorder %v499, %v1375
      %vm1400 = vcmp.eq.s32.totalorder %v502, %v1374
      %vm1401 = vcmp.eq.s32.totalorder %v502, %v1375
      %vm1402 = vcmp.eq.s32.totalorder %v505, %v1374
      %vm1403 = vcmp.eq.s32.totalorder %v505, %v1375
      %vm1404 = vcmp.eq.s32.totalorder %v508, %v1374
      %vm1405 = vcmp.eq.s32.totalorder %v508, %v1375
      %vm1406 = vcmp.eq.s32.totalorder %v511, %v1374
      %vm1407 = vcmp.eq.s32.totalorder %v511, %v1375
      %vm1408 = vcmp.eq.s32.totalorder %v514, %v1374
      %vm1409 = vcmp.eq.s32.totalorder %v514, %v1375
      %vm1410 = vcmp.eq.s32.totalorder %v517, %v1374
      %vm1411 = vcmp.eq.s32.totalorder %v517, %v1375
      %vm1412 = vcmp.eq.s32.totalorder %v520, %v1374
      %vm1413 = vcmp.eq.s32.totalorder %v520, %v1375
      %vm1414 = vcmp.eq.s32.totalorder %v523, %v1374
      %vm1415 = vcmp.eq.s32.totalorder %v523, %v1375
      %vm1416 = vcmp.eq.s32.totalorder %v526, %v1374
      %vm1417 = vcmp.eq.s32.totalorder %v526, %v1375
      %vm1418 = vcmp.eq.s32.totalorder %v529, %v1374
      %vm1419 = vcmp.eq.s32.totalorder %v529, %v1375
      %vm1420 = vcmp.eq.s32.totalorder %v532, %v1374
      %vm1421 = vcmp.eq.s32.totalorder %v532, %v1375
      %vm1422 = vcmp.eq.s32.totalorder %v535, %v1374
      %vm1423 = vcmp.eq.s32.totalorder %v535, %v1375
      %vm1424 = vcmp.eq.s32.totalorder %v538, %v1374
      %vm1425 = vcmp.eq.s32.totalorder %v538, %v1375
      %vm1426 = vcmp.eq.s32.totalorder %v541, %v1374
      %vm1427 = vcmp.eq.s32.totalorder %v541, %v1375
      %vm1428 = vcmp.eq.s32.totalorder %v544, %v1374
      %vm1429 = vcmp.eq.s32.totalorder %v544, %v1375
      %vm1430 = vcmp.eq.s32.totalorder %v547, %v1374
      %vm1431 = vcmp.eq.s32.totalorder %v547, %v1375
      %vm1432 = vcmp.eq.s32.totalorder %v550, %v1374
      %vm1433 = vcmp.eq.s32.totalorder %v550, %v1375
      %vm1434 = vcmp.eq.s32.totalorder %v553, %v1374
      %vm1435 = vcmp.eq.s32.totalorder %v553, %v1375
      %vm1436 = vcmp.eq.s32.totalorder %v556, %v1374
      %vm1437 = vcmp.eq.s32.totalorder %v556, %v1375
      %vm1438 = vcmp.eq.s32.totalorder %v559, %v1374
      %vm1439 = vcmp.eq.s32.totalorder %v559, %v1375
      %vm1440 = vcmp.eq.s32.totalorder %v562, %v1374
      %vm1441 = vcmp.eq.s32.totalorder %v562, %v1375
      %vm1442 = vcmp.eq.s32.totalorder %v565, %v1374
      %vm1443 = vcmp.eq.s32.totalorder %v565, %v1375
      %vm1444 = vcmp.eq.s32.totalorder %v568, %v1374
      %vm1445 = vcmp.eq.s32.totalorder %v568, %v1375
      %vm1446 = vcmp.eq.s32.totalorder %v571, %v1374
      %vm1447 = vcmp.eq.s32.totalorder %v571, %v1375
      %vm1448 = vcmp.eq.s32.totalorder %v574, %v1374
      %vm1449 = vcmp.eq.s32.totalorder %v574, %v1375
      %vm1450 = vcmp.eq.s32.totalorder %v577, %v1374
      %vm1451 = vcmp.eq.s32.totalorder %v577, %v1375
      %vm1452 = vcmp.eq.s32.totalorder %v580, %v1374
      %vm1453 = vcmp.eq.s32.totalorder %v580, %v1375
      %vm1454 = vcmp.eq.s32.totalorder %v583, %v1374
      %vm1455 = vcmp.eq.s32.totalorder %v583, %v1375
      %vm1456 = vcmp.eq.s32.totalorder %v586, %v1374
      %vm1457 = vcmp.eq.s32.totalorder %v586, %v1375
      %vm1458 = vcmp.eq.s32.totalorder %v589, %v1374
      %vm1459 = vcmp.eq.s32.totalorder %v589, %v1375
      %vm1460 = vcmp.eq.s32.totalorder %v592, %v1374
      %vm1461 = vcmp.eq.s32.totalorder %v592, %v1375
      %vm1462 = vcmp.eq.s32.totalorder %v595, %v1374
      %vm1463 = vcmp.eq.s32.totalorder %v595, %v1375
      %vm1464 = vcmp.eq.s32.totalorder %v598, %v1374
      %vm1465 = vcmp.eq.s32.totalorder %v598, %v1375
      %vm1466 = vcmp.eq.s32.totalorder %v601, %v1374
      %vm1467 = vcmp.eq.s32.totalorder %v601, %v1375
      %vm1468 = vcmp.eq.s32.totalorder %v604, %v1374
      %vm1469 = vcmp.eq.s32.totalorder %v604, %v1375
      %vm1470 = vcmp.eq.s32.totalorder %v607, %v1374
      %vm1471 = vcmp.eq.s32.totalorder %v607, %v1375
      %vm1472 = vcmp.eq.s32.totalorder %v610, %v1374
      %vm1473 = vcmp.eq.s32.totalorder %v610, %v1375
      %vm1474 = vcmp.eq.s32.totalorder %v613, %v1374
      %vm1475 = vcmp.eq.s32.totalorder %v613, %v1375
      %vm1476 = vcmp.eq.s32.totalorder %v616, %v1374
      %vm1477 = vcmp.eq.s32.totalorder %v616, %v1375
      %vm1478 = vcmp.eq.s32.totalorder %v619, %v1374
      %vm1479 = vcmp.eq.s32.totalorder %v619, %v1375
      %vm1480 = vcmp.eq.s32.totalorder %v622, %v1374
      %vm1481 = vcmp.eq.s32.totalorder %v622, %v1375
      %vm1482 = vcmp.eq.s32.totalorder %v625, %v1374
      %vm1483 = vcmp.eq.s32.totalorder %v625, %v1375
      %vm1484 = vcmp.eq.s32.totalorder %v628, %v1374
      %vm1485 = vcmp.eq.s32.totalorder %v628, %v1375
      %vm1486 = vcmp.eq.s32.totalorder %v631, %v1374
      %vm1487 = vcmp.eq.s32.totalorder %v631, %v1375
      %vm1488 = vcmp.eq.s32.totalorder %v634, %v1374
      %vm1489 = vcmp.eq.s32.totalorder %v634, %v1375
      %vm1490 = vcmp.eq.s32.totalorder %v637, %v1374
      %vm1491 = vcmp.eq.s32.totalorder %v637, %v1375
      %vm1492 = vcmp.eq.s32.totalorder %v640, %v1374
      %vm1493 = vcmp.eq.s32.totalorder %v640, %v1375
      %vm1494 = vcmp.eq.s32.totalorder %v643, %v1374
      %vm1495 = vcmp.eq.s32.totalorder %v643, %v1375
      %vm1496 = vcmp.eq.s32.totalorder %v646, %v1374
      %vm1497 = vcmp.eq.s32.totalorder %v646, %v1375
      %vm1498 = vcmp.eq.s32.totalorder %v649, %v1374
      %vm1499 = vcmp.eq.s32.totalorder %v649, %v1375
      %vm1500 = vcmp.eq.s32.totalorder %v652, %v1374
      %vm1501 = vcmp.eq.s32.totalorder %v652, %v1375
      %vm1502 = vcmp.eq.s32.totalorder %v655, %v1374
      %vm1503 = vcmp.eq.s32.totalorder %v655, %v1375
      %vm1504 = vcmp.eq.s32.totalorder %v658, %v1374
      %vm1505 = vcmp.eq.s32.totalorder %v658, %v1375
      %vm1506 = vcmp.eq.s32.totalorder %v661, %v1374
      %vm1507 = vcmp.eq.s32.totalorder %v661, %v1375
      %vm1508 = vcmp.eq.s32.totalorder %v664, %v1374
      %vm1509 = vcmp.eq.s32.totalorder %v664, %v1375
      %vm1510 = vcmp.eq.s32.totalorder %v667, %v1374
      %vm1511 = vcmp.eq.s32.totalorder %v667, %v1375
      %vm1512 = vcmp.eq.s32.totalorder %v670, %v1374
      %vm1513 = vcmp.eq.s32.totalorder %v670, %v1375
      %vm1514 = vcmp.eq.s32.totalorder %v673, %v1374
      %vm1515 = vcmp.eq.s32.totalorder %v673, %v1375
      %vm1516 = vcmp.eq.s32.totalorder %v676, %v1374
      %vm1517 = vcmp.eq.s32.totalorder %v676, %v1375
      %vm1518 = vcmp.eq.s32.totalorder %v679, %v1374
      %vm1519 = vcmp.eq.s32.totalorder %v679, %v1375
      %vm1520 = vcmp.eq.s32.totalorder %v682, %v1374
      %vm1521 = vcmp.eq.s32.totalorder %v682, %v1375
      %vm1522 = vcmp.eq.s32.totalorder %v685, %v1374
      %vm1523 = vcmp.eq.s32.totalorder %v685, %v1375
      %vm1524 = vcmp.eq.s32.totalorder %v688, %v1374
      %vm1525 = vcmp.eq.s32.totalorder %v688, %v1375
      %vm1526 = vcmp.eq.s32.totalorder %v691, %v1374
      %vm1527 = vcmp.eq.s32.totalorder %v691, %v1375
      %vm1528 = vcmp.eq.s32.totalorder %v694, %v1374
      %vm1529 = vcmp.eq.s32.totalorder %v694, %v1375
      %vm1530 = vcmp.eq.s32.totalorder %v697, %v1374
      %vm1531 = vcmp.eq.s32.totalorder %v697, %v1375
      %vm1532 = vcmp.eq.s32.totalorder %v700, %v1374
      %vm1533 = vcmp.eq.s32.totalorder %v700, %v1375
      %vm1534 = vcmp.eq.s32.totalorder %v703, %v1374
      %vm1535 = vcmp.eq.s32.totalorder %v703, %v1375
      %vm1536 = vcmp.eq.s32.totalorder %v706, %v1374
      %vm1537 = vcmp.eq.s32.totalorder %v706, %v1375
      %vm1538 = vcmp.eq.s32.totalorder %v709, %v1374
      %vm1539 = vcmp.eq.s32.totalorder %v709, %v1375
      %vm1540 = vcmp.eq.s32.totalorder %v712, %v1374
      %vm1541 = vcmp.eq.s32.totalorder %v712, %v1375
      %vm1542 = vcmp.eq.s32.totalorder %v715, %v1374
      %vm1543 = vcmp.eq.s32.totalorder %v715, %v1375
      %vm1544 = vcmp.eq.s32.totalorder %v718, %v1374
      %vm1545 = vcmp.eq.s32.totalorder %v718, %v1375
      %vm1546 = vcmp.eq.s32.totalorder %v721, %v1374
      %vm1547 = vcmp.eq.s32.totalorder %v721, %v1375
      %vm1548 = vcmp.eq.s32.totalorder %v724, %v1374
      %vm1549 = vcmp.eq.s32.totalorder %v724, %v1375
      %vm1550 = vcmp.eq.s32.totalorder %v727, %v1374
      %vm1551 = vcmp.eq.s32.totalorder %v727, %v1375
      %vm1552 = vcmp.eq.s32.totalorder %v730, %v1374
      %vm1553 = vcmp.eq.s32.totalorder %v730, %v1375
      %vm1554 = vcmp.eq.s32.totalorder %v733, %v1374
      %vm1555 = vcmp.eq.s32.totalorder %v733, %v1375
      %vm1556 = vcmp.eq.s32.totalorder %v736, %v1374
      %vm1557 = vcmp.eq.s32.totalorder %v736, %v1375
      %vm1558 = vcmp.eq.s32.totalorder %v739, %v1374
      %vm1559 = vcmp.eq.s32.totalorder %v739, %v1375
      %vm1560 = vcmp.eq.s32.totalorder %v742, %v1374
      %vm1561 = vcmp.eq.s32.totalorder %v742, %v1375
      %vm1562 = vcmp.eq.s32.totalorder %v745, %v1374
      %vm1563 = vcmp.eq.s32.totalorder %v745, %v1375
      %vm1564 = vcmp.eq.s32.totalorder %v748, %v1374
      %vm1565 = vcmp.eq.s32.totalorder %v748, %v1375
      %vm1566 = vcmp.eq.s32.totalorder %v751, %v1374
      %vm1567 = vcmp.eq.s32.totalorder %v751, %v1375
      %vm1568 = vcmp.eq.s32.totalorder %v754, %v1374
      %vm1569 = vcmp.eq.s32.totalorder %v754, %v1375
      %vm1570 = vcmp.eq.s32.totalorder %v757, %v1374
      %vm1571 = vcmp.eq.s32.totalorder %v757, %v1375
      %vm1572 = vcmp.eq.s32.totalorder %v760, %v1374
      %vm1573 = vcmp.eq.s32.totalorder %v760, %v1375
      %vm1574 = vcmp.eq.s32.totalorder %v763, %v1374
      %vm1575 = vcmp.eq.s32.totalorder %v763, %v1375
      %vm1576 = vcmp.eq.s32.totalorder %v766, %v1374
      %vm1577 = vcmp.eq.s32.totalorder %v766, %v1375
      %vm1578 = vcmp.eq.s32.totalorder %v769, %v1374
      %vm1579 = vcmp.eq.s32.totalorder %v769, %v1375
      %vm1580 = vcmp.eq.s32.totalorder %v772, %v1374
      %vm1581 = vcmp.eq.s32.totalorder %v772, %v1375
      %vm1582 = vcmp.eq.s32.totalorder %v775, %v1374
      %vm1583 = vcmp.eq.s32.totalorder %v775, %v1375
      %vm1584 = vcmp.eq.s32.totalorder %v778, %v1374
      %vm1585 = vcmp.eq.s32.totalorder %v778, %v1375
      %vm1586 = vcmp.eq.s32.totalorder %v781, %v1374
      %vm1587 = vcmp.eq.s32.totalorder %v781, %v1375
      %vm1588 = vcmp.eq.s32.totalorder %v784, %v1374
      %vm1589 = vcmp.eq.s32.totalorder %v784, %v1375
      %vm1590 = vcmp.eq.s32.totalorder %v787, %v1374
      %vm1591 = vcmp.eq.s32.totalorder %v787, %v1375
      %vm1592 = vcmp.eq.s32.totalorder %v790, %v1374
      %vm1593 = vcmp.eq.s32.totalorder %v790, %v1375
      %vm1594 = vcmp.eq.s32.totalorder %v793, %v1374
      %vm1595 = vcmp.eq.s32.totalorder %v793, %v1375
      %vm1596 = vcmp.eq.s32.totalorder %v796, %v1374
      %vm1597 = vcmp.eq.s32.totalorder %v796, %v1375
      %vm1598 = vcmp.eq.s32.totalorder %v799, %v1374
      %vm1599 = vcmp.eq.s32.totalorder %v799, %v1375
      %vm1600 = vcmp.eq.s32.totalorder %v802, %v1374
      %vm1601 = vcmp.eq.s32.totalorder %v802, %v1375
      %vm1602 = vcmp.eq.s32.totalorder %v805, %v1374
      %vm1603 = vcmp.eq.s32.totalorder %v805, %v1375
      %vm1604 = vcmp.eq.s32.totalorder %v808, %v1374
      %vm1605 = vcmp.eq.s32.totalorder %v808, %v1375
      %vm1606 = vcmp.eq.s32.totalorder %v811, %v1374
      %vm1607 = vcmp.eq.s32.totalorder %v811, %v1375
      %vm1608 = vcmp.eq.s32.totalorder %v814, %v1374
      %vm1609 = vcmp.eq.s32.totalorder %v814, %v1375
      %vm1610 = vcmp.eq.s32.totalorder %v817, %v1374
      %vm1611 = vcmp.eq.s32.totalorder %v817, %v1375
      %vm1612 = vcmp.eq.s32.totalorder %v820, %v1374
      %vm1613 = vcmp.eq.s32.totalorder %v820, %v1375
      %vm1614 = vcmp.eq.s32.totalorder %v823, %v1374
      %vm1615 = vcmp.eq.s32.totalorder %v823, %v1375
      %vm1616 = vcmp.eq.s32.totalorder %v826, %v1374
      %vm1617 = vcmp.eq.s32.totalorder %v826, %v1375
      %vm1618 = vcmp.eq.s32.totalorder %v829, %v1374
      %vm1619 = vcmp.eq.s32.totalorder %v829, %v1375
      %vm1620 = vcmp.eq.s32.totalorder %v832, %v1374
      %vm1621 = vcmp.eq.s32.totalorder %v832, %v1375
      %vm1622 = vcmp.eq.s32.totalorder %v835, %v1374
      %vm1623 = vcmp.eq.s32.totalorder %v835, %v1375
      %vm1624 = vcmp.eq.s32.totalorder %v838, %v1374
      %vm1625 = vcmp.eq.s32.totalorder %v838, %v1375
      %vm1626 = vcmp.eq.s32.totalorder %v841, %v1374
      %vm1627 = vcmp.eq.s32.totalorder %v841, %v1375
      %vm1628 = vcmp.eq.s32.totalorder %v844, %v1374
      %vm1629 = vcmp.eq.s32.totalorder %v844, %v1375
      %vm1630 = vcmp.eq.s32.totalorder %v847, %v1374
      %vm1631 = vcmp.eq.s32.totalorder %v847, %v1375
      %v1633 = vperm.slane %v463, 0
      %v1634 = vperm.slane %v463, 4
      %v1637 = vperm.slane %v1633, 0
      %v1638 = vperm.slane %v1634, 0
      %v1639 = vsel %vm1376, %v1637, 0.0
      %v1640 = vsel %vm1377, %v1638, 0.0
      %v1641 = vsel %vm1378, %v1637, 0.0
      %v1642 = vsel %vm1379, %v1638, 0.0
      %v1643 = vsel %vm1380, %v1637, 0.0
      %v1644 = vsel %vm1381, %v1638, 0.0
      %v1645 = vsel %vm1382, %v1637, 0.0
      %v1646 = vsel %vm1383, %v1638, 0.0
      %v1647 = vsel %vm1384, %v1637, 0.0
      %v1648 = vsel %vm1385, %v1638, 0.0
      %v1649 = vsel %vm1386, %v1637, 0.0
      %v1650 = vsel %vm1387, %v1638, 0.0
      %v1651 = vsel %vm1388, %v1637, 0.0
      %v1652 = vsel %vm1389, %v1638, 0.0
      %v1653 = vsel %vm1390, %v1637, 0.0
      %v1654 = vsel %vm1391, %v1638, 0.0
      %v1655 = vsel %vm1392, %v1637, 0.0
      %v1656 = vsel %vm1393, %v1638, 0.0
      %v1657 = vsel %vm1394, %v1637, 0.0
      %v1658 = vsel %vm1395, %v1638, 0.0
      %v1659 = vsel %vm1396, %v1637, 0.0
      %v1660 = vsel %vm1397, %v1638, 0.0
      %v1661 = vsel %vm1398, %v1637, 0.0
      %v1662 = vsel %vm1399, %v1638, 0.0
      %v1663 = vsel %vm1400, %v1637, 0.0
      %v1664 = vsel %vm1401, %v1638, 0.0
      %v1665 = vsel %vm1402, %v1637, 0.0
      %v1666 = vsel %vm1403, %v1638, 0.0
      %v1667 = vsel %vm1404, %v1637, 0.0
      %v1668 = vsel %vm1405, %v1638, 0.0
      %v1669 = vsel %vm1406, %v1637, 0.0
      %v1670 = vsel %vm1407, %v1638, 0.0
      %v1671 = vsel %vm1408, %v1637, 0.0
      %v1672 = vsel %vm1409, %v1638, 0.0
      %v1673 = vsel %vm1410, %v1637, 0.0
      %v1674 = vsel %vm1411, %v1638, 0.0
      %v1675 = vsel %vm1412, %v1637, 0.0
      %v1676 = vsel %vm1413, %v1638, 0.0
      %v1677 = vsel %vm1414, %v1637, 0.0
      %v1678 = vsel %vm1415, %v1638, 0.0
      %v1679 = vsel %vm1416, %v1637, 0.0
      %v1680 = vsel %vm1417, %v1638, 0.0
      %v1681 = vsel %vm1418, %v1637, 0.0
      %v1682 = vsel %vm1419, %v1638, 0.0
      %v1683 = vsel %vm1420, %v1637, 0.0
      %v1684 = vsel %vm1421, %v1638, 0.0
      %v1685 = vsel %vm1422, %v1637, 0.0
      %v1686 = vsel %vm1423, %v1638, 0.0
      %v1687 = vsel %vm1424, %v1637, 0.0
      %v1688 = vsel %vm1425, %v1638, 0.0
      %v1689 = vsel %vm1426, %v1637, 0.0
      %v1690 = vsel %vm1427, %v1638, 0.0
      %v1691 = vsel %vm1428, %v1637, 0.0
      %v1692 = vsel %vm1429, %v1638, 0.0
      %v1693 = vsel %vm1430, %v1637, 0.0
      %v1694 = vsel %vm1431, %v1638, 0.0
      %v1695 = vsel %vm1432, %v1637, 0.0
      %v1696 = vsel %vm1433, %v1638, 0.0
      %v1697 = vsel %vm1434, %v1637, 0.0
      %v1698 = vsel %vm1435, %v1638, 0.0
      %v1699 = vsel %vm1436, %v1637, 0.0
      %v1700 = vsel %vm1437, %v1638, 0.0
      %v1701 = vsel %vm1438, %v1637, 0.0
      %v1702 = vsel %vm1439, %v1638, 0.0
      %v1703 = vsel %vm1440, %v1637, 0.0
      %v1704 = vsel %vm1441, %v1638, 0.0
      %v1705 = vsel %vm1442, %v1637, 0.0
      %v1706 = vsel %vm1443, %v1638, 0.0
      %v1707 = vsel %vm1444, %v1637, 0.0
      %v1708 = vsel %vm1445, %v1638, 0.0
      %v1709 = vsel %vm1446, %v1637, 0.0
      %v1710 = vsel %vm1447, %v1638, 0.0
      %v1711 = vsel %vm1448, %v1637, 0.0
      %v1712 = vsel %vm1449, %v1638, 0.0
      %v1713 = vsel %vm1450, %v1637, 0.0
      %v1714 = vsel %vm1451, %v1638, 0.0
      %v1715 = vsel %vm1452, %v1637, 0.0
      %v1716 = vsel %vm1453, %v1638, 0.0
      %v1717 = vsel %vm1454, %v1637, 0.0
      %v1718 = vsel %vm1455, %v1638, 0.0
      %v1719 = vsel %vm1456, %v1637, 0.0
      %v1720 = vsel %vm1457, %v1638, 0.0
      %v1721 = vsel %vm1458, %v1637, 0.0
      %v1722 = vsel %vm1459, %v1638, 0.0
      %v1723 = vsel %vm1460, %v1637, 0.0
      %v1724 = vsel %vm1461, %v1638, 0.0
      %v1725 = vsel %vm1462, %v1637, 0.0
      %v1726 = vsel %vm1463, %v1638, 0.0
      %v1727 = vsel %vm1464, %v1637, 0.0
      %v1728 = vsel %vm1465, %v1638, 0.0
      %v1729 = vsel %vm1466, %v1637, 0.0
      %v1730 = vsel %vm1467, %v1638, 0.0
      %v1731 = vsel %vm1468, %v1637, 0.0
      %v1732 = vsel %vm1469, %v1638, 0.0
      %v1733 = vsel %vm1470, %v1637, 0.0
      %v1734 = vsel %vm1471, %v1638, 0.0
      %v1735 = vsel %vm1472, %v1637, 0.0
      %v1736 = vsel %vm1473, %v1638, 0.0
      %v1737 = vsel %vm1474, %v1637, 0.0
      %v1738 = vsel %vm1475, %v1638, 0.0
      %v1739 = vsel %vm1476, %v1637, 0.0
      %v1740 = vsel %vm1477, %v1638, 0.0
      %v1741 = vsel %vm1478, %v1637, 0.0
      %v1742 = vsel %vm1479, %v1638, 0.0
      %v1743 = vsel %vm1480, %v1637, 0.0
      %v1744 = vsel %vm1481, %v1638, 0.0
      %v1745 = vsel %vm1482, %v1637, 0.0
      %v1746 = vsel %vm1483, %v1638, 0.0
      %v1747 = vsel %vm1484, %v1637, 0.0
      %v1748 = vsel %vm1485, %v1638, 0.0
      %v1749 = vsel %vm1486, %v1637, 0.0
      %v1750 = vsel %vm1487, %v1638, 0.0
      %v1751 = vsel %vm1488, %v1637, 0.0
      %v1752 = vsel %vm1489, %v1638, 0.0
      %v1753 = vsel %vm1490, %v1637, 0.0
      %v1754 = vsel %vm1491, %v1638, 0.0
      %v1755 = vsel %vm1492, %v1637, 0.0
      %v1756 = vsel %vm1493, %v1638, 0.0
      %v1757 = vsel %vm1494, %v1637, 0.0
      %v1758 = vsel %vm1495, %v1638, 0.0
      %v1759 = vsel %vm1496, %v1637, 0.0
      %v1760 = vsel %vm1497, %v1638, 0.0
      %v1761 = vsel %vm1498, %v1637, 0.0
      %v1762 = vsel %vm1499, %v1638, 0.0
      %v1763 = vsel %vm1500, %v1637, 0.0
      %v1764 = vsel %vm1501, %v1638, 0.0
      %v1765 = vsel %vm1502, %v1637, 0.0
      %v1766 = vsel %vm1503, %v1638, 0.0
      %v1767 = vsel %vm1504, %v1637, 0.0
      %v1768 = vsel %vm1505, %v1638, 0.0
      %v1769 = vsel %vm1506, %v1637, 0.0
      %v1770 = vsel %vm1507, %v1638, 0.0
      %v1771 = vsel %vm1508, %v1637, 0.0
      %v1772 = vsel %vm1509, %v1638, 0.0
      %v1773 = vsel %vm1510, %v1637, 0.0
      %v1774 = vsel %vm1511, %v1638, 0.0
      %v1775 = vsel %vm1512, %v1637, 0.0
      %v1776 = vsel %vm1513, %v1638, 0.0
      %v1777 = vsel %vm1514, %v1637, 0.0
      %v1778 = vsel %vm1515, %v1638, 0.0
      %v1779 = vsel %vm1516, %v1637, 0.0
      %v1780 = vsel %vm1517, %v1638, 0.0
      %v1781 = vsel %vm1518, %v1637, 0.0
      %v1782 = vsel %vm1519, %v1638, 0.0
      %v1783 = vsel %vm1520, %v1637, 0.0
      %v1784 = vsel %vm1521, %v1638, 0.0
      %v1785 = vsel %vm1522, %v1637, 0.0
      %v1786 = vsel %vm1523, %v1638, 0.0
      %v1787 = vsel %vm1524, %v1637, 0.0
      %v1788 = vsel %vm1525, %v1638, 0.0
      %v1789 = vsel %vm1526, %v1637, 0.0
      %v1790 = vsel %vm1527, %v1638, 0.0
      %v1791 = vsel %vm1528, %v1637, 0.0
      %v1792 = vsel %vm1529, %v1638, 0.0
      %v1793 = vsel %vm1530, %v1637, 0.0
      %v1794 = vsel %vm1531, %v1638, 0.0
      %v1795 = vsel %vm1532, %v1637, 0.0
      %v1796 = vsel %vm1533, %v1638, 0.0
      %v1797 = vsel %vm1534, %v1637, 0.0
      %v1798 = vsel %vm1535, %v1638, 0.0
      %v1799 = vsel %vm1536, %v1637, 0.0
      %v1800 = vsel %vm1537, %v1638, 0.0
      %v1801 = vsel %vm1538, %v1637, 0.0
      %v1802 = vsel %vm1539, %v1638, 0.0
      %v1803 = vsel %vm1540, %v1637, 0.0
      %v1804 = vsel %vm1541, %v1638, 0.0
      %v1805 = vsel %vm1542, %v1637, 0.0
      %v1806 = vsel %vm1543, %v1638, 0.0
      %v1807 = vsel %vm1544, %v1637, 0.0
      %v1808 = vsel %vm1545, %v1638, 0.0
      %v1809 = vsel %vm1546, %v1637, 0.0
      %v1810 = vsel %vm1547, %v1638, 0.0
      %v1811 = vsel %vm1548, %v1637, 0.0
      %v1812 = vsel %vm1549, %v1638, 0.0
      %v1813 = vsel %vm1550, %v1637, 0.0
      %v1814 = vsel %vm1551, %v1638, 0.0
      %v1815 = vsel %vm1552, %v1637, 0.0
      %v1816 = vsel %vm1553, %v1638, 0.0
      %v1817 = vsel %vm1554, %v1637, 0.0
      %v1818 = vsel %vm1555, %v1638, 0.0
      %v1819 = vsel %vm1556, %v1637, 0.0
      %v1820 = vsel %vm1557, %v1638, 0.0
      %v1821 = vsel %vm1558, %v1637, 0.0
      %v1822 = vsel %vm1559, %v1638, 0.0
      %v1823 = vsel %vm1560, %v1637, 0.0
      %v1824 = vsel %vm1561, %v1638, 0.0
      %v1825 = vsel %vm1562, %v1637, 0.0
      %v1826 = vsel %vm1563, %v1638, 0.0
      %v1827 = vsel %vm1564, %v1637, 0.0
      %v1828 = vsel %vm1565, %v1638, 0.0
      %v1829 = vsel %vm1566, %v1637, 0.0
      %v1830 = vsel %vm1567, %v1638, 0.0
      %v1831 = vsel %vm1568, %v1637, 0.0
      %v1832 = vsel %vm1569, %v1638, 0.0
      %v1833 = vsel %vm1570, %v1637, 0.0
      %v1834 = vsel %vm1571, %v1638, 0.0
      %v1835 = vsel %vm1572, %v1637, 0.0
      %v1836 = vsel %vm1573, %v1638, 0.0
      %v1837 = vsel %vm1574, %v1637, 0.0
      %v1838 = vsel %vm1575, %v1638, 0.0
      %v1839 = vsel %vm1576, %v1637, 0.0
      %v1840 = vsel %vm1577, %v1638, 0.0
      %v1841 = vsel %vm1578, %v1637, 0.0
      %v1842 = vsel %vm1579, %v1638, 0.0
      %v1843 = vsel %vm1580, %v1637, 0.0
      %v1844 = vsel %vm1581, %v1638, 0.0
      %v1845 = vsel %vm1582, %v1637, 0.0
      %v1846 = vsel %vm1583, %v1638, 0.0
      %v1847 = vsel %vm1584, %v1637, 0.0
      %v1848 = vsel %vm1585, %v1638, 0.0
      %v1849 = vsel %vm1586, %v1637, 0.0
      %v1850 = vsel %vm1587, %v1638, 0.0
      %v1851 = vsel %vm1588, %v1637, 0.0
      %v1852 = vsel %vm1589, %v1638, 0.0
      %v1853 = vsel %vm1590, %v1637, 0.0
      %v1854 = vsel %vm1591, %v1638, 0.0
      %v1855 = vsel %vm1592, %v1637, 0.0
      %v1856 = vsel %vm1593, %v1638, 0.0
      %v1857 = vsel %vm1594, %v1637, 0.0
      %v1858 = vsel %vm1595, %v1638, 0.0
      %v1859 = vsel %vm1596, %v1637, 0.0
      %v1860 = vsel %vm1597, %v1638, 0.0
      %v1861 = vsel %vm1598, %v1637, 0.0
      %v1862 = vsel %vm1599, %v1638, 0.0
      %v1863 = vsel %vm1600, %v1637, 0.0
      %v1864 = vsel %vm1601, %v1638, 0.0
      %v1865 = vsel %vm1602, %v1637, 0.0
      %v1866 = vsel %vm1603, %v1638, 0.0
      %v1867 = vsel %vm1604, %v1637, 0.0
      %v1868 = vsel %vm1605, %v1638, 0.0
      %v1869 = vsel %vm1606, %v1637, 0.0
      %v1870 = vsel %vm1607, %v1638, 0.0
      %v1871 = vsel %vm1608, %v1637, 0.0
      %v1872 = vsel %vm1609, %v1638, 0.0
      %v1873 = vsel %vm1610, %v1637, 0.0
      %v1874 = vsel %vm1611, %v1638, 0.0
      %v1875 = vsel %vm1612, %v1637, 0.0
      %v1876 = vsel %vm1613, %v1638, 0.0
      %v1877 = vsel %vm1614, %v1637, 0.0
      %v1878 = vsel %vm1615, %v1638, 0.0
      %v1879 = vsel %vm1616, %v1637, 0.0
      %v1880 = vsel %vm1617, %v1638, 0.0
      %v1881 = vsel %vm1618, %v1637, 0.0
      %v1882 = vsel %vm1619, %v1638, 0.0
      %v1883 = vsel %vm1620, %v1637, 0.0
      %v1884 = vsel %vm1621, %v1638, 0.0
      %v1885 = vsel %vm1622, %v1637, 0.0
      %v1886 = vsel %vm1623, %v1638, 0.0
      %v1887 = vsel %vm1624, %v1637, 0.0
      %v1888 = vsel %vm1625, %v1638, 0.0
      %v1889 = vsel %vm1626, %v1637, 0.0
      %v1890 = vsel %vm1627, %v1638, 0.0
      %v1891 = vsel %vm1628, %v1637, 0.0
      %v1892 = vsel %vm1629, %v1638, 0.0
      %v1893 = vsel %vm1630, %v1637, 0.0
      %v1894 = vsel %vm1631, %v1638, 0.0
      %v1895 = vadd.f32 %v1116, %v1639
      %v1896 = vadd.f32 %v1117, %v1640
      %v1897 = vadd.f32 %v1118, %v1641
      %v1898 = vadd.f32 %v1119, %v1642
      %v1899 = vadd.f32 %v1120, %v1643
      %v1900 = vadd.f32 %v1121, %v1644
      %v1901 = vadd.f32 %v1122, %v1645
      %v1902 = vadd.f32 %v1123, %v1646
      %v1903 = vadd.f32 %v1124, %v1647
      %v1904 = vadd.f32 %v1125, %v1648
      %v1905 = vadd.f32 %v1126, %v1649
      %v1906 = vadd.f32 %v1127, %v1650
      %v1907 = vadd.f32 %v1128, %v1651
      %v1908 = vadd.f32 %v1129, %v1652
      %v1909 = vadd.f32 %v1130, %v1653
      %v1910 = vadd.f32 %v1131, %v1654
      %v1911 = vadd.f32 %v1132, %v1655
      %v1912 = vadd.f32 %v1133, %v1656
      %v1913 = vadd.f32 %v1134, %v1657
      %v1914 = vadd.f32 %v1135, %v1658
      %v1915 = vadd.f32 %v1136, %v1659
      %v1916 = vadd.f32 %v1137, %v1660
      %v1917 = vadd.f32 %v1138, %v1661
      %v1918 = vadd.f32 %v1139, %v1662
      %v1919 = vadd.f32 %v1140, %v1663
      %v1920 = vadd.f32 %v1141, %v1664
      %v1921 = vadd.f32 %v1142, %v1665
      %v1922 = vadd.f32 %v1143, %v1666
      %v1923 = vadd.f32 %v1144, %v1667
      %v1924 = vadd.f32 %v1145, %v1668
      %v1925 = vadd.f32 %v1146, %v1669
      %v1926 = vadd.f32 %v1147, %v1670
      %v1927 = vadd.f32 %v1148, %v1671
      %v1928 = vadd.f32 %v1149, %v1672
      %v1929 = vadd.f32 %v1150, %v1673
      %v1930 = vadd.f32 %v1151, %v1674
      %v1931 = vadd.f32 %v1152, %v1675
      %v1932 = vadd.f32 %v1153, %v1676
      %v1933 = vadd.f32 %v1154, %v1677
      %v1934 = vadd.f32 %v1155, %v1678
      %v1935 = vadd.f32 %v1156, %v1679
      %v1936 = vadd.f32 %v1157, %v1680
      %v1937 = vadd.f32 %v1158, %v1681
      %v1938 = vadd.f32 %v1159, %v1682
      %v1939 = vadd.f32 %v1160, %v1683
      %v1940 = vadd.f32 %v1161, %v1684
      %v1941 = vadd.f32 %v1162, %v1685
      %v1942 = vadd.f32 %v1163, %v1686
      %v1943 = vadd.f32 %v1164, %v1687
      %v1944 = vadd.f32 %v1165, %v1688
      %v1945 = vadd.f32 %v1166, %v1689
      %v1946 = vadd.f32 %v1167, %v1690
      %v1947 = vadd.f32 %v1168, %v1691
      %v1948 = vadd.f32 %v1169, %v1692
      %v1949 = vadd.f32 %v1170, %v1693
      %v1950 = vadd.f32 %v1171, %v1694
      %v1951 = vadd.f32 %v1172, %v1695
      %v1952 = vadd.f32 %v1173, %v1696
      %v1953 = vadd.f32 %v1174, %v1697
      %v1954 = vadd.f32 %v1175, %v1698
      %v1955 = vadd.f32 %v1176, %v1699
      %v1956 = vadd.f32 %v1177, %v1700
      %v1957 = vadd.f32 %v1178, %v1701
      %v1958 = vadd.f32 %v1179, %v1702
      %v1959 = vadd.f32 %v1180, %v1703
      %v1960 = vadd.f32 %v1181, %v1704
      %v1961 = vadd.f32 %v1182, %v1705
      %v1962 = vadd.f32 %v1183, %v1706
      %v1963 = vadd.f32 %v1184, %v1707
      %v1964 = vadd.f32 %v1185, %v1708
      %v1965 = vadd.f32 %v1186, %v1709
      %v1966 = vadd.f32 %v1187, %v1710
      %v1967 = vadd.f32 %v1188, %v1711
      %v1968 = vadd.f32 %v1189, %v1712
      %v1969 = vadd.f32 %v1190, %v1713
      %v1970 = vadd.f32 %v1191, %v1714
      %v1971 = vadd.f32 %v1192, %v1715
      %v1972 = vadd.f32 %v1193, %v1716
      %v1973 = vadd.f32 %v1194, %v1717
      %v1974 = vadd.f32 %v1195, %v1718
      %v1975 = vadd.f32 %v1196, %v1719
      %v1976 = vadd.f32 %v1197, %v1720
      %v1977 = vadd.f32 %v1198, %v1721
      %v1978 = vadd.f32 %v1199, %v1722
      %v1979 = vadd.f32 %v1200, %v1723
      %v1980 = vadd.f32 %v1201, %v1724
      %v1981 = vadd.f32 %v1202, %v1725
      %v1982 = vadd.f32 %v1203, %v1726
      %v1983 = vadd.f32 %v1204, %v1727
      %v1984 = vadd.f32 %v1205, %v1728
      %v1985 = vadd.f32 %v1206, %v1729
      %v1986 = vadd.f32 %v1207, %v1730
      %v1987 = vadd.f32 %v1208, %v1731
      %v1988 = vadd.f32 %v1209, %v1732
      %v1989 = vadd.f32 %v1210, %v1733
      %v1990 = vadd.f32 %v1211, %v1734
      %v1991 = vadd.f32 %v1212, %v1735
      %v1992 = vadd.f32 %v1213, %v1736
      %v1993 = vadd.f32 %v1214, %v1737
      %v1994 = vadd.f32 %v1215, %v1738
      %v1995 = vadd.f32 %v1216, %v1739
      %v1996 = vadd.f32 %v1217, %v1740
      %v1997 = vadd.f32 %v1218, %v1741
      %v1998 = vadd.f32 %v1219, %v1742
      %v1999 = vadd.f32 %v1220, %v1743
      %v2000 = vadd.f32 %v1221, %v1744
      %v2001 = vadd.f32 %v1222, %v1745
      %v2002 = vadd.f32 %v1223, %v1746
      %v2003 = vadd.f32 %v1224, %v1747
      %v2004 = vadd.f32 %v1225, %v1748
      %v2005 = vadd.f32 %v1226, %v1749
      %v2006 = vadd.f32 %v1227, %v1750
      %v2007 = vadd.f32 %v1228, %v1751
      %v2008 = vadd.f32 %v1229, %v1752
      %v2009 = vadd.f32 %v1230, %v1753
      %v2010 = vadd.f32 %v1231, %v1754
      %v2011 = vadd.f32 %v1232, %v1755
      %v2012 = vadd.f32 %v1233, %v1756
      %v2013 = vadd.f32 %v1234, %v1757
      %v2014 = vadd.f32 %v1235, %v1758
      %v2015 = vadd.f32 %v1236, %v1759
      %v2016 = vadd.f32 %v1237, %v1760
      %v2017 = vadd.f32 %v1238, %v1761
      %v2018 = vadd.f32 %v1239, %v1762
      %v2019 = vadd.f32 %v1240, %v1763
      %v2020 = vadd.f32 %v1241, %v1764
      %v2021 = vadd.f32 %v1242, %v1765
      %v2022 = vadd.f32 %v1243, %v1766
      %v2023 = vadd.f32 %v1244, %v1767
      %v2024 = vadd.f32 %v1245, %v1768
      %v2025 = vadd.f32 %v1246, %v1769
      %v2026 = vadd.f32 %v1247, %v1770
      %v2027 = vadd.f32 %v1248, %v1771
      %v2028 = vadd.f32 %v1249, %v1772
      %v2029 = vadd.f32 %v1250, %v1773
      %v2030 = vadd.f32 %v1251, %v1774
      %v2031 = vadd.f32 %v1252, %v1775
      %v2032 = vadd.f32 %v1253, %v1776
      %v2033 = vadd.f32 %v1254, %v1777
      %v2034 = vadd.f32 %v1255, %v1778
      %v2035 = vadd.f32 %v1256, %v1779
      %v2036 = vadd.f32 %v1257, %v1780
      %v2037 = vadd.f32 %v1258, %v1781
      %v2038 = vadd.f32 %v1259, %v1782
      %v2039 = vadd.f32 %v1260, %v1783
      %v2040 = vadd.f32 %v1261, %v1784
      %v2041 = vadd.f32 %v1262, %v1785
      %v2042 = vadd.f32 %v1263, %v1786
      %v2043 = vadd.f32 %v1264, %v1787
      %v2044 = vadd.f32 %v1265, %v1788
      %v2045 = vadd.f32 %v1266, %v1789
      %v2046 = vadd.f32 %v1267, %v1790
      %v2047 = vadd.f32 %v1268, %v1791
      %v2048 = vadd.f32 %v1269, %v1792
      %v2049 = vadd.f32 %v1270, %v1793
      %v2050 = vadd.f32 %v1271, %v1794
      %v2051 = vadd.f32 %v1272, %v1795
      %v2052 = vadd.f32 %v1273, %v1796
      %v2053 = vadd.f32 %v1274, %v1797
      %v2054 = vadd.f32 %v1275, %v1798
      %v2055 = vadd.f32 %v1276, %v1799
      %v2056 = vadd.f32 %v1277, %v1800
      %v2057 = vadd.f32 %v1278, %v1801
      %v2058 = vadd.f32 %v1279, %v1802
      %v2059 = vadd.f32 %v1280, %v1803
      %v2060 = vadd.f32 %v1281, %v1804
      %v2061 = vadd.f32 %v1282, %v1805
      %v2062 = vadd.f32 %v1283, %v1806
      %v2063 = vadd.f32 %v1284, %v1807
      %v2064 = vadd.f32 %v1285, %v1808
      %v2065 = vadd.f32 %v1286, %v1809
      %v2066 = vadd.f32 %v1287, %v1810
      %v2067 = vadd.f32 %v1288, %v1811
      %v2068 = vadd.f32 %v1289, %v1812
      %v2069 = vadd.f32 %v1290, %v1813
      %v2070 = vadd.f32 %v1291, %v1814
      %v2071 = vadd.f32 %v1292, %v1815
      %v2072 = vadd.f32 %v1293, %v1816
      %v2073 = vadd.f32 %v1294, %v1817
      %v2074 = vadd.f32 %v1295, %v1818
      %v2075 = vadd.f32 %v1296, %v1819
      %v2076 = vadd.f32 %v1297, %v1820
      %v2077 = vadd.f32 %v1298, %v1821
      %v2078 = vadd.f32 %v1299, %v1822
      %v2079 = vadd.f32 %v1300, %v1823
      %v2080 = vadd.f32 %v1301, %v1824
      %v2081 = vadd.f32 %v1302, %v1825
      %v2082 = vadd.f32 %v1303, %v1826
      %v2083 = vadd.f32 %v1304, %v1827
      %v2084 = vadd.f32 %v1305, %v1828
      %v2085 = vadd.f32 %v1306, %v1829
      %v2086 = vadd.f32 %v1307, %v1830
      %v2087 = vadd.f32 %v1308, %v1831
      %v2088 = vadd.f32 %v1309, %v1832
      %v2089 = vadd.f32 %v1310, %v1833
      %v2090 = vadd.f32 %v1311, %v1834
      %v2091 = vadd.f32 %v1312, %v1835
      %v2092 = vadd.f32 %v1313, %v1836
      %v2093 = vadd.f32 %v1314, %v1837
      %v2094 = vadd.f32 %v1315, %v1838
      %v2095 = vadd.f32 %v1316, %v1839
      %v2096 = vadd.f32 %v1317, %v1840
      %v2097 = vadd.f32 %v1318, %v1841
      %v2098 = vadd.f32 %v1319, %v1842
      %v2099 = vadd.f32 %v1320, %v1843
      %v2100 = vadd.f32 %v1321, %v1844
      %v2101 = vadd.f32 %v1322, %v1845
      %v2102 = vadd.f32 %v1323, %v1846
      %v2103 = vadd.f32 %v1324, %v1847
      %v2104 = vadd.f32 %v1325, %v1848
      %v2105 = vadd.f32 %v1326, %v1849
      %v2106 = vadd.f32 %v1327, %v1850
      %v2107 = vadd.f32 %v1328, %v1851
      %v2108 = vadd.f32 %v1329, %v1852
      %v2109 = vadd.f32 %v1330, %v1853
      %v2110 = vadd.f32 %v1331, %v1854
      %v2111 = vadd.f32 %v1332, %v1855
      %v2112 = vadd.f32 %v1333, %v1856
      %v2113 = vadd.f32 %v1334, %v1857
      %v2114 = vadd.f32 %v1335, %v1858
      %v2115 = vadd.f32 %v1336, %v1859
      %v2116 = vadd.f32 %v1337, %v1860
      %v2117 = vadd.f32 %v1338, %v1861
      %v2118 = vadd.f32 %v1339, %v1862
      %v2119 = vadd.f32 %v1340, %v1863
      %v2120 = vadd.f32 %v1341, %v1864
      %v2121 = vadd.f32 %v1342, %v1865
      %v2122 = vadd.f32 %v1343, %v1866
      %v2123 = vadd.f32 %v1344, %v1867
      %v2124 = vadd.f32 %v1345, %v1868
      %v2125 = vadd.f32 %v1346, %v1869
      %v2126 = vadd.f32 %v1347, %v1870
      %v2127 = vadd.f32 %v1348, %v1871
      %v2128 = vadd.f32 %v1349, %v1872
      %v2129 = vadd.f32 %v1350, %v1873
      %v2130 = vadd.f32 %v1351, %v1874
      %v2131 = vadd.f32 %v1352, %v1875
      %v2132 = vadd.f32 %v1353, %v1876
      %v2133 = vadd.f32 %v1354, %v1877
      %v2134 = vadd.f32 %v1355, %v1878
      %v2135 = vadd.f32 %v1356, %v1879
      %v2136 = vadd.f32 %v1357, %v1880
      %v2137 = vadd.f32 %v1358, %v1881
      %v2138 = vadd.f32 %v1359, %v1882
      %v2139 = vadd.f32 %v1360, %v1883
      %v2140 = vadd.f32 %v1361, %v1884
      %v2141 = vadd.f32 %v1362, %v1885
      %v2142 = vadd.f32 %v1363, %v1886
      %v2143 = vadd.f32 %v1364, %v1887
      %v2144 = vadd.f32 %v1365, %v1888
      %v2145 = vadd.f32 %v1366, %v1889
      %v2146 = vadd.f32 %v1367, %v1890
      %v2147 = vadd.f32 %v1368, %v1891
      %v2148 = vadd.f32 %v1369, %v1892
      %v2149 = vadd.f32 %v1370, %v1893
      %v2150 = vadd.f32 %v1371, %v1894
      %2151 = vset.pattern.permute.xlu0 1
      %2152 = vperm.xlu0 %2151, %v333
      %v2153 = vpop.permute.xlu0 %2152
      %2154 = vset.pattern.permute.xlu0 1
      %2155 = vperm.xlu0 %2154, %v334
      %v2156 = vpop.permute.xlu0 %2155
      %2157 = vset.pattern.permute.xlu0 1
      %2158 = vperm.xlu0 %2157, %v335
      %v2159 = vpop.permute.xlu0 %2158
      %2160 = vset.pattern.permute.xlu0 1
      %2161 = vperm.xlu0 %2160, %v336
      %v2162 = vpop.permute.xlu0 %2161
      %2163 = vset.pattern.permute.xlu0 1
      %2164 = vperm.xlu0 %2163, %v337
      %v2165 = vpop.permute.xlu0 %2164
      %2166 = vset.pattern.permute.xlu0 1
      %2167 = vperm.xlu0 %2166, %v338
      %v2168 = vpop.permute.xlu0 %2167
      %2169 = vset.pattern.permute.xlu0 1
      %2170 = vperm.xlu0 %2169, %v339
      %v2171 = vpop.permute.xlu0 %2170
      %2172 = vset.pattern.permute.xlu0 1
      %2173 = vperm.xlu0 %2172, %v340
      %v2174 = vpop.permute.xlu0 %2173
      %2175 = vset.pattern.permute.xlu0 1
      %2176 = vperm.xlu0 %2175, %v341
      %v2177 = vpop.permute.xlu0 %2176
      %2178 = vset.pattern.permute.xlu0 1
      %2179 = vperm.xlu0 %2178, %v342
      %v2180 = vpop.permute.xlu0 %2179
      %2181 = vset.pattern.permute.xlu0 1
      %2182 = vperm.xlu0 %2181, %v343
      %v2183 = vpop.permute.xlu0 %2182
      %2184 = vset.pattern.permute.xlu0 1
      %2185 = vperm.xlu0 %2184, %v344
      %v2186 = vpop.permute.xlu0 %2185
      %2187 = vset.pattern.permute.xlu0 1
      %2188 = vperm.xlu0 %2187, %v345
      %v2189 = vpop.permute.xlu0 %2188
      %2190 = vset.pattern.permute.xlu0 1
      %2191 = vperm.xlu0 %2190, %v346
      %v2192 = vpop.permute.xlu0 %2191
      %2193 = vset.pattern.permute.xlu0 1
      %2194 = vperm.xlu0 %2193, %v347
      %v2195 = vpop.permute.xlu0 %2194
      %2196 = vset.pattern.permute.xlu0 1
      %2197 = vperm.xlu0 %2196, %v348
      %v2198 = vpop.permute.xlu0 %2197
      %2199 = vset.pattern.permute.xlu0 1
      %2200 = vperm.xlu0 %2199, %v349
      %v2201 = vpop.permute.xlu0 %2200
      %2202 = vset.pattern.permute.xlu0 1
      %2203 = vperm.xlu0 %2202, %v350
      %v2204 = vpop.permute.xlu0 %2203
      %2205 = vset.pattern.permute.xlu0 1
      %2206 = vperm.xlu0 %2205, %v351
      %v2207 = vpop.permute.xlu0 %2206
      %2208 = vset.pattern.permute.xlu0 1
      %2209 = vperm.xlu0 %2208, %v352
      %v2210 = vpop.permute.xlu0 %2209
      %2211 = vset.pattern.permute.xlu0 1
      %2212 = vperm.xlu0 %2211, %v353
      %v2213 = vpop.permute.xlu0 %2212
      %2214 = vset.pattern.permute.xlu0 1
      %2215 = vperm.xlu0 %2214, %v354
      %v2216 = vpop.permute.xlu0 %2215
      %2217 = vset.pattern.permute.xlu0 1
      %2218 = vperm.xlu0 %2217, %v355
      %v2219 = vpop.permute.xlu0 %2218
      %2220 = vset.pattern.permute.xlu0 1
      %2221 = vperm.xlu0 %2220, %v356
      %v2222 = vpop.permute.xlu0 %2221
      %2223 = vset.pattern.permute.xlu0 1
      %2224 = vperm.xlu0 %2223, %v357
      %v2225 = vpop.permute.xlu0 %2224
      %2226 = vset.pattern.permute.xlu0 1
      %2227 = vperm.xlu0 %2226, %v358
      %v2228 = vpop.permute.xlu0 %2227
      %2229 = vset.pattern.permute.xlu0 1
      %2230 = vperm.xlu0 %2229, %v359
      %v2231 = vpop.permute.xlu0 %2230
      %2232 = vset.pattern.permute.xlu0 1
      %2233 = vperm.xlu0 %2232, %v360
      %v2234 = vpop.permute.xlu0 %2233
      %2235 = vset.pattern.permute.xlu0 1
      %2236 = vperm.xlu0 %2235, %v361
      %v2237 = vpop.permute.xlu0 %2236
      %2238 = vset.pattern.permute.xlu0 1
      %2239 = vperm.xlu0 %2238, %v362
      %v2240 = vpop.permute.xlu0 %2239
      %2241 = vset.pattern.permute.xlu0 1
      %2242 = vperm.xlu0 %2241, %v363
      %v2243 = vpop.permute.xlu0 %2242
      %2244 = vset.pattern.permute.xlu0 1
      %2245 = vperm.xlu0 %2244, %v364
      %v2246 = vpop.permute.xlu0 %2245
      %2247 = vset.pattern.permute.xlu0 1
      %2248 = vperm.xlu0 %2247, %v365
      %v2249 = vpop.permute.xlu0 %2248
      %2250 = vset.pattern.permute.xlu0 1
      %2251 = vperm.xlu0 %2250, %v366
      %v2252 = vpop.permute.xlu0 %2251
      %2253 = vset.pattern.permute.xlu0 1
      %2254 = vperm.xlu0 %2253, %v367
      %v2255 = vpop.permute.xlu0 %2254
      %2256 = vset.pattern.permute.xlu0 1
      %2257 = vperm.xlu0 %2256, %v368
      %v2258 = vpop.permute.xlu0 %2257
      %2259 = vset.pattern.permute.xlu0 1
      %2260 = vperm.xlu0 %2259, %v369
      %v2261 = vpop.permute.xlu0 %2260
      %2262 = vset.pattern.permute.xlu0 1
      %2263 = vperm.xlu0 %2262, %v370
      %v2264 = vpop.permute.xlu0 %2263
      %2265 = vset.pattern.permute.xlu0 1
      %2266 = vperm.xlu0 %2265, %v371
      %v2267 = vpop.permute.xlu0 %2266
      %2268 = vset.pattern.permute.xlu0 1
      %2269 = vperm.xlu0 %2268, %v372
      %v2270 = vpop.permute.xlu0 %2269
      %2271 = vset.pattern.permute.xlu0 1
      %2272 = vperm.xlu0 %2271, %v373
      %v2273 = vpop.permute.xlu0 %2272
      %2274 = vset.pattern.permute.xlu0 1
      %2275 = vperm.xlu0 %2274, %v374
      %v2276 = vpop.permute.xlu0 %2275
      %2277 = vset.pattern.permute.xlu0 1
      %2278 = vperm.xlu0 %2277, %v375
      %v2279 = vpop.permute.xlu0 %2278
      %2280 = vset.pattern.permute.xlu0 1
      %2281 = vperm.xlu0 %2280, %v376
      %v2282 = vpop.permute.xlu0 %2281
      %2283 = vset.pattern.permute.xlu0 1
      %2284 = vperm.xlu0 %2283, %v377
      %v2285 = vpop.permute.xlu0 %2284
      %2286 = vset.pattern.permute.xlu0 1
      %2287 = vperm.xlu0 %2286, %v378
      %v2288 = vpop.permute.xlu0 %2287
      %2289 = vset.pattern.permute.xlu0 1
      %2290 = vperm.xlu0 %2289, %v379
      %v2291 = vpop.permute.xlu0 %2290
      %2292 = vset.pattern.permute.xlu0 1
      %2293 = vperm.xlu0 %2292, %v380
      %v2294 = vpop.permute.xlu0 %2293
      %2295 = vset.pattern.permute.xlu0 1
      %2296 = vperm.xlu0 %2295, %v381
      %v2297 = vpop.permute.xlu0 %2296
      %2298 = vset.pattern.permute.xlu0 1
      %2299 = vperm.xlu0 %2298, %v382
      %v2300 = vpop.permute.xlu0 %2299
      %2301 = vset.pattern.permute.xlu0 1
      %2302 = vperm.xlu0 %2301, %v383
      %v2303 = vpop.permute.xlu0 %2302
      %2304 = vset.pattern.permute.xlu0 1
      %2305 = vperm.xlu0 %2304, %v384
      %v2306 = vpop.permute.xlu0 %2305
      %2307 = vset.pattern.permute.xlu0 1
      %2308 = vperm.xlu0 %2307, %v385
      %v2309 = vpop.permute.xlu0 %2308
      %2310 = vset.pattern.permute.xlu0 1
      %2311 = vperm.xlu0 %2310, %v386
      %v2312 = vpop.permute.xlu0 %2311
      %2313 = vset.pattern.permute.xlu0 1
      %2314 = vperm.xlu0 %2313, %v387
      %v2315 = vpop.permute.xlu0 %2314
      %2316 = vset.pattern.permute.xlu0 1
      %2317 = vperm.xlu0 %2316, %v388
      %v2318 = vpop.permute.xlu0 %2317
      %2319 = vset.pattern.permute.xlu0 1
      %2320 = vperm.xlu0 %2319, %v389
      %v2321 = vpop.permute.xlu0 %2320
      %2322 = vset.pattern.permute.xlu0 1
      %2323 = vperm.xlu0 %2322, %v390
      %v2324 = vpop.permute.xlu0 %2323
      %2325 = vset.pattern.permute.xlu0 1
      %2326 = vperm.xlu0 %2325, %v391
      %v2327 = vpop.permute.xlu0 %2326
      %2328 = vset.pattern.permute.xlu0 1
      %2329 = vperm.xlu0 %2328, %v392
      %v2330 = vpop.permute.xlu0 %2329
      %2331 = vset.pattern.permute.xlu0 1
      %2332 = vperm.xlu0 %2331, %v393
      %v2333 = vpop.permute.xlu0 %2332
      %2334 = vset.pattern.permute.xlu0 1
      %2335 = vperm.xlu0 %2334, %v394
      %v2336 = vpop.permute.xlu0 %2335
      %2337 = vset.pattern.permute.xlu0 1
      %2338 = vperm.xlu0 %2337, %v395
      %v2339 = vpop.permute.xlu0 %2338
      %2340 = vset.pattern.permute.xlu0 1
      %2341 = vperm.xlu0 %2340, %v396
      %v2342 = vpop.permute.xlu0 %2341
      %2343 = vset.pattern.permute.xlu0 1
      %2344 = vperm.xlu0 %2343, %v397
      %v2345 = vpop.permute.xlu0 %2344
      %2346 = vset.pattern.permute.xlu0 1
      %2347 = vperm.xlu0 %2346, %v398
      %v2348 = vpop.permute.xlu0 %2347
      %2349 = vset.pattern.permute.xlu0 1
      %2350 = vperm.xlu0 %2349, %v399
      %v2351 = vpop.permute.xlu0 %2350
      %2352 = vset.pattern.permute.xlu0 1
      %2353 = vperm.xlu0 %2352, %v400
      %v2354 = vpop.permute.xlu0 %2353
      %2355 = vset.pattern.permute.xlu0 1
      %2356 = vperm.xlu0 %2355, %v401
      %v2357 = vpop.permute.xlu0 %2356
      %2358 = vset.pattern.permute.xlu0 1
      %2359 = vperm.xlu0 %2358, %v402
      %v2360 = vpop.permute.xlu0 %2359
      %2361 = vset.pattern.permute.xlu0 1
      %2362 = vperm.xlu0 %2361, %v403
      %v2363 = vpop.permute.xlu0 %2362
      %2364 = vset.pattern.permute.xlu0 1
      %2365 = vperm.xlu0 %2364, %v404
      %v2366 = vpop.permute.xlu0 %2365
      %2367 = vset.pattern.permute.xlu0 1
      %2368 = vperm.xlu0 %2367, %v405
      %v2369 = vpop.permute.xlu0 %2368
      %2370 = vset.pattern.permute.xlu0 1
      %2371 = vperm.xlu0 %2370, %v406
      %v2372 = vpop.permute.xlu0 %2371
      %2373 = vset.pattern.permute.xlu0 1
      %2374 = vperm.xlu0 %2373, %v407
      %v2375 = vpop.permute.xlu0 %2374
      %2376 = vset.pattern.permute.xlu0 1
      %2377 = vperm.xlu0 %2376, %v408
      %v2378 = vpop.permute.xlu0 %2377
      %2379 = vset.pattern.permute.xlu0 1
      %2380 = vperm.xlu0 %2379, %v409
      %v2381 = vpop.permute.xlu0 %2380
      %2382 = vset.pattern.permute.xlu0 1
      %2383 = vperm.xlu0 %2382, %v410
      %v2384 = vpop.permute.xlu0 %2383
      %2385 = vset.pattern.permute.xlu0 1
      %2386 = vperm.xlu0 %2385, %v411
      %v2387 = vpop.permute.xlu0 %2386
      %2388 = vset.pattern.permute.xlu0 1
      %2389 = vperm.xlu0 %2388, %v412
      %v2390 = vpop.permute.xlu0 %2389
      %2391 = vset.pattern.permute.xlu0 1
      %2392 = vperm.xlu0 %2391, %v413
      %v2393 = vpop.permute.xlu0 %2392
      %2394 = vset.pattern.permute.xlu0 1
      %2395 = vperm.xlu0 %2394, %v414
      %v2396 = vpop.permute.xlu0 %2395
      %2397 = vset.pattern.permute.xlu0 1
      %2398 = vperm.xlu0 %2397, %v415
      %v2399 = vpop.permute.xlu0 %2398
      %2400 = vset.pattern.permute.xlu0 1
      %2401 = vperm.xlu0 %2400, %v416
      %v2402 = vpop.permute.xlu0 %2401
      %2403 = vset.pattern.permute.xlu0 1
      %2404 = vperm.xlu0 %2403, %v417
      %v2405 = vpop.permute.xlu0 %2404
      %2406 = vset.pattern.permute.xlu0 1
      %2407 = vperm.xlu0 %2406, %v418
      %v2408 = vpop.permute.xlu0 %2407
      %2409 = vset.pattern.permute.xlu0 1
      %2410 = vperm.xlu0 %2409, %v419
      %v2411 = vpop.permute.xlu0 %2410
      %2412 = vset.pattern.permute.xlu0 1
      %2413 = vperm.xlu0 %2412, %v420
      %v2414 = vpop.permute.xlu0 %2413
      %2415 = vset.pattern.permute.xlu0 1
      %2416 = vperm.xlu0 %2415, %v421
      %v2417 = vpop.permute.xlu0 %2416
      %2418 = vset.pattern.permute.xlu0 1
      %2419 = vperm.xlu0 %2418, %v422
      %v2420 = vpop.permute.xlu0 %2419
      %2421 = vset.pattern.permute.xlu0 1
      %2422 = vperm.xlu0 %2421, %v423
      %v2423 = vpop.permute.xlu0 %2422
      %2424 = vset.pattern.permute.xlu0 1
      %2425 = vperm.xlu0 %2424, %v424
      %v2426 = vpop.permute.xlu0 %2425
      %2427 = vset.pattern.permute.xlu0 1
      %2428 = vperm.xlu0 %2427, %v425
      %v2429 = vpop.permute.xlu0 %2428
      %2430 = vset.pattern.permute.xlu0 1
      %2431 = vperm.xlu0 %2430, %v426
      %v2432 = vpop.permute.xlu0 %2431
      %2433 = vset.pattern.permute.xlu0 1
      %2434 = vperm.xlu0 %2433, %v427
      %v2435 = vpop.permute.xlu0 %2434
      %2436 = vset.pattern.permute.xlu0 1
      %2437 = vperm.xlu0 %2436, %v428
      %v2438 = vpop.permute.xlu0 %2437
      %2439 = vset.pattern.permute.xlu0 1
      %2440 = vperm.xlu0 %2439, %v429
      %v2441 = vpop.permute.xlu0 %2440
      %2442 = vset.pattern.permute.xlu0 1
      %2443 = vperm.xlu0 %2442, %v430
      %v2444 = vpop.permute.xlu0 %2443
      %2445 = vset.pattern.permute.xlu0 1
      %2446 = vperm.xlu0 %2445, %v431
      %v2447 = vpop.permute.xlu0 %2446
      %2448 = vset.pattern.permute.xlu0 1
      %2449 = vperm.xlu0 %2448, %v432
      %v2450 = vpop.permute.xlu0 %2449
      %2451 = vset.pattern.permute.xlu0 1
      %2452 = vperm.xlu0 %2451, %v433
      %v2453 = vpop.permute.xlu0 %2452
      %2454 = vset.pattern.permute.xlu0 1
      %2455 = vperm.xlu0 %2454, %v434
      %v2456 = vpop.permute.xlu0 %2455
      %2457 = vset.pattern.permute.xlu0 1
      %2458 = vperm.xlu0 %2457, %v435
      %v2459 = vpop.permute.xlu0 %2458
      %2460 = vset.pattern.permute.xlu0 1
      %2461 = vperm.xlu0 %2460, %v436
      %v2462 = vpop.permute.xlu0 %2461
      %2463 = vset.pattern.permute.xlu0 1
      %2464 = vperm.xlu0 %2463, %v437
      %v2465 = vpop.permute.xlu0 %2464
      %2466 = vset.pattern.permute.xlu0 1
      %2467 = vperm.xlu0 %2466, %v438
      %v2468 = vpop.permute.xlu0 %2467
      %2469 = vset.pattern.permute.xlu0 1
      %2470 = vperm.xlu0 %2469, %v439
      %v2471 = vpop.permute.xlu0 %2470
      %2472 = vset.pattern.permute.xlu0 1
      %2473 = vperm.xlu0 %2472, %v440
      %v2474 = vpop.permute.xlu0 %2473
      %2475 = vset.pattern.permute.xlu0 1
      %2476 = vperm.xlu0 %2475, %v441
      %v2477 = vpop.permute.xlu0 %2476
      %2478 = vset.pattern.permute.xlu0 1
      %2479 = vperm.xlu0 %2478, %v442
      %v2480 = vpop.permute.xlu0 %2479
      %2481 = vset.pattern.permute.xlu0 1
      %2482 = vperm.xlu0 %2481, %v443
      %v2483 = vpop.permute.xlu0 %2482
      %2484 = vset.pattern.permute.xlu0 1
      %2485 = vperm.xlu0 %2484, %v444
      %v2486 = vpop.permute.xlu0 %2485
      %2487 = vset.pattern.permute.xlu0 1
      %2488 = vperm.xlu0 %2487, %v445
      %v2489 = vpop.permute.xlu0 %2488
      %2490 = vset.pattern.permute.xlu0 1
      %2491 = vperm.xlu0 %2490, %v446
      %v2492 = vpop.permute.xlu0 %2491
      %2493 = vset.pattern.permute.xlu0 1
      %2494 = vperm.xlu0 %2493, %v447
      %v2495 = vpop.permute.xlu0 %2494
      %2496 = vset.pattern.permute.xlu0 1
      %2497 = vperm.xlu0 %2496, %v448
      %v2498 = vpop.permute.xlu0 %2497
      %2499 = vset.pattern.permute.xlu0 1
      %2500 = vperm.xlu0 %2499, %v449
      %v2501 = vpop.permute.xlu0 %2500
      %2502 = vset.pattern.permute.xlu0 1
      %2503 = vperm.xlu0 %2502, %v450
      %v2504 = vpop.permute.xlu0 %2503
      %2505 = vset.pattern.permute.xlu0 1
      %2506 = vperm.xlu0 %2505, %v451
      %v2507 = vpop.permute.xlu0 %2506
      %2508 = vset.pattern.permute.xlu0 1
      %2509 = vperm.xlu0 %2508, %v452
      %v2510 = vpop.permute.xlu0 %2509
      %2511 = vset.pattern.permute.xlu0 1
      %2512 = vperm.xlu0 %2511, %v453
      %v2513 = vpop.permute.xlu0 %2512
      %2514 = vset.pattern.permute.xlu0 1
      %2515 = vperm.xlu0 %2514, %v454
      %v2516 = vpop.permute.xlu0 %2515
      %2517 = vset.pattern.permute.xlu0 1
      %2518 = vperm.xlu0 %2517, %v455
      %v2519 = vpop.permute.xlu0 %2518
      %2520 = vset.pattern.permute.xlu0 1
      %2521 = vperm.xlu0 %2520, %v456
      %v2522 = vpop.permute.xlu0 %2521
      %2523 = vset.pattern.permute.xlu0 1
      %2524 = vperm.xlu0 %2523, %v457
      %v2525 = vpop.permute.xlu0 %2524
      %2526 = vset.pattern.permute.xlu0 1
      %2527 = vperm.xlu0 %2526, %v458
      %v2528 = vpop.permute.xlu0 %2527
      %2529 = vset.pattern.permute.xlu0 1
      %2530 = vperm.xlu0 %2529, %v459
      %v2531 = vpop.permute.xlu0 %2530
      %2532 = vset.pattern.permute.xlu0 1
      %2533 = vperm.xlu0 %2532, %v460
      %v2534 = vpop.permute.xlu0 %2533
      %v2535 = vperm.slane %v461, 1
      %v2536 = vperm.slane %v461, 5
      %v2537 = vperm.slane %v2535, 1
      %v2538 = vperm.slane %v2536, 1
      %vm2539 = vcmp.eq.s32.totalorder %v2153, %v2537
      %vm2540 = vcmp.eq.s32.totalorder %v2153, %v2538
      %vm2541 = vcmp.eq.s32.totalorder %v2156, %v2537
      %vm2542 = vcmp.eq.s32.totalorder %v2156, %v2538
      %vm2543 = vcmp.eq.s32.totalorder %v2159, %v2537
      %vm2544 = vcmp.eq.s32.totalorder %v2159, %v2538
      %vm2545 = vcmp.eq.s32.totalorder %v2162, %v2537
      %vm2546 = vcmp.eq.s32.totalorder %v2162, %v2538
      %vm2547 = vcmp.eq.s32.totalorder %v2165, %v2537
      %vm2548 = vcmp.eq.s32.totalorder %v2165, %v2538
      %vm2549 = vcmp.eq.s32.totalorder %v2168, %v2537
      %vm2550 = vcmp.eq.s32.totalorder %v2168, %v2538
      %vm2551 = vcmp.eq.s32.totalorder %v2171, %v2537
      %vm2552 = vcmp.eq.s32.totalorder %v2171, %v2538
      %vm2553 = vcmp.eq.s32.totalorder %v2174, %v2537
      %vm2554 = vcmp.eq.s32.totalorder %v2174, %v2538
      %vm2555 = vcmp.eq.s32.totalorder %v2177, %v2537
      %vm2556 = vcmp.eq.s32.totalorder %v2177, %v2538
      %vm2557 = vcmp.eq.s32.totalorder %v2180, %v2537
      %vm2558 = vcmp.eq.s32.totalorder %v2180, %v2538
      %vm2559 = vcmp.eq.s32.totalorder %v2183, %v2537
      %vm2560 = vcmp.eq.s32.totalorder %v2183, %v2538
      %vm2561 = vcmp.eq.s32.totalorder %v2186, %v2537
      %vm2562 = vcmp.eq.s32.totalorder %v2186, %v2538
      %vm2563 = vcmp.eq.s32.totalorder %v2189, %v2537
      %vm2564 = vcmp.eq.s32.totalorder %v2189, %v2538
      %vm2565 = vcmp.eq.s32.totalorder %v2192, %v2537
      %vm2566 = vcmp.eq.s32.totalorder %v2192, %v2538
      %vm2567 = vcmp.eq.s32.totalorder %v2195, %v2537
      %vm2568 = vcmp.eq.s32.totalorder %v2195, %v2538
      %vm2569 = vcmp.eq.s32.totalorder %v2198, %v2537
      %vm2570 = vcmp.eq.s32.totalorder %v2198, %v2538
      %vm2571 = vcmp.eq.s32.totalorder %v2201, %v2537
      %vm2572 = vcmp.eq.s32.totalorder %v2201, %v2538
      %vm2573 = vcmp.eq.s32.totalorder %v2204, %v2537
      %vm2574 = vcmp.eq.s32.totalorder %v2204, %v2538
      %vm2575 = vcmp.eq.s32.totalorder %v2207, %v2537
      %vm2576 = vcmp.eq.s32.totalorder %v2207, %v2538
      %vm2577 = vcmp.eq.s32.totalorder %v2210, %v2537
      %vm2578 = vcmp.eq.s32.totalorder %v2210, %v2538
      %vm2579 = vcmp.eq.s32.totalorder %v2213, %v2537
      %vm2580 = vcmp.eq.s32.totalorder %v2213, %v2538
      %vm2581 = vcmp.eq.s32.totalorder %v2216, %v2537
      %vm2582 = vcmp.eq.s32.totalorder %v2216, %v2538
      %vm2583 = vcmp.eq.s32.totalorder %v2219, %v2537
      %vm2584 = vcmp.eq.s32.totalorder %v2219, %v2538
      %vm2585 = vcmp.eq.s32.totalorder %v2222, %v2537
      %vm2586 = vcmp.eq.s32.totalorder %v2222, %v2538
      %vm2587 = vcmp.eq.s32.totalorder %v2225, %v2537
      %vm2588 = vcmp.eq.s32.totalorder %v2225, %v2538
      %vm2589 = vcmp.eq.s32.totalorder %v2228, %v2537
      %vm2590 = vcmp.eq.s32.totalorder %v2228, %v2538
      %vm2591 = vcmp.eq.s32.totalorder %v2231, %v2537
      %vm2592 = vcmp.eq.s32.totalorder %v2231, %v2538
      %vm2593 = vcmp.eq.s32.totalorder %v2234, %v2537
      %vm2594 = vcmp.eq.s32.totalorder %v2234, %v2538
      %vm2595 = vcmp.eq.s32.totalorder %v2237, %v2537
      %vm2596 = vcmp.eq.s32.totalorder %v2237, %v2538
      %vm2597 = vcmp.eq.s32.totalorder %v2240, %v2537
      %vm2598 = vcmp.eq.s32.totalorder %v2240, %v2538
      %vm2599 = vcmp.eq.s32.totalorder %v2243, %v2537
      %vm2600 = vcmp.eq.s32.totalorder %v2243, %v2538
      %vm2601 = vcmp.eq.s32.totalorder %v2246, %v2537
      %vm2602 = vcmp.eq.s32.totalorder %v2246, %v2538
      %vm2603 = vcmp.eq.s32.totalorder %v2249, %v2537
      %vm2604 = vcmp.eq.s32.totalorder %v2249, %v2538
      %vm2605 = vcmp.eq.s32.totalorder %v2252, %v2537
      %vm2606 = vcmp.eq.s32.totalorder %v2252, %v2538
      %vm2607 = vcmp.eq.s32.totalorder %v2255, %v2537
      %vm2608 = vcmp.eq.s32.totalorder %v2255, %v2538
      %vm2609 = vcmp.eq.s32.totalorder %v2258, %v2537
      %vm2610 = vcmp.eq.s32.totalorder %v2258, %v2538
      %vm2611 = vcmp.eq.s32.totalorder %v2261, %v2537
      %vm2612 = vcmp.eq.s32.totalorder %v2261, %v2538
      %vm2613 = vcmp.eq.s32.totalorder %v2264, %v2537
      %vm2614 = vcmp.eq.s32.totalorder %v2264, %v2538
      %vm2615 = vcmp.eq.s32.totalorder %v2267, %v2537
      %vm2616 = vcmp.eq.s32.totalorder %v2267, %v2538
      %vm2617 = vcmp.eq.s32.totalorder %v2270, %v2537
      %vm2618 = vcmp.eq.s32.totalorder %v2270, %v2538
      %vm2619 = vcmp.eq.s32.totalorder %v2273, %v2537
      %vm2620 = vcmp.eq.s32.totalorder %v2273, %v2538
      %vm2621 = vcmp.eq.s32.totalorder %v2276, %v2537
      %vm2622 = vcmp.eq.s32.totalorder %v2276, %v2538
      %vm2623 = vcmp.eq.s32.totalorder %v2279, %v2537
      %vm2624 = vcmp.eq.s32.totalorder %v2279, %v2538
      %vm2625 = vcmp.eq.s32.totalorder %v2282, %v2537
      %vm2626 = vcmp.eq.s32.totalorder %v2282, %v2538
      %vm2627 = vcmp.eq.s32.totalorder %v2285, %v2537
      %vm2628 = vcmp.eq.s32.totalorder %v2285, %v2538
      %vm2629 = vcmp.eq.s32.totalorder %v2288, %v2537
      %vm2630 = vcmp.eq.s32.totalorder %v2288, %v2538
      %vm2631 = vcmp.eq.s32.totalorder %v2291, %v2537
      %vm2632 = vcmp.eq.s32.totalorder %v2291, %v2538
      %vm2633 = vcmp.eq.s32.totalorder %v2294, %v2537
      %vm2634 = vcmp.eq.s32.totalorder %v2294, %v2538
      %vm2635 = vcmp.eq.s32.totalorder %v2297, %v2537
      %vm2636 = vcmp.eq.s32.totalorder %v2297, %v2538
      %vm2637 = vcmp.eq.s32.totalorder %v2300, %v2537
      %vm2638 = vcmp.eq.s32.totalorder %v2300, %v2538
      %vm2639 = vcmp.eq.s32.totalorder %v2303, %v2537
      %vm2640 = vcmp.eq.s32.totalorder %v2303, %v2538
      %vm2641 = vcmp.eq.s32.totalorder %v2306, %v2537
      %vm2642 = vcmp.eq.s32.totalorder %v2306, %v2538
      %vm2643 = vcmp.eq.s32.totalorder %v2309, %v2537
      %vm2644 = vcmp.eq.s32.totalorder %v2309, %v2538
      %vm2645 = vcmp.eq.s32.totalorder %v2312, %v2537
      %vm2646 = vcmp.eq.s32.totalorder %v2312, %v2538
      %vm2647 = vcmp.eq.s32.totalorder %v2315, %v2537
      %vm2648 = vcmp.eq.s32.totalorder %v2315, %v2538
      %vm2649 = vcmp.eq.s32.totalorder %v2318, %v2537
      %vm2650 = vcmp.eq.s32.totalorder %v2318, %v2538
      %vm2651 = vcmp.eq.s32.totalorder %v2321, %v2537
      %vm2652 = vcmp.eq.s32.totalorder %v2321, %v2538
      %vm2653 = vcmp.eq.s32.totalorder %v2324, %v2537
      %vm2654 = vcmp.eq.s32.totalorder %v2324, %v2538
      %vm2655 = vcmp.eq.s32.totalorder %v2327, %v2537
      %vm2656 = vcmp.eq.s32.totalorder %v2327, %v2538
      %vm2657 = vcmp.eq.s32.totalorder %v2330, %v2537
      %vm2658 = vcmp.eq.s32.totalorder %v2330, %v2538
      %vm2659 = vcmp.eq.s32.totalorder %v2333, %v2537
      %vm2660 = vcmp.eq.s32.totalorder %v2333, %v2538
      %vm2661 = vcmp.eq.s32.totalorder %v2336, %v2537
      %vm2662 = vcmp.eq.s32.totalorder %v2336, %v2538
      %vm2663 = vcmp.eq.s32.totalorder %v2339, %v2537
      %vm2664 = vcmp.eq.s32.totalorder %v2339, %v2538
      %vm2665 = vcmp.eq.s32.totalorder %v2342, %v2537
      %vm2666 = vcmp.eq.s32.totalorder %v2342, %v2538
      %vm2667 = vcmp.eq.s32.totalorder %v2345, %v2537
      %vm2668 = vcmp.eq.s32.totalorder %v2345, %v2538
      %vm2669 = vcmp.eq.s32.totalorder %v2348, %v2537
      %vm2670 = vcmp.eq.s32.totalorder %v2348, %v2538
      %vm2671 = vcmp.eq.s32.totalorder %v2351, %v2537
      %vm2672 = vcmp.eq.s32.totalorder %v2351, %v2538
      %vm2673 = vcmp.eq.s32.totalorder %v2354, %v2537
      %vm2674 = vcmp.eq.s32.totalorder %v2354, %v2538
      %vm2675 = vcmp.eq.s32.totalorder %v2357, %v2537
      %vm2676 = vcmp.eq.s32.totalorder %v2357, %v2538
      %vm2677 = vcmp.eq.s32.totalorder %v2360, %v2537
      %vm2678 = vcmp.eq.s32.totalorder %v2360, %v2538
      %vm2679 = vcmp.eq.s32.totalorder %v2363, %v2537
      %vm2680 = vcmp.eq.s32.totalorder %v2363, %v2538
      %vm2681 = vcmp.eq.s32.totalorder %v2366, %v2537
      %vm2682 = vcmp.eq.s32.totalorder %v2366, %v2538
      %vm2683 = vcmp.eq.s32.totalorder %v2369, %v2537
      %vm2684 = vcmp.eq.s32.totalorder %v2369, %v2538
      %vm2685 = vcmp.eq.s32.totalorder %v2372, %v2537
      %vm2686 = vcmp.eq.s32.totalorder %v2372, %v2538
      %vm2687 = vcmp.eq.s32.totalorder %v2375, %v2537
      %vm2688 = vcmp.eq.s32.totalorder %v2375, %v2538
      %vm2689 = vcmp.eq.s32.totalorder %v2378, %v2537
      %vm2690 = vcmp.eq.s32.totalorder %v2378, %v2538
      %vm2691 = vcmp.eq.s32.totalorder %v2381, %v2537
      %vm2692 = vcmp.eq.s32.totalorder %v2381, %v2538
      %vm2693 = vcmp.eq.s32.totalorder %v2384, %v2537
      %vm2694 = vcmp.eq.s32.totalorder %v2384, %v2538
      %vm2695 = vcmp.eq.s32.totalorder %v2387, %v2537
      %vm2696 = vcmp.eq.s32.totalorder %v2387, %v2538
      %vm2697 = vcmp.eq.s32.totalorder %v2390, %v2537
      %vm2698 = vcmp.eq.s32.totalorder %v2390, %v2538
      %vm2699 = vcmp.eq.s32.totalorder %v2393, %v2537
      %vm2700 = vcmp.eq.s32.totalorder %v2393, %v2538
      %vm2701 = vcmp.eq.s32.totalorder %v2396, %v2537
      %vm2702 = vcmp.eq.s32.totalorder %v2396, %v2538
      %vm2703 = vcmp.eq.s32.totalorder %v2399, %v2537
      %vm2704 = vcmp.eq.s32.totalorder %v2399, %v2538
      %vm2705 = vcmp.eq.s32.totalorder %v2402, %v2537
      %vm2706 = vcmp.eq.s32.totalorder %v2402, %v2538
      %vm2707 = vcmp.eq.s32.totalorder %v2405, %v2537
      %vm2708 = vcmp.eq.s32.totalorder %v2405, %v2538
      %vm2709 = vcmp.eq.s32.totalorder %v2408, %v2537
      %vm2710 = vcmp.eq.s32.totalorder %v2408, %v2538
      %vm2711 = vcmp.eq.s32.totalorder %v2411, %v2537
      %vm2712 = vcmp.eq.s32.totalorder %v2411, %v2538
      %vm2713 = vcmp.eq.s32.totalorder %v2414, %v2537
      %vm2714 = vcmp.eq.s32.totalorder %v2414, %v2538
      %vm2715 = vcmp.eq.s32.totalorder %v2417, %v2537
      %vm2716 = vcmp.eq.s32.totalorder %v2417, %v2538
      %vm2717 = vcmp.eq.s32.totalorder %v2420, %v2537
      %vm2718 = vcmp.eq.s32.totalorder %v2420, %v2538
      %vm2719 = vcmp.eq.s32.totalorder %v2423, %v2537
      %vm2720 = vcmp.eq.s32.totalorder %v2423, %v2538
      %vm2721 = vcmp.eq.s32.totalorder %v2426, %v2537
      %vm2722 = vcmp.eq.s32.totalorder %v2426, %v2538
      %vm2723 = vcmp.eq.s32.totalorder %v2429, %v2537
      %vm2724 = vcmp.eq.s32.totalorder %v2429, %v2538
      %vm2725 = vcmp.eq.s32.totalorder %v2432, %v2537
      %vm2726 = vcmp.eq.s32.totalorder %v2432, %v2538
      %vm2727 = vcmp.eq.s32.totalorder %v2435, %v2537
      %vm2728 = vcmp.eq.s32.totalorder %v2435, %v2538
      %vm2729 = vcmp.eq.s32.totalorder %v2438, %v2537
      %vm2730 = vcmp.eq.s32.totalorder %v2438, %v2538
      %vm2731 = vcmp.eq.s32.totalorder %v2441, %v2537
      %vm2732 = vcmp.eq.s32.totalorder %v2441, %v2538
      %vm2733 = vcmp.eq.s32.totalorder %v2444, %v2537
      %vm2734 = vcmp.eq.s32.totalorder %v2444, %v2538
      %vm2735 = vcmp.eq.s32.totalorder %v2447, %v2537
      %vm2736 = vcmp.eq.s32.totalorder %v2447, %v2538
      %vm2737 = vcmp.eq.s32.totalorder %v2450, %v2537
      %vm2738 = vcmp.eq.s32.totalorder %v2450, %v2538
      %vm2739 = vcmp.eq.s32.totalorder %v2453, %v2537
      %vm2740 = vcmp.eq.s32.totalorder %v2453, %v2538
      %vm2741 = vcmp.eq.s32.totalorder %v2456, %v2537
      %vm2742 = vcmp.eq.s32.totalorder %v2456, %v2538
      %vm2743 = vcmp.eq.s32.totalorder %v2459, %v2537
      %vm2744 = vcmp.eq.s32.totalorder %v2459, %v2538
      %vm2745 = vcmp.eq.s32.totalorder %v2462, %v2537
      %vm2746 = vcmp.eq.s32.totalorder %v2462, %v2538
      %vm2747 = vcmp.eq.s32.totalorder %v2465, %v2537
      %vm2748 = vcmp.eq.s32.totalorder %v2465, %v2538
      %vm2749 = vcmp.eq.s32.totalorder %v2468, %v2537
      %vm2750 = vcmp.eq.s32.totalorder %v2468, %v2538
      %vm2751 = vcmp.eq.s32.totalorder %v2471, %v2537
      %vm2752 = vcmp.eq.s32.totalorder %v2471, %v2538
      %vm2753 = vcmp.eq.s32.totalorder %v2474, %v2537
      %vm2754 = vcmp.eq.s32.totalorder %v2474, %v2538
      %vm2755 = vcmp.eq.s32.totalorder %v2477, %v2537
      %vm2756 = vcmp.eq.s32.totalorder %v2477, %v2538
      %vm2757 = vcmp.eq.s32.totalorder %v2480, %v2537
      %vm2758 = vcmp.eq.s32.totalorder %v2480, %v2538
      %vm2759 = vcmp.eq.s32.totalorder %v2483, %v2537
      %vm2760 = vcmp.eq.s32.totalorder %v2483, %v2538
      %vm2761 = vcmp.eq.s32.totalorder %v2486, %v2537
      %vm2762 = vcmp.eq.s32.totalorder %v2486, %v2538
      %vm2763 = vcmp.eq.s32.totalorder %v2489, %v2537
      %vm2764 = vcmp.eq.s32.totalorder %v2489, %v2538
      %vm2765 = vcmp.eq.s32.totalorder %v2492, %v2537
      %vm2766 = vcmp.eq.s32.totalorder %v2492, %v2538
      %vm2767 = vcmp.eq.s32.totalorder %v2495, %v2537
      %vm2768 = vcmp.eq.s32.totalorder %v2495, %v2538
      %vm2769 = vcmp.eq.s32.totalorder %v2498, %v2537
      %vm2770 = vcmp.eq.s32.totalorder %v2498, %v2538
      %vm2771 = vcmp.eq.s32.totalorder %v2501, %v2537
      %vm2772 = vcmp.eq.s32.totalorder %v2501, %v2538
      %vm2773 = vcmp.eq.s32.totalorder %v2504, %v2537
      %vm2774 = vcmp.eq.s32.totalorder %v2504, %v2538
      %vm2775 = vcmp.eq.s32.totalorder %v2507, %v2537
      %vm2776 = vcmp.eq.s32.totalorder %v2507, %v2538
      %vm2777 = vcmp.eq.s32.totalorder %v2510, %v2537
      %vm2778 = vcmp.eq.s32.totalorder %v2510, %v2538
      %vm2779 = vcmp.eq.s32.totalorder %v2513, %v2537
      %vm2780 = vcmp.eq.s32.totalorder %v2513, %v2538
      %vm2781 = vcmp.eq.s32.totalorder %v2516, %v2537
      %vm2782 = vcmp.eq.s32.totalorder %v2516, %v2538
      %vm2783 = vcmp.eq.s32.totalorder %v2519, %v2537
      %vm2784 = vcmp.eq.s32.totalorder %v2519, %v2538
      %vm2785 = vcmp.eq.s32.totalorder %v2522, %v2537
      %vm2786 = vcmp.eq.s32.totalorder %v2522, %v2538
      %vm2787 = vcmp.eq.s32.totalorder %v2525, %v2537
      %vm2788 = vcmp.eq.s32.totalorder %v2525, %v2538
      %vm2789 = vcmp.eq.s32.totalorder %v2528, %v2537
      %vm2790 = vcmp.eq.s32.totalorder %v2528, %v2538
      %vm2791 = vcmp.eq.s32.totalorder %v2531, %v2537
      %vm2792 = vcmp.eq.s32.totalorder %v2531, %v2538
      %vm2793 = vcmp.eq.s32.totalorder %v2534, %v2537
      %vm2794 = vcmp.eq.s32.totalorder %v2534, %v2538
      %v2795 = vperm.slane %v1108, 1
      %v2796 = vperm.slane %v1108, 5
      %v2799 = vperm.slane %v2795, 1
      %v2800 = vperm.slane %v2796, 1
      %v2801 = vsel %vm2539, %v2799, 0.0
      %v2802 = vsel %vm2540, %v2800, 0.0
      %v2803 = vsel %vm2541, %v2799, 0.0
      %v2804 = vsel %vm2542, %v2800, 0.0
      %v2805 = vsel %vm2543, %v2799, 0.0
      %v2806 = vsel %vm2544, %v2800, 0.0
      %v2807 = vsel %vm2545, %v2799, 0.0
      %v2808 = vsel %vm2546, %v2800, 0.0
      %v2809 = vsel %vm2547, %v2799, 0.0
      %v2810 = vsel %vm2548, %v2800, 0.0
      %v2811 = vsel %vm2549, %v2799, 0.0
      %v2812 = vsel %vm2550, %v2800, 0.0
      %v2813 = vsel %vm2551, %v2799, 0.0
      %v2814 = vsel %vm2552, %v2800, 0.0
      %v2815 = vsel %vm2553, %v2799, 0.0
      %v2816 = vsel %vm2554, %v2800, 0.0
      %v2817 = vsel %vm2555, %v2799, 0.0
      %v2818 = vsel %vm2556, %v2800, 0.0
      %v2819 = vsel %vm2557, %v2799, 0.0
      %v2820 = vsel %vm2558, %v2800, 0.0
      %v2821 = vsel %vm2559, %v2799, 0.0
      %v2822 = vsel %vm2560, %v2800, 0.0
      %v2823 = vsel %vm2561, %v2799, 0.0
      %v2824 = vsel %vm2562, %v2800, 0.0
      %v2825 = vsel %vm2563, %v2799, 0.0
      %v2826 = vsel %vm2564, %v2800, 0.0
      %v2827 = vsel %vm2565, %v2799, 0.0
      %v2828 = vsel %vm2566, %v2800, 0.0
      %v2829 = vsel %vm2567, %v2799, 0.0
      %v2830 = vsel %vm2568, %v2800, 0.0
      %v2831 = vsel %vm2569, %v2799, 0.0
      %v2832 = vsel %vm2570, %v2800, 0.0
      %v2833 = vsel %vm2571, %v2799, 0.0
      %v2834 = vsel %vm2572, %v2800, 0.0
      %v2835 = vsel %vm2573, %v2799, 0.0
      %v2836 = vsel %vm2574, %v2800, 0.0
      %v2837 = vsel %vm2575, %v2799, 0.0
      %v2838 = vsel %vm2576, %v2800, 0.0
      %v2839 = vsel %vm2577, %v2799, 0.0
      %v2840 = vsel %vm2578, %v2800, 0.0
      %v2841 = vsel %vm2579, %v2799, 0.0
      %v2842 = vsel %vm2580, %v2800, 0.0
      %v2843 = vsel %vm2581, %v2799, 0.0
      %v2844 = vsel %vm2582, %v2800, 0.0
      %v2845 = vsel %vm2583, %v2799, 0.0
      %v2846 = vsel %vm2584, %v2800, 0.0
      %v2847 = vsel %vm2585, %v2799, 0.0
      %v2848 = vsel %vm2586, %v2800, 0.0
      %v2849 = vsel %vm2587, %v2799, 0.0
      %v2850 = vsel %vm2588, %v2800, 0.0
      %v2851 = vsel %vm2589, %v2799, 0.0
      %v2852 = vsel %vm2590, %v2800, 0.0
      %v2853 = vsel %vm2591, %v2799, 0.0
      %v2854 = vsel %vm2592, %v2800, 0.0
      %v2855 = vsel %vm2593, %v2799, 0.0
      %v2856 = vsel %vm2594, %v2800, 0.0
      %v2857 = vsel %vm2595, %v2799, 0.0
      %v2858 = vsel %vm2596, %v2800, 0.0
      %v2859 = vsel %vm2597, %v2799, 0.0
      %v2860 = vsel %vm2598, %v2800, 0.0
      %v2861 = vsel %vm2599, %v2799, 0.0
      %v2862 = vsel %vm2600, %v2800, 0.0
      %v2863 = vsel %vm2601, %v2799, 0.0
      %v2864 = vsel %vm2602, %v2800, 0.0
      %v2865 = vsel %vm2603, %v2799, 0.0
      %v2866 = vsel %vm2604, %v2800, 0.0
      %v2867 = vsel %vm2605, %v2799, 0.0
      %v2868 = vsel %vm2606, %v2800, 0.0
      %v2869 = vsel %vm2607, %v2799, 0.0
      %v2870 = vsel %vm2608, %v2800, 0.0
      %v2871 = vsel %vm2609, %v2799, 0.0
      %v2872 = vsel %vm2610, %v2800, 0.0
      %v2873 = vsel %vm2611, %v2799, 0.0
      %v2874 = vsel %vm2612, %v2800, 0.0
      %v2875 = vsel %vm2613, %v2799, 0.0
      %v2876 = vsel %vm2614, %v2800, 0.0
      %v2877 = vsel %vm2615, %v2799, 0.0
      %v2878 = vsel %vm2616, %v2800, 0.0
      %v2879 = vsel %vm2617, %v2799, 0.0
      %v2880 = vsel %vm2618, %v2800, 0.0
      %v2881 = vsel %vm2619, %v2799, 0.0
      %v2882 = vsel %vm2620, %v2800, 0.0
      %v2883 = vsel %vm2621, %v2799, 0.0
      %v2884 = vsel %vm2622, %v2800, 0.0
      %v2885 = vsel %vm2623, %v2799, 0.0
      %v2886 = vsel %vm2624, %v2800, 0.0
      %v2887 = vsel %vm2625, %v2799, 0.0
      %v2888 = vsel %vm2626, %v2800, 0.0
      %v2889 = vsel %vm2627, %v2799, 0.0
      %v2890 = vsel %vm2628, %v2800, 0.0
      %v2891 = vsel %vm2629, %v2799, 0.0
      %v2892 = vsel %vm2630, %v2800, 0.0
      %v2893 = vsel %vm2631, %v2799, 0.0
      %v2894 = vsel %vm2632, %v2800, 0.0
      %v2895 = vsel %vm2633, %v2799, 0.0
      %v2896 = vsel %vm2634, %v2800, 0.0
      %v2897 = vsel %vm2635, %v2799, 0.0
      %v2898 = vsel %vm2636, %v2800, 0.0
      %v2899 = vsel %vm2637, %v2799, 0.0
      %v2900 = vsel %vm2638, %v2800, 0.0
      %v2901 = vsel %vm2639, %v2799, 0.0
      %v2902 = vsel %vm2640, %v2800, 0.0
      %v2903 = vsel %vm2641, %v2799, 0.0
      %v2904 = vsel %vm2642, %v2800, 0.0
      %v2905 = vsel %vm2643, %v2799, 0.0
      %v2906 = vsel %vm2644, %v2800, 0.0
      %v2907 = vsel %vm2645, %v2799, 0.0
      %v2908 = vsel %vm2646, %v2800, 0.0
      %v2909 = vsel %vm2647, %v2799, 0.0
      %v2910 = vsel %vm2648, %v2800, 0.0
      %v2911 = vsel %vm2649, %v2799, 0.0
      %v2912 = vsel %vm2650, %v2800, 0.0
      %v2913 = vsel %vm2651, %v2799, 0.0
      %v2914 = vsel %vm2652, %v2800, 0.0
      %v2915 = vsel %vm2653, %v2799, 0.0
      %v2916 = vsel %vm2654, %v2800, 0.0
      %v2917 = vsel %vm2655, %v2799, 0.0
      %v2918 = vsel %vm2656, %v2800, 0.0
      %v2919 = vsel %vm2657, %v2799, 0.0
      %v2920 = vsel %vm2658, %v2800, 0.0
      %v2921 = vsel %vm2659, %v2799, 0.0
      %v2922 = vsel %vm2660, %v2800, 0.0
      %v2923 = vsel %vm2661, %v2799, 0.0
      %v2924 = vsel %vm2662, %v2800, 0.0
      %v2925 = vsel %vm2663, %v2799, 0.0
      %v2926 = vsel %vm2664, %v2800, 0.0
      %v2927 = vsel %vm2665, %v2799, 0.0
      %v2928 = vsel %vm2666, %v2800, 0.0
      %v2929 = vsel %vm2667, %v2799, 0.0
      %v2930 = vsel %vm2668, %v2800, 0.0
      %v2931 = vsel %vm2669, %v2799, 0.0
      %v2932 = vsel %vm2670, %v2800, 0.0
      %v2933 = vsel %vm2671, %v2799, 0.0
      %v2934 = vsel %vm2672, %v2800, 0.0
      %v2935 = vsel %vm2673, %v2799, 0.0
      %v2936 = vsel %vm2674, %v2800, 0.0
      %v2937 = vsel %vm2675, %v2799, 0.0
      %v2938 = vsel %vm2676, %v2800, 0.0
      %v2939 = vsel %vm2677, %v2799, 0.0
      %v2940 = vsel %vm2678, %v2800, 0.0
      %v2941 = vsel %vm2679, %v2799, 0.0
      %v2942 = vsel %vm2680, %v2800, 0.0
      %v2943 = vsel %vm2681, %v2799, 0.0
      %v2944 = vsel %vm2682, %v2800, 0.0
      %v2945 = vsel %vm2683, %v2799, 0.0
      %v2946 = vsel %vm2684, %v2800, 0.0
      %v2947 = vsel %vm2685, %v2799, 0.0
      %v2948 = vsel %vm2686, %v2800, 0.0
      %v2949 = vsel %vm2687, %v2799, 0.0
      %v2950 = vsel %vm2688, %v2800, 0.0
      %v2951 = vsel %vm2689, %v2799, 0.0
      %v2952 = vsel %vm2690, %v2800, 0.0
      %v2953 = vsel %vm2691, %v2799, 0.0
      %v2954 = vsel %vm2692, %v2800, 0.0
      %v2955 = vsel %vm2693, %v2799, 0.0
      %v2956 = vsel %vm2694, %v2800, 0.0
      %v2957 = vsel %vm2695, %v2799, 0.0
      %v2958 = vsel %vm2696, %v2800, 0.0
      %v2959 = vsel %vm2697, %v2799, 0.0
      %v2960 = vsel %vm2698, %v2800, 0.0
      %v2961 = vsel %vm2699, %v2799, 0.0
      %v2962 = vsel %vm2700, %v2800, 0.0
      %v2963 = vsel %vm2701, %v2799, 0.0
      %v2964 = vsel %vm2702, %v2800, 0.0
      %v2965 = vsel %vm2703, %v2799, 0.0
      %v2966 = vsel %vm2704, %v2800, 0.0
      %v2967 = vsel %vm2705, %v2799, 0.0
      %v2968 = vsel %vm2706, %v2800, 0.0
      %v2969 = vsel %vm2707, %v2799, 0.0
      %v2970 = vsel %vm2708, %v2800, 0.0
      %v2971 = vsel %vm2709, %v2799, 0.0
      %v2972 = vsel %vm2710, %v2800, 0.0
      %v2973 = vsel %vm2711, %v2799, 0.0
      %v2974 = vsel %vm2712, %v2800, 0.0
      %v2975 = vsel %vm2713, %v2799, 0.0
      %v2976 = vsel %vm2714, %v2800, 0.0
      %v2977 = vsel %vm2715, %v2799, 0.0
      %v2978 = vsel %vm2716, %v2800, 0.0
      %v2979 = vsel %vm2717, %v2799, 0.0
      %v2980 = vsel %vm2718, %v2800, 0.0
      %v2981 = vsel %vm2719, %v2799, 0.0
      %v2982 = vsel %vm2720, %v2800, 0.0
      %v2983 = vsel %vm2721, %v2799, 0.0
      %v2984 = vsel %vm2722, %v2800, 0.0
      %v2985 = vsel %vm2723, %v2799, 0.0
      %v2986 = vsel %vm2724, %v2800, 0.0
      %v2987 = vsel %vm2725, %v2799, 0.0
      %v2988 = vsel %vm2726, %v2800, 0.0
      %v2989 = vsel %vm2727, %v2799, 0.0
      %v2990 = vsel %vm2728, %v2800, 0.0
      %v2991 = vsel %vm2729, %v2799, 0.0
      %v2992 = vsel %vm2730, %v2800, 0.0
      %v2993 = vsel %vm2731, %v2799, 0.0
      %v2994 = vsel %vm2732, %v2800, 0.0
      %v2995 = vsel %vm2733, %v2799, 0.0
      %v2996 = vsel %vm2734, %v2800, 0.0
      %v2997 = vsel %vm2735, %v2799, 0.0
      %v2998 = vsel %vm2736, %v2800, 0.0
      %v2999 = vsel %vm2737, %v2799, 0.0
      %v3000 = vsel %vm2738, %v2800, 0.0
      %v3001 = vsel %vm2739, %v2799, 0.0
      %v3002 = vsel %vm2740, %v2800, 0.0
      %v3003 = vsel %vm2741, %v2799, 0.0
      %v3004 = vsel %vm2742, %v2800, 0.0
      %v3005 = vsel %vm2743, %v2799, 0.0
      %v3006 = vsel %vm2744, %v2800, 0.0
      %v3007 = vsel %vm2745, %v2799, 0.0
      %v3008 = vsel %vm2746, %v2800, 0.0
      %v3009 = vsel %vm2747, %v2799, 0.0
      %v3010 = vsel %vm2748, %v2800, 0.0
      %v3011 = vsel %vm2749, %v2799, 0.0
      %v3012 = vsel %vm2750, %v2800, 0.0
      %v3013 = vsel %vm2751, %v2799, 0.0
      %v3014 = vsel %vm2752, %v2800, 0.0
      %v3015 = vsel %vm2753, %v2799, 0.0
      %v3016 = vsel %vm2754, %v2800, 0.0
      %v3017 = vsel %vm2755, %v2799, 0.0
      %v3018 = vsel %vm2756, %v2800, 0.0
      %v3019 = vsel %vm2757, %v2799, 0.0
      %v3020 = vsel %vm2758, %v2800, 0.0
      %v3021 = vsel %vm2759, %v2799, 0.0
      %v3022 = vsel %vm2760, %v2800, 0.0
      %v3023 = vsel %vm2761, %v2799, 0.0
      %v3024 = vsel %vm2762, %v2800, 0.0
      %v3025 = vsel %vm2763, %v2799, 0.0
      %v3026 = vsel %vm2764, %v2800, 0.0
      %v3027 = vsel %vm2765, %v2799, 0.0
      %v3028 = vsel %vm2766, %v2800, 0.0
      %v3029 = vsel %vm2767, %v2799, 0.0
      %v3030 = vsel %vm2768, %v2800, 0.0
      %v3031 = vsel %vm2769, %v2799, 0.0
      %v3032 = vsel %vm2770, %v2800, 0.0
      %v3033 = vsel %vm2771, %v2799, 0.0
      %v3034 = vsel %vm2772, %v2800, 0.0
      %v3035 = vsel %vm2773, %v2799, 0.0
      %v3036 = vsel %vm2774, %v2800, 0.0
      %v3037 = vsel %vm2775, %v2799, 0.0
      %v3038 = vsel %vm2776, %v2800, 0.0
      %v3039 = vsel %vm2777, %v2799, 0.0
      %v3040 = vsel %vm2778, %v2800, 0.0
      %v3041 = vsel %vm2779, %v2799, 0.0
      %v3042 = vsel %vm2780, %v2800, 0.0
      %v3043 = vsel %vm2781, %v2799, 0.0
      %v3044 = vsel %vm2782, %v2800, 0.0
      %v3045 = vsel %vm2783, %v2799, 0.0
      %v3046 = vsel %vm2784, %v2800, 0.0
      %v3047 = vsel %vm2785, %v2799, 0.0
      %v3048 = vsel %vm2786, %v2800, 0.0
      %v3049 = vsel %vm2787, %v2799, 0.0
      %v3050 = vsel %vm2788, %v2800, 0.0
      %v3051 = vsel %vm2789, %v2799, 0.0
      %v3052 = vsel %vm2790, %v2800, 0.0
      %v3053 = vsel %vm2791, %v2799, 0.0
      %v3054 = vsel %vm2792, %v2800, 0.0
      %v3055 = vsel %vm2793, %v2799, 0.0
      %v3056 = vsel %vm2794, %v2800, 0.0
      %v3057 = vperm.slane %v462, 1
      %v3058 = vperm.slane %v462, 5
      %v3059 = vperm.slane %v3057, 1
      %v3060 = vperm.slane %v3058, 1
      %vm3061 = vcmp.eq.s32.totalorder %v2153, %v3059
      %vm3062 = vcmp.eq.s32.totalorder %v2153, %v3060
      %vm3063 = vcmp.eq.s32.totalorder %v2156, %v3059
      %vm3064 = vcmp.eq.s32.totalorder %v2156, %v3060
      %vm3065 = vcmp.eq.s32.totalorder %v2159, %v3059
      %vm3066 = vcmp.eq.s32.totalorder %v2159, %v3060
      %vm3067 = vcmp.eq.s32.totalorder %v2162, %v3059
      %vm3068 = vcmp.eq.s32.totalorder %v2162, %v3060
      %vm3069 = vcmp.eq.s32.totalorder %v2165, %v3059
      %vm3070 = vcmp.eq.s32.totalorder %v2165, %v3060
      %vm3071 = vcmp.eq.s32.totalorder %v2168, %v3059
      %vm3072 = vcmp.eq.s32.totalorder %v2168, %v3060
      %vm3073 = vcmp.eq.s32.totalorder %v2171, %v3059
      %vm3074 = vcmp.eq.s32.totalorder %v2171, %v3060
      %vm3075 = vcmp.eq.s32.totalorder %v2174, %v3059
      %vm3076 = vcmp.eq.s32.totalorder %v2174, %v3060
      %vm3077 = vcmp.eq.s32.totalorder %v2177, %v3059
      %vm3078 = vcmp.eq.s32.totalorder %v2177, %v3060
      %vm3079 = vcmp.eq.s32.totalorder %v2180, %v3059
      %vm3080 = vcmp.eq.s32.totalorder %v2180, %v3060
      %vm3081 = vcmp.eq.s32.totalorder %v2183, %v3059
      %vm3082 = vcmp.eq.s32.totalorder %v2183, %v3060
      %vm3083 = vcmp.eq.s32.totalorder %v2186, %v3059
      %vm3084 = vcmp.eq.s32.totalorder %v2186, %v3060
      %vm3085 = vcmp.eq.s32.totalorder %v2189, %v3059
      %vm3086 = vcmp.eq.s32.totalorder %v2189, %v3060
      %vm3087 = vcmp.eq.s32.totalorder %v2192, %v3059
      %vm3088 = vcmp.eq.s32.totalorder %v2192, %v3060
      %vm3089 = vcmp.eq.s32.totalorder %v2195, %v3059
      %vm3090 = vcmp.eq.s32.totalorder %v2195, %v3060
      %vm3091 = vcmp.eq.s32.totalorder %v2198, %v3059
      %vm3092 = vcmp.eq.s32.totalorder %v2198, %v3060
      %vm3093 = vcmp.eq.s32.totalorder %v2201, %v3059
      %vm3094 = vcmp.eq.s32.totalorder %v2201, %v3060
      %vm3095 = vcmp.eq.s32.totalorder %v2204, %v3059
      %vm3096 = vcmp.eq.s32.totalorder %v2204, %v3060
      %vm3097 = vcmp.eq.s32.totalorder %v2207, %v3059
      %vm3098 = vcmp.eq.s32.totalorder %v2207, %v3060
      %vm3099 = vcmp.eq.s32.totalorder %v2210, %v3059
      %vm3100 = vcmp.eq.s32.totalorder %v2210, %v3060
      %vm3101 = vcmp.eq.s32.totalorder %v2213, %v3059
      %vm3102 = vcmp.eq.s32.totalorder %v2213, %v3060
      %vm3103 = vcmp.eq.s32.totalorder %v2216, %v3059
      %vm3104 = vcmp.eq.s32.totalorder %v2216, %v3060
      %vm3105 = vcmp.eq.s32.totalorder %v2219, %v3059
      %vm3106 = vcmp.eq.s32.totalorder %v2219, %v3060
      %vm3107 = vcmp.eq.s32.totalorder %v2222, %v3059
      %vm3108 = vcmp.eq.s32.totalorder %v2222, %v3060
      %vm3109 = vcmp.eq.s32.totalorder %v2225, %v3059
      %vm3110 = vcmp.eq.s32.totalorder %v2225, %v3060
      %vm3111 = vcmp.eq.s32.totalorder %v2228, %v3059
      %vm3112 = vcmp.eq.s32.totalorder %v2228, %v3060
      %vm3113 = vcmp.eq.s32.totalorder %v2231, %v3059
      %vm3114 = vcmp.eq.s32.totalorder %v2231, %v3060
      %vm3115 = vcmp.eq.s32.totalorder %v2234, %v3059
      %vm3116 = vcmp.eq.s32.totalorder %v2234, %v3060
      %vm3117 = vcmp.eq.s32.totalorder %v2237, %v3059
      %vm3118 = vcmp.eq.s32.totalorder %v2237, %v3060
      %vm3119 = vcmp.eq.s32.totalorder %v2240, %v3059
      %vm3120 = vcmp.eq.s32.totalorder %v2240, %v3060
      %vm3121 = vcmp.eq.s32.totalorder %v2243, %v3059
      %vm3122 = vcmp.eq.s32.totalorder %v2243, %v3060
      %vm3123 = vcmp.eq.s32.totalorder %v2246, %v3059
      %vm3124 = vcmp.eq.s32.totalorder %v2246, %v3060
      %vm3125 = vcmp.eq.s32.totalorder %v2249, %v3059
      %vm3126 = vcmp.eq.s32.totalorder %v2249, %v3060
      %vm3127 = vcmp.eq.s32.totalorder %v2252, %v3059
      %vm3128 = vcmp.eq.s32.totalorder %v2252, %v3060
      %vm3129 = vcmp.eq.s32.totalorder %v2255, %v3059
      %vm3130 = vcmp.eq.s32.totalorder %v2255, %v3060
      %vm3131 = vcmp.eq.s32.totalorder %v2258, %v3059
      %vm3132 = vcmp.eq.s32.totalorder %v2258, %v3060
      %vm3133 = vcmp.eq.s32.totalorder %v2261, %v3059
      %vm3134 = vcmp.eq.s32.totalorder %v2261, %v3060
      %vm3135 = vcmp.eq.s32.totalorder %v2264, %v3059
      %vm3136 = vcmp.eq.s32.totalorder %v2264, %v3060
      %vm3137 = vcmp.eq.s32.totalorder %v2267, %v3059
      %vm3138 = vcmp.eq.s32.totalorder %v2267, %v3060
      %vm3139 = vcmp.eq.s32.totalorder %v2270, %v3059
      %vm3140 = vcmp.eq.s32.totalorder %v2270, %v3060
      %vm3141 = vcmp.eq.s32.totalorder %v2273, %v3059
      %vm3142 = vcmp.eq.s32.totalorder %v2273, %v3060
      %vm3143 = vcmp.eq.s32.totalorder %v2276, %v3059
      %vm3144 = vcmp.eq.s32.totalorder %v2276, %v3060
      %vm3145 = vcmp.eq.s32.totalorder %v2279, %v3059
      %vm3146 = vcmp.eq.s32.totalorder %v2279, %v3060
      %vm3147 = vcmp.eq.s32.totalorder %v2282, %v3059
      %vm3148 = vcmp.eq.s32.totalorder %v2282, %v3060
      %vm3149 = vcmp.eq.s32.totalorder %v2285, %v3059
      %vm3150 = vcmp.eq.s32.totalorder %v2285, %v3060
      %vm3151 = vcmp.eq.s32.totalorder %v2288, %v3059
      %vm3152 = vcmp.eq.s32.totalorder %v2288, %v3060
      %vm3153 = vcmp.eq.s32.totalorder %v2291, %v3059
      %vm3154 = vcmp.eq.s32.totalorder %v2291, %v3060
      %vm3155 = vcmp.eq.s32.totalorder %v2294, %v3059
      %vm3156 = vcmp.eq.s32.totalorder %v2294, %v3060
      %vm3157 = vcmp.eq.s32.totalorder %v2297, %v3059
      %vm3158 = vcmp.eq.s32.totalorder %v2297, %v3060
      %vm3159 = vcmp.eq.s32.totalorder %v2300, %v3059
      %vm3160 = vcmp.eq.s32.totalorder %v2300, %v3060
      %vm3161 = vcmp.eq.s32.totalorder %v2303, %v3059
      %vm3162 = vcmp.eq.s32.totalorder %v2303, %v3060
      %vm3163 = vcmp.eq.s32.totalorder %v2306, %v3059
      %vm3164 = vcmp.eq.s32.totalorder %v2306, %v3060
      %vm3165 = vcmp.eq.s32.totalorder %v2309, %v3059
      %vm3166 = vcmp.eq.s32.totalorder %v2309, %v3060
      %vm3167 = vcmp.eq.s32.totalorder %v2312, %v3059
      %vm3168 = vcmp.eq.s32.totalorder %v2312, %v3060
      %vm3169 = vcmp.eq.s32.totalorder %v2315, %v3059
      %vm3170 = vcmp.eq.s32.totalorder %v2315, %v3060
      %vm3171 = vcmp.eq.s32.totalorder %v2318, %v3059
      %vm3172 = vcmp.eq.s32.totalorder %v2318, %v3060
      %vm3173 = vcmp.eq.s32.totalorder %v2321, %v3059
      %vm3174 = vcmp.eq.s32.totalorder %v2321, %v3060
      %vm3175 = vcmp.eq.s32.totalorder %v2324, %v3059
      %vm3176 = vcmp.eq.s32.totalorder %v2324, %v3060
      %vm3177 = vcmp.eq.s32.totalorder %v2327, %v3059
      %vm3178 = vcmp.eq.s32.totalorder %v2327, %v3060
      %vm3179 = vcmp.eq.s32.totalorder %v2330, %v3059
      %vm3180 = vcmp.eq.s32.totalorder %v2330, %v3060
      %vm3181 = vcmp.eq.s32.totalorder %v2333, %v3059
      %vm3182 = vcmp.eq.s32.totalorder %v2333, %v3060
      %vm3183 = vcmp.eq.s32.totalorder %v2336, %v3059
      %vm3184 = vcmp.eq.s32.totalorder %v2336, %v3060
      %vm3185 = vcmp.eq.s32.totalorder %v2339, %v3059
      %vm3186 = vcmp.eq.s32.totalorder %v2339, %v3060
      %vm3187 = vcmp.eq.s32.totalorder %v2342, %v3059
      %vm3188 = vcmp.eq.s32.totalorder %v2342, %v3060
      %vm3189 = vcmp.eq.s32.totalorder %v2345, %v3059
      %vm3190 = vcmp.eq.s32.totalorder %v2345, %v3060
      %vm3191 = vcmp.eq.s32.totalorder %v2348, %v3059
      %vm3192 = vcmp.eq.s32.totalorder %v2348, %v3060
      %vm3193 = vcmp.eq.s32.totalorder %v2351, %v3059
      %vm3194 = vcmp.eq.s32.totalorder %v2351, %v3060
      %vm3195 = vcmp.eq.s32.totalorder %v2354, %v3059
      %vm3196 = vcmp.eq.s32.totalorder %v2354, %v3060
      %vm3197 = vcmp.eq.s32.totalorder %v2357, %v3059
      %vm3198 = vcmp.eq.s32.totalorder %v2357, %v3060
      %vm3199 = vcmp.eq.s32.totalorder %v2360, %v3059
      %vm3200 = vcmp.eq.s32.totalorder %v2360, %v3060
      %vm3201 = vcmp.eq.s32.totalorder %v2363, %v3059
      %vm3202 = vcmp.eq.s32.totalorder %v2363, %v3060
      %vm3203 = vcmp.eq.s32.totalorder %v2366, %v3059
      %vm3204 = vcmp.eq.s32.totalorder %v2366, %v3060
      %vm3205 = vcmp.eq.s32.totalorder %v2369, %v3059
      %vm3206 = vcmp.eq.s32.totalorder %v2369, %v3060
      %vm3207 = vcmp.eq.s32.totalorder %v2372, %v3059
      %vm3208 = vcmp.eq.s32.totalorder %v2372, %v3060
      %vm3209 = vcmp.eq.s32.totalorder %v2375, %v3059
      %vm3210 = vcmp.eq.s32.totalorder %v2375, %v3060
      %vm3211 = vcmp.eq.s32.totalorder %v2378, %v3059
      %vm3212 = vcmp.eq.s32.totalorder %v2378, %v3060
      %vm3213 = vcmp.eq.s32.totalorder %v2381, %v3059
      %vm3214 = vcmp.eq.s32.totalorder %v2381, %v3060
      %vm3215 = vcmp.eq.s32.totalorder %v2384, %v3059
      %vm3216 = vcmp.eq.s32.totalorder %v2384, %v3060
      %vm3217 = vcmp.eq.s32.totalorder %v2387, %v3059
      %vm3218 = vcmp.eq.s32.totalorder %v2387, %v3060
      %vm3219 = vcmp.eq.s32.totalorder %v2390, %v3059
      %vm3220 = vcmp.eq.s32.totalorder %v2390, %v3060
      %vm3221 = vcmp.eq.s32.totalorder %v2393, %v3059
      %vm3222 = vcmp.eq.s32.totalorder %v2393, %v3060
      %vm3223 = vcmp.eq.s32.totalorder %v2396, %v3059
      %vm3224 = vcmp.eq.s32.totalorder %v2396, %v3060
      %vm3225 = vcmp.eq.s32.totalorder %v2399, %v3059
      %vm3226 = vcmp.eq.s32.totalorder %v2399, %v3060
      %vm3227 = vcmp.eq.s32.totalorder %v2402, %v3059
      %vm3228 = vcmp.eq.s32.totalorder %v2402, %v3060
      %vm3229 = vcmp.eq.s32.totalorder %v2405, %v3059
      %vm3230 = vcmp.eq.s32.totalorder %v2405, %v3060
      %vm3231 = vcmp.eq.s32.totalorder %v2408, %v3059
      %vm3232 = vcmp.eq.s32.totalorder %v2408, %v3060
      %vm3233 = vcmp.eq.s32.totalorder %v2411, %v3059
      %vm3234 = vcmp.eq.s32.totalorder %v2411, %v3060
      %vm3235 = vcmp.eq.s32.totalorder %v2414, %v3059
      %vm3236 = vcmp.eq.s32.totalorder %v2414, %v3060
      %vm3237 = vcmp.eq.s32.totalorder %v2417, %v3059
      %vm3238 = vcmp.eq.s32.totalorder %v2417, %v3060
      %vm3239 = vcmp.eq.s32.totalorder %v2420, %v3059
      %vm3240 = vcmp.eq.s32.totalorder %v2420, %v3060
      %vm3241 = vcmp.eq.s32.totalorder %v2423, %v3059
      %vm3242 = vcmp.eq.s32.totalorder %v2423, %v3060
      %vm3243 = vcmp.eq.s32.totalorder %v2426, %v3059
      %vm3244 = vcmp.eq.s32.totalorder %v2426, %v3060
      %vm3245 = vcmp.eq.s32.totalorder %v2429, %v3059
      %vm3246 = vcmp.eq.s32.totalorder %v2429, %v3060
      %vm3247 = vcmp.eq.s32.totalorder %v2432, %v3059
      %vm3248 = vcmp.eq.s32.totalorder %v2432, %v3060
      %vm3249 = vcmp.eq.s32.totalorder %v2435, %v3059
      %vm3250 = vcmp.eq.s32.totalorder %v2435, %v3060
      %vm3251 = vcmp.eq.s32.totalorder %v2438, %v3059
      %vm3252 = vcmp.eq.s32.totalorder %v2438, %v3060
      %vm3253 = vcmp.eq.s32.totalorder %v2441, %v3059
      %vm3254 = vcmp.eq.s32.totalorder %v2441, %v3060
      %vm3255 = vcmp.eq.s32.totalorder %v2444, %v3059
      %vm3256 = vcmp.eq.s32.totalorder %v2444, %v3060
      %vm3257 = vcmp.eq.s32.totalorder %v2447, %v3059
      %vm3258 = vcmp.eq.s32.totalorder %v2447, %v3060
      %vm3259 = vcmp.eq.s32.totalorder %v2450, %v3059
      %vm3260 = vcmp.eq.s32.totalorder %v2450, %v3060
      %vm3261 = vcmp.eq.s32.totalorder %v2453, %v3059
      %vm3262 = vcmp.eq.s32.totalorder %v2453, %v3060
      %vm3263 = vcmp.eq.s32.totalorder %v2456, %v3059
      %vm3264 = vcmp.eq.s32.totalorder %v2456, %v3060
      %vm3265 = vcmp.eq.s32.totalorder %v2459, %v3059
      %vm3266 = vcmp.eq.s32.totalorder %v2459, %v3060
      %vm3267 = vcmp.eq.s32.totalorder %v2462, %v3059
      %vm3268 = vcmp.eq.s32.totalorder %v2462, %v3060
      %vm3269 = vcmp.eq.s32.totalorder %v2465, %v3059
      %vm3270 = vcmp.eq.s32.totalorder %v2465, %v3060
      %vm3271 = vcmp.eq.s32.totalorder %v2468, %v3059
      %vm3272 = vcmp.eq.s32.totalorder %v2468, %v3060
      %vm3273 = vcmp.eq.s32.totalorder %v2471, %v3059
      %vm3274 = vcmp.eq.s32.totalorder %v2471, %v3060
      %vm3275 = vcmp.eq.s32.totalorder %v2474, %v3059
      %vm3276 = vcmp.eq.s32.totalorder %v2474, %v3060
      %vm3277 = vcmp.eq.s32.totalorder %v2477, %v3059
      %vm3278 = vcmp.eq.s32.totalorder %v2477, %v3060
      %vm3279 = vcmp.eq.s32.totalorder %v2480, %v3059
      %vm3280 = vcmp.eq.s32.totalorder %v2480, %v3060
      %vm3281 = vcmp.eq.s32.totalorder %v2483, %v3059
      %vm3282 = vcmp.eq.s32.totalorder %v2483, %v3060
      %vm3283 = vcmp.eq.s32.totalorder %v2486, %v3059
      %vm3284 = vcmp.eq.s32.totalorder %v2486, %v3060
      %vm3285 = vcmp.eq.s32.totalorder %v2489, %v3059
      %vm3286 = vcmp.eq.s32.totalorder %v2489, %v3060
      %vm3287 = vcmp.eq.s32.totalorder %v2492, %v3059
      %vm3288 = vcmp.eq.s32.totalorder %v2492, %v3060
      %vm3289 = vcmp.eq.s32.totalorder %v2495, %v3059
      %vm3290 = vcmp.eq.s32.totalorder %v2495, %v3060
      %vm3291 = vcmp.eq.s32.totalorder %v2498, %v3059
      %vm3292 = vcmp.eq.s32.totalorder %v2498, %v3060
      %vm3293 = vcmp.eq.s32.totalorder %v2501, %v3059
      %vm3294 = vcmp.eq.s32.totalorder %v2501, %v3060
      %vm3295 = vcmp.eq.s32.totalorder %v2504, %v3059
      %vm3296 = vcmp.eq.s32.totalorder %v2504, %v3060
      %vm3297 = vcmp.eq.s32.totalorder %v2507, %v3059
      %vm3298 = vcmp.eq.s32.totalorder %v2507, %v3060
      %vm3299 = vcmp.eq.s32.totalorder %v2510, %v3059
      %vm3300 = vcmp.eq.s32.totalorder %v2510, %v3060
      %vm3301 = vcmp.eq.s32.totalorder %v2513, %v3059
      %vm3302 = vcmp.eq.s32.totalorder %v2513, %v3060
      %vm3303 = vcmp.eq.s32.totalorder %v2516, %v3059
      %vm3304 = vcmp.eq.s32.totalorder %v2516, %v3060
      %vm3305 = vcmp.eq.s32.totalorder %v2519, %v3059
      %vm3306 = vcmp.eq.s32.totalorder %v2519, %v3060
      %vm3307 = vcmp.eq.s32.totalorder %v2522, %v3059
      %vm3308 = vcmp.eq.s32.totalorder %v2522, %v3060
      %vm3309 = vcmp.eq.s32.totalorder %v2525, %v3059
      %vm3310 = vcmp.eq.s32.totalorder %v2525, %v3060
      %vm3311 = vcmp.eq.s32.totalorder %v2528, %v3059
      %vm3312 = vcmp.eq.s32.totalorder %v2528, %v3060
      %vm3313 = vcmp.eq.s32.totalorder %v2531, %v3059
      %vm3314 = vcmp.eq.s32.totalorder %v2531, %v3060
      %vm3315 = vcmp.eq.s32.totalorder %v2534, %v3059
      %vm3316 = vcmp.eq.s32.totalorder %v2534, %v3060
      %v3317 = vperm.slane %v463, 1
      %v3318 = vperm.slane %v463, 5
      %v3321 = vperm.slane %v3317, 1
      %v3322 = vperm.slane %v3318, 1
      %v3323 = vsel %vm3061, %v3321, 0.0
      %v3324 = vsel %vm3062, %v3322, 0.0
      %v3325 = vsel %vm3063, %v3321, 0.0
      %v3326 = vsel %vm3064, %v3322, 0.0
      %v3327 = vsel %vm3065, %v3321, 0.0
      %v3328 = vsel %vm3066, %v3322, 0.0
      %v3329 = vsel %vm3067, %v3321, 0.0
      %v3330 = vsel %vm3068, %v3322, 0.0
      %v3331 = vsel %vm3069, %v3321, 0.0
      %v3332 = vsel %vm3070, %v3322, 0.0
      %v3333 = vsel %vm3071, %v3321, 0.0
      %v3334 = vsel %vm3072, %v3322, 0.0
      %v3335 = vsel %vm3073, %v3321, 0.0
      %v3336 = vsel %vm3074, %v3322, 0.0
      %v3337 = vsel %vm3075, %v3321, 0.0
      %v3338 = vsel %vm3076, %v3322, 0.0
      %v3339 = vsel %vm3077, %v3321, 0.0
      %v3340 = vsel %vm3078, %v3322, 0.0
      %v3341 = vsel %vm3079, %v3321, 0.0
      %v3342 = vsel %vm3080, %v3322, 0.0
      %v3343 = vsel %vm3081, %v3321, 0.0
      %v3344 = vsel %vm3082, %v3322, 0.0
      %v3345 = vsel %vm3083, %v3321, 0.0
      %v3346 = vsel %vm3084, %v3322, 0.0
      %v3347 = vsel %vm3085, %v3321, 0.0
      %v3348 = vsel %vm3086, %v3322, 0.0
      %v3349 = vsel %vm3087, %v3321, 0.0
      %v3350 = vsel %vm3088, %v3322, 0.0
      %v3351 = vsel %vm3089, %v3321, 0.0
      %v3352 = vsel %vm3090, %v3322, 0.0
      %v3353 = vsel %vm3091, %v3321, 0.0
      %v3354 = vsel %vm3092, %v3322, 0.0
      %v3355 = vsel %vm3093, %v3321, 0.0
      %v3356 = vsel %vm3094, %v3322, 0.0
      %v3357 = vsel %vm3095, %v3321, 0.0
      %v3358 = vsel %vm3096, %v3322, 0.0
      %v3359 = vsel %vm3097, %v3321, 0.0
      %v3360 = vsel %vm3098, %v3322, 0.0
      %v3361 = vsel %vm3099, %v3321, 0.0
      %v3362 = vsel %vm3100, %v3322, 0.0
      %v3363 = vsel %vm3101, %v3321, 0.0
      %v3364 = vsel %vm3102, %v3322, 0.0
      %v3365 = vsel %vm3103, %v3321, 0.0
      %v3366 = vsel %vm3104, %v3322, 0.0
      %v3367 = vsel %vm3105, %v3321, 0.0
      %v3368 = vsel %vm3106, %v3322, 0.0
      %v3369 = vsel %vm3107, %v3321, 0.0
      %v3370 = vsel %vm3108, %v3322, 0.0
      %v3371 = vsel %vm3109, %v3321, 0.0
      %v3372 = vsel %vm3110, %v3322, 0.0
      %v3373 = vsel %vm3111, %v3321, 0.0
      %v3374 = vsel %vm3112, %v3322, 0.0
      %v3375 = vsel %vm3113, %v3321, 0.0
      %v3376 = vsel %vm3114, %v3322, 0.0
      %v3377 = vsel %vm3115, %v3321, 0.0
      %v3378 = vsel %vm3116, %v3322, 0.0
      %v3379 = vsel %vm3117, %v3321, 0.0
      %v3380 = vsel %vm3118, %v3322, 0.0
      %v3381 = vsel %vm3119, %v3321, 0.0
      %v3382 = vsel %vm3120, %v3322, 0.0
      %v3383 = vsel %vm3121, %v3321, 0.0
      %v3384 = vsel %vm3122, %v3322, 0.0
      %v3385 = vsel %vm3123, %v3321, 0.0
      %v3386 = vsel %vm3124, %v3322, 0.0
      %v3387 = vsel %vm3125, %v3321, 0.0
      %v3388 = vsel %vm3126, %v3322, 0.0
      %v3389 = vsel %vm3127, %v3321, 0.0
      %v3390 = vsel %vm3128, %v3322, 0.0
      %v3391 = vsel %vm3129, %v3321, 0.0
      %v3392 = vsel %vm3130, %v3322, 0.0
      %v3393 = vsel %vm3131, %v3321, 0.0
      %v3394 = vsel %vm3132, %v3322, 0.0
      %v3395 = vsel %vm3133, %v3321, 0.0
      %v3396 = vsel %vm3134, %v3322, 0.0
      %v3397 = vsel %vm3135, %v3321, 0.0
      %v3398 = vsel %vm3136, %v3322, 0.0
      %v3399 = vsel %vm3137, %v3321, 0.0
      %v3400 = vsel %vm3138, %v3322, 0.0
      %v3401 = vsel %vm3139, %v3321, 0.0
      %v3402 = vsel %vm3140, %v3322, 0.0
      %v3403 = vsel %vm3141, %v3321, 0.0
      %v3404 = vsel %vm3142, %v3322, 0.0
      %v3405 = vsel %vm3143, %v3321, 0.0
      %v3406 = vsel %vm3144, %v3322, 0.0
      %v3407 = vsel %vm3145, %v3321, 0.0
      %v3408 = vsel %vm3146, %v3322, 0.0
      %v3409 = vsel %vm3147, %v3321, 0.0
      %v3410 = vsel %vm3148, %v3322, 0.0
      %v3411 = vsel %vm3149, %v3321, 0.0
      %v3412 = vsel %vm3150, %v3322, 0.0
      %v3413 = vsel %vm3151, %v3321, 0.0
      %v3414 = vsel %vm3152, %v3322, 0.0
      %v3415 = vsel %vm3153, %v3321, 0.0
      %v3416 = vsel %vm3154, %v3322, 0.0
      %v3417 = vsel %vm3155, %v3321, 0.0
      %v3418 = vsel %vm3156, %v3322, 0.0
      %v3419 = vsel %vm3157, %v3321, 0.0
      %v3420 = vsel %vm3158, %v3322, 0.0
      %v3421 = vsel %vm3159, %v3321, 0.0
      %v3422 = vsel %vm3160, %v3322, 0.0
      %v3423 = vsel %vm3161, %v3321, 0.0
      %v3424 = vsel %vm3162, %v3322, 0.0
      %v3425 = vsel %vm3163, %v3321, 0.0
      %v3426 = vsel %vm3164, %v3322, 0.0
      %v3427 = vsel %vm3165, %v3321, 0.0
      %v3428 = vsel %vm3166, %v3322, 0.0
      %v3429 = vsel %vm3167, %v3321, 0.0
      %v3430 = vsel %vm3168, %v3322, 0.0
      %v3431 = vsel %vm3169, %v3321, 0.0
      %v3432 = vsel %vm3170, %v3322, 0.0
      %v3433 = vsel %vm3171, %v3321, 0.0
      %v3434 = vsel %vm3172, %v3322, 0.0
      %v3435 = vsel %vm3173, %v3321, 0.0
      %v3436 = vsel %vm3174, %v3322, 0.0
      %v3437 = vsel %vm3175, %v3321, 0.0
      %v3438 = vsel %vm3176, %v3322, 0.0
      %v3439 = vsel %vm3177, %v3321, 0.0
      %v3440 = vsel %vm3178, %v3322, 0.0
      %v3441 = vsel %vm3179, %v3321, 0.0
      %v3442 = vsel %vm3180, %v3322, 0.0
      %v3443 = vsel %vm3181, %v3321, 0.0
      %v3444 = vsel %vm3182, %v3322, 0.0
      %v3445 = vsel %vm3183, %v3321, 0.0
      %v3446 = vsel %vm3184, %v3322, 0.0
      %v3447 = vsel %vm3185, %v3321, 0.0
      %v3448 = vsel %vm3186, %v3322, 0.0
      %v3449 = vsel %vm3187, %v3321, 0.0
      %v3450 = vsel %vm3188, %v3322, 0.0
      %v3451 = vsel %vm3189, %v3321, 0.0
      %v3452 = vsel %vm3190, %v3322, 0.0
      %v3453 = vsel %vm3191, %v3321, 0.0
      %v3454 = vsel %vm3192, %v3322, 0.0
      %v3455 = vsel %vm3193, %v3321, 0.0
      %v3456 = vsel %vm3194, %v3322, 0.0
      %v3457 = vsel %vm3195, %v3321, 0.0
      %v3458 = vsel %vm3196, %v3322, 0.0
      %v3459 = vsel %vm3197, %v3321, 0.0
      %v3460 = vsel %vm3198, %v3322, 0.0
      %v3461 = vsel %vm3199, %v3321, 0.0
      %v3462 = vsel %vm3200, %v3322, 0.0
      %v3463 = vsel %vm3201, %v3321, 0.0
      %v3464 = vsel %vm3202, %v3322, 0.0
      %v3465 = vsel %vm3203, %v3321, 0.0
      %v3466 = vsel %vm3204, %v3322, 0.0
      %v3467 = vsel %vm3205, %v3321, 0.0
      %v3468 = vsel %vm3206, %v3322, 0.0
      %v3469 = vsel %vm3207, %v3321, 0.0
      %v3470 = vsel %vm3208, %v3322, 0.0
      %v3471 = vsel %vm3209, %v3321, 0.0
      %v3472 = vsel %vm3210, %v3322, 0.0
      %v3473 = vsel %vm3211, %v3321, 0.0
      %v3474 = vsel %vm3212, %v3322, 0.0
      %v3475 = vsel %vm3213, %v3321, 0.0
      %v3476 = vsel %vm3214, %v3322, 0.0
      %v3477 = vsel %vm3215, %v3321, 0.0
      %v3478 = vsel %vm3216, %v3322, 0.0
      %v3479 = vsel %vm3217, %v3321, 0.0
      %v3480 = vsel %vm3218, %v3322, 0.0
      %v3481 = vsel %vm3219, %v3321, 0.0
      %v3482 = vsel %vm3220, %v3322, 0.0
      %v3483 = vsel %vm3221, %v3321, 0.0
      %v3484 = vsel %vm3222, %v3322, 0.0
      %v3485 = vsel %vm3223, %v3321, 0.0
      %v3486 = vsel %vm3224, %v3322, 0.0
      %v3487 = vsel %vm3225, %v3321, 0.0
      %v3488 = vsel %vm3226, %v3322, 0.0
      %v3489 = vsel %vm3227, %v3321, 0.0
      %v3490 = vsel %vm3228, %v3322, 0.0
      %v3491 = vsel %vm3229, %v3321, 0.0
      %v3492 = vsel %vm3230, %v3322, 0.0
      %v3493 = vsel %vm3231, %v3321, 0.0
      %v3494 = vsel %vm3232, %v3322, 0.0
      %v3495 = vsel %vm3233, %v3321, 0.0
      %v3496 = vsel %vm3234, %v3322, 0.0
      %v3497 = vsel %vm3235, %v3321, 0.0
      %v3498 = vsel %vm3236, %v3322, 0.0
      %v3499 = vsel %vm3237, %v3321, 0.0
      %v3500 = vsel %vm3238, %v3322, 0.0
      %v3501 = vsel %vm3239, %v3321, 0.0
      %v3502 = vsel %vm3240, %v3322, 0.0
      %v3503 = vsel %vm3241, %v3321, 0.0
      %v3504 = vsel %vm3242, %v3322, 0.0
      %v3505 = vsel %vm3243, %v3321, 0.0
      %v3506 = vsel %vm3244, %v3322, 0.0
      %v3507 = vsel %vm3245, %v3321, 0.0
      %v3508 = vsel %vm3246, %v3322, 0.0
      %v3509 = vsel %vm3247, %v3321, 0.0
      %v3510 = vsel %vm3248, %v3322, 0.0
      %v3511 = vsel %vm3249, %v3321, 0.0
      %v3512 = vsel %vm3250, %v3322, 0.0
      %v3513 = vsel %vm3251, %v3321, 0.0
      %v3514 = vsel %vm3252, %v3322, 0.0
      %v3515 = vsel %vm3253, %v3321, 0.0
      %v3516 = vsel %vm3254, %v3322, 0.0
      %v3517 = vsel %vm3255, %v3321, 0.0
      %v3518 = vsel %vm3256, %v3322, 0.0
      %v3519 = vsel %vm3257, %v3321, 0.0
      %v3520 = vsel %vm3258, %v3322, 0.0
      %v3521 = vsel %vm3259, %v3321, 0.0
      %v3522 = vsel %vm3260, %v3322, 0.0
      %v3523 = vsel %vm3261, %v3321, 0.0
      %v3524 = vsel %vm3262, %v3322, 0.0
      %v3525 = vsel %vm3263, %v3321, 0.0
      %v3526 = vsel %vm3264, %v3322, 0.0
      %v3527 = vsel %vm3265, %v3321, 0.0
      %v3528 = vsel %vm3266, %v3322, 0.0
      %v3529 = vsel %vm3267, %v3321, 0.0
      %v3530 = vsel %vm3268, %v3322, 0.0
      %v3531 = vsel %vm3269, %v3321, 0.0
      %v3532 = vsel %vm3270, %v3322, 0.0
      %v3533 = vsel %vm3271, %v3321, 0.0
      %v3534 = vsel %vm3272, %v3322, 0.0
      %v3535 = vsel %vm3273, %v3321, 0.0
      %v3536 = vsel %vm3274, %v3322, 0.0
      %v3537 = vsel %vm3275, %v3321, 0.0
      %v3538 = vsel %vm3276, %v3322, 0.0
      %v3539 = vsel %vm3277, %v3321, 0.0
      %v3540 = vsel %vm3278, %v3322, 0.0
      %v3541 = vsel %vm3279, %v3321, 0.0
      %v3542 = vsel %vm3280, %v3322, 0.0
      %v3543 = vsel %vm3281, %v3321, 0.0
      %v3544 = vsel %vm3282, %v3322, 0.0
      %v3545 = vsel %vm3283, %v3321, 0.0
      %v3546 = vsel %vm3284, %v3322, 0.0
      %v3547 = vsel %vm3285, %v3321, 0.0
      %v3548 = vsel %vm3286, %v3322, 0.0
      %v3549 = vsel %vm3287, %v3321, 0.0
      %v3550 = vsel %vm3288, %v3322, 0.0
      %v3551 = vsel %vm3289, %v3321, 0.0
      %v3552 = vsel %vm3290, %v3322, 0.0
      %v3553 = vsel %vm3291, %v3321, 0.0
      %v3554 = vsel %vm3292, %v3322, 0.0
      %v3555 = vsel %vm3293, %v3321, 0.0
      %v3556 = vsel %vm3294, %v3322, 0.0
      %v3557 = vsel %vm3295, %v3321, 0.0
      %v3558 = vsel %vm3296, %v3322, 0.0
      %v3559 = vsel %vm3297, %v3321, 0.0
      %v3560 = vsel %vm3298, %v3322, 0.0
      %v3561 = vsel %vm3299, %v3321, 0.0
      %v3562 = vsel %vm3300, %v3322, 0.0
      %v3563 = vsel %vm3301, %v3321, 0.0
      %v3564 = vsel %vm3302, %v3322, 0.0
      %v3565 = vsel %vm3303, %v3321, 0.0
      %v3566 = vsel %vm3304, %v3322, 0.0
      %v3567 = vsel %vm3305, %v3321, 0.0
      %v3568 = vsel %vm3306, %v3322, 0.0
      %v3569 = vsel %vm3307, %v3321, 0.0
      %v3570 = vsel %vm3308, %v3322, 0.0
      %v3571 = vsel %vm3309, %v3321, 0.0
      %v3572 = vsel %vm3310, %v3322, 0.0
      %v3573 = vsel %vm3311, %v3321, 0.0
      %v3574 = vsel %vm3312, %v3322, 0.0
      %v3575 = vsel %vm3313, %v3321, 0.0
      %v3576 = vsel %vm3314, %v3322, 0.0
      %v3577 = vsel %vm3315, %v3321, 0.0
      %v3578 = vsel %vm3316, %v3322, 0.0
      %v3579 = vadd.f32 %v2801, %v3323
      %v3580 = vadd.f32 %v2802, %v3324
      %v3581 = vadd.f32 %v2803, %v3325
      %v3582 = vadd.f32 %v2804, %v3326
      %v3583 = vadd.f32 %v2805, %v3327
      %v3584 = vadd.f32 %v2806, %v3328
      %v3585 = vadd.f32 %v2807, %v3329
      %v3586 = vadd.f32 %v2808, %v3330
      %v3587 = vadd.f32 %v2809, %v3331
      %v3588 = vadd.f32 %v2810, %v3332
      %v3589 = vadd.f32 %v2811, %v3333
      %v3590 = vadd.f32 %v2812, %v3334
      %v3591 = vadd.f32 %v2813, %v3335
      %v3592 = vadd.f32 %v2814, %v3336
      %v3593 = vadd.f32 %v2815, %v3337
      %v3594 = vadd.f32 %v2816, %v3338
      %v3595 = vadd.f32 %v2817, %v3339
      %v3596 = vadd.f32 %v2818, %v3340
      %v3597 = vadd.f32 %v2819, %v3341
      %v3598 = vadd.f32 %v2820, %v3342
      %v3599 = vadd.f32 %v2821, %v3343
      %v3600 = vadd.f32 %v2822, %v3344
      %v3601 = vadd.f32 %v2823, %v3345
      %v3602 = vadd.f32 %v2824, %v3346
      %v3603 = vadd.f32 %v2825, %v3347
      %v3604 = vadd.f32 %v2826, %v3348
      %v3605 = vadd.f32 %v2827, %v3349
      %v3606 = vadd.f32 %v2828, %v3350
      %v3607 = vadd.f32 %v2829, %v3351
      %v3608 = vadd.f32 %v2830, %v3352
      %v3609 = vadd.f32 %v2831, %v3353
      %v3610 = vadd.f32 %v2832, %v3354
      %v3611 = vadd.f32 %v2833, %v3355
      %v3612 = vadd.f32 %v2834, %v3356
      %v3613 = vadd.f32 %v2835, %v3357
      %v3614 = vadd.f32 %v2836, %v3358
      %v3615 = vadd.f32 %v2837, %v3359
      %v3616 = vadd.f32 %v2838, %v3360
      %v3617 = vadd.f32 %v2839, %v3361
      %v3618 = vadd.f32 %v2840, %v3362
      %v3619 = vadd.f32 %v2841, %v3363
      %v3620 = vadd.f32 %v2842, %v3364
      %v3621 = vadd.f32 %v2843, %v3365
      %v3622 = vadd.f32 %v2844, %v3366
      %v3623 = vadd.f32 %v2845, %v3367
      %v3624 = vadd.f32 %v2846, %v3368
      %v3625 = vadd.f32 %v2847, %v3369
      %v3626 = vadd.f32 %v2848, %v3370
      %v3627 = vadd.f32 %v2849, %v3371
      %v3628 = vadd.f32 %v2850, %v3372
      %v3629 = vadd.f32 %v2851, %v3373
      %v3630 = vadd.f32 %v2852, %v3374
      %v3631 = vadd.f32 %v2853, %v3375
      %v3632 = vadd.f32 %v2854, %v3376
      %v3633 = vadd.f32 %v2855, %v3377
      %v3634 = vadd.f32 %v2856, %v3378
      %v3635 = vadd.f32 %v2857, %v3379
      %v3636 = vadd.f32 %v2858, %v3380
      %v3637 = vadd.f32 %v2859, %v3381
      %v3638 = vadd.f32 %v2860, %v3382
      %v3639 = vadd.f32 %v2861, %v3383
      %v3640 = vadd.f32 %v2862, %v3384
      %v3641 = vadd.f32 %v2863, %v3385
      %v3642 = vadd.f32 %v2864, %v3386
      %v3643 = vadd.f32 %v2865, %v3387
      %v3644 = vadd.f32 %v2866, %v3388
      %v3645 = vadd.f32 %v2867, %v3389
      %v3646 = vadd.f32 %v2868, %v3390
      %v3647 = vadd.f32 %v2869, %v3391
      %v3648 = vadd.f32 %v2870, %v3392
      %v3649 = vadd.f32 %v2871, %v3393
      %v3650 = vadd.f32 %v2872, %v3394
      %v3651 = vadd.f32 %v2873, %v3395
      %v3652 = vadd.f32 %v2874, %v3396
      %v3653 = vadd.f32 %v2875, %v3397
      %v3654 = vadd.f32 %v2876, %v3398
      %v3655 = vadd.f32 %v2877, %v3399
      %v3656 = vadd.f32 %v2878, %v3400
      %v3657 = vadd.f32 %v2879, %v3401
      %v3658 = vadd.f32 %v2880, %v3402
      %v3659 = vadd.f32 %v2881, %v3403
      %v3660 = vadd.f32 %v2882, %v3404
      %v3661 = vadd.f32 %v2883, %v3405
      %v3662 = vadd.f32 %v2884, %v3406
      %v3663 = vadd.f32 %v2885, %v3407
      %v3664 = vadd.f32 %v2886, %v3408
      %v3665 = vadd.f32 %v2887, %v3409
      %v3666 = vadd.f32 %v2888, %v3410
      %v3667 = vadd.f32 %v2889, %v3411
      %v3668 = vadd.f32 %v2890, %v3412
      %v3669 = vadd.f32 %v2891, %v3413
      %v3670 = vadd.f32 %v2892, %v3414
      %v3671 = vadd.f32 %v2893, %v3415
      %v3672 = vadd.f32 %v2894, %v3416
      %v3673 = vadd.f32 %v2895, %v3417
      %v3674 = vadd.f32 %v2896, %v3418
      %v3675 = vadd.f32 %v2897, %v3419
      %v3676 = vadd.f32 %v2898, %v3420
      %v3677 = vadd.f32 %v2899, %v3421
      %v3678 = vadd.f32 %v2900, %v3422
      %v3679 = vadd.f32 %v2901, %v3423
      %v3680 = vadd.f32 %v2902, %v3424
      %v3681 = vadd.f32 %v2903, %v3425
      %v3682 = vadd.f32 %v2904, %v3426
      %v3683 = vadd.f32 %v2905, %v3427
      %v3684 = vadd.f32 %v2906, %v3428
      %v3685 = vadd.f32 %v2907, %v3429
      %v3686 = vadd.f32 %v2908, %v3430
      %v3687 = vadd.f32 %v2909, %v3431
      %v3688 = vadd.f32 %v2910, %v3432
      %v3689 = vadd.f32 %v2911, %v3433
      %v3690 = vadd.f32 %v2912, %v3434
      %v3691 = vadd.f32 %v2913, %v3435
      %v3692 = vadd.f32 %v2914, %v3436
      %v3693 = vadd.f32 %v2915, %v3437
      %v3694 = vadd.f32 %v2916, %v3438
      %v3695 = vadd.f32 %v2917, %v3439
      %v3696 = vadd.f32 %v2918, %v3440
      %v3697 = vadd.f32 %v2919, %v3441
      %v3698 = vadd.f32 %v2920, %v3442
      %v3699 = vadd.f32 %v2921, %v3443
      %v3700 = vadd.f32 %v2922, %v3444
      %v3701 = vadd.f32 %v2923, %v3445
      %v3702 = vadd.f32 %v2924, %v3446
      %v3703 = vadd.f32 %v2925, %v3447
      %v3704 = vadd.f32 %v2926, %v3448
      %v3705 = vadd.f32 %v2927, %v3449
      %v3706 = vadd.f32 %v2928, %v3450
      %v3707 = vadd.f32 %v2929, %v3451
      %v3708 = vadd.f32 %v2930, %v3452
      %v3709 = vadd.f32 %v2931, %v3453
      %v3710 = vadd.f32 %v2932, %v3454
      %v3711 = vadd.f32 %v2933, %v3455
      %v3712 = vadd.f32 %v2934, %v3456
      %v3713 = vadd.f32 %v2935, %v3457
      %v3714 = vadd.f32 %v2936, %v3458
      %v3715 = vadd.f32 %v2937, %v3459
      %v3716 = vadd.f32 %v2938, %v3460
      %v3717 = vadd.f32 %v2939, %v3461
      %v3718 = vadd.f32 %v2940, %v3462
      %v3719 = vadd.f32 %v2941, %v3463
      %v3720 = vadd.f32 %v2942, %v3464
      %v3721 = vadd.f32 %v2943, %v3465
      %v3722 = vadd.f32 %v2944, %v3466
      %v3723 = vadd.f32 %v2945, %v3467
      %v3724 = vadd.f32 %v2946, %v3468
      %v3725 = vadd.f32 %v2947, %v3469
      %v3726 = vadd.f32 %v2948, %v3470
      %v3727 = vadd.f32 %v2949, %v3471
      %v3728 = vadd.f32 %v2950, %v3472
      %v3729 = vadd.f32 %v2951, %v3473
      %v3730 = vadd.f32 %v2952, %v3474
      %v3731 = vadd.f32 %v2953, %v3475
      %v3732 = vadd.f32 %v2954, %v3476
      %v3733 = vadd.f32 %v2955, %v3477
      %v3734 = vadd.f32 %v2956, %v3478
      %v3735 = vadd.f32 %v2957, %v3479
      %v3736 = vadd.f32 %v2958, %v3480
      %v3737 = vadd.f32 %v2959, %v3481
      %v3738 = vadd.f32 %v2960, %v3482
      %v3739 = vadd.f32 %v2961, %v3483
      %v3740 = vadd.f32 %v2962, %v3484
      %v3741 = vadd.f32 %v2963, %v3485
      %v3742 = vadd.f32 %v2964, %v3486
      %v3743 = vadd.f32 %v2965, %v3487
      %v3744 = vadd.f32 %v2966, %v3488
      %v3745 = vadd.f32 %v2967, %v3489
      %v3746 = vadd.f32 %v2968, %v3490
      %v3747 = vadd.f32 %v2969, %v3491
      %v3748 = vadd.f32 %v2970, %v3492
      %v3749 = vadd.f32 %v2971, %v3493
      %v3750 = vadd.f32 %v2972, %v3494
      %v3751 = vadd.f32 %v2973, %v3495
      %v3752 = vadd.f32 %v2974, %v3496
      %v3753 = vadd.f32 %v2975, %v3497
      %v3754 = vadd.f32 %v2976, %v3498
      %v3755 = vadd.f32 %v2977, %v3499
      %v3756 = vadd.f32 %v2978, %v3500
      %v3757 = vadd.f32 %v2979, %v3501
      %v3758 = vadd.f32 %v2980, %v3502
      %v3759 = vadd.f32 %v2981, %v3503
      %v3760 = vadd.f32 %v2982, %v3504
      %v3761 = vadd.f32 %v2983, %v3505
      %v3762 = vadd.f32 %v2984, %v3506
      %v3763 = vadd.f32 %v2985, %v3507
      %v3764 = vadd.f32 %v2986, %v3508
      %v3765 = vadd.f32 %v2987, %v3509
      %v3766 = vadd.f32 %v2988, %v3510
      %v3767 = vadd.f32 %v2989, %v3511
      %v3768 = vadd.f32 %v2990, %v3512
      %v3769 = vadd.f32 %v2991, %v3513
      %v3770 = vadd.f32 %v2992, %v3514
      %v3771 = vadd.f32 %v2993, %v3515
      %v3772 = vadd.f32 %v2994, %v3516
      %v3773 = vadd.f32 %v2995, %v3517
      %v3774 = vadd.f32 %v2996, %v3518
      %v3775 = vadd.f32 %v2997, %v3519
      %v3776 = vadd.f32 %v2998, %v3520
      %v3777 = vadd.f32 %v2999, %v3521
      %v3778 = vadd.f32 %v3000, %v3522
      %v3779 = vadd.f32 %v3001, %v3523
      %v3780 = vadd.f32 %v3002, %v3524
      %v3781 = vadd.f32 %v3003, %v3525
      %v3782 = vadd.f32 %v3004, %v3526
      %v3783 = vadd.f32 %v3005, %v3527
      %v3784 = vadd.f32 %v3006, %v3528
      %v3785 = vadd.f32 %v3007, %v3529
      %v3786 = vadd.f32 %v3008, %v3530
      %v3787 = vadd.f32 %v3009, %v3531
      %v3788 = vadd.f32 %v3010, %v3532
      %v3789 = vadd.f32 %v3011, %v3533
      %v3790 = vadd.f32 %v3012, %v3534
      %v3791 = vadd.f32 %v3013, %v3535
      %v3792 = vadd.f32 %v3014, %v3536
      %v3793 = vadd.f32 %v3015, %v3537
      %v3794 = vadd.f32 %v3016, %v3538
      %v3795 = vadd.f32 %v3017, %v3539
      %v3796 = vadd.f32 %v3018, %v3540
      %v3797 = vadd.f32 %v3019, %v3541
      %v3798 = vadd.f32 %v3020, %v3542
      %v3799 = vadd.f32 %v3021, %v3543
      %v3800 = vadd.f32 %v3022, %v3544
      %v3801 = vadd.f32 %v3023, %v3545
      %v3802 = vadd.f32 %v3024, %v3546
      %v3803 = vadd.f32 %v3025, %v3547
      %v3804 = vadd.f32 %v3026, %v3548
      %v3805 = vadd.f32 %v3027, %v3549
      %v3806 = vadd.f32 %v3028, %v3550
      %v3807 = vadd.f32 %v3029, %v3551
      %v3808 = vadd.f32 %v3030, %v3552
      %v3809 = vadd.f32 %v3031, %v3553
      %v3810 = vadd.f32 %v3032, %v3554
      %v3811 = vadd.f32 %v3033, %v3555
      %v3812 = vadd.f32 %v3034, %v3556
      %v3813 = vadd.f32 %v3035, %v3557
      %v3814 = vadd.f32 %v3036, %v3558
      %v3815 = vadd.f32 %v3037, %v3559
      %v3816 = vadd.f32 %v3038, %v3560
      %v3817 = vadd.f32 %v3039, %v3561
      %v3818 = vadd.f32 %v3040, %v3562
      %v3819 = vadd.f32 %v3041, %v3563
      %v3820 = vadd.f32 %v3042, %v3564
      %v3821 = vadd.f32 %v3043, %v3565
      %v3822 = vadd.f32 %v3044, %v3566
      %v3823 = vadd.f32 %v3045, %v3567
      %v3824 = vadd.f32 %v3046, %v3568
      %v3825 = vadd.f32 %v3047, %v3569
      %v3826 = vadd.f32 %v3048, %v3570
      %v3827 = vadd.f32 %v3049, %v3571
      %v3828 = vadd.f32 %v3050, %v3572
      %v3829 = vadd.f32 %v3051, %v3573
      %v3830 = vadd.f32 %v3052, %v3574
      %v3831 = vadd.f32 %v3053, %v3575
      %v3832 = vadd.f32 %v3054, %v3576
      %v3833 = vadd.f32 %v3055, %v3577
      %v3834 = vadd.f32 %v3056, %v3578
      %v3835 = vmul.f32 %v1895, %v3579
      %v3836 = vmul.f32 %v1896, %v3580
      %v3837 = vmul.f32 %v1897, %v3581
      %v3838 = vmul.f32 %v1898, %v3582
      %v3839 = vmul.f32 %v1899, %v3583
      %v3840 = vmul.f32 %v1900, %v3584
      %v3841 = vmul.f32 %v1901, %v3585
      %v3842 = vmul.f32 %v1902, %v3586
      %v3843 = vmul.f32 %v1903, %v3587
      %v3844 = vmul.f32 %v1904, %v3588
      %v3845 = vmul.f32 %v1905, %v3589
      %v3846 = vmul.f32 %v1906, %v3590
      %v3847 = vmul.f32 %v1907, %v3591
      %v3848 = vmul.f32 %v1908, %v3592
      %v3849 = vmul.f32 %v1909, %v3593
      %v3850 = vmul.f32 %v1910, %v3594
      %v3851 = vmul.f32 %v1911, %v3595
      %v3852 = vmul.f32 %v1912, %v3596
      %v3853 = vmul.f32 %v1913, %v3597
      %v3854 = vmul.f32 %v1914, %v3598
      %v3855 = vmul.f32 %v1915, %v3599
      %v3856 = vmul.f32 %v1916, %v3600
      %v3857 = vmul.f32 %v1917, %v3601
      %v3858 = vmul.f32 %v1918, %v3602
      %v3859 = vmul.f32 %v1919, %v3603
      %v3860 = vmul.f32 %v1920, %v3604
      %v3861 = vmul.f32 %v1921, %v3605
      %v3862 = vmul.f32 %v1922, %v3606
      %v3863 = vmul.f32 %v1923, %v3607
      %v3864 = vmul.f32 %v1924, %v3608
      %v3865 = vmul.f32 %v1925, %v3609
      %v3866 = vmul.f32 %v1926, %v3610
      %v3867 = vmul.f32 %v1927, %v3611
      %v3868 = vmul.f32 %v1928, %v3612
      %v3869 = vmul.f32 %v1929, %v3613
      %v3870 = vmul.f32 %v1930, %v3614
      %v3871 = vmul.f32 %v1931, %v3615
      %v3872 = vmul.f32 %v1932, %v3616
      %v3873 = vmul.f32 %v1933, %v3617
      %v3874 = vmul.f32 %v1934, %v3618
      %v3875 = vmul.f32 %v1935, %v3619
      %v3876 = vmul.f32 %v1936, %v3620
      %v3877 = vmul.f32 %v1937, %v3621
      %v3878 = vmul.f32 %v1938, %v3622
      %v3879 = vmul.f32 %v1939, %v3623
      %v3880 = vmul.f32 %v1940, %v3624
      %v3881 = vmul.f32 %v1941, %v3625
      %v3882 = vmul.f32 %v1942, %v3626
      %v3883 = vmul.f32 %v1943, %v3627
      %v3884 = vmul.f32 %v1944, %v3628
      %v3885 = vmul.f32 %v1945, %v3629
      %v3886 = vmul.f32 %v1946, %v3630
      %v3887 = vmul.f32 %v1947, %v3631
      %v3888 = vmul.f32 %v1948, %v3632
      %v3889 = vmul.f32 %v1949, %v3633
      %v3890 = vmul.f32 %v1950, %v3634
      %v3891 = vmul.f32 %v1951, %v3635
      %v3892 = vmul.f32 %v1952, %v3636
      %v3893 = vmul.f32 %v1953, %v3637
      %v3894 = vmul.f32 %v1954, %v3638
      %v3895 = vmul.f32 %v1955, %v3639
      %v3896 = vmul.f32 %v1956, %v3640
      %v3897 = vmul.f32 %v1957, %v3641
      %v3898 = vmul.f32 %v1958, %v3642
      %v3899 = vmul.f32 %v1959, %v3643
      %v3900 = vmul.f32 %v1960, %v3644
      %v3901 = vmul.f32 %v1961, %v3645
      %v3902 = vmul.f32 %v1962, %v3646
      %v3903 = vmul.f32 %v1963, %v3647
      %v3904 = vmul.f32 %v1964, %v3648
      %v3905 = vmul.f32 %v1965, %v3649
      %v3906 = vmul.f32 %v1966, %v3650
      %v3907 = vmul.f32 %v1967, %v3651
      %v3908 = vmul.f32 %v1968, %v3652
      %v3909 = vmul.f32 %v1969, %v3653
      %v3910 = vmul.f32 %v1970, %v3654
      %v3911 = vmul.f32 %v1971, %v3655
      %v3912 = vmul.f32 %v1972, %v3656
      %v3913 = vmul.f32 %v1973, %v3657
      %v3914 = vmul.f32 %v1974, %v3658
      %v3915 = vmul.f32 %v1975, %v3659
      %v3916 = vmul.f32 %v1976, %v3660
      %v3917 = vmul.f32 %v1977, %v3661
      %v3918 = vmul.f32 %v1978, %v3662
      %v3919 = vmul.f32 %v1979, %v3663
      %v3920 = vmul.f32 %v1980, %v3664
      %v3921 = vmul.f32 %v1981, %v3665
      %v3922 = vmul.f32 %v1982, %v3666
      %v3923 = vmul.f32 %v1983, %v3667
      %v3924 = vmul.f32 %v1984, %v3668
      %v3925 = vmul.f32 %v1985, %v3669
      %v3926 = vmul.f32 %v1986, %v3670
      %v3927 = vmul.f32 %v1987, %v3671
      %v3928 = vmul.f32 %v1988, %v3672
      %v3929 = vmul.f32 %v1989, %v3673
      %v3930 = vmul.f32 %v1990, %v3674
      %v3931 = vmul.f32 %v1991, %v3675
      %v3932 = vmul.f32 %v1992, %v3676
      %v3933 = vmul.f32 %v1993, %v3677
      %v3934 = vmul.f32 %v1994, %v3678
      %v3935 = vmul.f32 %v1995, %v3679
      %v3936 = vmul.f32 %v1996, %v3680
      %v3937 = vmul.f32 %v1997, %v3681
      %v3938 = vmul.f32 %v1998, %v3682
      %v3939 = vmul.f32 %v1999, %v3683
      %v3940 = vmul.f32 %v2000, %v3684
      %v3941 = vmul.f32 %v2001, %v3685
      %v3942 = vmul.f32 %v2002, %v3686
      %v3943 = vmul.f32 %v2003, %v3687
      %v3944 = vmul.f32 %v2004, %v3688
      %v3945 = vmul.f32 %v2005, %v3689
      %v3946 = vmul.f32 %v2006, %v3690
      %v3947 = vmul.f32 %v2007, %v3691
      %v3948 = vmul.f32 %v2008, %v3692
      %v3949 = vmul.f32 %v2009, %v3693
      %v3950 = vmul.f32 %v2010, %v3694
      %v3951 = vmul.f32 %v2011, %v3695
      %v3952 = vmul.f32 %v2012, %v3696
      %v3953 = vmul.f32 %v2013, %v3697
      %v3954 = vmul.f32 %v2014, %v3698
      %v3955 = vmul.f32 %v2015, %v3699
      %v3956 = vmul.f32 %v2016, %v3700
      %v3957 = vmul.f32 %v2017, %v3701
      %v3958 = vmul.f32 %v2018, %v3702
      %v3959 = vmul.f32 %v2019, %v3703
      %v3960 = vmul.f32 %v2020, %v3704
      %v3961 = vmul.f32 %v2021, %v3705
      %v3962 = vmul.f32 %v2022, %v3706
      %v3963 = vmul.f32 %v2023, %v3707
      %v3964 = vmul.f32 %v2024, %v3708
      %v3965 = vmul.f32 %v2025, %v3709
      %v3966 = vmul.f32 %v2026, %v3710
      %v3967 = vmul.f32 %v2027, %v3711
      %v3968 = vmul.f32 %v2028, %v3712
      %v3969 = vmul.f32 %v2029, %v3713
      %v3970 = vmul.f32 %v2030, %v3714
      %v3971 = vmul.f32 %v2031, %v3715
      %v3972 = vmul.f32 %v2032, %v3716
      %v3973 = vmul.f32 %v2033, %v3717
      %v3974 = vmul.f32 %v2034, %v3718
      %v3975 = vmul.f32 %v2035, %v3719
      %v3976 = vmul.f32 %v2036, %v3720
      %v3977 = vmul.f32 %v2037, %v3721
      %v3978 = vmul.f32 %v2038, %v3722
      %v3979 = vmul.f32 %v2039, %v3723
      %v3980 = vmul.f32 %v2040, %v3724
      %v3981 = vmul.f32 %v2041, %v3725
      %v3982 = vmul.f32 %v2042, %v3726
      %v3983 = vmul.f32 %v2043, %v3727
      %v3984 = vmul.f32 %v2044, %v3728
      %v3985 = vmul.f32 %v2045, %v3729
      %v3986 = vmul.f32 %v2046, %v3730
      %v3987 = vmul.f32 %v2047, %v3731
      %v3988 = vmul.f32 %v2048, %v3732
      %v3989 = vmul.f32 %v2049, %v3733
      %v3990 = vmul.f32 %v2050, %v3734
      %v3991 = vmul.f32 %v2051, %v3735
      %v3992 = vmul.f32 %v2052, %v3736
      %v3993 = vmul.f32 %v2053, %v3737
      %v3994 = vmul.f32 %v2054, %v3738
      %v3995 = vmul.f32 %v2055, %v3739
      %v3996 = vmul.f32 %v2056, %v3740
      %v3997 = vmul.f32 %v2057, %v3741
      %v3998 = vmul.f32 %v2058, %v3742
      %v3999 = vmul.f32 %v2059, %v3743
      %v4000 = vmul.f32 %v2060, %v3744
      %v4001 = vmul.f32 %v2061, %v3745
      %v4002 = vmul.f32 %v2062, %v3746
      %v4003 = vmul.f32 %v2063, %v3747
      %v4004 = vmul.f32 %v2064, %v3748
      %v4005 = vmul.f32 %v2065, %v3749
      %v4006 = vmul.f32 %v2066, %v3750
      %v4007 = vmul.f32 %v2067, %v3751
      %v4008 = vmul.f32 %v2068, %v3752
      %v4009 = vmul.f32 %v2069, %v3753
      %v4010 = vmul.f32 %v2070, %v3754
      %v4011 = vmul.f32 %v2071, %v3755
      %v4012 = vmul.f32 %v2072, %v3756
      %v4013 = vmul.f32 %v2073, %v3757
      %v4014 = vmul.f32 %v2074, %v3758
      %v4015 = vmul.f32 %v2075, %v3759
      %v4016 = vmul.f32 %v2076, %v3760
      %v4017 = vmul.f32 %v2077, %v3761
      %v4018 = vmul.f32 %v2078, %v3762
      %v4019 = vmul.f32 %v2079, %v3763
      %v4020 = vmul.f32 %v2080, %v3764
      %v4021 = vmul.f32 %v2081, %v3765
      %v4022 = vmul.f32 %v2082, %v3766
      %v4023 = vmul.f32 %v2083, %v3767
      %v4024 = vmul.f32 %v2084, %v3768
      %v4025 = vmul.f32 %v2085, %v3769
      %v4026 = vmul.f32 %v2086, %v3770
      %v4027 = vmul.f32 %v2087, %v3771
      %v4028 = vmul.f32 %v2088, %v3772
      %v4029 = vmul.f32 %v2089, %v3773
      %v4030 = vmul.f32 %v2090, %v3774
      %v4031 = vmul.f32 %v2091, %v3775
      %v4032 = vmul.f32 %v2092, %v3776
      %v4033 = vmul.f32 %v2093, %v3777
      %v4034 = vmul.f32 %v2094, %v3778
      %v4035 = vmul.f32 %v2095, %v3779
      %v4036 = vmul.f32 %v2096, %v3780
      %v4037 = vmul.f32 %v2097, %v3781
      %v4038 = vmul.f32 %v2098, %v3782
      %v4039 = vmul.f32 %v2099, %v3783
      %v4040 = vmul.f32 %v2100, %v3784
      %v4041 = vmul.f32 %v2101, %v3785
      %v4042 = vmul.f32 %v2102, %v3786
      %v4043 = vmul.f32 %v2103, %v3787
      %v4044 = vmul.f32 %v2104, %v3788
      %v4045 = vmul.f32 %v2105, %v3789
      %v4046 = vmul.f32 %v2106, %v3790
      %v4047 = vmul.f32 %v2107, %v3791
      %v4048 = vmul.f32 %v2108, %v3792
      %v4049 = vmul.f32 %v2109, %v3793
      %v4050 = vmul.f32 %v2110, %v3794
      %v4051 = vmul.f32 %v2111, %v3795
      %v4052 = vmul.f32 %v2112, %v3796
      %v4053 = vmul.f32 %v2113, %v3797
      %v4054 = vmul.f32 %v2114, %v3798
      %v4055 = vmul.f32 %v2115, %v3799
      %v4056 = vmul.f32 %v2116, %v3800
      %v4057 = vmul.f32 %v2117, %v3801
      %v4058 = vmul.f32 %v2118, %v3802
      %v4059 = vmul.f32 %v2119, %v3803
      %v4060 = vmul.f32 %v2120, %v3804
      %v4061 = vmul.f32 %v2121, %v3805
      %v4062 = vmul.f32 %v2122, %v3806
      %v4063 = vmul.f32 %v2123, %v3807
      %v4064 = vmul.f32 %v2124, %v3808
      %v4065 = vmul.f32 %v2125, %v3809
      %v4066 = vmul.f32 %v2126, %v3810
      %v4067 = vmul.f32 %v2127, %v3811
      %v4068 = vmul.f32 %v2128, %v3812
      %v4069 = vmul.f32 %v2129, %v3813
      %v4070 = vmul.f32 %v2130, %v3814
      %v4071 = vmul.f32 %v2131, %v3815
      %v4072 = vmul.f32 %v2132, %v3816
      %v4073 = vmul.f32 %v2133, %v3817
      %v4074 = vmul.f32 %v2134, %v3818
      %v4075 = vmul.f32 %v2135, %v3819
      %v4076 = vmul.f32 %v2136, %v3820
      %v4077 = vmul.f32 %v2137, %v3821
      %v4078 = vmul.f32 %v2138, %v3822
      %v4079 = vmul.f32 %v2139, %v3823
      %v4080 = vmul.f32 %v2140, %v3824
      %v4081 = vmul.f32 %v2141, %v3825
      %v4082 = vmul.f32 %v2142, %v3826
      %v4083 = vmul.f32 %v2143, %v3827
      %v4084 = vmul.f32 %v2144, %v3828
      %v4085 = vmul.f32 %v2145, %v3829
      %v4086 = vmul.f32 %v2146, %v3830
      %v4087 = vmul.f32 %v2147, %v3831
      %v4088 = vmul.f32 %v2148, %v3832
      %v4089 = vmul.f32 %v2149, %v3833
      %v4090 = vmul.f32 %v2150, %v3834
      %4091 = vset.pattern.permute.xlu0 2
      %4092 = vperm.xlu0 %4091, %v333
      %v4093 = vpop.permute.xlu0 %4092
      %4094 = vset.pattern.permute.xlu0 2
      %4095 = vperm.xlu0 %4094, %v334
      %v4096 = vpop.permute.xlu0 %4095
      %4097 = vset.pattern.permute.xlu0 2
      %4098 = vperm.xlu0 %4097, %v335
      %v4099 = vpop.permute.xlu0 %4098
      %4100 = vset.pattern.permute.xlu0 2
      %4101 = vperm.xlu0 %4100, %v336
      %v4102 = vpop.permute.xlu0 %4101
      %4103 = vset.pattern.permute.xlu0 2
      %4104 = vperm.xlu0 %4103, %v337
      %v4105 = vpop.permute.xlu0 %4104
      %4106 = vset.pattern.permute.xlu0 2
      %4107 = vperm.xlu0 %4106, %v338
      %v4108 = vpop.permute.xlu0 %4107
      %4109 = vset.pattern.permute.xlu0 2
      %4110 = vperm.xlu0 %4109, %v339
      %v4111 = vpop.permute.xlu0 %4110
      %4112 = vset.pattern.permute.xlu0 2
      %4113 = vperm.xlu0 %4112, %v340
      %v4114 = vpop.permute.xlu0 %4113
      %4115 = vset.pattern.permute.xlu0 2
      %4116 = vperm.xlu0 %4115, %v341
      %v4117 = vpop.permute.xlu0 %4116
      %4118 = vset.pattern.permute.xlu0 2
      %4119 = vperm.xlu0 %4118, %v342
      %v4120 = vpop.permute.xlu0 %4119
      %4121 = vset.pattern.permute.xlu0 2
      %4122 = vperm.xlu0 %4121, %v343
      %v4123 = vpop.permute.xlu0 %4122
      %4124 = vset.pattern.permute.xlu0 2
      %4125 = vperm.xlu0 %4124, %v344
      %v4126 = vpop.permute.xlu0 %4125
      %4127 = vset.pattern.permute.xlu0 2
      %4128 = vperm.xlu0 %4127, %v345
      %v4129 = vpop.permute.xlu0 %4128
      %4130 = vset.pattern.permute.xlu0 2
      %4131 = vperm.xlu0 %4130, %v346
      %v4132 = vpop.permute.xlu0 %4131
      %4133 = vset.pattern.permute.xlu0 2
      %4134 = vperm.xlu0 %4133, %v347
      %v4135 = vpop.permute.xlu0 %4134
      %4136 = vset.pattern.permute.xlu0 2
      %4137 = vperm.xlu0 %4136, %v348
      %v4138 = vpop.permute.xlu0 %4137
      %4139 = vset.pattern.permute.xlu0 2
      %4140 = vperm.xlu0 %4139, %v349
      %v4141 = vpop.permute.xlu0 %4140
      %4142 = vset.pattern.permute.xlu0 2
      %4143 = vperm.xlu0 %4142, %v350
      %v4144 = vpop.permute.xlu0 %4143
      %4145 = vset.pattern.permute.xlu0 2
      %4146 = vperm.xlu0 %4145, %v351
      %v4147 = vpop.permute.xlu0 %4146
      %4148 = vset.pattern.permute.xlu0 2
      %4149 = vperm.xlu0 %4148, %v352
      %v4150 = vpop.permute.xlu0 %4149
      %4151 = vset.pattern.permute.xlu0 2
      %4152 = vperm.xlu0 %4151, %v353
      %v4153 = vpop.permute.xlu0 %4152
      %4154 = vset.pattern.permute.xlu0 2
      %4155 = vperm.xlu0 %4154, %v354
      %v4156 = vpop.permute.xlu0 %4155
      %4157 = vset.pattern.permute.xlu0 2
      %4158 = vperm.xlu0 %4157, %v355
      %v4159 = vpop.permute.xlu0 %4158
      %4160 = vset.pattern.permute.xlu0 2
      %4161 = vperm.xlu0 %4160, %v356
      %v4162 = vpop.permute.xlu0 %4161
      %4163 = vset.pattern.permute.xlu0 2
      %4164 = vperm.xlu0 %4163, %v357
      %v4165 = vpop.permute.xlu0 %4164
      %4166 = vset.pattern.permute.xlu0 2
      %4167 = vperm.xlu0 %4166, %v358
      %v4168 = vpop.permute.xlu0 %4167
      %4169 = vset.pattern.permute.xlu0 2
      %4170 = vperm.xlu0 %4169, %v359
      %v4171 = vpop.permute.xlu0 %4170
      %4172 = vset.pattern.permute.xlu0 2
      %4173 = vperm.xlu0 %4172, %v360
      %v4174 = vpop.permute.xlu0 %4173
      %4175 = vset.pattern.permute.xlu0 2
      %4176 = vperm.xlu0 %4175, %v361
      %v4177 = vpop.permute.xlu0 %4176
      %4178 = vset.pattern.permute.xlu0 2
      %4179 = vperm.xlu0 %4178, %v362
      %v4180 = vpop.permute.xlu0 %4179
      %4181 = vset.pattern.permute.xlu0 2
      %4182 = vperm.xlu0 %4181, %v363
      %v4183 = vpop.permute.xlu0 %4182
      %4184 = vset.pattern.permute.xlu0 2
      %4185 = vperm.xlu0 %4184, %v364
      %v4186 = vpop.permute.xlu0 %4185
      %4187 = vset.pattern.permute.xlu0 2
      %4188 = vperm.xlu0 %4187, %v365
      %v4189 = vpop.permute.xlu0 %4188
      %4190 = vset.pattern.permute.xlu0 2
      %4191 = vperm.xlu0 %4190, %v366
      %v4192 = vpop.permute.xlu0 %4191
      %4193 = vset.pattern.permute.xlu0 2
      %4194 = vperm.xlu0 %4193, %v367
      %v4195 = vpop.permute.xlu0 %4194
      %4196 = vset.pattern.permute.xlu0 2
      %4197 = vperm.xlu0 %4196, %v368
      %v4198 = vpop.permute.xlu0 %4197
      %4199 = vset.pattern.permute.xlu0 2
      %4200 = vperm.xlu0 %4199, %v369
      %v4201 = vpop.permute.xlu0 %4200
      %4202 = vset.pattern.permute.xlu0 2
      %4203 = vperm.xlu0 %4202, %v370
      %v4204 = vpop.permute.xlu0 %4203
      %4205 = vset.pattern.permute.xlu0 2
      %4206 = vperm.xlu0 %4205, %v371
      %v4207 = vpop.permute.xlu0 %4206
      %4208 = vset.pattern.permute.xlu0 2
      %4209 = vperm.xlu0 %4208, %v372
      %v4210 = vpop.permute.xlu0 %4209
      %4211 = vset.pattern.permute.xlu0 2
      %4212 = vperm.xlu0 %4211, %v373
      %v4213 = vpop.permute.xlu0 %4212
      %4214 = vset.pattern.permute.xlu0 2
      %4215 = vperm.xlu0 %4214, %v374
      %v4216 = vpop.permute.xlu0 %4215
      %4217 = vset.pattern.permute.xlu0 2
      %4218 = vperm.xlu0 %4217, %v375
      %v4219 = vpop.permute.xlu0 %4218
      %4220 = vset.pattern.permute.xlu0 2
      %4221 = vperm.xlu0 %4220, %v376
      %v4222 = vpop.permute.xlu0 %4221
      %4223 = vset.pattern.permute.xlu0 2
      %4224 = vperm.xlu0 %4223, %v377
      %v4225 = vpop.permute.xlu0 %4224
      %4226 = vset.pattern.permute.xlu0 2
      %4227 = vperm.xlu0 %4226, %v378
      %v4228 = vpop.permute.xlu0 %4227
      %4229 = vset.pattern.permute.xlu0 2
      %4230 = vperm.xlu0 %4229, %v379
      %v4231 = vpop.permute.xlu0 %4230
      %4232 = vset.pattern.permute.xlu0 2
      %4233 = vperm.xlu0 %4232, %v380
      %v4234 = vpop.permute.xlu0 %4233
      %4235 = vset.pattern.permute.xlu0 2
      %4236 = vperm.xlu0 %4235, %v381
      %v4237 = vpop.permute.xlu0 %4236
      %4238 = vset.pattern.permute.xlu0 2
      %4239 = vperm.xlu0 %4238, %v382
      %v4240 = vpop.permute.xlu0 %4239
      %4241 = vset.pattern.permute.xlu0 2
      %4242 = vperm.xlu0 %4241, %v383
      %v4243 = vpop.permute.xlu0 %4242
      %4244 = vset.pattern.permute.xlu0 2
      %4245 = vperm.xlu0 %4244, %v384
      %v4246 = vpop.permute.xlu0 %4245
      %4247 = vset.pattern.permute.xlu0 2
      %4248 = vperm.xlu0 %4247, %v385
      %v4249 = vpop.permute.xlu0 %4248
      %4250 = vset.pattern.permute.xlu0 2
      %4251 = vperm.xlu0 %4250, %v386
      %v4252 = vpop.permute.xlu0 %4251
      %4253 = vset.pattern.permute.xlu0 2
      %4254 = vperm.xlu0 %4253, %v387
      %v4255 = vpop.permute.xlu0 %4254
      %4256 = vset.pattern.permute.xlu0 2
      %4257 = vperm.xlu0 %4256, %v388
      %v4258 = vpop.permute.xlu0 %4257
      %4259 = vset.pattern.permute.xlu0 2
      %4260 = vperm.xlu0 %4259, %v389
      %v4261 = vpop.permute.xlu0 %4260
      %4262 = vset.pattern.permute.xlu0 2
      %4263 = vperm.xlu0 %4262, %v390
      %v4264 = vpop.permute.xlu0 %4263
      %4265 = vset.pattern.permute.xlu0 2
      %4266 = vperm.xlu0 %4265, %v391
      %v4267 = vpop.permute.xlu0 %4266
      %4268 = vset.pattern.permute.xlu0 2
      %4269 = vperm.xlu0 %4268, %v392
      %v4270 = vpop.permute.xlu0 %4269
      %4271 = vset.pattern.permute.xlu0 2
      %4272 = vperm.xlu0 %4271, %v393
      %v4273 = vpop.permute.xlu0 %4272
      %4274 = vset.pattern.permute.xlu0 2
      %4275 = vperm.xlu0 %4274, %v394
      %v4276 = vpop.permute.xlu0 %4275
      %4277 = vset.pattern.permute.xlu0 2
      %4278 = vperm.xlu0 %4277, %v395
      %v4279 = vpop.permute.xlu0 %4278
      %4280 = vset.pattern.permute.xlu0 2
      %4281 = vperm.xlu0 %4280, %v396
      %v4282 = vpop.permute.xlu0 %4281
      %4283 = vset.pattern.permute.xlu0 2
      %4284 = vperm.xlu0 %4283, %v397
      %v4285 = vpop.permute.xlu0 %4284
      %4286 = vset.pattern.permute.xlu0 2
      %4287 = vperm.xlu0 %4286, %v398
      %v4288 = vpop.permute.xlu0 %4287
      %4289 = vset.pattern.permute.xlu0 2
      %4290 = vperm.xlu0 %4289, %v399
      %v4291 = vpop.permute.xlu0 %4290
      %4292 = vset.pattern.permute.xlu0 2
      %4293 = vperm.xlu0 %4292, %v400
      %v4294 = vpop.permute.xlu0 %4293
      %4295 = vset.pattern.permute.xlu0 2
      %4296 = vperm.xlu0 %4295, %v401
      %v4297 = vpop.permute.xlu0 %4296
      %4298 = vset.pattern.permute.xlu0 2
      %4299 = vperm.xlu0 %4298, %v402
      %v4300 = vpop.permute.xlu0 %4299
      %4301 = vset.pattern.permute.xlu0 2
      %4302 = vperm.xlu0 %4301, %v403
      %v4303 = vpop.permute.xlu0 %4302
      %4304 = vset.pattern.permute.xlu0 2
      %4305 = vperm.xlu0 %4304, %v404
      %v4306 = vpop.permute.xlu0 %4305
      %4307 = vset.pattern.permute.xlu0 2
      %4308 = vperm.xlu0 %4307, %v405
      %v4309 = vpop.permute.xlu0 %4308
      %4310 = vset.pattern.permute.xlu0 2
      %4311 = vperm.xlu0 %4310, %v406
      %v4312 = vpop.permute.xlu0 %4311
      %4313 = vset.pattern.permute.xlu0 2
      %4314 = vperm.xlu0 %4313, %v407
      %v4315 = vpop.permute.xlu0 %4314
      %4316 = vset.pattern.permute.xlu0 2
      %4317 = vperm.xlu0 %4316, %v408
      %v4318 = vpop.permute.xlu0 %4317
      %4319 = vset.pattern.permute.xlu0 2
      %4320 = vperm.xlu0 %4319, %v409
      %v4321 = vpop.permute.xlu0 %4320
      %4322 = vset.pattern.permute.xlu0 2
      %4323 = vperm.xlu0 %4322, %v410
      %v4324 = vpop.permute.xlu0 %4323
      %4325 = vset.pattern.permute.xlu0 2
      %4326 = vperm.xlu0 %4325, %v411
      %v4327 = vpop.permute.xlu0 %4326
      %4328 = vset.pattern.permute.xlu0 2
      %4329 = vperm.xlu0 %4328, %v412
      %v4330 = vpop.permute.xlu0 %4329
      %4331 = vset.pattern.permute.xlu0 2
      %4332 = vperm.xlu0 %4331, %v413
      %v4333 = vpop.permute.xlu0 %4332
      %4334 = vset.pattern.permute.xlu0 2
      %4335 = vperm.xlu0 %4334, %v414
      %v4336 = vpop.permute.xlu0 %4335
      %4337 = vset.pattern.permute.xlu0 2
      %4338 = vperm.xlu0 %4337, %v415
      %v4339 = vpop.permute.xlu0 %4338
      %4340 = vset.pattern.permute.xlu0 2
      %4341 = vperm.xlu0 %4340, %v416
      %v4342 = vpop.permute.xlu0 %4341
      %4343 = vset.pattern.permute.xlu0 2
      %4344 = vperm.xlu0 %4343, %v417
      %v4345 = vpop.permute.xlu0 %4344
      %4346 = vset.pattern.permute.xlu0 2
      %4347 = vperm.xlu0 %4346, %v418
      %v4348 = vpop.permute.xlu0 %4347
      %4349 = vset.pattern.permute.xlu0 2
      %4350 = vperm.xlu0 %4349, %v419
      %v4351 = vpop.permute.xlu0 %4350
      %4352 = vset.pattern.permute.xlu0 2
      %4353 = vperm.xlu0 %4352, %v420
      %v4354 = vpop.permute.xlu0 %4353
      %4355 = vset.pattern.permute.xlu0 2
      %4356 = vperm.xlu0 %4355, %v421
      %v4357 = vpop.permute.xlu0 %4356
      %4358 = vset.pattern.permute.xlu0 2
      %4359 = vperm.xlu0 %4358, %v422
      %v4360 = vpop.permute.xlu0 %4359
      %4361 = vset.pattern.permute.xlu0 2
      %4362 = vperm.xlu0 %4361, %v423
      %v4363 = vpop.permute.xlu0 %4362
      %4364 = vset.pattern.permute.xlu0 2
      %4365 = vperm.xlu0 %4364, %v424
      %v4366 = vpop.permute.xlu0 %4365
      %4367 = vset.pattern.permute.xlu0 2
      %4368 = vperm.xlu0 %4367, %v425
      %v4369 = vpop.permute.xlu0 %4368
      %4370 = vset.pattern.permute.xlu0 2
      %4371 = vperm.xlu0 %4370, %v426
      %v4372 = vpop.permute.xlu0 %4371
      %4373 = vset.pattern.permute.xlu0 2
      %4374 = vperm.xlu0 %4373, %v427
      %v4375 = vpop.permute.xlu0 %4374
      %4376 = vset.pattern.permute.xlu0 2
      %4377 = vperm.xlu0 %4376, %v428
      %v4378 = vpop.permute.xlu0 %4377
      %4379 = vset.pattern.permute.xlu0 2
      %4380 = vperm.xlu0 %4379, %v429
      %v4381 = vpop.permute.xlu0 %4380
      %4382 = vset.pattern.permute.xlu0 2
      %4383 = vperm.xlu0 %4382, %v430
      %v4384 = vpop.permute.xlu0 %4383
      %4385 = vset.pattern.permute.xlu0 2
      %4386 = vperm.xlu0 %4385, %v431
      %v4387 = vpop.permute.xlu0 %4386
      %4388 = vset.pattern.permute.xlu0 2
      %4389 = vperm.xlu0 %4388, %v432
      %v4390 = vpop.permute.xlu0 %4389
      %4391 = vset.pattern.permute.xlu0 2
      %4392 = vperm.xlu0 %4391, %v433
      %v4393 = vpop.permute.xlu0 %4392
      %4394 = vset.pattern.permute.xlu0 2
      %4395 = vperm.xlu0 %4394, %v434
      %v4396 = vpop.permute.xlu0 %4395
      %4397 = vset.pattern.permute.xlu0 2
      %4398 = vperm.xlu0 %4397, %v435
      %v4399 = vpop.permute.xlu0 %4398
      %4400 = vset.pattern.permute.xlu0 2
      %4401 = vperm.xlu0 %4400, %v436
      %v4402 = vpop.permute.xlu0 %4401
      %4403 = vset.pattern.permute.xlu0 2
      %4404 = vperm.xlu0 %4403, %v437
      %v4405 = vpop.permute.xlu0 %4404
      %4406 = vset.pattern.permute.xlu0 2
      %4407 = vperm.xlu0 %4406, %v438
      %v4408 = vpop.permute.xlu0 %4407
      %4409 = vset.pattern.permute.xlu0 2
      %4410 = vperm.xlu0 %4409, %v439
      %v4411 = vpop.permute.xlu0 %4410
      %4412 = vset.pattern.permute.xlu0 2
      %4413 = vperm.xlu0 %4412, %v440
      %v4414 = vpop.permute.xlu0 %4413
      %4415 = vset.pattern.permute.xlu0 2
      %4416 = vperm.xlu0 %4415, %v441
      %v4417 = vpop.permute.xlu0 %4416
      %4418 = vset.pattern.permute.xlu0 2
      %4419 = vperm.xlu0 %4418, %v442
      %v4420 = vpop.permute.xlu0 %4419
      %4421 = vset.pattern.permute.xlu0 2
      %4422 = vperm.xlu0 %4421, %v443
      %v4423 = vpop.permute.xlu0 %4422
      %4424 = vset.pattern.permute.xlu0 2
      %4425 = vperm.xlu0 %4424, %v444
      %v4426 = vpop.permute.xlu0 %4425
      %4427 = vset.pattern.permute.xlu0 2
      %4428 = vperm.xlu0 %4427, %v445
      %v4429 = vpop.permute.xlu0 %4428
      %4430 = vset.pattern.permute.xlu0 2
      %4431 = vperm.xlu0 %4430, %v446
      %v4432 = vpop.permute.xlu0 %4431
      %4433 = vset.pattern.permute.xlu0 2
      %4434 = vperm.xlu0 %4433, %v447
      %v4435 = vpop.permute.xlu0 %4434
      %4436 = vset.pattern.permute.xlu0 2
      %4437 = vperm.xlu0 %4436, %v448
      %v4438 = vpop.permute.xlu0 %4437
      %4439 = vset.pattern.permute.xlu0 2
      %4440 = vperm.xlu0 %4439, %v449
      %v4441 = vpop.permute.xlu0 %4440
      %4442 = vset.pattern.permute.xlu0 2
      %4443 = vperm.xlu0 %4442, %v450
      %v4444 = vpop.permute.xlu0 %4443
      %4445 = vset.pattern.permute.xlu0 2
      %4446 = vperm.xlu0 %4445, %v451
      %v4447 = vpop.permute.xlu0 %4446
      %4448 = vset.pattern.permute.xlu0 2
      %4449 = vperm.xlu0 %4448, %v452
      %v4450 = vpop.permute.xlu0 %4449
      %4451 = vset.pattern.permute.xlu0 2
      %4452 = vperm.xlu0 %4451, %v453
      %v4453 = vpop.permute.xlu0 %4452
      %4454 = vset.pattern.permute.xlu0 2
      %4455 = vperm.xlu0 %4454, %v454
      %v4456 = vpop.permute.xlu0 %4455
      %4457 = vset.pattern.permute.xlu0 2
      %4458 = vperm.xlu0 %4457, %v455
      %v4459 = vpop.permute.xlu0 %4458
      %4460 = vset.pattern.permute.xlu0 2
      %4461 = vperm.xlu0 %4460, %v456
      %v4462 = vpop.permute.xlu0 %4461
      %4463 = vset.pattern.permute.xlu0 2
      %4464 = vperm.xlu0 %4463, %v457
      %v4465 = vpop.permute.xlu0 %4464
      %4466 = vset.pattern.permute.xlu0 2
      %4467 = vperm.xlu0 %4466, %v458
      %v4468 = vpop.permute.xlu0 %4467
      %4469 = vset.pattern.permute.xlu0 2
      %4470 = vperm.xlu0 %4469, %v459
      %v4471 = vpop.permute.xlu0 %4470
      %4472 = vset.pattern.permute.xlu0 2
      %4473 = vperm.xlu0 %4472, %v460
      %v4474 = vpop.permute.xlu0 %4473
      %v4475 = vperm.slane %v461, 2
      %v4476 = vperm.slane %v461, 6
      %v4477 = vperm.slane %v4475, 2
      %v4478 = vperm.slane %v4476, 2
      %vm4479 = vcmp.eq.s32.totalorder %v4093, %v4477
      %vm4480 = vcmp.eq.s32.totalorder %v4093, %v4478
      %vm4481 = vcmp.eq.s32.totalorder %v4096, %v4477
      %vm4482 = vcmp.eq.s32.totalorder %v4096, %v4478
      %vm4483 = vcmp.eq.s32.totalorder %v4099, %v4477
      %vm4484 = vcmp.eq.s32.totalorder %v4099, %v4478
      %vm4485 = vcmp.eq.s32.totalorder %v4102, %v4477
      %vm4486 = vcmp.eq.s32.totalorder %v4102, %v4478
      %vm4487 = vcmp.eq.s32.totalorder %v4105, %v4477
      %vm4488 = vcmp.eq.s32.totalorder %v4105, %v4478
      %vm4489 = vcmp.eq.s32.totalorder %v4108, %v4477
      %vm4490 = vcmp.eq.s32.totalorder %v4108, %v4478
      %vm4491 = vcmp.eq.s32.totalorder %v4111, %v4477
      %vm4492 = vcmp.eq.s32.totalorder %v4111, %v4478
      %vm4493 = vcmp.eq.s32.totalorder %v4114, %v4477
      %vm4494 = vcmp.eq.s32.totalorder %v4114, %v4478
      %vm4495 = vcmp.eq.s32.totalorder %v4117, %v4477
      %vm4496 = vcmp.eq.s32.totalorder %v4117, %v4478
      %vm4497 = vcmp.eq.s32.totalorder %v4120, %v4477
      %vm4498 = vcmp.eq.s32.totalorder %v4120, %v4478
      %vm4499 = vcmp.eq.s32.totalorder %v4123, %v4477
      %vm4500 = vcmp.eq.s32.totalorder %v4123, %v4478
      %vm4501 = vcmp.eq.s32.totalorder %v4126, %v4477
      %vm4502 = vcmp.eq.s32.totalorder %v4126, %v4478
      %vm4503 = vcmp.eq.s32.totalorder %v4129, %v4477
      %vm4504 = vcmp.eq.s32.totalorder %v4129, %v4478
      %vm4505 = vcmp.eq.s32.totalorder %v4132, %v4477
      %vm4506 = vcmp.eq.s32.totalorder %v4132, %v4478
      %vm4507 = vcmp.eq.s32.totalorder %v4135, %v4477
      %vm4508 = vcmp.eq.s32.totalorder %v4135, %v4478
      %vm4509 = vcmp.eq.s32.totalorder %v4138, %v4477
      %vm4510 = vcmp.eq.s32.totalorder %v4138, %v4478
      %vm4511 = vcmp.eq.s32.totalorder %v4141, %v4477
      %vm4512 = vcmp.eq.s32.totalorder %v4141, %v4478
      %vm4513 = vcmp.eq.s32.totalorder %v4144, %v4477
      %vm4514 = vcmp.eq.s32.totalorder %v4144, %v4478
      %vm4515 = vcmp.eq.s32.totalorder %v4147, %v4477
      %vm4516 = vcmp.eq.s32.totalorder %v4147, %v4478
      %vm4517 = vcmp.eq.s32.totalorder %v4150, %v4477
      %vm4518 = vcmp.eq.s32.totalorder %v4150, %v4478
      %vm4519 = vcmp.eq.s32.totalorder %v4153, %v4477
      %vm4520 = vcmp.eq.s32.totalorder %v4153, %v4478
      %vm4521 = vcmp.eq.s32.totalorder %v4156, %v4477
      %vm4522 = vcmp.eq.s32.totalorder %v4156, %v4478
      %vm4523 = vcmp.eq.s32.totalorder %v4159, %v4477
      %vm4524 = vcmp.eq.s32.totalorder %v4159, %v4478
      %vm4525 = vcmp.eq.s32.totalorder %v4162, %v4477
      %vm4526 = vcmp.eq.s32.totalorder %v4162, %v4478
      %vm4527 = vcmp.eq.s32.totalorder %v4165, %v4477
      %vm4528 = vcmp.eq.s32.totalorder %v4165, %v4478
      %vm4529 = vcmp.eq.s32.totalorder %v4168, %v4477
      %vm4530 = vcmp.eq.s32.totalorder %v4168, %v4478
      %vm4531 = vcmp.eq.s32.totalorder %v4171, %v4477
      %vm4532 = vcmp.eq.s32.totalorder %v4171, %v4478
      %vm4533 = vcmp.eq.s32.totalorder %v4174, %v4477
      %vm4534 = vcmp.eq.s32.totalorder %v4174, %v4478
      %vm4535 = vcmp.eq.s32.totalorder %v4177, %v4477
      %vm4536 = vcmp.eq.s32.totalorder %v4177, %v4478
      %vm4537 = vcmp.eq.s32.totalorder %v4180, %v4477
      %vm4538 = vcmp.eq.s32.totalorder %v4180, %v4478
      %vm4539 = vcmp.eq.s32.totalorder %v4183, %v4477
      %vm4540 = vcmp.eq.s32.totalorder %v4183, %v4478
      %vm4541 = vcmp.eq.s32.totalorder %v4186, %v4477
      %vm4542 = vcmp.eq.s32.totalorder %v4186, %v4478
      %vm4543 = vcmp.eq.s32.totalorder %v4189, %v4477
      %vm4544 = vcmp.eq.s32.totalorder %v4189, %v4478
      %vm4545 = vcmp.eq.s32.totalorder %v4192, %v4477
      %vm4546 = vcmp.eq.s32.totalorder %v4192, %v4478
      %vm4547 = vcmp.eq.s32.totalorder %v4195, %v4477
      %vm4548 = vcmp.eq.s32.totalorder %v4195, %v4478
      %vm4549 = vcmp.eq.s32.totalorder %v4198, %v4477
      %vm4550 = vcmp.eq.s32.totalorder %v4198, %v4478
      %vm4551 = vcmp.eq.s32.totalorder %v4201, %v4477
      %vm4552 = vcmp.eq.s32.totalorder %v4201, %v4478
      %vm4553 = vcmp.eq.s32.totalorder %v4204, %v4477
      %vm4554 = vcmp.eq.s32.totalorder %v4204, %v4478
      %vm4555 = vcmp.eq.s32.totalorder %v4207, %v4477
      %vm4556 = vcmp.eq.s32.totalorder %v4207, %v4478
      %vm4557 = vcmp.eq.s32.totalorder %v4210, %v4477
      %vm4558 = vcmp.eq.s32.totalorder %v4210, %v4478
      %vm4559 = vcmp.eq.s32.totalorder %v4213, %v4477
      %vm4560 = vcmp.eq.s32.totalorder %v4213, %v4478
      %vm4561 = vcmp.eq.s32.totalorder %v4216, %v4477
      %vm4562 = vcmp.eq.s32.totalorder %v4216, %v4478
      %vm4563 = vcmp.eq.s32.totalorder %v4219, %v4477
      %vm4564 = vcmp.eq.s32.totalorder %v4219, %v4478
      %vm4565 = vcmp.eq.s32.totalorder %v4222, %v4477
      %vm4566 = vcmp.eq.s32.totalorder %v4222, %v4478
      %vm4567 = vcmp.eq.s32.totalorder %v4225, %v4477
      %vm4568 = vcmp.eq.s32.totalorder %v4225, %v4478
      %vm4569 = vcmp.eq.s32.totalorder %v4228, %v4477
      %vm4570 = vcmp.eq.s32.totalorder %v4228, %v4478
      %vm4571 = vcmp.eq.s32.totalorder %v4231, %v4477
      %vm4572 = vcmp.eq.s32.totalorder %v4231, %v4478
      %vm4573 = vcmp.eq.s32.totalorder %v4234, %v4477
      %vm4574 = vcmp.eq.s32.totalorder %v4234, %v4478
      %vm4575 = vcmp.eq.s32.totalorder %v4237, %v4477
      %vm4576 = vcmp.eq.s32.totalorder %v4237, %v4478
      %vm4577 = vcmp.eq.s32.totalorder %v4240, %v4477
      %vm4578 = vcmp.eq.s32.totalorder %v4240, %v4478
      %vm4579 = vcmp.eq.s32.totalorder %v4243, %v4477
      %vm4580 = vcmp.eq.s32.totalorder %v4243, %v4478
      %vm4581 = vcmp.eq.s32.totalorder %v4246, %v4477
      %vm4582 = vcmp.eq.s32.totalorder %v4246, %v4478
      %vm4583 = vcmp.eq.s32.totalorder %v4249, %v4477
      %vm4584 = vcmp.eq.s32.totalorder %v4249, %v4478
      %vm4585 = vcmp.eq.s32.totalorder %v4252, %v4477
      %vm4586 = vcmp.eq.s32.totalorder %v4252, %v4478
      %vm4587 = vcmp.eq.s32.totalorder %v4255, %v4477
      %vm4588 = vcmp.eq.s32.totalorder %v4255, %v4478
      %vm4589 = vcmp.eq.s32.totalorder %v4258, %v4477
      %vm4590 = vcmp.eq.s32.totalorder %v4258, %v4478
      %vm4591 = vcmp.eq.s32.totalorder %v4261, %v4477
      %vm4592 = vcmp.eq.s32.totalorder %v4261, %v4478
      %vm4593 = vcmp.eq.s32.totalorder %v4264, %v4477
      %vm4594 = vcmp.eq.s32.totalorder %v4264, %v4478
      %vm4595 = vcmp.eq.s32.totalorder %v4267, %v4477
      %vm4596 = vcmp.eq.s32.totalorder %v4267, %v4478
      %vm4597 = vcmp.eq.s32.totalorder %v4270, %v4477
      %vm4598 = vcmp.eq.s32.totalorder %v4270, %v4478
      %vm4599 = vcmp.eq.s32.totalorder %v4273, %v4477
      %vm4600 = vcmp.eq.s32.totalorder %v4273, %v4478
      %vm4601 = vcmp.eq.s32.totalorder %v4276, %v4477
      %vm4602 = vcmp.eq.s32.totalorder %v4276, %v4478
      %vm4603 = vcmp.eq.s32.totalorder %v4279, %v4477
      %vm4604 = vcmp.eq.s32.totalorder %v4279, %v4478
      %vm4605 = vcmp.eq.s32.totalorder %v4282, %v4477
      %vm4606 = vcmp.eq.s32.totalorder %v4282, %v4478
      %vm4607 = vcmp.eq.s32.totalorder %v4285, %v4477
      %vm4608 = vcmp.eq.s32.totalorder %v4285, %v4478
      %vm4609 = vcmp.eq.s32.totalorder %v4288, %v4477
      %vm4610 = vcmp.eq.s32.totalorder %v4288, %v4478
      %vm4611 = vcmp.eq.s32.totalorder %v4291, %v4477
      %vm4612 = vcmp.eq.s32.totalorder %v4291, %v4478
      %vm4613 = vcmp.eq.s32.totalorder %v4294, %v4477
      %vm4614 = vcmp.eq.s32.totalorder %v4294, %v4478
      %vm4615 = vcmp.eq.s32.totalorder %v4297, %v4477
      %vm4616 = vcmp.eq.s32.totalorder %v4297, %v4478
      %vm4617 = vcmp.eq.s32.totalorder %v4300, %v4477
      %vm4618 = vcmp.eq.s32.totalorder %v4300, %v4478
      %vm4619 = vcmp.eq.s32.totalorder %v4303, %v4477
      %vm4620 = vcmp.eq.s32.totalorder %v4303, %v4478
      %vm4621 = vcmp.eq.s32.totalorder %v4306, %v4477
      %vm4622 = vcmp.eq.s32.totalorder %v4306, %v4478
      %vm4623 = vcmp.eq.s32.totalorder %v4309, %v4477
      %vm4624 = vcmp.eq.s32.totalorder %v4309, %v4478
      %vm4625 = vcmp.eq.s32.totalorder %v4312, %v4477
      %vm4626 = vcmp.eq.s32.totalorder %v4312, %v4478
      %vm4627 = vcmp.eq.s32.totalorder %v4315, %v4477
      %vm4628 = vcmp.eq.s32.totalorder %v4315, %v4478
      %vm4629 = vcmp.eq.s32.totalorder %v4318, %v4477
      %vm4630 = vcmp.eq.s32.totalorder %v4318, %v4478
      %vm4631 = vcmp.eq.s32.totalorder %v4321, %v4477
      %vm4632 = vcmp.eq.s32.totalorder %v4321, %v4478
      %vm4633 = vcmp.eq.s32.totalorder %v4324, %v4477
      %vm4634 = vcmp.eq.s32.totalorder %v4324, %v4478
      %vm4635 = vcmp.eq.s32.totalorder %v4327, %v4477
      %vm4636 = vcmp.eq.s32.totalorder %v4327, %v4478
      %vm4637 = vcmp.eq.s32.totalorder %v4330, %v4477
      %vm4638 = vcmp.eq.s32.totalorder %v4330, %v4478
      %vm4639 = vcmp.eq.s32.totalorder %v4333, %v4477
      %vm4640 = vcmp.eq.s32.totalorder %v4333, %v4478
      %vm4641 = vcmp.eq.s32.totalorder %v4336, %v4477
      %vm4642 = vcmp.eq.s32.totalorder %v4336, %v4478
      %vm4643 = vcmp.eq.s32.totalorder %v4339, %v4477
      %vm4644 = vcmp.eq.s32.totalorder %v4339, %v4478
      %vm4645 = vcmp.eq.s32.totalorder %v4342, %v4477
      %vm4646 = vcmp.eq.s32.totalorder %v4342, %v4478
      %vm4647 = vcmp.eq.s32.totalorder %v4345, %v4477
      %vm4648 = vcmp.eq.s32.totalorder %v4345, %v4478
      %vm4649 = vcmp.eq.s32.totalorder %v4348, %v4477
      %vm4650 = vcmp.eq.s32.totalorder %v4348, %v4478
      %vm4651 = vcmp.eq.s32.totalorder %v4351, %v4477
      %vm4652 = vcmp.eq.s32.totalorder %v4351, %v4478
      %vm4653 = vcmp.eq.s32.totalorder %v4354, %v4477
      %vm4654 = vcmp.eq.s32.totalorder %v4354, %v4478
      %vm4655 = vcmp.eq.s32.totalorder %v4357, %v4477
      %vm4656 = vcmp.eq.s32.totalorder %v4357, %v4478
      %vm4657 = vcmp.eq.s32.totalorder %v4360, %v4477
      %vm4658 = vcmp.eq.s32.totalorder %v4360, %v4478
      %vm4659 = vcmp.eq.s32.totalorder %v4363, %v4477
      %vm4660 = vcmp.eq.s32.totalorder %v4363, %v4478
      %vm4661 = vcmp.eq.s32.totalorder %v4366, %v4477
      %vm4662 = vcmp.eq.s32.totalorder %v4366, %v4478
      %vm4663 = vcmp.eq.s32.totalorder %v4369, %v4477
      %vm4664 = vcmp.eq.s32.totalorder %v4369, %v4478
      %vm4665 = vcmp.eq.s32.totalorder %v4372, %v4477
      %vm4666 = vcmp.eq.s32.totalorder %v4372, %v4478
      %vm4667 = vcmp.eq.s32.totalorder %v4375, %v4477
      %vm4668 = vcmp.eq.s32.totalorder %v4375, %v4478
      %vm4669 = vcmp.eq.s32.totalorder %v4378, %v4477
      %vm4670 = vcmp.eq.s32.totalorder %v4378, %v4478
      %vm4671 = vcmp.eq.s32.totalorder %v4381, %v4477
      %vm4672 = vcmp.eq.s32.totalorder %v4381, %v4478
      %vm4673 = vcmp.eq.s32.totalorder %v4384, %v4477
      %vm4674 = vcmp.eq.s32.totalorder %v4384, %v4478
      %vm4675 = vcmp.eq.s32.totalorder %v4387, %v4477
      %vm4676 = vcmp.eq.s32.totalorder %v4387, %v4478
      %vm4677 = vcmp.eq.s32.totalorder %v4390, %v4477
      %vm4678 = vcmp.eq.s32.totalorder %v4390, %v4478
      %vm4679 = vcmp.eq.s32.totalorder %v4393, %v4477
      %vm4680 = vcmp.eq.s32.totalorder %v4393, %v4478
      %vm4681 = vcmp.eq.s32.totalorder %v4396, %v4477
      %vm4682 = vcmp.eq.s32.totalorder %v4396, %v4478
      %vm4683 = vcmp.eq.s32.totalorder %v4399, %v4477
      %vm4684 = vcmp.eq.s32.totalorder %v4399, %v4478
      %vm4685 = vcmp.eq.s32.totalorder %v4402, %v4477
      %vm4686 = vcmp.eq.s32.totalorder %v4402, %v4478
      %vm4687 = vcmp.eq.s32.totalorder %v4405, %v4477
      %vm4688 = vcmp.eq.s32.totalorder %v4405, %v4478
      %vm4689 = vcmp.eq.s32.totalorder %v4408, %v4477
      %vm4690 = vcmp.eq.s32.totalorder %v4408, %v4478
      %vm4691 = vcmp.eq.s32.totalorder %v4411, %v4477
      %vm4692 = vcmp.eq.s32.totalorder %v4411, %v4478
      %vm4693 = vcmp.eq.s32.totalorder %v4414, %v4477
      %vm4694 = vcmp.eq.s32.totalorder %v4414, %v4478
      %vm4695 = vcmp.eq.s32.totalorder %v4417, %v4477
      %vm4696 = vcmp.eq.s32.totalorder %v4417, %v4478
      %vm4697 = vcmp.eq.s32.totalorder %v4420, %v4477
      %vm4698 = vcmp.eq.s32.totalorder %v4420, %v4478
      %vm4699 = vcmp.eq.s32.totalorder %v4423, %v4477
      %vm4700 = vcmp.eq.s32.totalorder %v4423, %v4478
      %vm4701 = vcmp.eq.s32.totalorder %v4426, %v4477
      %vm4702 = vcmp.eq.s32.totalorder %v4426, %v4478
      %vm4703 = vcmp.eq.s32.totalorder %v4429, %v4477
      %vm4704 = vcmp.eq.s32.totalorder %v4429, %v4478
      %vm4705 = vcmp.eq.s32.totalorder %v4432, %v4477
      %vm4706 = vcmp.eq.s32.totalorder %v4432, %v4478
      %vm4707 = vcmp.eq.s32.totalorder %v4435, %v4477
      %vm4708 = vcmp.eq.s32.totalorder %v4435, %v4478
      %vm4709 = vcmp.eq.s32.totalorder %v4438, %v4477
      %vm4710 = vcmp.eq.s32.totalorder %v4438, %v4478
      %vm4711 = vcmp.eq.s32.totalorder %v4441, %v4477
      %vm4712 = vcmp.eq.s32.totalorder %v4441, %v4478
      %vm4713 = vcmp.eq.s32.totalorder %v4444, %v4477
      %vm4714 = vcmp.eq.s32.totalorder %v4444, %v4478
      %vm4715 = vcmp.eq.s32.totalorder %v4447, %v4477
      %vm4716 = vcmp.eq.s32.totalorder %v4447, %v4478
      %vm4717 = vcmp.eq.s32.totalorder %v4450, %v4477
      %vm4718 = vcmp.eq.s32.totalorder %v4450, %v4478
      %vm4719 = vcmp.eq.s32.totalorder %v4453, %v4477
      %vm4720 = vcmp.eq.s32.totalorder %v4453, %v4478
      %vm4721 = vcmp.eq.s32.totalorder %v4456, %v4477
      %vm4722 = vcmp.eq.s32.totalorder %v4456, %v4478
      %vm4723 = vcmp.eq.s32.totalorder %v4459, %v4477
      %vm4724 = vcmp.eq.s32.totalorder %v4459, %v4478
      %vm4725 = vcmp.eq.s32.totalorder %v4462, %v4477
      %vm4726 = vcmp.eq.s32.totalorder %v4462, %v4478
      %vm4727 = vcmp.eq.s32.totalorder %v4465, %v4477
      %vm4728 = vcmp.eq.s32.totalorder %v4465, %v4478
      %vm4729 = vcmp.eq.s32.totalorder %v4468, %v4477
      %vm4730 = vcmp.eq.s32.totalorder %v4468, %v4478
      %vm4731 = vcmp.eq.s32.totalorder %v4471, %v4477
      %vm4732 = vcmp.eq.s32.totalorder %v4471, %v4478
      %vm4733 = vcmp.eq.s32.totalorder %v4474, %v4477
      %vm4734 = vcmp.eq.s32.totalorder %v4474, %v4478
      %v4735 = vperm.slane %v1108, 2
      %v4736 = vperm.slane %v1108, 6
      %v4739 = vperm.slane %v4735, 2
      %v4740 = vperm.slane %v4736, 2
      %v4741 = vsel %vm4479, %v4739, 0.0
      %v4742 = vsel %vm4480, %v4740, 0.0
      %v4743 = vsel %vm4481, %v4739, 0.0
      %v4744 = vsel %vm4482, %v4740, 0.0
      %v4745 = vsel %vm4483, %v4739, 0.0
      %v4746 = vsel %vm4484, %v4740, 0.0
      %v4747 = vsel %vm4485, %v4739, 0.0
      %v4748 = vsel %vm4486, %v4740, 0.0
      %v4749 = vsel %vm4487, %v4739, 0.0
      %v4750 = vsel %vm4488, %v4740, 0.0
      %v4751 = vsel %vm4489, %v4739, 0.0
      %v4752 = vsel %vm4490, %v4740, 0.0
      %v4753 = vsel %vm4491, %v4739, 0.0
      %v4754 = vsel %vm4492, %v4740, 0.0
      %v4755 = vsel %vm4493, %v4739, 0.0
      %v4756 = vsel %vm4494, %v4740, 0.0
      %v4757 = vsel %vm4495, %v4739, 0.0
      %v4758 = vsel %vm4496, %v4740, 0.0
      %v4759 = vsel %vm4497, %v4739, 0.0
      %v4760 = vsel %vm4498, %v4740, 0.0
      %v4761 = vsel %vm4499, %v4739, 0.0
      %v4762 = vsel %vm4500, %v4740, 0.0
      %v4763 = vsel %vm4501, %v4739, 0.0
      %v4764 = vsel %vm4502, %v4740, 0.0
      %v4765 = vsel %vm4503, %v4739, 0.0
      %v4766 = vsel %vm4504, %v4740, 0.0
      %v4767 = vsel %vm4505, %v4739, 0.0
      %v4768 = vsel %vm4506, %v4740, 0.0
      %v4769 = vsel %vm4507, %v4739, 0.0
      %v4770 = vsel %vm4508, %v4740, 0.0
      %v4771 = vsel %vm4509, %v4739, 0.0
      %v4772 = vsel %vm4510, %v4740, 0.0
      %v4773 = vsel %vm4511, %v4739, 0.0
      %v4774 = vsel %vm4512, %v4740, 0.0
      %v4775 = vsel %vm4513, %v4739, 0.0
      %v4776 = vsel %vm4514, %v4740, 0.0
      %v4777 = vsel %vm4515, %v4739, 0.0
      %v4778 = vsel %vm4516, %v4740, 0.0
      %v4779 = vsel %vm4517, %v4739, 0.0
      %v4780 = vsel %vm4518, %v4740, 0.0
      %v4781 = vsel %vm4519, %v4739, 0.0
      %v4782 = vsel %vm4520, %v4740, 0.0
      %v4783 = vsel %vm4521, %v4739, 0.0
      %v4784 = vsel %vm4522, %v4740, 0.0
      %v4785 = vsel %vm4523, %v4739, 0.0
      %v4786 = vsel %vm4524, %v4740, 0.0
      %v4787 = vsel %vm4525, %v4739, 0.0
      %v4788 = vsel %vm4526, %v4740, 0.0
      %v4789 = vsel %vm4527, %v4739, 0.0
      %v4790 = vsel %vm4528, %v4740, 0.0
      %v4791 = vsel %vm4529, %v4739, 0.0
      %v4792 = vsel %vm4530, %v4740, 0.0
      %v4793 = vsel %vm4531, %v4739, 0.0
      %v4794 = vsel %vm4532, %v4740, 0.0
      %v4795 = vsel %vm4533, %v4739, 0.0
      %v4796 = vsel %vm4534, %v4740, 0.0
      %v4797 = vsel %vm4535, %v4739, 0.0
      %v4798 = vsel %vm4536, %v4740, 0.0
      %v4799 = vsel %vm4537, %v4739, 0.0
      %v4800 = vsel %vm4538, %v4740, 0.0
      %v4801 = vsel %vm4539, %v4739, 0.0
      %v4802 = vsel %vm4540, %v4740, 0.0
      %v4803 = vsel %vm4541, %v4739, 0.0
      %v4804 = vsel %vm4542, %v4740, 0.0
      %v4805 = vsel %vm4543, %v4739, 0.0
      %v4806 = vsel %vm4544, %v4740, 0.0
      %v4807 = vsel %vm4545, %v4739, 0.0
      %v4808 = vsel %vm4546, %v4740, 0.0
      %v4809 = vsel %vm4547, %v4739, 0.0
      %v4810 = vsel %vm4548, %v4740, 0.0
      %v4811 = vsel %vm4549, %v4739, 0.0
      %v4812 = vsel %vm4550, %v4740, 0.0
      %v4813 = vsel %vm4551, %v4739, 0.0
      %v4814 = vsel %vm4552, %v4740, 0.0
      %v4815 = vsel %vm4553, %v4739, 0.0
      %v4816 = vsel %vm4554, %v4740, 0.0
      %v4817 = vsel %vm4555, %v4739, 0.0
      %v4818 = vsel %vm4556, %v4740, 0.0
      %v4819 = vsel %vm4557, %v4739, 0.0
      %v4820 = vsel %vm4558, %v4740, 0.0
      %v4821 = vsel %vm4559, %v4739, 0.0
      %v4822 = vsel %vm4560, %v4740, 0.0
      %v4823 = vsel %vm4561, %v4739, 0.0
      %v4824 = vsel %vm4562, %v4740, 0.0
      %v4825 = vsel %vm4563, %v4739, 0.0
      %v4826 = vsel %vm4564, %v4740, 0.0
      %v4827 = vsel %vm4565, %v4739, 0.0
      %v4828 = vsel %vm4566, %v4740, 0.0
      %v4829 = vsel %vm4567, %v4739, 0.0
      %v4830 = vsel %vm4568, %v4740, 0.0
      %v4831 = vsel %vm4569, %v4739, 0.0
      %v4832 = vsel %vm4570, %v4740, 0.0
      %v4833 = vsel %vm4571, %v4739, 0.0
      %v4834 = vsel %vm4572, %v4740, 0.0
      %v4835 = vsel %vm4573, %v4739, 0.0
      %v4836 = vsel %vm4574, %v4740, 0.0
      %v4837 = vsel %vm4575, %v4739, 0.0
      %v4838 = vsel %vm4576, %v4740, 0.0
      %v4839 = vsel %vm4577, %v4739, 0.0
      %v4840 = vsel %vm4578, %v4740, 0.0
      %v4841 = vsel %vm4579, %v4739, 0.0
      %v4842 = vsel %vm4580, %v4740, 0.0
      %v4843 = vsel %vm4581, %v4739, 0.0
      %v4844 = vsel %vm4582, %v4740, 0.0
      %v4845 = vsel %vm4583, %v4739, 0.0
      %v4846 = vsel %vm4584, %v4740, 0.0
      %v4847 = vsel %vm4585, %v4739, 0.0
      %v4848 = vsel %vm4586, %v4740, 0.0
      %v4849 = vsel %vm4587, %v4739, 0.0
      %v4850 = vsel %vm4588, %v4740, 0.0
      %v4851 = vsel %vm4589, %v4739, 0.0
      %v4852 = vsel %vm4590, %v4740, 0.0
      %v4853 = vsel %vm4591, %v4739, 0.0
      %v4854 = vsel %vm4592, %v4740, 0.0
      %v4855 = vsel %vm4593, %v4739, 0.0
      %v4856 = vsel %vm4594, %v4740, 0.0
      %v4857 = vsel %vm4595, %v4739, 0.0
      %v4858 = vsel %vm4596, %v4740, 0.0
      %v4859 = vsel %vm4597, %v4739, 0.0
      %v4860 = vsel %vm4598, %v4740, 0.0
      %v4861 = vsel %vm4599, %v4739, 0.0
      %v4862 = vsel %vm4600, %v4740, 0.0
      %v4863 = vsel %vm4601, %v4739, 0.0
      %v4864 = vsel %vm4602, %v4740, 0.0
      %v4865 = vsel %vm4603, %v4739, 0.0
      %v4866 = vsel %vm4604, %v4740, 0.0
      %v4867 = vsel %vm4605, %v4739, 0.0
      %v4868 = vsel %vm4606, %v4740, 0.0
      %v4869 = vsel %vm4607, %v4739, 0.0
      %v4870 = vsel %vm4608, %v4740, 0.0
      %v4871 = vsel %vm4609, %v4739, 0.0
      %v4872 = vsel %vm4610, %v4740, 0.0
      %v4873 = vsel %vm4611, %v4739, 0.0
      %v4874 = vsel %vm4612, %v4740, 0.0
      %v4875 = vsel %vm4613, %v4739, 0.0
      %v4876 = vsel %vm4614, %v4740, 0.0
      %v4877 = vsel %vm4615, %v4739, 0.0
      %v4878 = vsel %vm4616, %v4740, 0.0
      %v4879 = vsel %vm4617, %v4739, 0.0
      %v4880 = vsel %vm4618, %v4740, 0.0
      %v4881 = vsel %vm4619, %v4739, 0.0
      %v4882 = vsel %vm4620, %v4740, 0.0
      %v4883 = vsel %vm4621, %v4739, 0.0
      %v4884 = vsel %vm4622, %v4740, 0.0
      %v4885 = vsel %vm4623, %v4739, 0.0
      %v4886 = vsel %vm4624, %v4740, 0.0
      %v4887 = vsel %vm4625, %v4739, 0.0
      %v4888 = vsel %vm4626, %v4740, 0.0
      %v4889 = vsel %vm4627, %v4739, 0.0
      %v4890 = vsel %vm4628, %v4740, 0.0
      %v4891 = vsel %vm4629, %v4739, 0.0
      %v4892 = vsel %vm4630, %v4740, 0.0
      %v4893 = vsel %vm4631, %v4739, 0.0
      %v4894 = vsel %vm4632, %v4740, 0.0
      %v4895 = vsel %vm4633, %v4739, 0.0
      %v4896 = vsel %vm4634, %v4740, 0.0
      %v4897 = vsel %vm4635, %v4739, 0.0
      %v4898 = vsel %vm4636, %v4740, 0.0
      %v4899 = vsel %vm4637, %v4739, 0.0
      %v4900 = vsel %vm4638, %v4740, 0.0
      %v4901 = vsel %vm4639, %v4739, 0.0
      %v4902 = vsel %vm4640, %v4740, 0.0
      %v4903 = vsel %vm4641, %v4739, 0.0
      %v4904 = vsel %vm4642, %v4740, 0.0
      %v4905 = vsel %vm4643, %v4739, 0.0
      %v4906 = vsel %vm4644, %v4740, 0.0
      %v4907 = vsel %vm4645, %v4739, 0.0
      %v4908 = vsel %vm4646, %v4740, 0.0
      %v4909 = vsel %vm4647, %v4739, 0.0
      %v4910 = vsel %vm4648, %v4740, 0.0
      %v4911 = vsel %vm4649, %v4739, 0.0
      %v4912 = vsel %vm4650, %v4740, 0.0
      %v4913 = vsel %vm4651, %v4739, 0.0
      %v4914 = vsel %vm4652, %v4740, 0.0
      %v4915 = vsel %vm4653, %v4739, 0.0
      %v4916 = vsel %vm4654, %v4740, 0.0
      %v4917 = vsel %vm4655, %v4739, 0.0
      %v4918 = vsel %vm4656, %v4740, 0.0
      %v4919 = vsel %vm4657, %v4739, 0.0
      %v4920 = vsel %vm4658, %v4740, 0.0
      %v4921 = vsel %vm4659, %v4739, 0.0
      %v4922 = vsel %vm4660, %v4740, 0.0
      %v4923 = vsel %vm4661, %v4739, 0.0
      %v4924 = vsel %vm4662, %v4740, 0.0
      %v4925 = vsel %vm4663, %v4739, 0.0
      %v4926 = vsel %vm4664, %v4740, 0.0
      %v4927 = vsel %vm4665, %v4739, 0.0
      %v4928 = vsel %vm4666, %v4740, 0.0
      %v4929 = vsel %vm4667, %v4739, 0.0
      %v4930 = vsel %vm4668, %v4740, 0.0
      %v4931 = vsel %vm4669, %v4739, 0.0
      %v4932 = vsel %vm4670, %v4740, 0.0
      %v4933 = vsel %vm4671, %v4739, 0.0
      %v4934 = vsel %vm4672, %v4740, 0.0
      %v4935 = vsel %vm4673, %v4739, 0.0
      %v4936 = vsel %vm4674, %v4740, 0.0
      %v4937 = vsel %vm4675, %v4739, 0.0
      %v4938 = vsel %vm4676, %v4740, 0.0
      %v4939 = vsel %vm4677, %v4739, 0.0
      %v4940 = vsel %vm4678, %v4740, 0.0
      %v4941 = vsel %vm4679, %v4739, 0.0
      %v4942 = vsel %vm4680, %v4740, 0.0
      %v4943 = vsel %vm4681, %v4739, 0.0
      %v4944 = vsel %vm4682, %v4740, 0.0
      %v4945 = vsel %vm4683, %v4739, 0.0
      %v4946 = vsel %vm4684, %v4740, 0.0
      %v4947 = vsel %vm4685, %v4739, 0.0
      %v4948 = vsel %vm4686, %v4740, 0.0
      %v4949 = vsel %vm4687, %v4739, 0.0
      %v4950 = vsel %vm4688, %v4740, 0.0
      %v4951 = vsel %vm4689, %v4739, 0.0
      %v4952 = vsel %vm4690, %v4740, 0.0
      %v4953 = vsel %vm4691, %v4739, 0.0
      %v4954 = vsel %vm4692, %v4740, 0.0
      %v4955 = vsel %vm4693, %v4739, 0.0
      %v4956 = vsel %vm4694, %v4740, 0.0
      %v4957 = vsel %vm4695, %v4739, 0.0
      %v4958 = vsel %vm4696, %v4740, 0.0
      %v4959 = vsel %vm4697, %v4739, 0.0
      %v4960 = vsel %vm4698, %v4740, 0.0
      %v4961 = vsel %vm4699, %v4739, 0.0
      %v4962 = vsel %vm4700, %v4740, 0.0
      %v4963 = vsel %vm4701, %v4739, 0.0
      %v4964 = vsel %vm4702, %v4740, 0.0
      %v4965 = vsel %vm4703, %v4739, 0.0
      %v4966 = vsel %vm4704, %v4740, 0.0
      %v4967 = vsel %vm4705, %v4739, 0.0
      %v4968 = vsel %vm4706, %v4740, 0.0
      %v4969 = vsel %vm4707, %v4739, 0.0
      %v4970 = vsel %vm4708, %v4740, 0.0
      %v4971 = vsel %vm4709, %v4739, 0.0
      %v4972 = vsel %vm4710, %v4740, 0.0
      %v4973 = vsel %vm4711, %v4739, 0.0
      %v4974 = vsel %vm4712, %v4740, 0.0
      %v4975 = vsel %vm4713, %v4739, 0.0
      %v4976 = vsel %vm4714, %v4740, 0.0
      %v4977 = vsel %vm4715, %v4739, 0.0
      %v4978 = vsel %vm4716, %v4740, 0.0
      %v4979 = vsel %vm4717, %v4739, 0.0
      %v4980 = vsel %vm4718, %v4740, 0.0
      %v4981 = vsel %vm4719, %v4739, 0.0
      %v4982 = vsel %vm4720, %v4740, 0.0
      %v4983 = vsel %vm4721, %v4739, 0.0
      %v4984 = vsel %vm4722, %v4740, 0.0
      %v4985 = vsel %vm4723, %v4739, 0.0
      %v4986 = vsel %vm4724, %v4740, 0.0
      %v4987 = vsel %vm4725, %v4739, 0.0
      %v4988 = vsel %vm4726, %v4740, 0.0
      %v4989 = vsel %vm4727, %v4739, 0.0
      %v4990 = vsel %vm4728, %v4740, 0.0
      %v4991 = vsel %vm4729, %v4739, 0.0
      %v4992 = vsel %vm4730, %v4740, 0.0
      %v4993 = vsel %vm4731, %v4739, 0.0
      %v4994 = vsel %vm4732, %v4740, 0.0
      %v4995 = vsel %vm4733, %v4739, 0.0
      %v4996 = vsel %vm4734, %v4740, 0.0
      %v4997 = vperm.slane %v462, 2
      %v4998 = vperm.slane %v462, 6
      %v4999 = vperm.slane %v4997, 2
      %v5000 = vperm.slane %v4998, 2
      %vm5001 = vcmp.eq.s32.totalorder %v4093, %v4999
      %vm5002 = vcmp.eq.s32.totalorder %v4093, %v5000
      %vm5003 = vcmp.eq.s32.totalorder %v4096, %v4999
      %vm5004 = vcmp.eq.s32.totalorder %v4096, %v5000
      %vm5005 = vcmp.eq.s32.totalorder %v4099, %v4999
      %vm5006 = vcmp.eq.s32.totalorder %v4099, %v5000
      %vm5007 = vcmp.eq.s32.totalorder %v4102, %v4999
      %vm5008 = vcmp.eq.s32.totalorder %v4102, %v5000
      %vm5009 = vcmp.eq.s32.totalorder %v4105, %v4999
      %vm5010 = vcmp.eq.s32.totalorder %v4105, %v5000
      %vm5011 = vcmp.eq.s32.totalorder %v4108, %v4999
      %vm5012 = vcmp.eq.s32.totalorder %v4108, %v5000
      %vm5013 = vcmp.eq.s32.totalorder %v4111, %v4999
      %vm5014 = vcmp.eq.s32.totalorder %v4111, %v5000
      %vm5015 = vcmp.eq.s32.totalorder %v4114, %v4999
      %vm5016 = vcmp.eq.s32.totalorder %v4114, %v5000
      %vm5017 = vcmp.eq.s32.totalorder %v4117, %v4999
      %vm5018 = vcmp.eq.s32.totalorder %v4117, %v5000
      %vm5019 = vcmp.eq.s32.totalorder %v4120, %v4999
      %vm5020 = vcmp.eq.s32.totalorder %v4120, %v5000
      %vm5021 = vcmp.eq.s32.totalorder %v4123, %v4999
      %vm5022 = vcmp.eq.s32.totalorder %v4123, %v5000
      %vm5023 = vcmp.eq.s32.totalorder %v4126, %v4999
      %vm5024 = vcmp.eq.s32.totalorder %v4126, %v5000
      %vm5025 = vcmp.eq.s32.totalorder %v4129, %v4999
      %vm5026 = vcmp.eq.s32.totalorder %v4129, %v5000
      %vm5027 = vcmp.eq.s32.totalorder %v4132, %v4999
      %vm5028 = vcmp.eq.s32.totalorder %v4132, %v5000
      %vm5029 = vcmp.eq.s32.totalorder %v4135, %v4999
      %vm5030 = vcmp.eq.s32.totalorder %v4135, %v5000
      %vm5031 = vcmp.eq.s32.totalorder %v4138, %v4999
      %vm5032 = vcmp.eq.s32.totalorder %v4138, %v5000
      %vm5033 = vcmp.eq.s32.totalorder %v4141, %v4999
      %vm5034 = vcmp.eq.s32.totalorder %v4141, %v5000
      %vm5035 = vcmp.eq.s32.totalorder %v4144, %v4999
      %vm5036 = vcmp.eq.s32.totalorder %v4144, %v5000
      %vm5037 = vcmp.eq.s32.totalorder %v4147, %v4999
      %vm5038 = vcmp.eq.s32.totalorder %v4147, %v5000
      %vm5039 = vcmp.eq.s32.totalorder %v4150, %v4999
      %vm5040 = vcmp.eq.s32.totalorder %v4150, %v5000
      %vm5041 = vcmp.eq.s32.totalorder %v4153, %v4999
      %vm5042 = vcmp.eq.s32.totalorder %v4153, %v5000
      %vm5043 = vcmp.eq.s32.totalorder %v4156, %v4999
      %vm5044 = vcmp.eq.s32.totalorder %v4156, %v5000
      %vm5045 = vcmp.eq.s32.totalorder %v4159, %v4999
      %vm5046 = vcmp.eq.s32.totalorder %v4159, %v5000
      %vm5047 = vcmp.eq.s32.totalorder %v4162, %v4999
      %vm5048 = vcmp.eq.s32.totalorder %v4162, %v5000
      %vm5049 = vcmp.eq.s32.totalorder %v4165, %v4999
      %vm5050 = vcmp.eq.s32.totalorder %v4165, %v5000
      %vm5051 = vcmp.eq.s32.totalorder %v4168, %v4999
      %vm5052 = vcmp.eq.s32.totalorder %v4168, %v5000
      %vm5053 = vcmp.eq.s32.totalorder %v4171, %v4999
      %vm5054 = vcmp.eq.s32.totalorder %v4171, %v5000
      %vm5055 = vcmp.eq.s32.totalorder %v4174, %v4999
      %vm5056 = vcmp.eq.s32.totalorder %v4174, %v5000
      %vm5057 = vcmp.eq.s32.totalorder %v4177, %v4999
      %vm5058 = vcmp.eq.s32.totalorder %v4177, %v5000
      %vm5059 = vcmp.eq.s32.totalorder %v4180, %v4999
      %vm5060 = vcmp.eq.s32.totalorder %v4180, %v5000
      %vm5061 = vcmp.eq.s32.totalorder %v4183, %v4999
      %vm5062 = vcmp.eq.s32.totalorder %v4183, %v5000
      %vm5063 = vcmp.eq.s32.totalorder %v4186, %v4999
      %vm5064 = vcmp.eq.s32.totalorder %v4186, %v5000
      %vm5065 = vcmp.eq.s32.totalorder %v4189, %v4999
      %vm5066 = vcmp.eq.s32.totalorder %v4189, %v5000
      %vm5067 = vcmp.eq.s32.totalorder %v4192, %v4999
      %vm5068 = vcmp.eq.s32.totalorder %v4192, %v5000
      %vm5069 = vcmp.eq.s32.totalorder %v4195, %v4999
      %vm5070 = vcmp.eq.s32.totalorder %v4195, %v5000
      %vm5071 = vcmp.eq.s32.totalorder %v4198, %v4999
      %vm5072 = vcmp.eq.s32.totalorder %v4198, %v5000
      %vm5073 = vcmp.eq.s32.totalorder %v4201, %v4999
      %vm5074 = vcmp.eq.s32.totalorder %v4201, %v5000
      %vm5075 = vcmp.eq.s32.totalorder %v4204, %v4999
      %vm5076 = vcmp.eq.s32.totalorder %v4204, %v5000
      %vm5077 = vcmp.eq.s32.totalorder %v4207, %v4999
      %vm5078 = vcmp.eq.s32.totalorder %v4207, %v5000
      %vm5079 = vcmp.eq.s32.totalorder %v4210, %v4999
      %vm5080 = vcmp.eq.s32.totalorder %v4210, %v5000
      %vm5081 = vcmp.eq.s32.totalorder %v4213, %v4999
      %vm5082 = vcmp.eq.s32.totalorder %v4213, %v5000
      %vm5083 = vcmp.eq.s32.totalorder %v4216, %v4999
      %vm5084 = vcmp.eq.s32.totalorder %v4216, %v5000
      %vm5085 = vcmp.eq.s32.totalorder %v4219, %v4999
      %vm5086 = vcmp.eq.s32.totalorder %v4219, %v5000
      %vm5087 = vcmp.eq.s32.totalorder %v4222, %v4999
      %vm5088 = vcmp.eq.s32.totalorder %v4222, %v5000
      %vm5089 = vcmp.eq.s32.totalorder %v4225, %v4999
      %vm5090 = vcmp.eq.s32.totalorder %v4225, %v5000
      %vm5091 = vcmp.eq.s32.totalorder %v4228, %v4999
      %vm5092 = vcmp.eq.s32.totalorder %v4228, %v5000
      %vm5093 = vcmp.eq.s32.totalorder %v4231, %v4999
      %vm5094 = vcmp.eq.s32.totalorder %v4231, %v5000
      %vm5095 = vcmp.eq.s32.totalorder %v4234, %v4999
      %vm5096 = vcmp.eq.s32.totalorder %v4234, %v5000
      %vm5097 = vcmp.eq.s32.totalorder %v4237, %v4999
      %vm5098 = vcmp.eq.s32.totalorder %v4237, %v5000
      %vm5099 = vcmp.eq.s32.totalorder %v4240, %v4999
      %vm5100 = vcmp.eq.s32.totalorder %v4240, %v5000
      %vm5101 = vcmp.eq.s32.totalorder %v4243, %v4999
      %vm5102 = vcmp.eq.s32.totalorder %v4243, %v5000
      %vm5103 = vcmp.eq.s32.totalorder %v4246, %v4999
      %vm5104 = vcmp.eq.s32.totalorder %v4246, %v5000
      %vm5105 = vcmp.eq.s32.totalorder %v4249, %v4999
      %vm5106 = vcmp.eq.s32.totalorder %v4249, %v5000
      %vm5107 = vcmp.eq.s32.totalorder %v4252, %v4999
      %vm5108 = vcmp.eq.s32.totalorder %v4252, %v5000
      %vm5109 = vcmp.eq.s32.totalorder %v4255, %v4999
      %vm5110 = vcmp.eq.s32.totalorder %v4255, %v5000
      %vm5111 = vcmp.eq.s32.totalorder %v4258, %v4999
      %vm5112 = vcmp.eq.s32.totalorder %v4258, %v5000
      %vm5113 = vcmp.eq.s32.totalorder %v4261, %v4999
      %vm5114 = vcmp.eq.s32.totalorder %v4261, %v5000
      %vm5115 = vcmp.eq.s32.totalorder %v4264, %v4999
      %vm5116 = vcmp.eq.s32.totalorder %v4264, %v5000
      %vm5117 = vcmp.eq.s32.totalorder %v4267, %v4999
      %vm5118 = vcmp.eq.s32.totalorder %v4267, %v5000
      %vm5119 = vcmp.eq.s32.totalorder %v4270, %v4999
      %vm5120 = vcmp.eq.s32.totalorder %v4270, %v5000
      %vm5121 = vcmp.eq.s32.totalorder %v4273, %v4999
      %vm5122 = vcmp.eq.s32.totalorder %v4273, %v5000
      %vm5123 = vcmp.eq.s32.totalorder %v4276, %v4999
      %vm5124 = vcmp.eq.s32.totalorder %v4276, %v5000
      %vm5125 = vcmp.eq.s32.totalorder %v4279, %v4999
      %vm5126 = vcmp.eq.s32.totalorder %v4279, %v5000
      %vm5127 = vcmp.eq.s32.totalorder %v4282, %v4999
      %vm5128 = vcmp.eq.s32.totalorder %v4282, %v5000
      %vm5129 = vcmp.eq.s32.totalorder %v4285, %v4999
      %vm5130 = vcmp.eq.s32.totalorder %v4285, %v5000
      %vm5131 = vcmp.eq.s32.totalorder %v4288, %v4999
      %vm5132 = vcmp.eq.s32.totalorder %v4288, %v5000
      %vm5133 = vcmp.eq.s32.totalorder %v4291, %v4999
      %vm5134 = vcmp.eq.s32.totalorder %v4291, %v5000
      %vm5135 = vcmp.eq.s32.totalorder %v4294, %v4999
      %vm5136 = vcmp.eq.s32.totalorder %v4294, %v5000
      %vm5137 = vcmp.eq.s32.totalorder %v4297, %v4999
      %vm5138 = vcmp.eq.s32.totalorder %v4297, %v5000
      %vm5139 = vcmp.eq.s32.totalorder %v4300, %v4999
      %vm5140 = vcmp.eq.s32.totalorder %v4300, %v5000
      %vm5141 = vcmp.eq.s32.totalorder %v4303, %v4999
      %vm5142 = vcmp.eq.s32.totalorder %v4303, %v5000
      %vm5143 = vcmp.eq.s32.totalorder %v4306, %v4999
      %vm5144 = vcmp.eq.s32.totalorder %v4306, %v5000
      %vm5145 = vcmp.eq.s32.totalorder %v4309, %v4999
      %vm5146 = vcmp.eq.s32.totalorder %v4309, %v5000
      %vm5147 = vcmp.eq.s32.totalorder %v4312, %v4999
      %vm5148 = vcmp.eq.s32.totalorder %v4312, %v5000
      %vm5149 = vcmp.eq.s32.totalorder %v4315, %v4999
      %vm5150 = vcmp.eq.s32.totalorder %v4315, %v5000
      %vm5151 = vcmp.eq.s32.totalorder %v4318, %v4999
      %vm5152 = vcmp.eq.s32.totalorder %v4318, %v5000
      %vm5153 = vcmp.eq.s32.totalorder %v4321, %v4999
      %vm5154 = vcmp.eq.s32.totalorder %v4321, %v5000
      %vm5155 = vcmp.eq.s32.totalorder %v4324, %v4999
      %vm5156 = vcmp.eq.s32.totalorder %v4324, %v5000
      %vm5157 = vcmp.eq.s32.totalorder %v4327, %v4999
      %vm5158 = vcmp.eq.s32.totalorder %v4327, %v5000
      %vm5159 = vcmp.eq.s32.totalorder %v4330, %v4999
      %vm5160 = vcmp.eq.s32.totalorder %v4330, %v5000
      %vm5161 = vcmp.eq.s32.totalorder %v4333, %v4999
      %vm5162 = vcmp.eq.s32.totalorder %v4333, %v5000
      %vm5163 = vcmp.eq.s32.totalorder %v4336, %v4999
      %vm5164 = vcmp.eq.s32.totalorder %v4336, %v5000
      %vm5165 = vcmp.eq.s32.totalorder %v4339, %v4999
      %vm5166 = vcmp.eq.s32.totalorder %v4339, %v5000
      %vm5167 = vcmp.eq.s32.totalorder %v4342, %v4999
      %vm5168 = vcmp.eq.s32.totalorder %v4342, %v5000
      %vm5169 = vcmp.eq.s32.totalorder %v4345, %v4999
      %vm5170 = vcmp.eq.s32.totalorder %v4345, %v5000
      %vm5171 = vcmp.eq.s32.totalorder %v4348, %v4999
      %vm5172 = vcmp.eq.s32.totalorder %v4348, %v5000
      %vm5173 = vcmp.eq.s32.totalorder %v4351, %v4999
      %vm5174 = vcmp.eq.s32.totalorder %v4351, %v5000
      %vm5175 = vcmp.eq.s32.totalorder %v4354, %v4999
      %vm5176 = vcmp.eq.s32.totalorder %v4354, %v5000
      %vm5177 = vcmp.eq.s32.totalorder %v4357, %v4999
      %vm5178 = vcmp.eq.s32.totalorder %v4357, %v5000
      %vm5179 = vcmp.eq.s32.totalorder %v4360, %v4999
      %vm5180 = vcmp.eq.s32.totalorder %v4360, %v5000
      %vm5181 = vcmp.eq.s32.totalorder %v4363, %v4999
      %vm5182 = vcmp.eq.s32.totalorder %v4363, %v5000
      %vm5183 = vcmp.eq.s32.totalorder %v4366, %v4999
      %vm5184 = vcmp.eq.s32.totalorder %v4366, %v5000
      %vm5185 = vcmp.eq.s32.totalorder %v4369, %v4999
      %vm5186 = vcmp.eq.s32.totalorder %v4369, %v5000
      %vm5187 = vcmp.eq.s32.totalorder %v4372, %v4999
      %vm5188 = vcmp.eq.s32.totalorder %v4372, %v5000
      %vm5189 = vcmp.eq.s32.totalorder %v4375, %v4999
      %vm5190 = vcmp.eq.s32.totalorder %v4375, %v5000
      %vm5191 = vcmp.eq.s32.totalorder %v4378, %v4999
      %vm5192 = vcmp.eq.s32.totalorder %v4378, %v5000
      %vm5193 = vcmp.eq.s32.totalorder %v4381, %v4999
      %vm5194 = vcmp.eq.s32.totalorder %v4381, %v5000
      %vm5195 = vcmp.eq.s32.totalorder %v4384, %v4999
      %vm5196 = vcmp.eq.s32.totalorder %v4384, %v5000
      %vm5197 = vcmp.eq.s32.totalorder %v4387, %v4999
      %vm5198 = vcmp.eq.s32.totalorder %v4387, %v5000
      %vm5199 = vcmp.eq.s32.totalorder %v4390, %v4999
      %vm5200 = vcmp.eq.s32.totalorder %v4390, %v5000
      %vm5201 = vcmp.eq.s32.totalorder %v4393, %v4999
      %vm5202 = vcmp.eq.s32.totalorder %v4393, %v5000
      %vm5203 = vcmp.eq.s32.totalorder %v4396, %v4999
      %vm5204 = vcmp.eq.s32.totalorder %v4396, %v5000
      %vm5205 = vcmp.eq.s32.totalorder %v4399, %v4999
      %vm5206 = vcmp.eq.s32.totalorder %v4399, %v5000
      %vm5207 = vcmp.eq.s32.totalorder %v4402, %v4999
      %vm5208 = vcmp.eq.s32.totalorder %v4402, %v5000
      %vm5209 = vcmp.eq.s32.totalorder %v4405, %v4999
      %vm5210 = vcmp.eq.s32.totalorder %v4405, %v5000
      %vm5211 = vcmp.eq.s32.totalorder %v4408, %v4999
      %vm5212 = vcmp.eq.s32.totalorder %v4408, %v5000
      %vm5213 = vcmp.eq.s32.totalorder %v4411, %v4999
      %vm5214 = vcmp.eq.s32.totalorder %v4411, %v5000
      %vm5215 = vcmp.eq.s32.totalorder %v4414, %v4999
      %vm5216 = vcmp.eq.s32.totalorder %v4414, %v5000
      %vm5217 = vcmp.eq.s32.totalorder %v4417, %v4999
      %vm5218 = vcmp.eq.s32.totalorder %v4417, %v5000
      %vm5219 = vcmp.eq.s32.totalorder %v4420, %v4999
      %vm5220 = vcmp.eq.s32.totalorder %v4420, %v5000
      %vm5221 = vcmp.eq.s32.totalorder %v4423, %v4999
      %vm5222 = vcmp.eq.s32.totalorder %v4423, %v5000
      %vm5223 = vcmp.eq.s32.totalorder %v4426, %v4999
      %vm5224 = vcmp.eq.s32.totalorder %v4426, %v5000
      %vm5225 = vcmp.eq.s32.totalorder %v4429, %v4999
      %vm5226 = vcmp.eq.s32.totalorder %v4429, %v5000
      %vm5227 = vcmp.eq.s32.totalorder %v4432, %v4999
      %vm5228 = vcmp.eq.s32.totalorder %v4432, %v5000
      %vm5229 = vcmp.eq.s32.totalorder %v4435, %v4999
      %vm5230 = vcmp.eq.s32.totalorder %v4435, %v5000
      %vm5231 = vcmp.eq.s32.totalorder %v4438, %v4999
      %vm5232 = vcmp.eq.s32.totalorder %v4438, %v5000
      %vm5233 = vcmp.eq.s32.totalorder %v4441, %v4999
      %vm5234 = vcmp.eq.s32.totalorder %v4441, %v5000
      %vm5235 = vcmp.eq.s32.totalorder %v4444, %v4999
      %vm5236 = vcmp.eq.s32.totalorder %v4444, %v5000
      %vm5237 = vcmp.eq.s32.totalorder %v4447, %v4999
      %vm5238 = vcmp.eq.s32.totalorder %v4447, %v5000
      %vm5239 = vcmp.eq.s32.totalorder %v4450, %v4999
      %vm5240 = vcmp.eq.s32.totalorder %v4450, %v5000
      %vm5241 = vcmp.eq.s32.totalorder %v4453, %v4999
      %vm5242 = vcmp.eq.s32.totalorder %v4453, %v5000
      %vm5243 = vcmp.eq.s32.totalorder %v4456, %v4999
      %vm5244 = vcmp.eq.s32.totalorder %v4456, %v5000
      %vm5245 = vcmp.eq.s32.totalorder %v4459, %v4999
      %vm5246 = vcmp.eq.s32.totalorder %v4459, %v5000
      %vm5247 = vcmp.eq.s32.totalorder %v4462, %v4999
      %vm5248 = vcmp.eq.s32.totalorder %v4462, %v5000
      %vm5249 = vcmp.eq.s32.totalorder %v4465, %v4999
      %vm5250 = vcmp.eq.s32.totalorder %v4465, %v5000
      %vm5251 = vcmp.eq.s32.totalorder %v4468, %v4999
      %vm5252 = vcmp.eq.s32.totalorder %v4468, %v5000
      %vm5253 = vcmp.eq.s32.totalorder %v4471, %v4999
      %vm5254 = vcmp.eq.s32.totalorder %v4471, %v5000
      %vm5255 = vcmp.eq.s32.totalorder %v4474, %v4999
      %vm5256 = vcmp.eq.s32.totalorder %v4474, %v5000
      %v5257 = vperm.slane %v463, 2
      %v5258 = vperm.slane %v463, 6
      %v5261 = vperm.slane %v5257, 2
      %v5262 = vperm.slane %v5258, 2
      %v5263 = vsel %vm5001, %v5261, 0.0
      %v5264 = vsel %vm5002, %v5262, 0.0
      %v5265 = vsel %vm5003, %v5261, 0.0
      %v5266 = vsel %vm5004, %v5262, 0.0
      %v5267 = vsel %vm5005, %v5261, 0.0
      %v5268 = vsel %vm5006, %v5262, 0.0
      %v5269 = vsel %vm5007, %v5261, 0.0
      %v5270 = vsel %vm5008, %v5262, 0.0
      %v5271 = vsel %vm5009, %v5261, 0.0
      %v5272 = vsel %vm5010, %v5262, 0.0
      %v5273 = vsel %vm5011, %v5261, 0.0
      %v5274 = vsel %vm5012, %v5262, 0.0
      %v5275 = vsel %vm5013, %v5261, 0.0
      %v5276 = vsel %vm5014, %v5262, 0.0
      %v5277 = vsel %vm5015, %v5261, 0.0
      %v5278 = vsel %vm5016, %v5262, 0.0
      %v5279 = vsel %vm5017, %v5261, 0.0
      %v5280 = vsel %vm5018, %v5262, 0.0
      %v5281 = vsel %vm5019, %v5261, 0.0
      %v5282 = vsel %vm5020, %v5262, 0.0
      %v5283 = vsel %vm5021, %v5261, 0.0
      %v5284 = vsel %vm5022, %v5262, 0.0
      %v5285 = vsel %vm5023, %v5261, 0.0
      %v5286 = vsel %vm5024, %v5262, 0.0
      %v5287 = vsel %vm5025, %v5261, 0.0
      %v5288 = vsel %vm5026, %v5262, 0.0
      %v5289 = vsel %vm5027, %v5261, 0.0
      %v5290 = vsel %vm5028, %v5262, 0.0
      %v5291 = vsel %vm5029, %v5261, 0.0
      %v5292 = vsel %vm5030, %v5262, 0.0
      %v5293 = vsel %vm5031, %v5261, 0.0
      %v5294 = vsel %vm5032, %v5262, 0.0
      %v5295 = vsel %vm5033, %v5261, 0.0
      %v5296 = vsel %vm5034, %v5262, 0.0
      %v5297 = vsel %vm5035, %v5261, 0.0
      %v5298 = vsel %vm5036, %v5262, 0.0
      %v5299 = vsel %vm5037, %v5261, 0.0
      %v5300 = vsel %vm5038, %v5262, 0.0
      %v5301 = vsel %vm5039, %v5261, 0.0
      %v5302 = vsel %vm5040, %v5262, 0.0
      %v5303 = vsel %vm5041, %v5261, 0.0
      %v5304 = vsel %vm5042, %v5262, 0.0
      %v5305 = vsel %vm5043, %v5261, 0.0
      %v5306 = vsel %vm5044, %v5262, 0.0
      %v5307 = vsel %vm5045, %v5261, 0.0
      %v5308 = vsel %vm5046, %v5262, 0.0
      %v5309 = vsel %vm5047, %v5261, 0.0
      %v5310 = vsel %vm5048, %v5262, 0.0
      %v5311 = vsel %vm5049, %v5261, 0.0
      %v5312 = vsel %vm5050, %v5262, 0.0
      %v5313 = vsel %vm5051, %v5261, 0.0
      %v5314 = vsel %vm5052, %v5262, 0.0
      %v5315 = vsel %vm5053, %v5261, 0.0
      %v5316 = vsel %vm5054, %v5262, 0.0
      %v5317 = vsel %vm5055, %v5261, 0.0
      %v5318 = vsel %vm5056, %v5262, 0.0
      %v5319 = vsel %vm5057, %v5261, 0.0
      %v5320 = vsel %vm5058, %v5262, 0.0
      %v5321 = vsel %vm5059, %v5261, 0.0
      %v5322 = vsel %vm5060, %v5262, 0.0
      %v5323 = vsel %vm5061, %v5261, 0.0
      %v5324 = vsel %vm5062, %v5262, 0.0
      %v5325 = vsel %vm5063, %v5261, 0.0
      %v5326 = vsel %vm5064, %v5262, 0.0
      %v5327 = vsel %vm5065, %v5261, 0.0
      %v5328 = vsel %vm5066, %v5262, 0.0
      %v5329 = vsel %vm5067, %v5261, 0.0
      %v5330 = vsel %vm5068, %v5262, 0.0
      %v5331 = vsel %vm5069, %v5261, 0.0
      %v5332 = vsel %vm5070, %v5262, 0.0
      %v5333 = vsel %vm5071, %v5261, 0.0
      %v5334 = vsel %vm5072, %v5262, 0.0
      %v5335 = vsel %vm5073, %v5261, 0.0
      %v5336 = vsel %vm5074, %v5262, 0.0
      %v5337 = vsel %vm5075, %v5261, 0.0
      %v5338 = vsel %vm5076, %v5262, 0.0
      %v5339 = vsel %vm5077, %v5261, 0.0
      %v5340 = vsel %vm5078, %v5262, 0.0
      %v5341 = vsel %vm5079, %v5261, 0.0
      %v5342 = vsel %vm5080, %v5262, 0.0
      %v5343 = vsel %vm5081, %v5261, 0.0
      %v5344 = vsel %vm5082, %v5262, 0.0
      %v5345 = vsel %vm5083, %v5261, 0.0
      %v5346 = vsel %vm5084, %v5262, 0.0
      %v5347 = vsel %vm5085, %v5261, 0.0
      %v5348 = vsel %vm5086, %v5262, 0.0
      %v5349 = vsel %vm5087, %v5261, 0.0
      %v5350 = vsel %vm5088, %v5262, 0.0
      %v5351 = vsel %vm5089, %v5261, 0.0
      %v5352 = vsel %vm5090, %v5262, 0.0
      %v5353 = vsel %vm5091, %v5261, 0.0
      %v5354 = vsel %vm5092, %v5262, 0.0
      %v5355 = vsel %vm5093, %v5261, 0.0
      %v5356 = vsel %vm5094, %v5262, 0.0
      %v5357 = vsel %vm5095, %v5261, 0.0
      %v5358 = vsel %vm5096, %v5262, 0.0
      %v5359 = vsel %vm5097, %v5261, 0.0
      %v5360 = vsel %vm5098, %v5262, 0.0
      %v5361 = vsel %vm5099, %v5261, 0.0
      %v5362 = vsel %vm5100, %v5262, 0.0
      %v5363 = vsel %vm5101, %v5261, 0.0
      %v5364 = vsel %vm5102, %v5262, 0.0
      %v5365 = vsel %vm5103, %v5261, 0.0
      %v5366 = vsel %vm5104, %v5262, 0.0
      %v5367 = vsel %vm5105, %v5261, 0.0
      %v5368 = vsel %vm5106, %v5262, 0.0
      %v5369 = vsel %vm5107, %v5261, 0.0
      %v5370 = vsel %vm5108, %v5262, 0.0
      %v5371 = vsel %vm5109, %v5261, 0.0
      %v5372 = vsel %vm5110, %v5262, 0.0
      %v5373 = vsel %vm5111, %v5261, 0.0
      %v5374 = vsel %vm5112, %v5262, 0.0
      %v5375 = vsel %vm5113, %v5261, 0.0
      %v5376 = vsel %vm5114, %v5262, 0.0
      %v5377 = vsel %vm5115, %v5261, 0.0
      %v5378 = vsel %vm5116, %v5262, 0.0
      %v5379 = vsel %vm5117, %v5261, 0.0
      %v5380 = vsel %vm5118, %v5262, 0.0
      %v5381 = vsel %vm5119, %v5261, 0.0
      %v5382 = vsel %vm5120, %v5262, 0.0
      %v5383 = vsel %vm5121, %v5261, 0.0
      %v5384 = vsel %vm5122, %v5262, 0.0
      %v5385 = vsel %vm5123, %v5261, 0.0
      %v5386 = vsel %vm5124, %v5262, 0.0
      %v5387 = vsel %vm5125, %v5261, 0.0
      %v5388 = vsel %vm5126, %v5262, 0.0
      %v5389 = vsel %vm5127, %v5261, 0.0
      %v5390 = vsel %vm5128, %v5262, 0.0
      %v5391 = vsel %vm5129, %v5261, 0.0
      %v5392 = vsel %vm5130, %v5262, 0.0
      %v5393 = vsel %vm5131, %v5261, 0.0
      %v5394 = vsel %vm5132, %v5262, 0.0
      %v5395 = vsel %vm5133, %v5261, 0.0
      %v5396 = vsel %vm5134, %v5262, 0.0
      %v5397 = vsel %vm5135, %v5261, 0.0
      %v5398 = vsel %vm5136, %v5262, 0.0
      %v5399 = vsel %vm5137, %v5261, 0.0
      %v5400 = vsel %vm5138, %v5262, 0.0
      %v5401 = vsel %vm5139, %v5261, 0.0
      %v5402 = vsel %vm5140, %v5262, 0.0
      %v5403 = vsel %vm5141, %v5261, 0.0
      %v5404 = vsel %vm5142, %v5262, 0.0
      %v5405 = vsel %vm5143, %v5261, 0.0
      %v5406 = vsel %vm5144, %v5262, 0.0
      %v5407 = vsel %vm5145, %v5261, 0.0
      %v5408 = vsel %vm5146, %v5262, 0.0
      %v5409 = vsel %vm5147, %v5261, 0.0
      %v5410 = vsel %vm5148, %v5262, 0.0
      %v5411 = vsel %vm5149, %v5261, 0.0
      %v5412 = vsel %vm5150, %v5262, 0.0
      %v5413 = vsel %vm5151, %v5261, 0.0
      %v5414 = vsel %vm5152, %v5262, 0.0
      %v5415 = vsel %vm5153, %v5261, 0.0
      %v5416 = vsel %vm5154, %v5262, 0.0
      %v5417 = vsel %vm5155, %v5261, 0.0
      %v5418 = vsel %vm5156, %v5262, 0.0
      %v5419 = vsel %vm5157, %v5261, 0.0
      %v5420 = vsel %vm5158, %v5262, 0.0
      %v5421 = vsel %vm5159, %v5261, 0.0
      %v5422 = vsel %vm5160, %v5262, 0.0
      %v5423 = vsel %vm5161, %v5261, 0.0
      %v5424 = vsel %vm5162, %v5262, 0.0
      %v5425 = vsel %vm5163, %v5261, 0.0
      %v5426 = vsel %vm5164, %v5262, 0.0
      %v5427 = vsel %vm5165, %v5261, 0.0
      %v5428 = vsel %vm5166, %v5262, 0.0
      %v5429 = vsel %vm5167, %v5261, 0.0
      %v5430 = vsel %vm5168, %v5262, 0.0
      %v5431 = vsel %vm5169, %v5261, 0.0
      %v5432 = vsel %vm5170, %v5262, 0.0
      %v5433 = vsel %vm5171, %v5261, 0.0
      %v5434 = vsel %vm5172, %v5262, 0.0
      %v5435 = vsel %vm5173, %v5261, 0.0
      %v5436 = vsel %vm5174, %v5262, 0.0
      %v5437 = vsel %vm5175, %v5261, 0.0
      %v5438 = vsel %vm5176, %v5262, 0.0
      %v5439 = vsel %vm5177, %v5261, 0.0
      %v5440 = vsel %vm5178, %v5262, 0.0
      %v5441 = vsel %vm5179, %v5261, 0.0
      %v5442 = vsel %vm5180, %v5262, 0.0
      %v5443 = vsel %vm5181, %v5261, 0.0
      %v5444 = vsel %vm5182, %v5262, 0.0
      %v5445 = vsel %vm5183, %v5261, 0.0
      %v5446 = vsel %vm5184, %v5262, 0.0
      %v5447 = vsel %vm5185, %v5261, 0.0
      %v5448 = vsel %vm5186, %v5262, 0.0
      %v5449 = vsel %vm5187, %v5261, 0.0
      %v5450 = vsel %vm5188, %v5262, 0.0
      %v5451 = vsel %vm5189, %v5261, 0.0
      %v5452 = vsel %vm5190, %v5262, 0.0
      %v5453 = vsel %vm5191, %v5261, 0.0
      %v5454 = vsel %vm5192, %v5262, 0.0
      %v5455 = vsel %vm5193, %v5261, 0.0
      %v5456 = vsel %vm5194, %v5262, 0.0
      %v5457 = vsel %vm5195, %v5261, 0.0
      %v5458 = vsel %vm5196, %v5262, 0.0
      %v5459 = vsel %vm5197, %v5261, 0.0
      %v5460 = vsel %vm5198, %v5262, 0.0
      %v5461 = vsel %vm5199, %v5261, 0.0
      %v5462 = vsel %vm5200, %v5262, 0.0
      %v5463 = vsel %vm5201, %v5261, 0.0
      %v5464 = vsel %vm5202, %v5262, 0.0
      %v5465 = vsel %vm5203, %v5261, 0.0
      %v5466 = vsel %vm5204, %v5262, 0.0
      %v5467 = vsel %vm5205, %v5261, 0.0
      %v5468 = vsel %vm5206, %v5262, 0.0
      %v5469 = vsel %vm5207, %v5261, 0.0
      %v5470 = vsel %vm5208, %v5262, 0.0
      %v5471 = vsel %vm5209, %v5261, 0.0
      %v5472 = vsel %vm5210, %v5262, 0.0
      %v5473 = vsel %vm5211, %v5261, 0.0
      %v5474 = vsel %vm5212, %v5262, 0.0
      %v5475 = vsel %vm5213, %v5261, 0.0
      %v5476 = vsel %vm5214, %v5262, 0.0
      %v5477 = vsel %vm5215, %v5261, 0.0
      %v5478 = vsel %vm5216, %v5262, 0.0
      %v5479 = vsel %vm5217, %v5261, 0.0
      %v5480 = vsel %vm5218, %v5262, 0.0
      %v5481 = vsel %vm5219, %v5261, 0.0
      %v5482 = vsel %vm5220, %v5262, 0.0
      %v5483 = vsel %vm5221, %v5261, 0.0
      %v5484 = vsel %vm5222, %v5262, 0.0
      %v5485 = vsel %vm5223, %v5261, 0.0
      %v5486 = vsel %vm5224, %v5262, 0.0
      %v5487 = vsel %vm5225, %v5261, 0.0
      %v5488 = vsel %vm5226, %v5262, 0.0
      %v5489 = vsel %vm5227, %v5261, 0.0
      %v5490 = vsel %vm5228, %v5262, 0.0
      %v5491 = vsel %vm5229, %v5261, 0.0
      %v5492 = vsel %vm5230, %v5262, 0.0
      %v5493 = vsel %vm5231, %v5261, 0.0
      %v5494 = vsel %vm5232, %v5262, 0.0
      %v5495 = vsel %vm5233, %v5261, 0.0
      %v5496 = vsel %vm5234, %v5262, 0.0
      %v5497 = vsel %vm5235, %v5261, 0.0
      %v5498 = vsel %vm5236, %v5262, 0.0
      %v5499 = vsel %vm5237, %v5261, 0.0
      %v5500 = vsel %vm5238, %v5262, 0.0
      %v5501 = vsel %vm5239, %v5261, 0.0
      %v5502 = vsel %vm5240, %v5262, 0.0
      %v5503 = vsel %vm5241, %v5261, 0.0
      %v5504 = vsel %vm5242, %v5262, 0.0
      %v5505 = vsel %vm5243, %v5261, 0.0
      %v5506 = vsel %vm5244, %v5262, 0.0
      %v5507 = vsel %vm5245, %v5261, 0.0
      %v5508 = vsel %vm5246, %v5262, 0.0
      %v5509 = vsel %vm5247, %v5261, 0.0
      %v5510 = vsel %vm5248, %v5262, 0.0
      %v5511 = vsel %vm5249, %v5261, 0.0
      %v5512 = vsel %vm5250, %v5262, 0.0
      %v5513 = vsel %vm5251, %v5261, 0.0
      %v5514 = vsel %vm5252, %v5262, 0.0
      %v5515 = vsel %vm5253, %v5261, 0.0
      %v5516 = vsel %vm5254, %v5262, 0.0
      %v5517 = vsel %vm5255, %v5261, 0.0
      %v5518 = vsel %vm5256, %v5262, 0.0
      %v5519 = vadd.f32 %v4741, %v5263
      %v5520 = vadd.f32 %v4742, %v5264
      %v5521 = vadd.f32 %v4743, %v5265
      %v5522 = vadd.f32 %v4744, %v5266
      %v5523 = vadd.f32 %v4745, %v5267
      %v5524 = vadd.f32 %v4746, %v5268
      %v5525 = vadd.f32 %v4747, %v5269
      %v5526 = vadd.f32 %v4748, %v5270
      %v5527 = vadd.f32 %v4749, %v5271
      %v5528 = vadd.f32 %v4750, %v5272
      %v5529 = vadd.f32 %v4751, %v5273
      %v5530 = vadd.f32 %v4752, %v5274
      %v5531 = vadd.f32 %v4753, %v5275
      %v5532 = vadd.f32 %v4754, %v5276
      %v5533 = vadd.f32 %v4755, %v5277
      %v5534 = vadd.f32 %v4756, %v5278
      %v5535 = vadd.f32 %v4757, %v5279
      %v5536 = vadd.f32 %v4758, %v5280
      %v5537 = vadd.f32 %v4759, %v5281
      %v5538 = vadd.f32 %v4760, %v5282
      %v5539 = vadd.f32 %v4761, %v5283
      %v5540 = vadd.f32 %v4762, %v5284
      %v5541 = vadd.f32 %v4763, %v5285
      %v5542 = vadd.f32 %v4764, %v5286
      %v5543 = vadd.f32 %v4765, %v5287
      %v5544 = vadd.f32 %v4766, %v5288
      %v5545 = vadd.f32 %v4767, %v5289
      %v5546 = vadd.f32 %v4768, %v5290
      %v5547 = vadd.f32 %v4769, %v5291
      %v5548 = vadd.f32 %v4770, %v5292
      %v5549 = vadd.f32 %v4771, %v5293
      %v5550 = vadd.f32 %v4772, %v5294
      %v5551 = vadd.f32 %v4773, %v5295
      %v5552 = vadd.f32 %v4774, %v5296
      %v5553 = vadd.f32 %v4775, %v5297
      %v5554 = vadd.f32 %v4776, %v5298
      %v5555 = vadd.f32 %v4777, %v5299
      %v5556 = vadd.f32 %v4778, %v5300
      %v5557 = vadd.f32 %v4779, %v5301
      %v5558 = vadd.f32 %v4780, %v5302
      %v5559 = vadd.f32 %v4781, %v5303
      %v5560 = vadd.f32 %v4782, %v5304
      %v5561 = vadd.f32 %v4783, %v5305
      %v5562 = vadd.f32 %v4784, %v5306
      %v5563 = vadd.f32 %v4785, %v5307
      %v5564 = vadd.f32 %v4786, %v5308
      %v5565 = vadd.f32 %v4787, %v5309
      %v5566 = vadd.f32 %v4788, %v5310
      %v5567 = vadd.f32 %v4789, %v5311
      %v5568 = vadd.f32 %v4790, %v5312
      %v5569 = vadd.f32 %v4791, %v5313
      %v5570 = vadd.f32 %v4792, %v5314
      %v5571 = vadd.f32 %v4793, %v5315
      %v5572 = vadd.f32 %v4794, %v5316
      %v5573 = vadd.f32 %v4795, %v5317
      %v5574 = vadd.f32 %v4796, %v5318
      %v5575 = vadd.f32 %v4797, %v5319
      %v5576 = vadd.f32 %v4798, %v5320
      %v5577 = vadd.f32 %v4799, %v5321
      %v5578 = vadd.f32 %v4800, %v5322
      %v5579 = vadd.f32 %v4801, %v5323
      %v5580 = vadd.f32 %v4802, %v5324
      %v5581 = vadd.f32 %v4803, %v5325
      %v5582 = vadd.f32 %v4804, %v5326
      %v5583 = vadd.f32 %v4805, %v5327
      %v5584 = vadd.f32 %v4806, %v5328
      %v5585 = vadd.f32 %v4807, %v5329
      %v5586 = vadd.f32 %v4808, %v5330
      %v5587 = vadd.f32 %v4809, %v5331
      %v5588 = vadd.f32 %v4810, %v5332
      %v5589 = vadd.f32 %v4811, %v5333
      %v5590 = vadd.f32 %v4812, %v5334
      %v5591 = vadd.f32 %v4813, %v5335
      %v5592 = vadd.f32 %v4814, %v5336
      %v5593 = vadd.f32 %v4815, %v5337
      %v5594 = vadd.f32 %v4816, %v5338
      %v5595 = vadd.f32 %v4817, %v5339
      %v5596 = vadd.f32 %v4818, %v5340
      %v5597 = vadd.f32 %v4819, %v5341
      %v5598 = vadd.f32 %v4820, %v5342
      %v5599 = vadd.f32 %v4821, %v5343
      %v5600 = vadd.f32 %v4822, %v5344
      %v5601 = vadd.f32 %v4823, %v5345
      %v5602 = vadd.f32 %v4824, %v5346
      %v5603 = vadd.f32 %v4825, %v5347
      %v5604 = vadd.f32 %v4826, %v5348
      %v5605 = vadd.f32 %v4827, %v5349
      %v5606 = vadd.f32 %v4828, %v5350
      %v5607 = vadd.f32 %v4829, %v5351
      %v5608 = vadd.f32 %v4830, %v5352
      %v5609 = vadd.f32 %v4831, %v5353
      %v5610 = vadd.f32 %v4832, %v5354
      %v5611 = vadd.f32 %v4833, %v5355
      %v5612 = vadd.f32 %v4834, %v5356
      %v5613 = vadd.f32 %v4835, %v5357
      %v5614 = vadd.f32 %v4836, %v5358
      %v5615 = vadd.f32 %v4837, %v5359
      %v5616 = vadd.f32 %v4838, %v5360
      %v5617 = vadd.f32 %v4839, %v5361
      %v5618 = vadd.f32 %v4840, %v5362
      %v5619 = vadd.f32 %v4841, %v5363
      %v5620 = vadd.f32 %v4842, %v5364
      %v5621 = vadd.f32 %v4843, %v5365
      %v5622 = vadd.f32 %v4844, %v5366
      %v5623 = vadd.f32 %v4845, %v5367
      %v5624 = vadd.f32 %v4846, %v5368
      %v5625 = vadd.f32 %v4847, %v5369
      %v5626 = vadd.f32 %v4848, %v5370
      %v5627 = vadd.f32 %v4849, %v5371
      %v5628 = vadd.f32 %v4850, %v5372
      %v5629 = vadd.f32 %v4851, %v5373
      %v5630 = vadd.f32 %v4852, %v5374
      %v5631 = vadd.f32 %v4853, %v5375
      %v5632 = vadd.f32 %v4854, %v5376
      %v5633 = vadd.f32 %v4855, %v5377
      %v5634 = vadd.f32 %v4856, %v5378
      %v5635 = vadd.f32 %v4857, %v5379
      %v5636 = vadd.f32 %v4858, %v5380
      %v5637 = vadd.f32 %v4859, %v5381
      %v5638 = vadd.f32 %v4860, %v5382
      %v5639 = vadd.f32 %v4861, %v5383
      %v5640 = vadd.f32 %v4862, %v5384
      %v5641 = vadd.f32 %v4863, %v5385
      %v5642 = vadd.f32 %v4864, %v5386
      %v5643 = vadd.f32 %v4865, %v5387
      %v5644 = vadd.f32 %v4866, %v5388
      %v5645 = vadd.f32 %v4867, %v5389
      %v5646 = vadd.f32 %v4868, %v5390
      %v5647 = vadd.f32 %v4869, %v5391
      %v5648 = vadd.f32 %v4870, %v5392
      %v5649 = vadd.f32 %v4871, %v5393
      %v5650 = vadd.f32 %v4872, %v5394
      %v5651 = vadd.f32 %v4873, %v5395
      %v5652 = vadd.f32 %v4874, %v5396
      %v5653 = vadd.f32 %v4875, %v5397
      %v5654 = vadd.f32 %v4876, %v5398
      %v5655 = vadd.f32 %v4877, %v5399
      %v5656 = vadd.f32 %v4878, %v5400
      %v5657 = vadd.f32 %v4879, %v5401
      %v5658 = vadd.f32 %v4880, %v5402
      %v5659 = vadd.f32 %v4881, %v5403
      %v5660 = vadd.f32 %v4882, %v5404
      %v5661 = vadd.f32 %v4883, %v5405
      %v5662 = vadd.f32 %v4884, %v5406
      %v5663 = vadd.f32 %v4885, %v5407
      %v5664 = vadd.f32 %v4886, %v5408
      %v5665 = vadd.f32 %v4887, %v5409
      %v5666 = vadd.f32 %v4888, %v5410
      %v5667 = vadd.f32 %v4889, %v5411
      %v5668 = vadd.f32 %v4890, %v5412
      %v5669 = vadd.f32 %v4891, %v5413
      %v5670 = vadd.f32 %v4892, %v5414
      %v5671 = vadd.f32 %v4893, %v5415
      %v5672 = vadd.f32 %v4894, %v5416
      %v5673 = vadd.f32 %v4895, %v5417
      %v5674 = vadd.f32 %v4896, %v5418
      %v5675 = vadd.f32 %v4897, %v5419
      %v5676 = vadd.f32 %v4898, %v5420
      %v5677 = vadd.f32 %v4899, %v5421
      %v5678 = vadd.f32 %v4900, %v5422
      %v5679 = vadd.f32 %v4901, %v5423
      %v5680 = vadd.f32 %v4902, %v5424
      %v5681 = vadd.f32 %v4903, %v5425
      %v5682 = vadd.f32 %v4904, %v5426
      %v5683 = vadd.f32 %v4905, %v5427
      %v5684 = vadd.f32 %v4906, %v5428
      %v5685 = vadd.f32 %v4907, %v5429
      %v5686 = vadd.f32 %v4908, %v5430
      %v5687 = vadd.f32 %v4909, %v5431
      %v5688 = vadd.f32 %v4910, %v5432
      %v5689 = vadd.f32 %v4911, %v5433
      %v5690 = vadd.f32 %v4912, %v5434
      %v5691 = vadd.f32 %v4913, %v5435
      %v5692 = vadd.f32 %v4914, %v5436
      %v5693 = vadd.f32 %v4915, %v5437
      %v5694 = vadd.f32 %v4916, %v5438
      %v5695 = vadd.f32 %v4917, %v5439
      %v5696 = vadd.f32 %v4918, %v5440
      %v5697 = vadd.f32 %v4919, %v5441
      %v5698 = vadd.f32 %v4920, %v5442
      %v5699 = vadd.f32 %v4921, %v5443
      %v5700 = vadd.f32 %v4922, %v5444
      %v5701 = vadd.f32 %v4923, %v5445
      %v5702 = vadd.f32 %v4924, %v5446
      %v5703 = vadd.f32 %v4925, %v5447
      %v5704 = vadd.f32 %v4926, %v5448
      %v5705 = vadd.f32 %v4927, %v5449
      %v5706 = vadd.f32 %v4928, %v5450
      %v5707 = vadd.f32 %v4929, %v5451
      %v5708 = vadd.f32 %v4930, %v5452
      %v5709 = vadd.f32 %v4931, %v5453
      %v5710 = vadd.f32 %v4932, %v5454
      %v5711 = vadd.f32 %v4933, %v5455
      %v5712 = vadd.f32 %v4934, %v5456
      %v5713 = vadd.f32 %v4935, %v5457
      %v5714 = vadd.f32 %v4936, %v5458
      %v5715 = vadd.f32 %v4937, %v5459
      %v5716 = vadd.f32 %v4938, %v5460
      %v5717 = vadd.f32 %v4939, %v5461
      %v5718 = vadd.f32 %v4940, %v5462
      %v5719 = vadd.f32 %v4941, %v5463
      %v5720 = vadd.f32 %v4942, %v5464
      %v5721 = vadd.f32 %v4943, %v5465
      %v5722 = vadd.f32 %v4944, %v5466
      %v5723 = vadd.f32 %v4945, %v5467
      %v5724 = vadd.f32 %v4946, %v5468
      %v5725 = vadd.f32 %v4947, %v5469
      %v5726 = vadd.f32 %v4948, %v5470
      %v5727 = vadd.f32 %v4949, %v5471
      %v5728 = vadd.f32 %v4950, %v5472
      %v5729 = vadd.f32 %v4951, %v5473
      %v5730 = vadd.f32 %v4952, %v5474
      %v5731 = vadd.f32 %v4953, %v5475
      %v5732 = vadd.f32 %v4954, %v5476
      %v5733 = vadd.f32 %v4955, %v5477
      %v5734 = vadd.f32 %v4956, %v5478
      %v5735 = vadd.f32 %v4957, %v5479
      %v5736 = vadd.f32 %v4958, %v5480
      %v5737 = vadd.f32 %v4959, %v5481
      %v5738 = vadd.f32 %v4960, %v5482
      %v5739 = vadd.f32 %v4961, %v5483
      %v5740 = vadd.f32 %v4962, %v5484
      %v5741 = vadd.f32 %v4963, %v5485
      %v5742 = vadd.f32 %v4964, %v5486
      %v5743 = vadd.f32 %v4965, %v5487
      %v5744 = vadd.f32 %v4966, %v5488
      %v5745 = vadd.f32 %v4967, %v5489
      %v5746 = vadd.f32 %v4968, %v5490
      %v5747 = vadd.f32 %v4969, %v5491
      %v5748 = vadd.f32 %v4970, %v5492
      %v5749 = vadd.f32 %v4971, %v5493
      %v5750 = vadd.f32 %v4972, %v5494
      %v5751 = vadd.f32 %v4973, %v5495
      %v5752 = vadd.f32 %v4974, %v5496
      %v5753 = vadd.f32 %v4975, %v5497
      %v5754 = vadd.f32 %v4976, %v5498
      %v5755 = vadd.f32 %v4977, %v5499
      %v5756 = vadd.f32 %v4978, %v5500
      %v5757 = vadd.f32 %v4979, %v5501
      %v5758 = vadd.f32 %v4980, %v5502
      %v5759 = vadd.f32 %v4981, %v5503
      %v5760 = vadd.f32 %v4982, %v5504
      %v5761 = vadd.f32 %v4983, %v5505
      %v5762 = vadd.f32 %v4984, %v5506
      %v5763 = vadd.f32 %v4985, %v5507
      %v5764 = vadd.f32 %v4986, %v5508
      %v5765 = vadd.f32 %v4987, %v5509
      %v5766 = vadd.f32 %v4988, %v5510
      %v5767 = vadd.f32 %v4989, %v5511
      %v5768 = vadd.f32 %v4990, %v5512
      %v5769 = vadd.f32 %v4991, %v5513
      %v5770 = vadd.f32 %v4992, %v5514
      %v5771 = vadd.f32 %v4993, %v5515
      %v5772 = vadd.f32 %v4994, %v5516
      %v5773 = vadd.f32 %v4995, %v5517
      %v5774 = vadd.f32 %v4996, %v5518
      %v5775 = vmul.f32 %v3835, %v5519
      %v5776 = vmul.f32 %v3836, %v5520
      %v5777 = vmul.f32 %v3837, %v5521
      %v5778 = vmul.f32 %v3838, %v5522
      %v5779 = vmul.f32 %v3839, %v5523
      %v5780 = vmul.f32 %v3840, %v5524
      %v5781 = vmul.f32 %v3841, %v5525
      %v5782 = vmul.f32 %v3842, %v5526
      %v5783 = vmul.f32 %v3843, %v5527
      %v5784 = vmul.f32 %v3844, %v5528
      %v5785 = vmul.f32 %v3845, %v5529
      %v5786 = vmul.f32 %v3846, %v5530
      %v5787 = vmul.f32 %v3847, %v5531
      %v5788 = vmul.f32 %v3848, %v5532
      %v5789 = vmul.f32 %v3849, %v5533
      %v5790 = vmul.f32 %v3850, %v5534
      %v5791 = vmul.f32 %v3851, %v5535
      %v5792 = vmul.f32 %v3852, %v5536
      %v5793 = vmul.f32 %v3853, %v5537
      %v5794 = vmul.f32 %v3854, %v5538
      %v5795 = vmul.f32 %v3855, %v5539
      %v5796 = vmul.f32 %v3856, %v5540
      %v5797 = vmul.f32 %v3857, %v5541
      %v5798 = vmul.f32 %v3858, %v5542
      %v5799 = vmul.f32 %v3859, %v5543
      %v5800 = vmul.f32 %v3860, %v5544
      %v5801 = vmul.f32 %v3861, %v5545
      %v5802 = vmul.f32 %v3862, %v5546
      %v5803 = vmul.f32 %v3863, %v5547
      %v5804 = vmul.f32 %v3864, %v5548
      %v5805 = vmul.f32 %v3865, %v5549
      %v5806 = vmul.f32 %v3866, %v5550
      %v5807 = vmul.f32 %v3867, %v5551
      %v5808 = vmul.f32 %v3868, %v5552
      %v5809 = vmul.f32 %v3869, %v5553
      %v5810 = vmul.f32 %v3870, %v5554
      %v5811 = vmul.f32 %v3871, %v5555
      %v5812 = vmul.f32 %v3872, %v5556
      %v5813 = vmul.f32 %v3873, %v5557
      %v5814 = vmul.f32 %v3874, %v5558
      %v5815 = vmul.f32 %v3875, %v5559
      %v5816 = vmul.f32 %v3876, %v5560
      %v5817 = vmul.f32 %v3877, %v5561
      %v5818 = vmul.f32 %v3878, %v5562
      %v5819 = vmul.f32 %v3879, %v5563
      %v5820 = vmul.f32 %v3880, %v5564
      %v5821 = vmul.f32 %v3881, %v5565
      %v5822 = vmul.f32 %v3882, %v5566
      %v5823 = vmul.f32 %v3883, %v5567
      %v5824 = vmul.f32 %v3884, %v5568
      %v5825 = vmul.f32 %v3885, %v5569
      %v5826 = vmul.f32 %v3886, %v5570
      %v5827 = vmul.f32 %v3887, %v5571
      %v5828 = vmul.f32 %v3888, %v5572
      %v5829 = vmul.f32 %v3889, %v5573
      %v5830 = vmul.f32 %v3890, %v5574
      %v5831 = vmul.f32 %v3891, %v5575
      %v5832 = vmul.f32 %v3892, %v5576
      %v5833 = vmul.f32 %v3893, %v5577
      %v5834 = vmul.f32 %v3894, %v5578
      %v5835 = vmul.f32 %v3895, %v5579
      %v5836 = vmul.f32 %v3896, %v5580
      %v5837 = vmul.f32 %v3897, %v5581
      %v5838 = vmul.f32 %v3898, %v5582
      %v5839 = vmul.f32 %v3899, %v5583
      %v5840 = vmul.f32 %v3900, %v5584
      %v5841 = vmul.f32 %v3901, %v5585
      %v5842 = vmul.f32 %v3902, %v5586
      %v5843 = vmul.f32 %v3903, %v5587
      %v5844 = vmul.f32 %v3904, %v5588
      %v5845 = vmul.f32 %v3905, %v5589
      %v5846 = vmul.f32 %v3906, %v5590
      %v5847 = vmul.f32 %v3907, %v5591
      %v5848 = vmul.f32 %v3908, %v5592
      %v5849 = vmul.f32 %v3909, %v5593
      %v5850 = vmul.f32 %v3910, %v5594
      %v5851 = vmul.f32 %v3911, %v5595
      %v5852 = vmul.f32 %v3912, %v5596
      %v5853 = vmul.f32 %v3913, %v5597
      %v5854 = vmul.f32 %v3914, %v5598
      %v5855 = vmul.f32 %v3915, %v5599
      %v5856 = vmul.f32 %v3916, %v5600
      %v5857 = vmul.f32 %v3917, %v5601
      %v5858 = vmul.f32 %v3918, %v5602
      %v5859 = vmul.f32 %v3919, %v5603
      %v5860 = vmul.f32 %v3920, %v5604
      %v5861 = vmul.f32 %v3921, %v5605
      %v5862 = vmul.f32 %v3922, %v5606
      %v5863 = vmul.f32 %v3923, %v5607
      %v5864 = vmul.f32 %v3924, %v5608
      %v5865 = vmul.f32 %v3925, %v5609
      %v5866 = vmul.f32 %v3926, %v5610
      %v5867 = vmul.f32 %v3927, %v5611
      %v5868 = vmul.f32 %v3928, %v5612
      %v5869 = vmul.f32 %v3929, %v5613
      %v5870 = vmul.f32 %v3930, %v5614
      %v5871 = vmul.f32 %v3931, %v5615
      %v5872 = vmul.f32 %v3932, %v5616
      %v5873 = vmul.f32 %v3933, %v5617
      %v5874 = vmul.f32 %v3934, %v5618
      %v5875 = vmul.f32 %v3935, %v5619
      %v5876 = vmul.f32 %v3936, %v5620
      %v5877 = vmul.f32 %v3937, %v5621
      %v5878 = vmul.f32 %v3938, %v5622
      %v5879 = vmul.f32 %v3939, %v5623
      %v5880 = vmul.f32 %v3940, %v5624
      %v5881 = vmul.f32 %v3941, %v5625
      %v5882 = vmul.f32 %v3942, %v5626
      %v5883 = vmul.f32 %v3943, %v5627
      %v5884 = vmul.f32 %v3944, %v5628
      %v5885 = vmul.f32 %v3945, %v5629
      %v5886 = vmul.f32 %v3946, %v5630
      %v5887 = vmul.f32 %v3947, %v5631
      %v5888 = vmul.f32 %v3948, %v5632
      %v5889 = vmul.f32 %v3949, %v5633
      %v5890 = vmul.f32 %v3950, %v5634
      %v5891 = vmul.f32 %v3951, %v5635
      %v5892 = vmul.f32 %v3952, %v5636
      %v5893 = vmul.f32 %v3953, %v5637
      %v5894 = vmul.f32 %v3954, %v5638
      %v5895 = vmul.f32 %v3955, %v5639
      %v5896 = vmul.f32 %v3956, %v5640
      %v5897 = vmul.f32 %v3957, %v5641
      %v5898 = vmul.f32 %v3958, %v5642
      %v5899 = vmul.f32 %v3959, %v5643
      %v5900 = vmul.f32 %v3960, %v5644
      %v5901 = vmul.f32 %v3961, %v5645
      %v5902 = vmul.f32 %v3962, %v5646
      %v5903 = vmul.f32 %v3963, %v5647
      %v5904 = vmul.f32 %v3964, %v5648
      %v5905 = vmul.f32 %v3965, %v5649
      %v5906 = vmul.f32 %v3966, %v5650
      %v5907 = vmul.f32 %v3967, %v5651
      %v5908 = vmul.f32 %v3968, %v5652
      %v5909 = vmul.f32 %v3969, %v5653
      %v5910 = vmul.f32 %v3970, %v5654
      %v5911 = vmul.f32 %v3971, %v5655
      %v5912 = vmul.f32 %v3972, %v5656
      %v5913 = vmul.f32 %v3973, %v5657
      %v5914 = vmul.f32 %v3974, %v5658
      %v5915 = vmul.f32 %v3975, %v5659
      %v5916 = vmul.f32 %v3976, %v5660
      %v5917 = vmul.f32 %v3977, %v5661
      %v5918 = vmul.f32 %v3978, %v5662
      %v5919 = vmul.f32 %v3979, %v5663
      %v5920 = vmul.f32 %v3980, %v5664
      %v5921 = vmul.f32 %v3981, %v5665
      %v5922 = vmul.f32 %v3982, %v5666
      %v5923 = vmul.f32 %v3983, %v5667
      %v5924 = vmul.f32 %v3984, %v5668
      %v5925 = vmul.f32 %v3985, %v5669
      %v5926 = vmul.f32 %v3986, %v5670
      %v5927 = vmul.f32 %v3987, %v5671
      %v5928 = vmul.f32 %v3988, %v5672
      %v5929 = vmul.f32 %v3989, %v5673
      %v5930 = vmul.f32 %v3990, %v5674
      %v5931 = vmul.f32 %v3991, %v5675
      %v5932 = vmul.f32 %v3992, %v5676
      %v5933 = vmul.f32 %v3993, %v5677
      %v5934 = vmul.f32 %v3994, %v5678
      %v5935 = vmul.f32 %v3995, %v5679
      %v5936 = vmul.f32 %v3996, %v5680
      %v5937 = vmul.f32 %v3997, %v5681
      %v5938 = vmul.f32 %v3998, %v5682
      %v5939 = vmul.f32 %v3999, %v5683
      %v5940 = vmul.f32 %v4000, %v5684
      %v5941 = vmul.f32 %v4001, %v5685
      %v5942 = vmul.f32 %v4002, %v5686
      %v5943 = vmul.f32 %v4003, %v5687
      %v5944 = vmul.f32 %v4004, %v5688
      %v5945 = vmul.f32 %v4005, %v5689
      %v5946 = vmul.f32 %v4006, %v5690
      %v5947 = vmul.f32 %v4007, %v5691
      %v5948 = vmul.f32 %v4008, %v5692
      %v5949 = vmul.f32 %v4009, %v5693
      %v5950 = vmul.f32 %v4010, %v5694
      %v5951 = vmul.f32 %v4011, %v5695
      %v5952 = vmul.f32 %v4012, %v5696
      %v5953 = vmul.f32 %v4013, %v5697
      %v5954 = vmul.f32 %v4014, %v5698
      %v5955 = vmul.f32 %v4015, %v5699
      %v5956 = vmul.f32 %v4016, %v5700
      %v5957 = vmul.f32 %v4017, %v5701
      %v5958 = vmul.f32 %v4018, %v5702
      %v5959 = vmul.f32 %v4019, %v5703
      %v5960 = vmul.f32 %v4020, %v5704
      %v5961 = vmul.f32 %v4021, %v5705
      %v5962 = vmul.f32 %v4022, %v5706
      %v5963 = vmul.f32 %v4023, %v5707
      %v5964 = vmul.f32 %v4024, %v5708
      %v5965 = vmul.f32 %v4025, %v5709
      %v5966 = vmul.f32 %v4026, %v5710
      %v5967 = vmul.f32 %v4027, %v5711
      %v5968 = vmul.f32 %v4028, %v5712
      %v5969 = vmul.f32 %v4029, %v5713
      %v5970 = vmul.f32 %v4030, %v5714
      %v5971 = vmul.f32 %v4031, %v5715
      %v5972 = vmul.f32 %v4032, %v5716
      %v5973 = vmul.f32 %v4033, %v5717
      %v5974 = vmul.f32 %v4034, %v5718
      %v5975 = vmul.f32 %v4035, %v5719
      %v5976 = vmul.f32 %v4036, %v5720
      %v5977 = vmul.f32 %v4037, %v5721
      %v5978 = vmul.f32 %v4038, %v5722
      %v5979 = vmul.f32 %v4039, %v5723
      %v5980 = vmul.f32 %v4040, %v5724
      %v5981 = vmul.f32 %v4041, %v5725
      %v5982 = vmul.f32 %v4042, %v5726
      %v5983 = vmul.f32 %v4043, %v5727
      %v5984 = vmul.f32 %v4044, %v5728
      %v5985 = vmul.f32 %v4045, %v5729
      %v5986 = vmul.f32 %v4046, %v5730
      %v5987 = vmul.f32 %v4047, %v5731
      %v5988 = vmul.f32 %v4048, %v5732
      %v5989 = vmul.f32 %v4049, %v5733
      %v5990 = vmul.f32 %v4050, %v5734
      %v5991 = vmul.f32 %v4051, %v5735
      %v5992 = vmul.f32 %v4052, %v5736
      %v5993 = vmul.f32 %v4053, %v5737
      %v5994 = vmul.f32 %v4054, %v5738
      %v5995 = vmul.f32 %v4055, %v5739
      %v5996 = vmul.f32 %v4056, %v5740
      %v5997 = vmul.f32 %v4057, %v5741
      %v5998 = vmul.f32 %v4058, %v5742
      %v5999 = vmul.f32 %v4059, %v5743
      %v6000 = vmul.f32 %v4060, %v5744
      %v6001 = vmul.f32 %v4061, %v5745
      %v6002 = vmul.f32 %v4062, %v5746
      %v6003 = vmul.f32 %v4063, %v5747
      %v6004 = vmul.f32 %v4064, %v5748
      %v6005 = vmul.f32 %v4065, %v5749
      %v6006 = vmul.f32 %v4066, %v5750
      %v6007 = vmul.f32 %v4067, %v5751
      %v6008 = vmul.f32 %v4068, %v5752
      %v6009 = vmul.f32 %v4069, %v5753
      %v6010 = vmul.f32 %v4070, %v5754
      %v6011 = vmul.f32 %v4071, %v5755
      %v6012 = vmul.f32 %v4072, %v5756
      %v6013 = vmul.f32 %v4073, %v5757
      %v6014 = vmul.f32 %v4074, %v5758
      %v6015 = vmul.f32 %v4075, %v5759
      %v6016 = vmul.f32 %v4076, %v5760
      %v6017 = vmul.f32 %v4077, %v5761
      %v6018 = vmul.f32 %v4078, %v5762
      %v6019 = vmul.f32 %v4079, %v5763
      %v6020 = vmul.f32 %v4080, %v5764
      %v6021 = vmul.f32 %v4081, %v5765
      %v6022 = vmul.f32 %v4082, %v5766
      %v6023 = vmul.f32 %v4083, %v5767
      %v6024 = vmul.f32 %v4084, %v5768
      %v6025 = vmul.f32 %v4085, %v5769
      %v6026 = vmul.f32 %v4086, %v5770
      %v6027 = vmul.f32 %v4087, %v5771
      %v6028 = vmul.f32 %v4088, %v5772
      %v6029 = vmul.f32 %v4089, %v5773
      %v6030 = vmul.f32 %v4090, %v5774
      %v6031 = vld [vmem:[%s326] sm:$0xff]
      %v6032 = vld [vmem:[%s296] sm:$0xff]
      %v6033 = vld [vmem:[%s296 + $0x8] sm:$0xff]
      %v6034 = vld [vmem:[%s296 + $0x10] sm:$0xff]
      %v6035 = vld [vmem:[%s296 + $0x18] sm:$0xff]
      %6040 = vst [vmem:[#allocation1] ss:$2 sm:$0xff] %v6032
      %s6041 = scalar_lea.vmem [#allocation1], 16
      %6042 = vst [vmem:[%s6041] ss:$2 sm:$0xff] %v6033
      %s6043 = scalar_lea.vmem [#allocation1], 32
      %6044 = vst [vmem:[%s6043] ss:$2 sm:$0xff] %v6034
      %s6045 = scalar_lea.vmem [#allocation1], 48
      %6046 = vst [vmem:[%s6045] ss:$2 sm:$0xff] %v6035
      %v6047 = vld.sshfl [vmem:[#allocation1] sm:$0xff pattern:$0x75316420]
      %v6048 = vld.sshfl [vmem:[#allocation1 + $0x8] sm:$0xff pattern:$0x75316420]
      %v6049 = vld.sshfl [vmem:[#allocation1 + $0x10] sm:$0xff pattern:$0x75316420]
      %v6050 = vld.sshfl [vmem:[#allocation1 + $0x18] sm:$0xff pattern:$0x75316420]
      %v6051 = vld.sshfl [vmem:[#allocation1 + $0x20] sm:$0xff pattern:$0x75316420]
      %v6052 = vld.sshfl [vmem:[#allocation1 + $0x28] sm:$0xff pattern:$0x75316420]
      %v6053 = vld.sshfl [vmem:[#allocation1 + $0x30] sm:$0xff pattern:$0x75316420]
      %v6054 = vld.sshfl [vmem:[#allocation1 + $0x38] sm:$0xff pattern:$0x75316420]
      %6063 = vmatpush.msra.mxu0 %v5805
      %6064 = vmatpush.msra.mxu0 %v5803
      %6065 = vmatpush.msra.mxu0 %v5801
      %6066 = vmatpush.msra.mxu0 %v5799
      %6067 = vmatpush.msra.mxu0 %v5797
      %6068 = vmatpush.msra.mxu0 %v5795
      %6069 = vmatpush.msra.mxu0 %v5793
      %6070 = vmatpush.msra.mxu0 %v5791
      %6071 = vmatpush.msra.mxu0 %v5789
      %6072 = vmatpush.msra.mxu0 %v5787
      %6073 = vmatpush.msra.mxu0 %v5785
      %6074 = vmatpush.msra.mxu0 %v5783
      %6075 = vmatpush.msra.mxu0 %v5781
      %6076 = vmatpush.msra.mxu0 %v5779
      %6077 = vmatpush.msra.mxu0 %v5777
      %6078 = vmatpush.msra.mxu0 %v5775
      %6079 = vmatmul.f32.gmra.mxu0 %v6047
      %v6080 = vpop.f32.mrf.mxu0
      %v6081 = vadd.f32 0.0, %v6080
      %6082 = vdwg.mxu0
      %6083 = vmatpush.msra.mxu0 %v5837
      %6084 = vmatpush.msra.mxu0 %v5835
      %6085 = vmatpush.msra.mxu0 %v5833
      %6086 = vmatpush.msra.mxu0 %v5831
      %6087 = vmatpush.msra.mxu0 %v5829
      %6088 = vmatpush.msra.mxu0 %v5827
      %6089 = vmatpush.msra.mxu0 %v5825
      %6090 = vmatpush.msra.mxu0 %v5823
      %6091 = vmatpush.msra.mxu0 %v5821
      %6092 = vmatpush.msra.mxu0 %v5819
      %6093 = vmatpush.msra.mxu0 %v5817
      %6094 = vmatpush.msra.mxu0 %v5815
      %6095 = vmatpush.msra.mxu0 %v5813
      %6096 = vmatpush.msra.mxu0 %v5811
      %6097 = vmatpush.msra.mxu0 %v5809
      %6098 = vmatpush.msra.mxu0 %v5807
      %6099 = vmatmul.f32.gmra.mxu0 %v6048
      %v6100 = vpop.f32.mrf.mxu0
      %v6101 = vadd.f32 %v6081, %v6100
      %6102 = vdwg.mxu0
      %6103 = vmatpush.msra.mxu0 %v5869
      %6104 = vmatpush.msra.mxu0 %v5867
      %6105 = vmatpush.msra.mxu0 %v5865
      %6106 = vmatpush.msra.mxu0 %v5863
      %6107 = vmatpush.msra.mxu0 %v5861
      %6108 = vmatpush.msra.mxu0 %v5859
      %6109 = vmatpush.msra.mxu0 %v5857
      %6110 = vmatpush.msra.mxu0 %v5855
      %6111 = vmatpush.msra.mxu0 %v5853
      %6112 = vmatpush.msra.mxu0 %v5851
      %6113 = vmatpush.msra.mxu0 %v5849
      %6114 = vmatpush.msra.mxu0 %v5847
      %6115 = vmatpush.msra.mxu0 %v5845
      %6116 = vmatpush.msra.mxu0 %v5843
      %6117 = vmatpush.msra.mxu0 %v5841
      %6118 = vmatpush.msra.mxu0 %v5839
      %6119 = vmatmul.f32.gmra.mxu0 %v6049
      %v6120 = vpop.f32.mrf.mxu0
      %v6121 = vadd.f32 %v6101, %v6120
      %6122 = vdwg.mxu0
      %6123 = vmatpush.msra.mxu0 %v5901
      %6124 = vmatpush.msra.mxu0 %v5899
      %6125 = vmatpush.msra.mxu0 %v5897
      %6126 = vmatpush.msra.mxu0 %v5895
      %6127 = vmatpush.msra.mxu0 %v5893
      %6128 = vmatpush.msra.mxu0 %v5891
      %6129 = vmatpush.msra.mxu0 %v5889
      %6130 = vmatpush.msra.mxu0 %v5887
      %6131 = vmatpush.msra.mxu0 %v5885
      %6132 = vmatpush.msra.mxu0 %v5883
      %6133 = vmatpush.msra.mxu0 %v5881
      %6134 = vmatpush.msra.mxu0 %v5879
      %6135 = vmatpush.msra.mxu0 %v5877
      %6136 = vmatpush.msra.mxu0 %v5875
      %6137 = vmatpush.msra.mxu0 %v5873
      %6138 = vmatpush.msra.mxu0 %v5871
      %6139 = vmatmul.f32.gmra.mxu0 %v6050
      %v6140 = vpop.f32.mrf.mxu0
      %v6141 = vadd.f32 %v6121, %v6140
      %6142 = vdwg.mxu0
      %6143 = vmatpush.msra.mxu0 %v5933
      %6144 = vmatpush.msra.mxu0 %v5931
      %6145 = vmatpush.msra.mxu0 %v5929
      %6146 = vmatpush.msra.mxu0 %v5927
      %6147 = vmatpush.msra.mxu0 %v5925
      %6148 = vmatpush.msra.mxu0 %v5923
      %6149 = vmatpush.msra.mxu0 %v5921
      %6150 = vmatpush.msra.mxu0 %v5919
      %6151 = vmatpush.msra.mxu0 %v5917
      %6152 = vmatpush.msra.mxu0 %v5915
      %6153 = vmatpush.msra.mxu0 %v5913
      %6154 = vmatpush.msra.mxu0 %v5911
      %6155 = vmatpush.msra.mxu0 %v5909
      %6156 = vmatpush.msra.mxu0 %v5907
      %6157 = vmatpush.msra.mxu0 %v5905
      %6158 = vmatpush.msra.mxu0 %v5903
      %6159 = vmatmul.f32.gmra.mxu0 %v6051
      %v6160 = vpop.f32.mrf.mxu0
      %v6161 = vadd.f32 %v6141, %v6160
      %6162 = vdwg.mxu0
      %6163 = vmatpush.msra.mxu0 %v5965
      %6164 = vmatpush.msra.mxu0 %v5963
      %6165 = vmatpush.msra.mxu0 %v5961
      %6166 = vmatpush.msra.mxu0 %v5959
      %6167 = vmatpush.msra.mxu0 %v5957
      %6168 = vmatpush.msra.mxu0 %v5955
      %6169 = vmatpush.msra.mxu0 %v5953
      %6170 = vmatpush.msra.mxu0 %v5951
      %6171 = vmatpush.msra.mxu0 %v5949
      %6172 = vmatpush.msra.mxu0 %v5947
      %6173 = vmatpush.msra.mxu0 %v5945
      %6174 = vmatpush.msra.mxu0 %v5943
      %6175 = vmatpush.msra.mxu0 %v5941
      %6176 = vmatpush.msra.mxu0 %v5939
      %6177 = vmatpush.msra.mxu0 %v5937
      %6178 = vmatpush.msra.mxu0 %v5935
      %6179 = vmatmul.f32.gmra.mxu0 %v6052
      %v6180 = vpop.f32.mrf.mxu0
      %v6181 = vadd.f32 %v6161, %v6180
      %6182 = vdwg.mxu0
      %6183 = vmatpush.msra.mxu0 %v5997
      %6184 = vmatpush.msra.mxu0 %v5995
      %6185 = vmatpush.msra.mxu0 %v5993
      %6186 = vmatpush.msra.mxu0 %v5991
      %6187 = vmatpush.msra.mxu0 %v5989
      %6188 = vmatpush.msra.mxu0 %v5987
      %6189 = vmatpush.msra.mxu0 %v5985
      %6190 = vmatpush.msra.mxu0 %v5983
      %6191 = vmatpush.msra.mxu0 %v5981
      %6192 = vmatpush.msra.mxu0 %v5979
      %6193 = vmatpush.msra.mxu0 %v5977
      %6194 = vmatpush.msra.mxu0 %v5975
      %6195 = vmatpush.msra.mxu0 %v5973
      %6196 = vmatpush.msra.mxu0 %v5971
      %6197 = vmatpush.msra.mxu0 %v5969
      %6198 = vmatpush.msra.mxu0 %v5967
      %6199 = vmatmul.f32.gmra.mxu0 %v6053
      %v6200 = vpop.f32.mrf.mxu0
      %v6201 = vadd.f32 %v6181, %v6200
      %6202 = vdwg.mxu0
      %6203 = vmatpush.msra.mxu0 %v6029
      %6204 = vmatpush.msra.mxu0 %v6027
      %6205 = vmatpush.msra.mxu0 %v6025
      %6206 = vmatpush.msra.mxu0 %v6023
      %6207 = vmatpush.msra.mxu0 %v6021
      %6208 = vmatpush.msra.mxu0 %v6019
      %6209 = vmatpush.msra.mxu0 %v6017
      %6210 = vmatpush.msra.mxu0 %v6015
      %6211 = vmatpush.msra.mxu0 %v6013
      %6212 = vmatpush.msra.mxu0 %v6011
      %6213 = vmatpush.msra.mxu0 %v6009
      %6214 = vmatpush.msra.mxu0 %v6007
      %6215 = vmatpush.msra.mxu0 %v6005
      %6216 = vmatpush.msra.mxu0 %v6003
      %6217 = vmatpush.msra.mxu0 %v6001
      %6218 = vmatpush.msra.mxu0 %v5999
      %6219 = vmatmul.f32.gmra.mxu0 %v6054
      %v6220 = vpop.f32.mrf.mxu0
      %v6221 = vadd.f32 %v6201, %v6220
      %6222 = vdwg.mxu0
      %6223 = vmatpush.msra.mxu0 %v5806
      %6224 = vmatpush.msra.mxu0 %v5804
      %6225 = vmatpush.msra.mxu0 %v5802
      %6226 = vmatpush.msra.mxu0 %v5800
      %6227 = vmatpush.msra.mxu0 %v5798
      %6228 = vmatpush.msra.mxu0 %v5796
      %6229 = vmatpush.msra.mxu0 %v5794
      %6230 = vmatpush.msra.mxu0 %v5792
      %6231 = vmatpush.msra.mxu0 %v5790
      %6232 = vmatpush.msra.mxu0 %v5788
      %6233 = vmatpush.msra.mxu0 %v5786
      %6234 = vmatpush.msra.mxu0 %v5784
      %6235 = vmatpush.msra.mxu0 %v5782
      %6236 = vmatpush.msra.mxu0 %v5780
      %6237 = vmatpush.msra.mxu0 %v5778
      %6238 = vmatpush.msra.mxu0 %v5776
      %6239 = vmatmul.f32.gmra.mxu0 %v6047
      %v6240 = vpop.f32.mrf.mxu0
      %v6241 = vadd.f32 0.0, %v6240
      %6242 = vdwg.mxu0
      %6243 = vmatpush.msra.mxu0 %v5838
      %6244 = vmatpush.msra.mxu0 %v5836
      %6245 = vmatpush.msra.mxu0 %v5834
      %6246 = vmatpush.msra.mxu0 %v5832
      %6247 = vmatpush.msra.mxu0 %v5830
      %6248 = vmatpush.msra.mxu0 %v5828
      %6249 = vmatpush.msra.mxu0 %v5826
      %6250 = vmatpush.msra.mxu0 %v5824
      %6251 = vmatpush.msra.mxu0 %v5822
      %6252 = vmatpush.msra.mxu0 %v5820
      %6253 = vmatpush.msra.mxu0 %v5818
      %6254 = vmatpush.msra.mxu0 %v5816
      %6255 = vmatpush.msra.mxu0 %v5814
      %6256 = vmatpush.msra.mxu0 %v5812
      %6257 = vmatpush.msra.mxu0 %v5810
      %6258 = vmatpush.msra.mxu0 %v5808
      %6259 = vmatmul.f32.gmra.mxu0 %v6048
      %v6260 = vpop.f32.mrf.mxu0
      %v6261 = vadd.f32 %v6241, %v6260
      %6262 = vdwg.mxu0
      %6263 = vmatpush.msra.mxu0 %v5870
      %6264 = vmatpush.msra.mxu0 %v5868
      %6265 = vmatpush.msra.mxu0 %v5866
      %6266 = vmatpush.msra.mxu0 %v5864
      %6267 = vmatpush.msra.mxu0 %v5862
      %6268 = vmatpush.msra.mxu0 %v5860
      %6269 = vmatpush.msra.mxu0 %v5858
      %6270 = vmatpush.msra.mxu0 %v5856
      %6271 = vmatpush.msra.mxu0 %v5854
      %6272 = vmatpush.msra.mxu0 %v5852
      %6273 = vmatpush.msra.mxu0 %v5850
      %6274 = vmatpush.msra.mxu0 %v5848
      %6275 = vmatpush.msra.mxu0 %v5846
      %6276 = vmatpush.msra.mxu0 %v5844
      %6277 = vmatpush.msra.mxu0 %v5842
      %6278 = vmatpush.msra.mxu0 %v5840
      %6279 = vmatmul.f32.gmra.mxu0 %v6049
      %v6280 = vpop.f32.mrf.mxu0
      %v6281 = vadd.f32 %v6261, %v6280
      %6282 = vdwg.mxu0
      %6283 = vmatpush.msra.mxu0 %v5902
      %6284 = vmatpush.msra.mxu0 %v5900
      %6285 = vmatpush.msra.mxu0 %v5898
      %6286 = vmatpush.msra.mxu0 %v5896
      %6287 = vmatpush.msra.mxu0 %v5894
      %6288 = vmatpush.msra.mxu0 %v5892
      %6289 = vmatpush.msra.mxu0 %v5890
      %6290 = vmatpush.msra.mxu0 %v5888
      %6291 = vmatpush.msra.mxu0 %v5886
      %6292 = vmatpush.msra.mxu0 %v5884
      %6293 = vmatpush.msra.mxu0 %v5882
      %6294 = vmatpush.msra.mxu0 %v5880
      %6295 = vmatpush.msra.mxu0 %v5878
      %6296 = vmatpush.msra.mxu0 %v5876
      %6297 = vmatpush.msra.mxu0 %v5874
      %6298 = vmatpush.msra.mxu0 %v5872
      %6299 = vmatmul.f32.gmra.mxu0 %v6050
      %v6300 = vpop.f32.mrf.mxu0
      %v6301 = vadd.f32 %v6281, %v6300
      %6302 = vdwg.mxu0
      %6303 = vmatpush.msra.mxu0 %v5934
      %6304 = vmatpush.msra.mxu0 %v5932
      %6305 = vmatpush.msra.mxu0 %v5930
      %6306 = vmatpush.msra.mxu0 %v5928
      %6307 = vmatpush.msra.mxu0 %v5926
      %6308 = vmatpush.msra.mxu0 %v5924
      %6309 = vmatpush.msra.mxu0 %v5922
      %6310 = vmatpush.msra.mxu0 %v5920
      %6311 = vmatpush.msra.mxu0 %v5918
      %6312 = vmatpush.msra.mxu0 %v5916
      %6313 = vmatpush.msra.mxu0 %v5914
      %6314 = vmatpush.msra.mxu0 %v5912
      %6315 = vmatpush.msra.mxu0 %v5910
      %6316 = vmatpush.msra.mxu0 %v5908
      %6317 = vmatpush.msra.mxu0 %v5906
      %6318 = vmatpush.msra.mxu0 %v5904
      %6319 = vmatmul.f32.gmra.mxu0 %v6051
      %v6320 = vpop.f32.mrf.mxu0
      %v6321 = vadd.f32 %v6301, %v6320
      %6322 = vdwg.mxu0
      %6323 = vmatpush.msra.mxu0 %v5966
      %6324 = vmatpush.msra.mxu0 %v5964
      %6325 = vmatpush.msra.mxu0 %v5962
      %6326 = vmatpush.msra.mxu0 %v5960
      %6327 = vmatpush.msra.mxu0 %v5958
      %6328 = vmatpush.msra.mxu0 %v5956
      %6329 = vmatpush.msra.mxu0 %v5954
      %6330 = vmatpush.msra.mxu0 %v5952
      %6331 = vmatpush.msra.mxu0 %v5950
      %6332 = vmatpush.msra.mxu0 %v5948
      %6333 = vmatpush.msra.mxu0 %v5946
      %6334 = vmatpush.msra.mxu0 %v5944
      %6335 = vmatpush.msra.mxu0 %v5942
      %6336 = vmatpush.msra.mxu0 %v5940
      %6337 = vmatpush.msra.mxu0 %v5938
      %6338 = vmatpush.msra.mxu0 %v5936
      %6339 = vmatmul.f32.gmra.mxu0 %v6052
      %v6340 = vpop.f32.mrf.mxu0
      %v6341 = vadd.f32 %v6321, %v6340
      %6342 = vdwg.mxu0
      %6343 = vmatpush.msra.mxu0 %v5998
      %6344 = vmatpush.msra.mxu0 %v5996
      %6345 = vmatpush.msra.mxu0 %v5994
      %6346 = vmatpush.msra.mxu0 %v5992
      %6347 = vmatpush.msra.mxu0 %v5990
      %6348 = vmatpush.msra.mxu0 %v5988
      %6349 = vmatpush.msra.mxu0 %v5986
      %6350 = vmatpush.msra.mxu0 %v5984
      %6351 = vmatpush.msra.mxu0 %v5982
      %6352 = vmatpush.msra.mxu0 %v5980
      %6353 = vmatpush.msra.mxu0 %v5978
      %6354 = vmatpush.msra.mxu0 %v5976
      %6355 = vmatpush.msra.mxu0 %v5974
      %6356 = vmatpush.msra.mxu0 %v5972
      %6357 = vmatpush.msra.mxu0 %v5970
      %6358 = vmatpush.msra.mxu0 %v5968
      %6359 = vmatmul.f32.gmra.mxu0 %v6053
      %v6360 = vpop.f32.mrf.mxu0
      %v6361 = vadd.f32 %v6341, %v6360
      %6362 = vdwg.mxu0
      %6363 = vmatpush.msra.mxu0 %v6030
      %6364 = vmatpush.msra.mxu0 %v6028
      %6365 = vmatpush.msra.mxu0 %v6026
      %6366 = vmatpush.msra.mxu0 %v6024
      %6367 = vmatpush.msra.mxu0 %v6022
      %6368 = vmatpush.msra.mxu0 %v6020
      %6369 = vmatpush.msra.mxu0 %v6018
      %6370 = vmatpush.msra.mxu0 %v6016
      %6371 = vmatpush.msra.mxu0 %v6014
      %6372 = vmatpush.msra.mxu0 %v6012
      %6373 = vmatpush.msra.mxu0 %v6010
      %6374 = vmatpush.msra.mxu0 %v6008
      %6375 = vmatpush.msra.mxu0 %v6006
      %6376 = vmatpush.msra.mxu0 %v6004
      %6377 = vmatpush.msra.mxu0 %v6002
      %6378 = vmatpush.msra.mxu0 %v6000
      %6379 = vmatmul.f32.gmra.mxu0 %v6054
      %v6380 = vpop.f32.mrf.mxu0
      %v6381 = vadd.f32 %v6361, %v6380
      %6382 = vdwg.mxu0
      %v6385 = vrot.slane %v6381, 4
      %vm6386 = vcmask 1043456
      %v6387 = vsel %vm6386, %v6221, %v6385
      %v6389 = vadd.f32 %v6031, %v6387
      %6390 = vst [vmem:[%s326] sm:$0xff] %v6389
      %s6391 = smul.u32 2, %s20
      %p6392 = scmp.lt.s32.totalorder %s6391, 3
      %s6393 = scalar_select %p6392, %s6391, 3
      %s6394 = smul.addr %s6393, 4
      %s6395 = scalar_lea.vmem %s5, %s6394
      // Predicated region
      $region45: #{_forward_impl.2} parent=39 // pred_check
        %p6396 = pneg %p176
      $region46: #{_forward_impl.2} parent=39 // pred_check_branch
        %6398 = sbr.rel (%p6396) target = $region48
      $region47: #{_forward_impl.2} parent=39 // pred_region
        %s6399 = smul.u32 2, %s20
      $region48: #{_forward_impl.2} parent=39 // pred_fallthru
        _
    $region40: #{_forward_impl.2} parent=5 // pred_fallthru
      _
    %p6400 = scmp.le.s32.totalorder 2, %s11
    // Predicated region
    $region49: #{_forward_impl.2} parent=5 // pred_check
      %p6401 = pneg %p6400
    $region50: #{_forward_impl.2} parent=5 // pred_check_branch
      %6403 = sbr.rel (%p6401) target = $region52
    $region51: #{_forward_impl.2} parent=5 // pred_region
      %s6404 = ssub.s32 %s11, 2
      // Predicated region
      $region53: #{_forward_impl.2} parent=51 // pred_check
        %p6405 = pneg %p182
      $region54: #{_forward_impl.2} parent=51 // pred_check_branch
        %6407 = sbr.rel (%p6405) target = $region56
      $region55: #{_forward_impl.2} parent=51 // pred_region
        %s6408 = smul.u32 2, %s22
        %p6409 = scmp.lt.s32.totalorder %s6408, 3
        %s6410 = scalar_select %p6409, %s6408, 3
        %s6411 = smul.addr %s6410, 4
        %s6412 = scalar_lea.vmem %s5, %s6411
      $region56: #{_forward_impl.2} parent=51 // pred_fallthru
        _
    $region52: #{_forward_impl.2} parent=5 // pred_fallthru
      _
  $region6: #{_forward_impl.2} parent=0 // loop_footer
    %s15 = sadd.s32 1, %s11
  $region7: #{_forward_impl.2} parent=0 // loop_footer_branch
    %10 = sbr.rel target = $region3
  $region8: #{_forward_impl.2} parent=0 // loop_exit
    _

</llo_original>
